<compile_context>
chip_gen: v7x
topology: tpu7x:2x2x1
jax: 0.10.0
libtpu: 0.0.40
codegen_flags: <defaults>
</compile_context>

<pallas_src>
import functools

import jax
import jax.numpy as jnp
from jax.experimental import pallas as pl
from jax.experimental.pallas import tpu as pltpu


# ---------------------------------------------------------------------------
# VMEM budgeting (generation-aware).
# ---------------------------------------------------------------------------
def _tpu_vmem_capacity():
    """Physical VMEM per TensorCore (bytes); conservative fallback if unknown."""
    try:
        cap = int(getattr(pltpu.get_tpu_info(), "vmem_capacity_bytes", 0))
        if cap > 0:
            return cap
    except Exception:
        pass
    return 64 << 20          # v7x per-TC size: safe lower bound across generations


def _vmem_limit(*nbytes):
    """2x (double-buffer) the live blocks + headroom, floored at 16 MiB and capped
    at ~80% of physical VMEM (leave room for Mosaic-internal scratch)."""
    cap = int(0.8 * _tpu_vmem_capacity())
    need = 2 * sum(int(n) for n in nbytes) + (4 << 20)
    return int(min(max(need, 16 << 20), cap))


# ---------------------------------------------------------------------------
# Kernel 1: layer-0 input projection  gi0 = x @ [W_r|W_z|W_n] + bias
# One fused (tile, E) @ (E, 3H) MXU matmul over all T*B rows, hoisted out of the
# serial loop.  bias already contains b_ih (+ b_hh for the r and z gates).
# ---------------------------------------------------------------------------
def in_proj_kernel(x_ref, w_ref, b_ref, o_ref, *, hidden, fused_out):
    acc = (jnp.dot(x_ref[...], w_ref[...], preferred_element_type=jnp.float32)
           + b_ref[...])                                # (tile, 3H) f32
    if fused_out:                                       # H % 128 == 0: keep (N, 3H)
        o_ref[...] = acc
    else:                                               # gate-major (3, N, H)
        for g in range(3):
            o_ref[g] = acc[:, g * hidden:(g + 1) * hidden]


def input_projection(x2d, w_fused, bias, *, hidden, fused_out, row_tile):
    """x2d: (N, E) bf16, w_fused: (E, 3H) bf16, bias: (1, 3H) f32.
    Returns gi0 as (N, 3H) f32 if fused_out else (3, N, H) f32."""
    N, E = x2d.shape
    H3 = w_fused.shape[-1]
    tile = N if N <= row_tile else row_tile
    limit = _vmem_limit(tile * E * 2, E * H3 * 2, tile * H3 * 4, H3 * 4)
    if fused_out:
        out_shape = jax.ShapeDtypeStruct((N, H3), jnp.float32)
        out_spec = pl.BlockSpec((tile, H3), lambda i: (i, 0))
    else:
        out_shape = jax.ShapeDtypeStruct((3, N, hidden), jnp.float32)
        out_spec = pl.BlockSpec((3, tile, hidden), lambda i: (0, i, 0))
    kernel = functools.partial(in_proj_kernel, hidden=hidden, fused_out=fused_out)
    return pl.pallas_call(
        kernel,
        out_shape=out_shape,
        grid=(pl.cdiv(N, tile),),
        in_specs=[
            pl.BlockSpec((tile, E), lambda i: (i, 0)),
            pl.BlockSpec((E, H3), lambda i: (0, 0)),
            pl.BlockSpec((1, H3), lambda i: (0, 0)),
        ],
        out_specs=out_spec,
        compiler_params=pltpu.CompilerParams(
            dimension_semantics=("parallel",),
            vmem_limit_bytes=limit),
    )(x2d, w_fused, bias)


# ---------------------------------------------------------------------------
# Kernel 2: fused 2-layer GRU recurrence over time (wavefront), chunked along T.
# h0/h1 carried in VMEM f32 scratch; per step: layer-0 hidden matmul(s) + gates,
# then layer-1 input + hidden matmul(s) + gates.
# ---------------------------------------------------------------------------
def gru2_rec_kernel(gi0_ref, whh0_ref, wih1_ref, whh1_ref,
                    bhn0_ref, bx1_ref, bhn1_ref,
                    out_ref, h0_last_ref, h1_last_ref,
                    h0_s, h1_s, *, chunk, total_t, hidden, fuse):
    c = pl.program_id(0)

    @pl.when(c == 0)
    def _():
        h0_s[...] = jnp.zeros_like(h0_s)                # PyTorch default h0 = 0
        h1_s[...] = jnp.zeros_like(h1_s)

    def split3(a):
        return (a[:, 0:hidden], a[:, hidden:2 * hidden], a[:, 2 * hidden:3 * hidden])

    def matmul3(lhs_bf16, w_ref):
        if fuse:   # single (B,H)@(H,3H) matmul; lane-aligned slices (H % 128 == 0)
            return split3(jnp.dot(lhs_bf16, w_ref[...],
                                  preferred_element_type=jnp.float32))
        return tuple(jnp.dot(lhs_bf16, w_ref[g], preferred_element_type=jnp.float32)
                     for g in range(3))

    # Biases hoisted out of the serial loop.
    bhn0 = bhn0_ref[...]                                 # (1, H) f32
    bhn1 = bhn1_ref[...]
    if fuse:
        bx1_r, bx1_z, bx1_n = split3(bx1_ref[...])
    else:
        bx1_r, bx1_z, bx1_n = bx1_ref[0], bx1_ref[1], bx1_ref[2]

    def step(i, carry):
        # ---------------- layer 0 ----------------
        h0 = h0_s[...]                                   # (B, H) f32
        gh0_r, gh0_z, gh0_n = matmul3(h0.astype(jnp.bfloat16), whh0_ref)
        if fuse:
            gi0_r, gi0_z, gi0_n = split3(gi0_ref[i])
        else:
            gi0_r, gi0_z, gi0_n = gi0_ref[0, i], gi0_ref[1, i], gi0_ref[2, i]
        # gi0 already holds x@W_ih0 + b_ih0 (+ b_hh0 for r,z) -> only n-gate bias left.
        r0 = jax.nn.sigmoid(gi0_r + gh0_r)
        z0 = jax.nn.sigmoid(gi0_z + gh0_z)
        n0 = jnp.tanh(gi0_n + r0 * (gh0_n + bhn0))
        h0n = (1.0 - z0) * n0 + z0 * h0
        h0_s[...] = h0n

        # -------- layer 1 (input = h0n; inter-layer dropout = identity / eval) ------
        h1 = h1_s[...]
        gi1_r, gi1_z, gi1_n = matmul3(h0n.astype(jnp.bfloat16), wih1_ref)
        gh1_r, gh1_z, gh1_n = matmul3(h1.astype(jnp.bfloat16), whh1_ref)
        r1 = jax.nn.sigmoid(gi1_r + gh1_r + bx1_r)
        z1 = jax.nn.sigmoid(gi1_z + gh1_z + bx1_z)
        n1 = jnp.tanh(gi1_n + bx1_n + r1 * (gh1_n + bhn1))
        h1n = (1.0 - z1) * n1 + z1 * h1
        h1_s[...] = h1n

        out_ref[i] = h1n.astype(out_ref.dtype)
        return carry

    if total_t % chunk == 0:
        jax.lax.fori_loop(0, chunk, step, 0, unroll=min(chunk, 8))
    else:
        # Ragged last chunk: dynamic trip count; Pallas pads the partial output block.
        steps = jnp.minimum(chunk, total_t - c * chunk)
        jax.lax.fori_loop(0, steps, step, 0)

    h0_last_ref[...] = h0_s[...]
    h1_last_ref[...] = h1_s[...]


def gru2_recurrence(gi0, whh0, wih1, whh1, bhn0, bx1, bhn1,
                    *, batch, hidden, total_t, fuse, out_dtype=jnp.float32):
    """Fused 2-layer GRU recurrence.  gi0: (3,T,B,H) f32 (gate-major) or
    (T,B,3H) f32 (lane-fused).  Returns (out (T,B,H), h_last0 (B,H), h_last1 (B,H))."""
    B, H, T = batch, hidden, total_t
    vcap = _tpu_vmem_capacity()
    chunk_bytes = max(2 << 20, vcap // 6)               # bigger chunks on v5e/v6e
    out_isz = jnp.dtype(out_dtype).itemsize
    per_step = 3 * B * H * 4 + B * H * out_isz
    chunk = max(1, min(T, chunk_bytes // max(per_step, 1)))
    num_chunks = pl.cdiv(T, chunk)

    if fuse:
        gi_spec = pl.BlockSpec((chunk, B, 3 * H), lambda c: (c, 0, 0))
        w_specs = [pl.BlockSpec((H, 3 * H), lambda c: (0, 0))] * 3
        bx1_spec = pl.BlockSpec((1, 3 * H), lambda c: (0, 0))
    else:
        gi_spec = pl.BlockSpec((3, chunk, B, H), lambda c: (0, c, 0, 0))
        w_specs = [pl.BlockSpec((3, H, H), lambda c: (0, 0, 0))] * 3
        bx1_spec = pl.BlockSpec((3, 1, H), lambda c: (0, 0, 0))

    limit = _vmem_limit(3 * chunk * B * H * 4, chunk * B * H * out_isz,
                        3 * 3 * H * H * 2, 16 * B * H * 4)

    kernel = functools.partial(gru2_rec_kernel, chunk=chunk, total_t=T,
                               hidden=H, fuse=fuse)
    # NOTE: at realistic batch sizes a leading "parallel" batch axis (or a per-layer
    # core_map split) would use both v7x TensorCores; skipped at these tiny shapes.
    out, h_last0, h_last1 = pl.pallas_call(
        kernel,
        out_shape=(jax.ShapeDtypeStruct((T, B, H), out_dtype),
                   jax.ShapeDtypeStruct((B, H), jnp.float32),
                   jax.ShapeDtypeStruct((B, H), jnp.float32)),
        grid_spec=pltpu.PrefetchScalarGridSpec(
            num_scalar_prefetch=0,
            grid=(num_chunks,),
            in_specs=[gi_spec, w_specs[0], w_specs[1], w_specs[2],
                      pl.BlockSpec((1, H), lambda c: (0, 0)),
                      bx1_spec,
                      pl.BlockSpec((1, H), lambda c: (0, 0))],
            out_specs=[pl.BlockSpec((chunk, B, H), lambda c: (c, 0, 0)),
                       pl.BlockSpec((B, H), lambda c: (0, 0)),
                       pl.BlockSpec((B, H), lambda c: (0, 0))],
            scratch_shapes=[pltpu.VMEM((B, H), jnp.float32),
                            pltpu.VMEM((B, H), jnp.float32)],
        ),
        compiler_params=pltpu.CompilerParams(
            dimension_semantics=("arbitrary",),     # recurrence is sequential in time
            vmem_limit_bytes=limit),
    )(gi0, whh0, wih1, whh1, bhn0, bx1, bhn1)
    return out, h_last0, h_last1


# ---------------------------------------------------------------------------
# Encoder forward: embedding -> (dropout: identity) -> fused 2-layer GRU.
# ---------------------------------------------------------------------------
def encoder_forward(params, input_ids):
    """input_ids: int32 (B, T).  Returns (output (B, T, H) f32, hidden (2, B, H) f32)."""
    B, T = input_ids.shape
    H = params["bhh0"].shape[-1]
    fuse = (H % 128 == 0)                     # lane-aligned gate slices only when true
    row_tile = 512 if _tpu_vmem_capacity() >= (96 << 20) else 256

    # Embedding gather directly in time-major layout (no (B,T,E) transpose round trip).
    x = jnp.take(params["emb"], input_ids.T, axis=0)            # (T, B, E) bf16
    # TODO(synk): nn.Dropout on embeddings and GRU inter-layer dropout are identity
    # (eval-mode semantics); training-mode RNG dropout not implemented.
    E = x.shape[-1]

    def fuse_w(w):                              # (3, in, H) -> (in, 3H)
        return jnp.concatenate([w[0], w[1], w[2]], axis=-1)

    # Layer-0 projection: fused weight + bias with b_hh r,z folded in.
    wih0_f = fuse_w(params["wih0"])                              # (E, 3H) bf16
    b_proj0 = jnp.concatenate([params["bih0"][0] + params["bhh0"][0],
                               params["bih0"][1] + params["bhh0"][1],
                               params["bih0"][2]], axis=-1)      # (1, 3H) f32
    bhn0 = params["bhh0"][2]                                     # (1, H) f32
    bhn1 = params["bhh1"][2]                                     # (1, H) f32
    bx1_gm = jnp.stack([params["bih1"][0] + params["bhh1"][0],
                        params["bih1"][1] + params["bhh1"][1],
                        params["bih1"][2]], axis=0)              # (3, 1, H) f32

    if fuse:
        whh0, wih1, whh1 = fuse_w(params["whh0"]), fuse_w(params["wih1"]), fuse_w(params["whh1"])
        bx1 = jnp.concatenate([bx1_gm[0], bx1_gm[1], bx1_gm[2]], axis=-1)   # (1, 3H)
    else:
        whh0, wih1, whh1, bx1 = params["whh0"], params["wih1"], params["whh1"], bx1_gm

    # Hoisted layer-0 input projection: one big MXU matmul over all T*B rows.
    gi0 = input_projection(x.reshape(T * B, E), wih0_f, b_proj0,
                           hidden=H, fused_out=fuse, row_tile=row_tile)
    gi0 = gi0.reshape((T, B, 3 * H) if fuse else (3, T, B, H))   # contiguous reshape

    # Fused two-layer recurrence (wavefront over time); no gi1/out0 HBM round trip.
    out, h_last0, h_last1 = gru2_recurrence(
        gi0, whh0, wih1, whh1, bhn0, bx1, bhn1,
        batch=B, hidden=H, total_t=T, fuse=fuse, out_dtype=jnp.float32)

    output = jnp.transpose(out, (1, 0, 2))                       # (B, T, H) batch_first
    hidden = jnp.stack([h_last0, h_last1], axis=0)               # (num_layers=2, B, H)
    return output, hidden


# ---------------------------------------------------------------------------
# Parameter construction (PyTorch-style init, gate order r,z,n; pad row zeroed).
# ---------------------------------------------------------------------------
def init_params(key, vocab, emb, hidden, pad_idx=0):
    ks = jax.random.split(key, 9)
    s = 1.0 / float(hidden) ** 0.5

    def u(k, shape):
        return jax.random.uniform(k, shape, jnp.float32, -s, s)

    emb_tbl = jax.random.normal(ks[0], (vocab, emb), jnp.float32)
    emb_tbl = emb_tbl.at[pad_idx].set(0.0)          # nn.Embedding padding_idx row = 0
    return dict(
        emb=emb_tbl.astype(jnp.bfloat16),
        # layer 0 (input size = emb)
        wih0=u(ks[1], (3, emb, hidden)).astype(jnp.bfloat16),
        whh0=u(ks[2], (3, hidden, hidden)).astype(jnp.bfloat16),
        bih0=u(ks[3], (3, 1, hidden)),
        bhh0=u(ks[4], (3, 1, hidden)),
        # layer 1 (input size = hidden)
        wih1=u(ks[5], (3, hidden, hidden)).astype(jnp.bfloat16),
        whh1=u(ks[6], (3, hidden, hidden)).astype(jnp.bfloat16),
        bih1=u(ks[7], (3, 1, hidden)),
        bhh1=u(ks[8], (3, 1, hidden)),
    )


# ---------------------------------------------------------------------------
# Pure-JAX reference (mirrors the kernel's bf16-operand / f32-accumulate numerics).
# ---------------------------------------------------------------------------
def _ref_gru_layer(x_bf16, h0, wih, whh, bih, bhh):
    T = x_bf16.shape[0]
    h = h0
    outs = []
    for t in range(T):
        xt = x_bf16[t]
        gi = [jnp.dot(xt, wih[g], preferred_element_type=jnp.float32) + bih[g]
              for g in range(3)]
        hb = h.astype(jnp.bfloat16)
        gh = [jnp.dot(hb, whh[g], preferred_element_type=jnp.float32) + bhh[g]
              for g in range(3)]
        r = jax.nn.sigmoid(gi[0] + gh[0])
        z = jax.nn.sigmoid(gi[1] + gh[1])
        n = jnp.tanh(gi[2] + r * gh[2])
        h = (1.0 - z) * n + z * h
        outs.append(h)
    return jnp.stack(outs, axis=0), h


def _ref_encoder(params, ids):
    B, _ = ids.shape
    H = params["bhh0"].shape[-1]
    x = jnp.take(params["emb"], ids.T, axis=0)
    h0 = jnp.zeros((B, H), jnp.float32)
    out0, h_last0 = _ref_gru_layer(x, h0, params["wih0"], params["whh0"],
                                   params["bih0"], params["bhh0"])
    out1, h_last1 = _ref_gru_layer(out0.astype(jnp.bfloat16), h0,
                                   params["wih1"], params["whh1"],
                                   params["bih1"], params["bhh1"])
    return jnp.transpose(out1, (1, 0, 2)), jnp.stack([h_last0, h_last1], axis=0)


if __name__ == "__main__":
    B, T = 2, 8
    VOCAB, EMB, HID = 16, 32, 32
    PAD = 0

    key = jax.random.PRNGKey(0)
    k_params, k_data = jax.random.split(key)
    params = init_params(k_params, VOCAB, EMB, HID, pad_idx=PAD)
    input_ids = jax.random.randint(k_data, (B, T), 0, VOCAB, dtype=jnp.int32)

    fwd = jax.jit(encoder_forward)
    output, hidden = fwd(params, input_ids)
    jax.block_until_ready((output, hidden))

    assert output.shape == (B, T, HID), output.shape
    assert hidden.shape == (2, B, HID), hidden.shape
    assert bool(jnp.all(jnp.isfinite(output))) and bool(jnp.all(jnp.isfinite(hidden)))

    ref_out, ref_hid = _ref_encoder(params, input_ids)
    assert jnp.allclose(output, ref_out, atol=2e-2, rtol=2e-2), \
        float(jnp.max(jnp.abs(output - ref_out)))
    assert jnp.allclose(hidden, ref_hid, atol=2e-2, rtol=2e-2), \
        float(jnp.max(jnp.abs(hidden - ref_hid)))

    print("KERNEL_OK")
</pallas_src>

<mosaic_0001>
module attributes {stable_mosaic.version = 11 : i64} {
  func.func @in_proj_kernel(%arg0: i32, %arg1: memref<16x32xbf16, #tpu.memory_space<vmem>>, %arg2: memref<32x96xbf16, #tpu.memory_space<vmem>>, %arg3: memref<1x96xf32, #tpu.memory_space<vmem>>, %arg4: memref<3x16x32xf32, #tpu.memory_space<vmem>>) attributes {dimension_semantics = [#tpu.dimension_semantics<parallel>], iteration_bounds = array<i64: 1>, scalar_prefetch = 0 : i64, scratch_operands = 0 : i64, tpu.core_type = #tpu.core_type<tc>, window_params = [{transform_indices = @transform_0, window_bounds = array<i64: 16, 32>}, {pipeline_mode = #tpu.pipeline_mode<synchronous>, transform_indices = @transform_1, window_bounds = array<i64: 32, 96>}, {pipeline_mode = #tpu.pipeline_mode<synchronous>, transform_indices = @transform_2, window_bounds = array<i64: 1, 96>}, {transform_indices = @transform_3, window_bounds = array<i64: 3, 16, 32>}]} {
    %c0 = arith.constant 0 : index
    %c0_0 = arith.constant 0 : index
    %0 = vector.load %arg1[%c0, %c0_0] : memref<16x32xbf16, #tpu.memory_space<vmem>>, vector<16x32xbf16>
    %c0_1 = arith.constant 0 : index
    %c0_2 = arith.constant 0 : index
    %1 = vector.load %arg2[%c0_1, %c0_2] : memref<32x96xbf16, #tpu.memory_space<vmem>>, vector<32x96xbf16>
    %cst = arith.constant dense<0.000000e+00> : vector<16x96xf32>
    %2 = tpu.matmul %0, %1, %cst {dimension_numbers = #tpu.dot_dimension_numbers<[1], [0], [0], [1], [0, 0, 1, 1], [], []>} : vector<16x32xbf16>, vector<32x96xbf16>, vector<16x96xf32> -> vector<16x96xf32>
    %c0_3 = arith.constant 0 : index
    %c0_4 = arith.constant 0 : index
    %3 = vector.load %arg3[%c0_3, %c0_4] : memref<1x96xf32, #tpu.memory_space<vmem>>, vector<1x96xf32>
    %4 = vector.broadcast %3 : vector<1x96xf32> to vector<16x96xf32>
    %5 = arith.addf %2, %4 : vector<16x96xf32>
    %6 = vector.extract_strided_slice %5 {offsets = [0, 0], sizes = [16, 32], strides = [1, 1]} : vector<16x96xf32> to vector<16x32xf32>
    %c0_5 = arith.constant 0 : index
    %c0_6 = arith.constant 0 : index
    %c0_7 = arith.constant 0 : index
    %7 = vector.load %arg4[%c0_5, %c0_6, %c0_7] : memref<3x16x32xf32, #tpu.memory_space<vmem>>, vector<1x16x32xf32>
    %8 = vector.shape_cast %7 : vector<1x16x32xf32> to vector<16x32xf32>
    %9 = vector.shape_cast %6 : vector<16x32xf32> to vector<1x16x32xf32>
    tpu.vector_store %arg4[%c0_5, %c0_6, %c0_7], %9 {strides = array<i32>} : memref<3x16x32xf32, #tpu.memory_space<vmem>>, vector<1x16x32xf32>,
    %10 = vector.extract_strided_slice %5 {offsets = [0, 32], sizes = [16, 32], strides = [1, 1]} : vector<16x96xf32> to vector<16x32xf32>
    %c1 = arith.constant 1 : index
    %c0_8 = arith.constant 0 : index
    %c0_9 = arith.constant 0 : index
    %11 = vector.load %arg4[%c1, %c0_8, %c0_9] : memref<3x16x32xf32, #tpu.memory_space<vmem>>, vector<1x16x32xf32>
    %12 = vector.shape_cast %11 : vector<1x16x32xf32> to vector<16x32xf32>
    %13 = vector.shape_cast %10 : vector<16x32xf32> to vector<1x16x32xf32>
    tpu.vector_store %arg4[%c1, %c0_8, %c0_9], %13 {strides = array<i32>} : memref<3x16x32xf32, #tpu.memory_space<vmem>>, vector<1x16x32xf32>,
    %14 = vector.extract_strided_slice %5 {offsets = [0, 64], sizes = [16, 32], strides = [1, 1]} : vector<16x96xf32> to vector<16x32xf32>
    %c2 = arith.constant 2 : index
    %c0_10 = arith.constant 0 : index
    %c0_11 = arith.constant 0 : index
    %15 = vector.load %arg4[%c2, %c0_10, %c0_11] : memref<3x16x32xf32, #tpu.memory_space<vmem>>, vector<1x16x32xf32>
    %16 = vector.shape_cast %15 : vector<1x16x32xf32> to vector<16x32xf32>
    %17 = vector.shape_cast %14 : vector<16x32xf32> to vector<1x16x32xf32>
    tpu.vector_store %arg4[%c2, %c0_10, %c0_11], %17 {strides = array<i32>} : memref<3x16x32xf32, #tpu.memory_space<vmem>>, vector<1x16x32xf32>,
    return
  }
  func.func @transform_0(%arg0: i32) -> (i32, i32) {
    %c0_i32 = arith.constant 0 : i32
    %c0_i32_0 = arith.constant 0 : i32
    return %arg0, %c0_i32 : i32, i32
  }
  func.func @transform_1(%arg0: i32) -> (i32, i32) {
    %c0_i32 = arith.constant 0 : i32
    %c0_i32_0 = arith.constant 0 : i32
    %c0_i32_1 = arith.constant 0 : i32
    return %c0_i32, %c0_i32_0 : i32, i32
  }
  func.func @transform_2(%arg0: i32) -> (i32, i32) {
    %c0_i32 = arith.constant 0 : i32
    %c0_i32_0 = arith.constant 0 : i32
    %c0_i32_1 = arith.constant 0 : i32
    return %c0_i32, %c0_i32_0 : i32, i32
  }
  func.func @transform_3(%arg0: i32) -> (i32, i32, i32) {
    %c0_i32 = arith.constant 0 : i32
    %c0_i32_0 = arith.constant 0 : i32
    %c0_i32_1 = arith.constant 0 : i32
    return %c0_i32, %arg0, %c0_i32_0 : i32, i32, i32
  }
}

module attributes {stable_mosaic.version = 11 : i64} {
  func.func @gru2_rec_kernel(%arg0: i32, %arg1: memref<3x8x2x32xf32, #tpu.memory_space<vmem>>, %arg2: memref<3x32x32xbf16, #tpu.memory_space<vmem>>, %arg3: memref<3x32x32xbf16, #tpu.memory_space<vmem>>, %arg4: memref<3x32x32xbf16, #tpu.memory_space<vmem>>, %arg5: memref<1x32xf32, #tpu.memory_space<vmem>>, %arg6: memref<3x1x32xf32, #tpu.memory_space<vmem>>, %arg7: memref<1x32xf32, #tpu.memory_space<vmem>>, %arg8: memref<8x2x32xf32, #tpu.memory_space<vmem>>, %arg9: memref<2x32xf32, #tpu.memory_space<vmem>>, %arg10: memref<2x32xf32, #tpu.memory_space<vmem>>, %arg11: memref<2x32xf32, #tpu.memory_space<vmem>>, %arg12: memref<2x32xf32, #tpu.memory_space<vmem>>) attributes {dimension_semantics = [#tpu.dimension_semantics<arbitrary>], iteration_bounds = array<i64: 1>, scalar_prefetch = 0 : i64, scratch_operands = 2 : i64, tpu.core_type = #tpu.core_type<tc>, window_params = [{transform_indices = @transform_0, window_bounds = array<i64: 3, 8, 2, 32>}, {pipeline_mode = #tpu.pipeline_mode<synchronous>, transform_indices = @transform_1, window_bounds = array<i64: 3, 32, 32>}, {pipeline_mode = #tpu.pipeline_mode<synchronous>, transform_indices = @transform_2, window_bounds = array<i64: 3, 32, 32>}, {pipeline_mode = #tpu.pipeline_mode<synchronous>, transform_indices = @transform_3, window_bounds = array<i64: 3, 32, 32>}, {pipeline_mode = #tpu.pipeline_mode<synchronous>, transform_indices = @transform_4, window_bounds = array<i64: 1, 32>}, {pipeline_mode = #tpu.pipeline_mode<synchronous>, transform_indices = @transform_5, window_bounds = array<i64: 3, 1, 32>}, {pipeline_mode = #tpu.pipeline_mode<synchronous>, transform_indices = @transform_6, window_bounds = array<i64: 1, 32>}, {transform_indices = @transform_7, window_bounds = array<i64: 8, 2, 32>}, {pipeline_mode = #tpu.pipeline_mode<synchronous>, transform_indices = @transform_8, window_bounds = array<i64: 2, 32>}, {pipeline_mode = #tpu.pipeline_mode<synchronous>, transform_indices = @transform_9, window_bounds = array<i64: 2, 32>}]} {
    %c0_i32 = arith.constant 0 : i32
    %0 = arith.cmpi eq, %arg0, %c0_i32 : i32
    %1 = arith.extui %0 : i1 to i32
    %c0_i32_0 = arith.constant 0 : i32
    %2 = arith.cmpi ne, %1, %c0_i32_0 : i32
    scf.if %2 {
      %cst_507 = arith.constant 0.000000e+00 : f32
      %791 = vector.broadcast %cst_507 : f32 to vector<2x32xf32>
      %c0_508 = arith.constant 0 : index
      %c0_509 = arith.constant 0 : index
      %792 = vector.load %arg11[%c0_508, %c0_509] : memref<2x32xf32, #tpu.memory_space<vmem>>, vector<2x32xf32>
      tpu.vector_store %arg11[%c0_508, %c0_509], %791 {strides = array<i32>} : memref<2x32xf32, #tpu.memory_space<vmem>>, vector<2x32xf32>,
      %cst_510 = arith.constant 0.000000e+00 : f32
      %793 = vector.broadcast %cst_510 : f32 to vector<2x32xf32>
      %c0_511 = arith.constant 0 : index
      %c0_512 = arith.constant 0 : index
      %794 = vector.load %arg12[%c0_511, %c0_512] : memref<2x32xf32, #tpu.memory_space<vmem>>, vector<2x32xf32>
      tpu.vector_store %arg12[%c0_511, %c0_512], %793 {strides = array<i32>} : memref<2x32xf32, #tpu.memory_space<vmem>>, vector<2x32xf32>,
    } else {
    }
    %c0 = arith.constant 0 : index
    %c0_1 = arith.constant 0 : index
    %3 = vector.load %arg5[%c0, %c0_1] : memref<1x32xf32, #tpu.memory_space<vmem>>, vector<1x32xf32>
    %c0_2 = arith.constant 0 : index
    %c0_3 = arith.constant 0 : index
    %4 = vector.load %arg7[%c0_2, %c0_3] : memref<1x32xf32, #tpu.memory_space<vmem>>, vector<1x32xf32>
    %c0_4 = arith.constant 0 : index
    %c0_5 = arith.constant 0 : index
    %c0_6 = arith.constant 0 : index
    %5 = vector.load %arg6[%c0_4, %c0_5, %c0_6] : memref<3x1x32xf32, #tpu.memory_space<vmem>>, vector<1x1x32xf32>
    %6 = vector.shape_cast %5 : vector<1x1x32xf32> to vector<1x32xf32>
    %c1 = arith.constant 1 : index
    %c0_7 = arith.constant 0 : index
    %c0_8 = arith.constant 0 : index
    %7 = vector.load %arg6[%c1, %c0_7, %c0_8] : memref<3x1x32xf32, #tpu.memory_space<vmem>>, vector<1x1x32xf32>
    %8 = vector.shape_cast %7 : vector<1x1x32xf32> to vector<1x32xf32>
    %c2 = arith.constant 2 : index
    %c0_9 = arith.constant 0 : index
    %c0_10 = arith.constant 0 : index
    %9 = vector.load %arg6[%c2, %c0_9, %c0_10] : memref<3x1x32xf32, #tpu.memory_space<vmem>>, vector<1x1x32xf32>
    %10 = vector.shape_cast %9 : vector<1x1x32xf32> to vector<1x32xf32>
    %c0_i32_11 = arith.constant 0 : i32
    %c0_12 = arith.constant 0 : index
    %c0_13 = arith.constant 0 : index
    %11 = vector.load %arg11[%c0_12, %c0_13] : memref<2x32xf32, #tpu.memory_space<vmem>>, vector<2x32xf32>
    %12 = arith.truncf %11 : vector<2x32xf32> to vector<2x32xbf16>
    %c0_14 = arith.constant 0 : index
    %c0_15 = arith.constant 0 : index
    %c0_16 = arith.constant 0 : index
    %13 = vector.load %arg2[%c0_14, %c0_15, %c0_16] : memref<3x32x32xbf16, #tpu.memory_space<vmem>>, vector<1x32x32xbf16>
    %14 = vector.shape_cast %13 : vector<1x32x32xbf16> to vector<32x32xbf16>
    %cst = arith.constant dense<0.000000e+00> : vector<2x32xf32>
    %15 = tpu.matmul %12, %14, %cst {dimension_numbers = #tpu.dot_dimension_numbers<[1], [0], [0], [1], [0, 0, 1, 1], [], []>} : vector<2x32xbf16>, vector<32x32xbf16>, vector<2x32xf32> -> vector<2x32xf32>
    %c1_17 = arith.constant 1 : index
    %c0_18 = arith.constant 0 : index
    %c0_19 = arith.constant 0 : index
    %16 = vector.load %arg2[%c1_17, %c0_18, %c0_19] : memref<3x32x32xbf16, #tpu.memory_space<vmem>>, vector<1x32x32xbf16>
    %17 = vector.shape_cast %16 : vector<1x32x32xbf16> to vector<32x32xbf16>
    %cst_20 = arith.constant dense<0.000000e+00> : vector<2x32xf32>
    %18 = tpu.matmul %12, %17, %cst_20 {dimension_numbers = #tpu.dot_dimension_numbers<[1], [0], [0], [1], [0, 0, 1, 1], [], []>} : vector<2x32xbf16>, vector<32x32xbf16>, vector<2x32xf32> -> vector<2x32xf32>
    %c2_21 = arith.constant 2 : index
    %c0_22 = arith.constant 0 : index
    %c0_23 = arith.constant 0 : index
    %19 = vector.load %arg2[%c2_21, %c0_22, %c0_23] : memref<3x32x32xbf16, #tpu.memory_space<vmem>>, vector<1x32x32xbf16>
    %20 = vector.shape_cast %19 : vector<1x32x32xbf16> to vector<32x32xbf16>
    %cst_24 = arith.constant dense<0.000000e+00> : vector<2x32xf32>
    %21 = tpu.matmul %12, %20, %cst_24 {dimension_numbers = #tpu.dot_dimension_numbers<[1], [0], [0], [1], [0, 0, 1, 1], [], []>} : vector<2x32xbf16>, vector<32x32xbf16>, vector<2x32xf32> -> vector<2x32xf32>
    %c0_25 = arith.constant 0 : index
    %22 = arith.index_cast %c0_i32_11 : i32 to index
    %c0_26 = arith.constant 0 : index
    %c0_27 = arith.constant 0 : index
    %23 = vector.load %arg1[%c0_25, %22, %c0_26, %c0_27] : memref<3x8x2x32xf32, #tpu.memory_space<vmem>>, vector<1x1x2x32xf32>
    %24 = vector.shape_cast %23 : vector<1x1x2x32xf32> to vector<2x32xf32>
    %c1_28 = arith.constant 1 : index
    %25 = arith.index_cast %c0_i32_11 : i32 to index
    %c0_29 = arith.constant 0 : index
    %c0_30 = arith.constant 0 : index
    %26 = vector.load %arg1[%c1_28, %25, %c0_29, %c0_30] : memref<3x8x2x32xf32, #tpu.memory_space<vmem>>, vector<1x1x2x32xf32>
    %27 = vector.shape_cast %26 : vector<1x1x2x32xf32> to vector<2x32xf32>
    %c2_31 = arith.constant 2 : index
    %28 = arith.index_cast %c0_i32_11 : i32 to index
    %c0_32 = arith.constant 0 : index
    %c0_33 = arith.constant 0 : index
    %29 = vector.load %arg1[%c2_31, %28, %c0_32, %c0_33] : memref<3x8x2x32xf32, #tpu.memory_space<vmem>>, vector<1x1x2x32xf32>
    %30 = vector.shape_cast %29 : vector<1x1x2x32xf32> to vector<2x32xf32>
    %31 = arith.addf %24, %15 : vector<2x32xf32>
    %32 = arith.negf %31 : vector<2x32xf32>
    %33 = math.exp %32 : vector<2x32xf32>
    %cst_34 = arith.constant 1.000000e+00 : f32
    %34 = vector.broadcast %cst_34 : f32 to vector<2x32xf32>
    %35 = arith.addf %34, %33 : vector<2x32xf32>
    %36 = arith.divf %34, %35 : vector<2x32xf32>
    %37 = arith.addf %27, %18 : vector<2x32xf32>
    %38 = arith.negf %37 : vector<2x32xf32>
    %39 = math.exp %38 : vector<2x32xf32>
    %cst_35 = arith.constant 1.000000e+00 : f32
    %40 = vector.broadcast %cst_35 : f32 to vector<2x32xf32>
    %41 = arith.addf %40, %39 : vector<2x32xf32>
    %42 = arith.divf %40, %41 : vector<2x32xf32>
    %43 = vector.broadcast %3 : vector<1x32xf32> to vector<2x32xf32>
    %44 = arith.addf %21, %43 : vector<2x32xf32>
    %45 = arith.mulf %36, %44 : vector<2x32xf32>
    %46 = arith.addf %30, %45 : vector<2x32xf32>
    %47 = math.tanh %46 : vector<2x32xf32>
    %cst_36 = arith.constant 1.000000e+00 : f32
    %48 = vector.broadcast %cst_36 : f32 to vector<2x32xf32>
    %49 = arith.subf %48, %42 : vector<2x32xf32>
    %50 = arith.mulf %49, %47 : vector<2x32xf32>
    %51 = arith.mulf %42, %11 : vector<2x32xf32>
    %52 = arith.addf %50, %51 : vector<2x32xf32>
    %c0_37 = arith.constant 0 : index
    %c0_38 = arith.constant 0 : index
    %53 = vector.load %arg11[%c0_37, %c0_38] : memref<2x32xf32, #tpu.memory_space<vmem>>, vector<2x32xf32>
    tpu.vector_store %arg11[%c0_37, %c0_38], %52 {strides = array<i32>} : memref<2x32xf32, #tpu.memory_space<vmem>>, vector<2x32xf32>,
    %c0_39 = arith.constant 0 : index
    %c0_40 = arith.constant 0 : index
    %54 = vector.load %arg12[%c0_39, %c0_40] : memref<2x32xf32, #tpu.memory_space<vmem>>, vector<2x32xf32>
    %55 = arith.truncf %52 : vector<2x32xf32> to vector<2x32xbf16>
    %c0_41 = arith.constant 0 : index
    %c0_42 = arith.constant 0 : index
    %c0_43 = arith.constant 0 : index
    %56 = vector.load %arg3[%c0_41, %c0_42, %c0_43] : memref<3x32x32xbf16, #tpu.memory_space<vmem>>, vector<1x32x32xbf16>
    %57 = vector.shape_cast %56 : vector<1x32x32xbf16> to vector<32x32xbf16>
    %cst_44 = arith.constant dense<0.000000e+00> : vector<2x32xf32>
    %58 = tpu.matmul %55, %57, %cst_44 {dimension_numbers = #tpu.dot_dimension_numbers<[1], [0], [0], [1], [0, 0, 1, 1], [], []>} : vector<2x32xbf16>, vector<32x32xbf16>, vector<2x32xf32> -> vector<2x32xf32>
    %c1_45 = arith.constant 1 : index
    %c0_46 = arith.constant 0 : index
    %c0_47 = arith.constant 0 : index
    %59 = vector.load %arg3[%c1_45, %c0_46, %c0_47] : memref<3x32x32xbf16, #tpu.memory_space<vmem>>, vector<1x32x32xbf16>
    %60 = vector.shape_cast %59 : vector<1x32x32xbf16> to vector<32x32xbf16>
    %cst_48 = arith.constant dense<0.000000e+00> : vector<2x32xf32>
    %61 = tpu.matmul %55, %60, %cst_48 {dimension_numbers = #tpu.dot_dimension_numbers<[1], [0], [0], [1], [0, 0, 1, 1], [], []>} : vector<2x32xbf16>, vector<32x32xbf16>, vector<2x32xf32> -> vector<2x32xf32>
    %c2_49 = arith.constant 2 : index
    %c0_50 = arith.constant 0 : index
    %c0_51 = arith.constant 0 : index
    %62 = vector.load %arg3[%c2_49, %c0_50, %c0_51] : memref<3x32x32xbf16, #tpu.memory_space<vmem>>, vector<1x32x32xbf16>
    %63 = vector.shape_cast %62 : vector<1x32x32xbf16> to vector<32x32xbf16>
    %cst_52 = arith.constant dense<0.000000e+00> : vector<2x32xf32>
    %64 = tpu.matmul %55, %63, %cst_52 {dimension_numbers = #tpu.dot_dimension_numbers<[1], [0], [0], [1], [0, 0, 1, 1], [], []>} : vector<2x32xbf16>, vector<32x32xbf16>, vector<2x32xf32> -> vector<2x32xf32>
    %65 = arith.truncf %54 : vector<2x32xf32> to vector<2x32xbf16>
    %c0_53 = arith.constant 0 : index
    %c0_54 = arith.constant 0 : index
    %c0_55 = arith.constant 0 : index
    %66 = vector.load %arg4[%c0_53, %c0_54, %c0_55] : memref<3x32x32xbf16, #tpu.memory_space<vmem>>, vector<1x32x32xbf16>
    %67 = vector.shape_cast %66 : vector<1x32x32xbf16> to vector<32x32xbf16>
    %cst_56 = arith.constant dense<0.000000e+00> : vector<2x32xf32>
    %68 = tpu.matmul %65, %67, %cst_56 {dimension_numbers = #tpu.dot_dimension_numbers<[1], [0], [0], [1], [0, 0, 1, 1], [], []>} : vector<2x32xbf16>, vector<32x32xbf16>, vector<2x32xf32> -> vector<2x32xf32>
    %c1_57 = arith.constant 1 : index
    %c0_58 = arith.constant 0 : index
    %c0_59 = arith.constant 0 : index
    %69 = vector.load %arg4[%c1_57, %c0_58, %c0_59] : memref<3x32x32xbf16, #tpu.memory_space<vmem>>, vector<1x32x32xbf16>
    %70 = vector.shape_cast %69 : vector<1x32x32xbf16> to vector<32x32xbf16>
    %cst_60 = arith.constant dense<0.000000e+00> : vector<2x32xf32>
    %71 = tpu.matmul %65, %70, %cst_60 {dimension_numbers = #tpu.dot_dimension_numbers<[1], [0], [0], [1], [0, 0, 1, 1], [], []>} : vector<2x32xbf16>, vector<32x32xbf16>, vector<2x32xf32> -> vector<2x32xf32>
    %c2_61 = arith.constant 2 : index
    %c0_62 = arith.constant 0 : index
    %c0_63 = arith.constant 0 : index
    %72 = vector.load %arg4[%c2_61, %c0_62, %c0_63] : memref<3x32x32xbf16, #tpu.memory_space<vmem>>, vector<1x32x32xbf16>
    %73 = vector.shape_cast %72 : vector<1x32x32xbf16> to vector<32x32xbf16>
    %cst_64 = arith.constant dense<0.000000e+00> : vector<2x32xf32>
    %74 = tpu.matmul %65, %73, %cst_64 {dimension_numbers = #tpu.dot_dimension_numbers<[1], [0], [0], [1], [0, 0, 1, 1], [], []>} : vector<2x32xbf16>, vector<32x32xbf16>, vector<2x32xf32> -> vector<2x32xf32>
    %75 = arith.addf %58, %68 : vector<2x32xf32>
    %76 = vector.broadcast %6 : vector<1x32xf32> to vector<2x32xf32>
    %77 = arith.addf %75, %76 : vector<2x32xf32>
    %78 = arith.negf %77 : vector<2x32xf32>
    %79 = math.exp %78 : vector<2x32xf32>
    %cst_65 = arith.constant 1.000000e+00 : f32
    %80 = vector.broadcast %cst_65 : f32 to vector<2x32xf32>
    %81 = arith.addf %80, %79 : vector<2x32xf32>
    %82 = arith.divf %80, %81 : vector<2x32xf32>
    %83 = arith.addf %61, %71 : vector<2x32xf32>
    %84 = vector.broadcast %8 : vector<1x32xf32> to vector<2x32xf32>
    %85 = arith.addf %83, %84 : vector<2x32xf32>
    %86 = arith.negf %85 : vector<2x32xf32>
    %87 = math.exp %86 : vector<2x32xf32>
    %cst_66 = arith.constant 1.000000e+00 : f32
    %88 = vector.broadcast %cst_66 : f32 to vector<2x32xf32>
    %89 = arith.addf %88, %87 : vector<2x32xf32>
    %90 = arith.divf %88, %89 : vector<2x32xf32>
    %91 = vector.broadcast %10 : vector<1x32xf32> to vector<2x32xf32>
    %92 = arith.addf %64, %91 : vector<2x32xf32>
    %93 = vector.broadcast %4 : vector<1x32xf32> to vector<2x32xf32>
    %94 = arith.addf %74, %93 : vector<2x32xf32>
    %95 = arith.mulf %82, %94 : vector<2x32xf32>
    %96 = arith.addf %92, %95 : vector<2x32xf32>
    %97 = math.tanh %96 : vector<2x32xf32>
    %cst_67 = arith.constant 1.000000e+00 : f32
    %98 = vector.broadcast %cst_67 : f32 to vector<2x32xf32>
    %99 = arith.subf %98, %90 : vector<2x32xf32>
    %100 = arith.mulf %99, %97 : vector<2x32xf32>
    %101 = arith.mulf %90, %54 : vector<2x32xf32>
    %102 = arith.addf %100, %101 : vector<2x32xf32>
    %c0_68 = arith.constant 0 : index
    %c0_69 = arith.constant 0 : index
    %103 = vector.load %arg12[%c0_68, %c0_69] : memref<2x32xf32, #tpu.memory_space<vmem>>, vector<2x32xf32>
    tpu.vector_store %arg12[%c0_68, %c0_69], %102 {strides = array<i32>} : memref<2x32xf32, #tpu.memory_space<vmem>>, vector<2x32xf32>,
    %104 = arith.index_cast %c0_i32_11 : i32 to index
    %c0_70 = arith.constant 0 : index
    %c0_71 = arith.constant 0 : index
    %105 = vector.load %arg8[%104, %c0_70, %c0_71] : memref<8x2x32xf32, #tpu.memory_space<vmem>>, vector<1x2x32xf32>
    %106 = vector.shape_cast %105 : vector<1x2x32xf32> to vector<2x32xf32>
    %107 = vector.shape_cast %102 : vector<2x32xf32> to vector<1x2x32xf32>
    tpu.vector_store %arg8[%104, %c0_70, %c0_71], %107 {strides = array<i32>} : memref<8x2x32xf32, #tpu.memory_space<vmem>>, vector<1x2x32xf32>,
    %c1_i32 = arith.constant 1 : i32
    %c0_72 = arith.constant 0 : index
    %c0_73 = arith.constant 0 : index
    %108 = vector.load %arg11[%c0_72, %c0_73] : memref<2x32xf32, #tpu.memory_space<vmem>>, vector<2x32xf32>
    %109 = arith.truncf %108 : vector<2x32xf32> to vector<2x32xbf16>
    %c0_74 = arith.constant 0 : index
    %c0_75 = arith.constant 0 : index
    %c0_76 = arith.constant 0 : index
    %110 = vector.load %arg2[%c0_74, %c0_75, %c0_76] : memref<3x32x32xbf16, #tpu.memory_space<vmem>>, vector<1x32x32xbf16>
    %111 = vector.shape_cast %110 : vector<1x32x32xbf16> to vector<32x32xbf16>
    %cst_77 = arith.constant dense<0.000000e+00> : vector<2x32xf32>
    %112 = tpu.matmul %109, %111, %cst_77 {dimension_numbers = #tpu.dot_dimension_numbers<[1], [0], [0], [1], [0, 0, 1, 1], [], []>} : vector<2x32xbf16>, vector<32x32xbf16>, vector<2x32xf32> -> vector<2x32xf32>
    %c1_78 = arith.constant 1 : index
    %c0_79 = arith.constant 0 : index
    %c0_80 = arith.constant 0 : index
    %113 = vector.load %arg2[%c1_78, %c0_79, %c0_80] : memref<3x32x32xbf16, #tpu.memory_space<vmem>>, vector<1x32x32xbf16>
    %114 = vector.shape_cast %113 : vector<1x32x32xbf16> to vector<32x32xbf16>
    %cst_81 = arith.constant dense<0.000000e+00> : vector<2x32xf32>
    %115 = tpu.matmul %109, %114, %cst_81 {dimension_numbers = #tpu.dot_dimension_numbers<[1], [0], [0], [1], [0, 0, 1, 1], [], []>} : vector<2x32xbf16>, vector<32x32xbf16>, vector<2x32xf32> -> vector<2x32xf32>
    %c2_82 = arith.constant 2 : index
    %c0_83 = arith.constant 0 : index
    %c0_84 = arith.constant 0 : index
    %116 = vector.load %arg2[%c2_82, %c0_83, %c0_84] : memref<3x32x32xbf16, #tpu.memory_space<vmem>>, vector<1x32x32xbf16>
    %117 = vector.shape_cast %116 : vector<1x32x32xbf16> to vector<32x32xbf16>
    %cst_85 = arith.constant dense<0.000000e+00> : vector<2x32xf32>
    %118 = tpu.matmul %109, %117, %cst_85 {dimension_numbers = #tpu.dot_dimension_numbers<[1], [0], [0], [1], [0, 0, 1, 1], [], []>} : vector<2x32xbf16>, vector<32x32xbf16>, vector<2x32xf32> -> vector<2x32xf32>
    %c0_86 = arith.constant 0 : index
    %119 = arith.index_cast %c1_i32 : i32 to index
    %c0_87 = arith.constant 0 : index
    %c0_88 = arith.constant 0 : index
    %120 = vector.load %arg1[%c0_86, %119, %c0_87, %c0_88] : memref<3x8x2x32xf32, #tpu.memory_space<vmem>>, vector<1x1x2x32xf32>
    %121 = vector.shape_cast %120 : vector<1x1x2x32xf32> to vector<2x32xf32>
    %c1_89 = arith.constant 1 : index
    %122 = arith.index_cast %c1_i32 : i32 to index
    %c0_90 = arith.constant 0 : index
    %c0_91 = arith.constant 0 : index
    %123 = vector.load %arg1[%c1_89, %122, %c0_90, %c0_91] : memref<3x8x2x32xf32, #tpu.memory_space<vmem>>, vector<1x1x2x32xf32>
    %124 = vector.shape_cast %123 : vector<1x1x2x32xf32> to vector<2x32xf32>
    %c2_92 = arith.constant 2 : index
    %125 = arith.index_cast %c1_i32 : i32 to index
    %c0_93 = arith.constant 0 : index
    %c0_94 = arith.constant 0 : index
    %126 = vector.load %arg1[%c2_92, %125, %c0_93, %c0_94] : memref<3x8x2x32xf32, #tpu.memory_space<vmem>>, vector<1x1x2x32xf32>
    %127 = vector.shape_cast %126 : vector<1x1x2x32xf32> to vector<2x32xf32>
    %128 = arith.addf %121, %112 : vector<2x32xf32>
    %129 = arith.negf %128 : vector<2x32xf32>
    %130 = math.exp %129 : vector<2x32xf32>
    %cst_95 = arith.constant 1.000000e+00 : f32
    %131 = vector.broadcast %cst_95 : f32 to vector<2x32xf32>
    %132 = arith.addf %131, %130 : vector<2x32xf32>
    %133 = arith.divf %131, %132 : vector<2x32xf32>
    %134 = arith.addf %124, %115 : vector<2x32xf32>
    %135 = arith.negf %134 : vector<2x32xf32>
    %136 = math.exp %135 : vector<2x32xf32>
    %cst_96 = arith.constant 1.000000e+00 : f32
    %137 = vector.broadcast %cst_96 : f32 to vector<2x32xf32>
    %138 = arith.addf %137, %136 : vector<2x32xf32>
    %139 = arith.divf %137, %138 : vector<2x32xf32>
    %140 = vector.broadcast %3 : vector<1x32xf32> to vector<2x32xf32>
    %141 = arith.addf %118, %140 : vector<2x32xf32>
    %142 = arith.mulf %133, %141 : vector<2x32xf32>
    %143 = arith.addf %127, %142 : vector<2x32xf32>
    %144 = math.tanh %143 : vector<2x32xf32>
    %cst_97 = arith.constant 1.000000e+00 : f32
    %145 = vector.broadcast %cst_97 : f32 to vector<2x32xf32>
    %146 = arith.subf %145, %139 : vector<2x32xf32>
    %147 = arith.mulf %146, %144 : vector<2x32xf32>
    %148 = arith.mulf %139, %108 : vector<2x32xf32>
    %149 = arith.addf %147, %148 : vector<2x32xf32>
    %c0_98 = arith.constant 0 : index
    %c0_99 = arith.constant 0 : index
    %150 = vector.load %arg11[%c0_98, %c0_99] : memref<2x32xf32, #tpu.memory_space<vmem>>, vector<2x32xf32>
    tpu.vector_store %arg11[%c0_98, %c0_99], %149 {strides = array<i32>} : memref<2x32xf32, #tpu.memory_space<vmem>>, vector<2x32xf32>,
    %c0_100 = arith.constant 0 : index
    %c0_101 = arith.constant 0 : index
    %151 = vector.load %arg12[%c0_100, %c0_101] : memref<2x32xf32, #tpu.memory_space<vmem>>, vector<2x32xf32>
    %152 = arith.truncf %149 : vector<2x32xf32> to vector<2x32xbf16>
    %c0_102 = arith.constant 0 : index
    %c0_103 = arith.constant 0 : index
    %c0_104 = arith.constant 0 : index
    %153 = vector.load %arg3[%c0_102, %c0_103, %c0_104] : memref<3x32x32xbf16, #tpu.memory_space<vmem>>, vector<1x32x32xbf16>
    %154 = vector.shape_cast %153 : vector<1x32x32xbf16> to vector<32x32xbf16>
    %cst_105 = arith.constant dense<0.000000e+00> : vector<2x32xf32>
    %155 = tpu.matmul %152, %154, %cst_105 {dimension_numbers = #tpu.dot_dimension_numbers<[1], [0], [0], [1], [0, 0, 1, 1], [], []>} : vector<2x32xbf16>, vector<32x32xbf16>, vector<2x32xf32> -> vector<2x32xf32>
    %c1_106 = arith.constant 1 : index
    %c0_107 = arith.constant 0 : index
    %c0_108 = arith.constant 0 : index
    %156 = vector.load %arg3[%c1_106, %c0_107, %c0_108] : memref<3x32x32xbf16, #tpu.memory_space<vmem>>, vector<1x32x32xbf16>
    %157 = vector.shape_cast %156 : vector<1x32x32xbf16> to vector<32x32xbf16>
    %cst_109 = arith.constant dense<0.000000e+00> : vector<2x32xf32>
    %158 = tpu.matmul %152, %157, %cst_109 {dimension_numbers = #tpu.dot_dimension_numbers<[1], [0], [0], [1], [0, 0, 1, 1], [], []>} : vector<2x32xbf16>, vector<32x32xbf16>, vector<2x32xf32> -> vector<2x32xf32>
    %c2_110 = arith.constant 2 : index
    %c0_111 = arith.constant 0 : index
    %c0_112 = arith.constant 0 : index
    %159 = vector.load %arg3[%c2_110, %c0_111, %c0_112] : memref<3x32x32xbf16, #tpu.memory_space<vmem>>, vector<1x32x32xbf16>
    %160 = vector.shape_cast %159 : vector<1x32x32xbf16> to vector<32x32xbf16>
    %cst_113 = arith.constant dense<0.000000e+00> : vector<2x32xf32>
    %161 = tpu.matmul %152, %160, %cst_113 {dimension_numbers = #tpu.dot_dimension_numbers<[1], [0], [0], [1], [0, 0, 1, 1], [], []>} : vector<2x32xbf16>, vector<32x32xbf16>, vector<2x32xf32> -> vector<2x32xf32>
    %162 = arith.truncf %151 : vector<2x32xf32> to vector<2x32xbf16>
    %c0_114 = arith.constant 0 : index
    %c0_115 = arith.constant 0 : index
    %c0_116 = arith.constant 0 : index
    %163 = vector.load %arg4[%c0_114, %c0_115, %c0_116] : memref<3x32x32xbf16, #tpu.memory_space<vmem>>, vector<1x32x32xbf16>
    %164 = vector.shape_cast %163 : vector<1x32x32xbf16> to vector<32x32xbf16>
    %cst_117 = arith.constant dense<0.000000e+00> : vector<2x32xf32>
    %165 = tpu.matmul %162, %164, %cst_117 {dimension_numbers = #tpu.dot_dimension_numbers<[1], [0], [0], [1], [0, 0, 1, 1], [], []>} : vector<2x32xbf16>, vector<32x32xbf16>, vector<2x32xf32> -> vector<2x32xf32>
    %c1_118 = arith.constant 1 : index
    %c0_119 = arith.constant 0 : index
    %c0_120 = arith.constant 0 : index
    %166 = vector.load %arg4[%c1_118, %c0_119, %c0_120] : memref<3x32x32xbf16, #tpu.memory_space<vmem>>, vector<1x32x32xbf16>
    %167 = vector.shape_cast %166 : vector<1x32x32xbf16> to vector<32x32xbf16>
    %cst_121 = arith.constant dense<0.000000e+00> : vector<2x32xf32>
    %168 = tpu.matmul %162, %167, %cst_121 {dimension_numbers = #tpu.dot_dimension_numbers<[1], [0], [0], [1], [0, 0, 1, 1], [], []>} : vector<2x32xbf16>, vector<32x32xbf16>, vector<2x32xf32> -> vector<2x32xf32>
    %c2_122 = arith.constant 2 : index
    %c0_123 = arith.constant 0 : index
    %c0_124 = arith.constant 0 : index
    %169 = vector.load %arg4[%c2_122, %c0_123, %c0_124] : memref<3x32x32xbf16, #tpu.memory_space<vmem>>, vector<1x32x32xbf16>
    %170 = vector.shape_cast %169 : vector<1x32x32xbf16> to vector<32x32xbf16>
    %cst_125 = arith.constant dense<0.000000e+00> : vector<2x32xf32>
    %171 = tpu.matmul %162, %170, %cst_125 {dimension_numbers = #tpu.dot_dimension_numbers<[1], [0], [0], [1], [0, 0, 1, 1], [], []>} : vector<2x32xbf16>, vector<32x32xbf16>, vector<2x32xf32> -> vector<2x32xf32>
    %172 = arith.addf %155, %165 : vector<2x32xf32>
    %173 = vector.broadcast %6 : vector<1x32xf32> to vector<2x32xf32>
    %174 = arith.addf %172, %173 : vector<2x32xf32>
    %175 = arith.negf %174 : vector<2x32xf32>
    %176 = math.exp %175 : vector<2x32xf32>
    %cst_126 = arith.constant 1.000000e+00 : f32
    %177 = vector.broadcast %cst_126 : f32 to vector<2x32xf32>
    %178 = arith.addf %177, %176 : vector<2x32xf32>
    %179 = arith.divf %177, %178 : vector<2x32xf32>
    %180 = arith.addf %158, %168 : vector<2x32xf32>
    %181 = vector.broadcast %8 : vector<1x32xf32> to vector<2x32xf32>
    %182 = arith.addf %180, %181 : vector<2x32xf32>
    %183 = arith.negf %182 : vector<2x32xf32>
    %184 = math.exp %183 : vector<2x32xf32>
    %cst_127 = arith.constant 1.000000e+00 : f32
    %185 = vector.broadcast %cst_127 : f32 to vector<2x32xf32>
    %186 = arith.addf %185, %184 : vector<2x32xf32>
    %187 = arith.divf %185, %186 : vector<2x32xf32>
    %188 = vector.broadcast %10 : vector<1x32xf32> to vector<2x32xf32>
    %189 = arith.addf %161, %188 : vector<2x32xf32>
    %190 = vector.broadcast %4 : vector<1x32xf32> to vector<2x32xf32>
    %191 = arith.addf %171, %190 : vector<2x32xf32>
    %192 = arith.mulf %179, %191 : vector<2x32xf32>
    %193 = arith.addf %189, %192 : vector<2x32xf32>
    %194 = math.tanh %193 : vector<2x32xf32>
    %cst_128 = arith.constant 1.000000e+00 : f32
    %195 = vector.broadcast %cst_128 : f32 to vector<2x32xf32>
    %196 = arith.subf %195, %187 : vector<2x32xf32>
    %197 = arith.mulf %196, %194 : vector<2x32xf32>
    %198 = arith.mulf %187, %151 : vector<2x32xf32>
    %199 = arith.addf %197, %198 : vector<2x32xf32>
    %c0_129 = arith.constant 0 : index
    %c0_130 = arith.constant 0 : index
    %200 = vector.load %arg12[%c0_129, %c0_130] : memref<2x32xf32, #tpu.memory_space<vmem>>, vector<2x32xf32>
    tpu.vector_store %arg12[%c0_129, %c0_130], %199 {strides = array<i32>} : memref<2x32xf32, #tpu.memory_space<vmem>>, vector<2x32xf32>,
    %201 = arith.index_cast %c1_i32 : i32 to index
    %c0_131 = arith.constant 0 : index
    %c0_132 = arith.constant 0 : index
    %202 = vector.load %arg8[%201, %c0_131, %c0_132] : memref<8x2x32xf32, #tpu.memory_space<vmem>>, vector<1x2x32xf32>
    %203 = vector.shape_cast %202 : vector<1x2x32xf32> to vector<2x32xf32>
    %204 = vector.shape_cast %199 : vector<2x32xf32> to vector<1x2x32xf32>
    tpu.vector_store %arg8[%201, %c0_131, %c0_132], %204 {strides = array<i32>} : memref<8x2x32xf32, #tpu.memory_space<vmem>>, vector<1x2x32xf32>,
    %c2_i32 = arith.constant 2 : i32
    %c0_133 = arith.constant 0 : index
    %c0_134 = arith.constant 0 : index
    %205 = vector.load %arg11[%c0_133, %c0_134] : memref<2x32xf32, #tpu.memory_space<vmem>>, vector<2x32xf32>
    %206 = arith.truncf %205 : vector<2x32xf32> to vector<2x32xbf16>
    %c0_135 = arith.constant 0 : index
    %c0_136 = arith.constant 0 : index
    %c0_137 = arith.constant 0 : index
    %207 = vector.load %arg2[%c0_135, %c0_136, %c0_137] : memref<3x32x32xbf16, #tpu.memory_space<vmem>>, vector<1x32x32xbf16>
    %208 = vector.shape_cast %207 : vector<1x32x32xbf16> to vector<32x32xbf16>
    %cst_138 = arith.constant dense<0.000000e+00> : vector<2x32xf32>
    %209 = tpu.matmul %206, %208, %cst_138 {dimension_numbers = #tpu.dot_dimension_numbers<[1], [0], [0], [1], [0, 0, 1, 1], [], []>} : vector<2x32xbf16>, vector<32x32xbf16>, vector<2x32xf32> -> vector<2x32xf32>
    %c1_139 = arith.constant 1 : index
    %c0_140 = arith.constant 0 : index
    %c0_141 = arith.constant 0 : index
    %210 = vector.load %arg2[%c1_139, %c0_140, %c0_141] : memref<3x32x32xbf16, #tpu.memory_space<vmem>>, vector<1x32x32xbf16>
    %211 = vector.shape_cast %210 : vector<1x32x32xbf16> to vector<32x32xbf16>
    %cst_142 = arith.constant dense<0.000000e+00> : vector<2x32xf32>
    %212 = tpu.matmul %206, %211, %cst_142 {dimension_numbers = #tpu.dot_dimension_numbers<[1], [0], [0], [1], [0, 0, 1, 1], [], []>} : vector<2x32xbf16>, vector<32x32xbf16>, vector<2x32xf32> -> vector<2x32xf32>
    %c2_143 = arith.constant 2 : index
    %c0_144 = arith.constant 0 : index
    %c0_145 = arith.constant 0 : index
    %213 = vector.load %arg2[%c2_143, %c0_144, %c0_145] : memref<3x32x32xbf16, #tpu.memory_space<vmem>>, vector<1x32x32xbf16>
    %214 = vector.shape_cast %213 : vector<1x32x32xbf16> to vector<32x32xbf16>
    %cst_146 = arith.constant dense<0.000000e+00> : vector<2x32xf32>
    %215 = tpu.matmul %206, %214, %cst_146 {dimension_numbers = #tpu.dot_dimension_numbers<[1], [0], [0], [1], [0, 0, 1, 1], [], []>} : vector<2x32xbf16>, vector<32x32xbf16>, vector<2x32xf32> -> vector<2x32xf32>
    %c0_147 = arith.constant 0 : index
    %216 = arith.index_cast %c2_i32 : i32 to index
    %c0_148 = arith.constant 0 : index
    %c0_149 = arith.constant 0 : index
    %217 = vector.load %arg1[%c0_147, %216, %c0_148, %c0_149] : memref<3x8x2x32xf32, #tpu.memory_space<vmem>>, vector<1x1x2x32xf32>
    %218 = vector.shape_cast %217 : vector<1x1x2x32xf32> to vector<2x32xf32>
    %c1_150 = arith.constant 1 : index
    %219 = arith.index_cast %c2_i32 : i32 to index
    %c0_151 = arith.constant 0 : index
    %c0_152 = arith.constant 0 : index
    %220 = vector.load %arg1[%c1_150, %219, %c0_151, %c0_152] : memref<3x8x2x32xf32, #tpu.memory_space<vmem>>, vector<1x1x2x32xf32>
    %221 = vector.shape_cast %220 : vector<1x1x2x32xf32> to vector<2x32xf32>
    %c2_153 = arith.constant 2 : index
    %222 = arith.index_cast %c2_i32 : i32 to index
    %c0_154 = arith.constant 0 : index
    %c0_155 = arith.constant 0 : index
    %223 = vector.load %arg1[%c2_153, %222, %c0_154, %c0_155] : memref<3x8x2x32xf32, #tpu.memory_space<vmem>>, vector<1x1x2x32xf32>
    %224 = vector.shape_cast %223 : vector<1x1x2x32xf32> to vector<2x32xf32>
    %225 = arith.addf %218, %209 : vector<2x32xf32>
    %226 = arith.negf %225 : vector<2x32xf32>
    %227 = math.exp %226 : vector<2x32xf32>
    %cst_156 = arith.constant 1.000000e+00 : f32
    %228 = vector.broadcast %cst_156 : f32 to vector<2x32xf32>
    %229 = arith.addf %228, %227 : vector<2x32xf32>
    %230 = arith.divf %228, %229 : vector<2x32xf32>
    %231 = arith.addf %221, %212 : vector<2x32xf32>
    %232 = arith.negf %231 : vector<2x32xf32>
    %233 = math.exp %232 : vector<2x32xf32>
    %cst_157 = arith.constant 1.000000e+00 : f32
    %234 = vector.broadcast %cst_157 : f32 to vector<2x32xf32>
    %235 = arith.addf %234, %233 : vector<2x32xf32>
    %236 = arith.divf %234, %235 : vector<2x32xf32>
    %237 = vector.broadcast %3 : vector<1x32xf32> to vector<2x32xf32>
    %238 = arith.addf %215, %237 : vector<2x32xf32>
    %239 = arith.mulf %230, %238 : vector<2x32xf32>
    %240 = arith.addf %224, %239 : vector<2x32xf32>
    %241 = math.tanh %240 : vector<2x32xf32>
    %cst_158 = arith.constant 1.000000e+00 : f32
    %242 = vector.broadcast %cst_158 : f32 to vector<2x32xf32>
    %243 = arith.subf %242, %236 : vector<2x32xf32>
    %244 = arith.mulf %243, %241 : vector<2x32xf32>
    %245 = arith.mulf %236, %205 : vector<2x32xf32>
    %246 = arith.addf %244, %245 : vector<2x32xf32>
    %c0_159 = arith.constant 0 : index
    %c0_160 = arith.constant 0 : index
    %247 = vector.load %arg11[%c0_159, %c0_160] : memref<2x32xf32, #tpu.memory_space<vmem>>, vector<2x32xf32>
    tpu.vector_store %arg11[%c0_159, %c0_160], %246 {strides = array<i32>} : memref<2x32xf32, #tpu.memory_space<vmem>>, vector<2x32xf32>,
    %c0_161 = arith.constant 0 : index
    %c0_162 = arith.constant 0 : index
    %248 = vector.load %arg12[%c0_161, %c0_162] : memref<2x32xf32, #tpu.memory_space<vmem>>, vector<2x32xf32>
    %249 = arith.truncf %246 : vector<2x32xf32> to vector<2x32xbf16>
    %c0_163 = arith.constant 0 : index
    %c0_164 = arith.constant 0 : index
    %c0_165 = arith.constant 0 : index
    %250 = vector.load %arg3[%c0_163, %c0_164, %c0_165] : memref<3x32x32xbf16, #tpu.memory_space<vmem>>, vector<1x32x32xbf16>
    %251 = vector.shape_cast %250 : vector<1x32x32xbf16> to vector<32x32xbf16>
    %cst_166 = arith.constant dense<0.000000e+00> : vector<2x32xf32>
    %252 = tpu.matmul %249, %251, %cst_166 {dimension_numbers = #tpu.dot_dimension_numbers<[1], [0], [0], [1], [0, 0, 1, 1], [], []>} : vector<2x32xbf16>, vector<32x32xbf16>, vector<2x32xf32> -> vector<2x32xf32>
    %c1_167 = arith.constant 1 : index
    %c0_168 = arith.constant 0 : index
    %c0_169 = arith.constant 0 : index
    %253 = vector.load %arg3[%c1_167, %c0_168, %c0_169] : memref<3x32x32xbf16, #tpu.memory_space<vmem>>, vector<1x32x32xbf16>
    %254 = vector.shape_cast %253 : vector<1x32x32xbf16> to vector<32x32xbf16>
    %cst_170 = arith.constant dense<0.000000e+00> : vector<2x32xf32>
    %255 = tpu.matmul %249, %254, %cst_170 {dimension_numbers = #tpu.dot_dimension_numbers<[1], [0], [0], [1], [0, 0, 1, 1], [], []>} : vector<2x32xbf16>, vector<32x32xbf16>, vector<2x32xf32> -> vector<2x32xf32>
    %c2_171 = arith.constant 2 : index
    %c0_172 = arith.constant 0 : index
    %c0_173 = arith.constant 0 : index
    %256 = vector.load %arg3[%c2_171, %c0_172, %c0_173] : memref<3x32x32xbf16, #tpu.memory_space<vmem>>, vector<1x32x32xbf16>
    %257 = vector.shape_cast %256 : vector<1x32x32xbf16> to vector<32x32xbf16>
    %cst_174 = arith.constant dense<0.000000e+00> : vector<2x32xf32>
    %258 = tpu.matmul %249, %257, %cst_174 {dimension_numbers = #tpu.dot_dimension_numbers<[1], [0], [0], [1], [0, 0, 1, 1], [], []>} : vector<2x32xbf16>, vector<32x32xbf16>, vector<2x32xf32> -> vector<2x32xf32>
    %259 = arith.truncf %248 : vector<2x32xf32> to vector<2x32xbf16>
    %c0_175 = arith.constant 0 : index
    %c0_176 = arith.constant 0 : index
    %c0_177 = arith.constant 0 : index
    %260 = vector.load %arg4[%c0_175, %c0_176, %c0_177] : memref<3x32x32xbf16, #tpu.memory_space<vmem>>, vector<1x32x32xbf16>
    %261 = vector.shape_cast %260 : vector<1x32x32xbf16> to vector<32x32xbf16>
    %cst_178 = arith.constant dense<0.000000e+00> : vector<2x32xf32>
    %262 = tpu.matmul %259, %261, %cst_178 {dimension_numbers = #tpu.dot_dimension_numbers<[1], [0], [0], [1], [0, 0, 1, 1], [], []>} : vector<2x32xbf16>, vector<32x32xbf16>, vector<2x32xf32> -> vector<2x32xf32>
    %c1_179 = arith.constant 1 : index
    %c0_180 = arith.constant 0 : index
    %c0_181 = arith.constant 0 : index
    %263 = vector.load %arg4[%c1_179, %c0_180, %c0_181] : memref<3x32x32xbf16, #tpu.memory_space<vmem>>, vector<1x32x32xbf16>
    %264 = vector.shape_cast %263 : vector<1x32x32xbf16> to vector<32x32xbf16>
    %cst_182 = arith.constant dense<0.000000e+00> : vector<2x32xf32>
    %265 = tpu.matmul %259, %264, %cst_182 {dimension_numbers = #tpu.dot_dimension_numbers<[1], [0], [0], [1], [0, 0, 1, 1], [], []>} : vector<2x32xbf16>, vector<32x32xbf16>, vector<2x32xf32> -> vector<2x32xf32>
    %c2_183 = arith.constant 2 : index
    %c0_184 = arith.constant 0 : index
    %c0_185 = arith.constant 0 : index
    %266 = vector.load %arg4[%c2_183, %c0_184, %c0_185] : memref<3x32x32xbf16, #tpu.memory_space<vmem>>, vector<1x32x32xbf16>
    %267 = vector.shape_cast %266 : vector<1x32x32xbf16> to vector<32x32xbf16>
    %cst_186 = arith.constant dense<0.000000e+00> : vector<2x32xf32>
    %268 = tpu.matmul %259, %267, %cst_186 {dimension_numbers = #tpu.dot_dimension_numbers<[1], [0], [0], [1], [0, 0, 1, 1], [], []>} : vector<2x32xbf16>, vector<32x32xbf16>, vector<2x32xf32> -> vector<2x32xf32>
    %269 = arith.addf %252, %262 : vector<2x32xf32>
    %270 = vector.broadcast %6 : vector<1x32xf32> to vector<2x32xf32>
    %271 = arith.addf %269, %270 : vector<2x32xf32>
    %272 = arith.negf %271 : vector<2x32xf32>
    %273 = math.exp %272 : vector<2x32xf32>
    %cst_187 = arith.constant 1.000000e+00 : f32
    %274 = vector.broadcast %cst_187 : f32 to vector<2x32xf32>
    %275 = arith.addf %274, %273 : vector<2x32xf32>
    %276 = arith.divf %274, %275 : vector<2x32xf32>
    %277 = arith.addf %255, %265 : vector<2x32xf32>
    %278 = vector.broadcast %8 : vector<1x32xf32> to vector<2x32xf32>
    %279 = arith.addf %277, %278 : vector<2x32xf32>
    %280 = arith.negf %279 : vector<2x32xf32>
    %281 = math.exp %280 : vector<2x32xf32>
    %cst_188 = arith.constant 1.000000e+00 : f32
    %282 = vector.broadcast %cst_188 : f32 to vector<2x32xf32>
    %283 = arith.addf %282, %281 : vector<2x32xf32>
    %284 = arith.divf %282, %283 : vector<2x32xf32>
    %285 = vector.broadcast %10 : vector<1x32xf32> to vector<2x32xf32>
    %286 = arith.addf %258, %285 : vector<2x32xf32>
    %287 = vector.broadcast %4 : vector<1x32xf32> to vector<2x32xf32>
    %288 = arith.addf %268, %287 : vector<2x32xf32>
    %289 = arith.mulf %276, %288 : vector<2x32xf32>
    %290 = arith.addf %286, %289 : vector<2x32xf32>
    %291 = math.tanh %290 : vector<2x32xf32>
    %cst_189 = arith.constant 1.000000e+00 : f32
    %292 = vector.broadcast %cst_189 : f32 to vector<2x32xf32>
    %293 = arith.subf %292, %284 : vector<2x32xf32>
    %294 = arith.mulf %293, %291 : vector<2x32xf32>
    %295 = arith.mulf %284, %248 : vector<2x32xf32>
    %296 = arith.addf %294, %295 : vector<2x32xf32>
    %c0_190 = arith.constant 0 : index
    %c0_191 = arith.constant 0 : index
    %297 = vector.load %arg12[%c0_190, %c0_191] : memref<2x32xf32, #tpu.memory_space<vmem>>, vector<2x32xf32>
    tpu.vector_store %arg12[%c0_190, %c0_191], %296 {strides = array<i32>} : memref<2x32xf32, #tpu.memory_space<vmem>>, vector<2x32xf32>,
    %298 = arith.index_cast %c2_i32 : i32 to index
    %c0_192 = arith.constant 0 : index
    %c0_193 = arith.constant 0 : index
    %299 = vector.load %arg8[%298, %c0_192, %c0_193] : memref<8x2x32xf32, #tpu.memory_space<vmem>>, vector<1x2x32xf32>
    %300 = vector.shape_cast %299 : vector<1x2x32xf32> to vector<2x32xf32>
    %301 = vector.shape_cast %296 : vector<2x32xf32> to vector<1x2x32xf32>
    tpu.vector_store %arg8[%298, %c0_192, %c0_193], %301 {strides = array<i32>} : memref<8x2x32xf32, #tpu.memory_space<vmem>>, vector<1x2x32xf32>,
    %c3_i32 = arith.constant 3 : i32
    %c0_194 = arith.constant 0 : index
    %c0_195 = arith.constant 0 : index
    %302 = vector.load %arg11[%c0_194, %c0_195] : memref<2x32xf32, #tpu.memory_space<vmem>>, vector<2x32xf32>
    %303 = arith.truncf %302 : vector<2x32xf32> to vector<2x32xbf16>
    %c0_196 = arith.constant 0 : index
    %c0_197 = arith.constant 0 : index
    %c0_198 = arith.constant 0 : index
    %304 = vector.load %arg2[%c0_196, %c0_197, %c0_198] : memref<3x32x32xbf16, #tpu.memory_space<vmem>>, vector<1x32x32xbf16>
    %305 = vector.shape_cast %304 : vector<1x32x32xbf16> to vector<32x32xbf16>
    %cst_199 = arith.constant dense<0.000000e+00> : vector<2x32xf32>
    %306 = tpu.matmul %303, %305, %cst_199 {dimension_numbers = #tpu.dot_dimension_numbers<[1], [0], [0], [1], [0, 0, 1, 1], [], []>} : vector<2x32xbf16>, vector<32x32xbf16>, vector<2x32xf32> -> vector<2x32xf32>
    %c1_200 = arith.constant 1 : index
    %c0_201 = arith.constant 0 : index
    %c0_202 = arith.constant 0 : index
    %307 = vector.load %arg2[%c1_200, %c0_201, %c0_202] : memref<3x32x32xbf16, #tpu.memory_space<vmem>>, vector<1x32x32xbf16>
    %308 = vector.shape_cast %307 : vector<1x32x32xbf16> to vector<32x32xbf16>
    %cst_203 = arith.constant dense<0.000000e+00> : vector<2x32xf32>
    %309 = tpu.matmul %303, %308, %cst_203 {dimension_numbers = #tpu.dot_dimension_numbers<[1], [0], [0], [1], [0, 0, 1, 1], [], []>} : vector<2x32xbf16>, vector<32x32xbf16>, vector<2x32xf32> -> vector<2x32xf32>
    %c2_204 = arith.constant 2 : index
    %c0_205 = arith.constant 0 : index
    %c0_206 = arith.constant 0 : index
    %310 = vector.load %arg2[%c2_204, %c0_205, %c0_206] : memref<3x32x32xbf16, #tpu.memory_space<vmem>>, vector<1x32x32xbf16>
    %311 = vector.shape_cast %310 : vector<1x32x32xbf16> to vector<32x32xbf16>
    %cst_207 = arith.constant dense<0.000000e+00> : vector<2x32xf32>
    %312 = tpu.matmul %303, %311, %cst_207 {dimension_numbers = #tpu.dot_dimension_numbers<[1], [0], [0], [1], [0, 0, 1, 1], [], []>} : vector<2x32xbf16>, vector<32x32xbf16>, vector<2x32xf32> -> vector<2x32xf32>
    %c0_208 = arith.constant 0 : index
    %313 = arith.index_cast %c3_i32 : i32 to index
    %c0_209 = arith.constant 0 : index
    %c0_210 = arith.constant 0 : index
    %314 = vector.load %arg1[%c0_208, %313, %c0_209, %c0_210] : memref<3x8x2x32xf32, #tpu.memory_space<vmem>>, vector<1x1x2x32xf32>
    %315 = vector.shape_cast %314 : vector<1x1x2x32xf32> to vector<2x32xf32>
    %c1_211 = arith.constant 1 : index
    %316 = arith.index_cast %c3_i32 : i32 to index
    %c0_212 = arith.constant 0 : index
    %c0_213 = arith.constant 0 : index
    %317 = vector.load %arg1[%c1_211, %316, %c0_212, %c0_213] : memref<3x8x2x32xf32, #tpu.memory_space<vmem>>, vector<1x1x2x32xf32>
    %318 = vector.shape_cast %317 : vector<1x1x2x32xf32> to vector<2x32xf32>
    %c2_214 = arith.constant 2 : index
    %319 = arith.index_cast %c3_i32 : i32 to index
    %c0_215 = arith.constant 0 : index
    %c0_216 = arith.constant 0 : index
    %320 = vector.load %arg1[%c2_214, %319, %c0_215, %c0_216] : memref<3x8x2x32xf32, #tpu.memory_space<vmem>>, vector<1x1x2x32xf32>
    %321 = vector.shape_cast %320 : vector<1x1x2x32xf32> to vector<2x32xf32>
    %322 = arith.addf %315, %306 : vector<2x32xf32>
    %323 = arith.negf %322 : vector<2x32xf32>
    %324 = math.exp %323 : vector<2x32xf32>
    %cst_217 = arith.constant 1.000000e+00 : f32
    %325 = vector.broadcast %cst_217 : f32 to vector<2x32xf32>
    %326 = arith.addf %325, %324 : vector<2x32xf32>
    %327 = arith.divf %325, %326 : vector<2x32xf32>
    %328 = arith.addf %318, %309 : vector<2x32xf32>
    %329 = arith.negf %328 : vector<2x32xf32>
    %330 = math.exp %329 : vector<2x32xf32>
    %cst_218 = arith.constant 1.000000e+00 : f32
    %331 = vector.broadcast %cst_218 : f32 to vector<2x32xf32>
    %332 = arith.addf %331, %330 : vector<2x32xf32>
    %333 = arith.divf %331, %332 : vector<2x32xf32>
    %334 = vector.broadcast %3 : vector<1x32xf32> to vector<2x32xf32>
    %335 = arith.addf %312, %334 : vector<2x32xf32>
    %336 = arith.mulf %327, %335 : vector<2x32xf32>
    %337 = arith.addf %321, %336 : vector<2x32xf32>
    %338 = math.tanh %337 : vector<2x32xf32>
    %cst_219 = arith.constant 1.000000e+00 : f32
    %339 = vector.broadcast %cst_219 : f32 to vector<2x32xf32>
    %340 = arith.subf %339, %333 : vector<2x32xf32>
    %341 = arith.mulf %340, %338 : vector<2x32xf32>
    %342 = arith.mulf %333, %302 : vector<2x32xf32>
    %343 = arith.addf %341, %342 : vector<2x32xf32>
    %c0_220 = arith.constant 0 : index
    %c0_221 = arith.constant 0 : index
    %344 = vector.load %arg11[%c0_220, %c0_221] : memref<2x32xf32, #tpu.memory_space<vmem>>, vector<2x32xf32>
    tpu.vector_store %arg11[%c0_220, %c0_221], %343 {strides = array<i32>} : memref<2x32xf32, #tpu.memory_space<vmem>>, vector<2x32xf32>,
    %c0_222 = arith.constant 0 : index
    %c0_223 = arith.constant 0 : index
    %345 = vector.load %arg12[%c0_222, %c0_223] : memref<2x32xf32, #tpu.memory_space<vmem>>, vector<2x32xf32>
    %346 = arith.truncf %343 : vector<2x32xf32> to vector<2x32xbf16>
    %c0_224 = arith.constant 0 : index
    %c0_225 = arith.constant 0 : index
    %c0_226 = arith.constant 0 : index
    %347 = vector.load %arg3[%c0_224, %c0_225, %c0_226] : memref<3x32x32xbf16, #tpu.memory_space<vmem>>, vector<1x32x32xbf16>
    %348 = vector.shape_cast %347 : vector<1x32x32xbf16> to vector<32x32xbf16>
    %cst_227 = arith.constant dense<0.000000e+00> : vector<2x32xf32>
    %349 = tpu.matmul %346, %348, %cst_227 {dimension_numbers = #tpu.dot_dimension_numbers<[1], [0], [0], [1], [0, 0, 1, 1], [], []>} : vector<2x32xbf16>, vector<32x32xbf16>, vector<2x32xf32> -> vector<2x32xf32>
    %c1_228 = arith.constant 1 : index
    %c0_229 = arith.constant 0 : index
    %c0_230 = arith.constant 0 : index
    %350 = vector.load %arg3[%c1_228, %c0_229, %c0_230] : memref<3x32x32xbf16, #tpu.memory_space<vmem>>, vector<1x32x32xbf16>
    %351 = vector.shape_cast %350 : vector<1x32x32xbf16> to vector<32x32xbf16>
    %cst_231 = arith.constant dense<0.000000e+00> : vector<2x32xf32>
    %352 = tpu.matmul %346, %351, %cst_231 {dimension_numbers = #tpu.dot_dimension_numbers<[1], [0], [0], [1], [0, 0, 1, 1], [], []>} : vector<2x32xbf16>, vector<32x32xbf16>, vector<2x32xf32> -> vector<2x32xf32>
    %c2_232 = arith.constant 2 : index
    %c0_233 = arith.constant 0 : index
    %c0_234 = arith.constant 0 : index
    %353 = vector.load %arg3[%c2_232, %c0_233, %c0_234] : memref<3x32x32xbf16, #tpu.memory_space<vmem>>, vector<1x32x32xbf16>
    %354 = vector.shape_cast %353 : vector<1x32x32xbf16> to vector<32x32xbf16>
    %cst_235 = arith.constant dense<0.000000e+00> : vector<2x32xf32>
    %355 = tpu.matmul %346, %354, %cst_235 {dimension_numbers = #tpu.dot_dimension_numbers<[1], [0], [0], [1], [0, 0, 1, 1], [], []>} : vector<2x32xbf16>, vector<32x32xbf16>, vector<2x32xf32> -> vector<2x32xf32>
    %356 = arith.truncf %345 : vector<2x32xf32> to vector<2x32xbf16>
    %c0_236 = arith.constant 0 : index
    %c0_237 = arith.constant 0 : index
    %c0_238 = arith.constant 0 : index
    %357 = vector.load %arg4[%c0_236, %c0_237, %c0_238] : memref<3x32x32xbf16, #tpu.memory_space<vmem>>, vector<1x32x32xbf16>
    %358 = vector.shape_cast %357 : vector<1x32x32xbf16> to vector<32x32xbf16>
    %cst_239 = arith.constant dense<0.000000e+00> : vector<2x32xf32>
    %359 = tpu.matmul %356, %358, %cst_239 {dimension_numbers = #tpu.dot_dimension_numbers<[1], [0], [0], [1], [0, 0, 1, 1], [], []>} : vector<2x32xbf16>, vector<32x32xbf16>, vector<2x32xf32> -> vector<2x32xf32>
    %c1_240 = arith.constant 1 : index
    %c0_241 = arith.constant 0 : index
    %c0_242 = arith.constant 0 : index
    %360 = vector.load %arg4[%c1_240, %c0_241, %c0_242] : memref<3x32x32xbf16, #tpu.memory_space<vmem>>, vector<1x32x32xbf16>
    %361 = vector.shape_cast %360 : vector<1x32x32xbf16> to vector<32x32xbf16>
    %cst_243 = arith.constant dense<0.000000e+00> : vector<2x32xf32>
    %362 = tpu.matmul %356, %361, %cst_243 {dimension_numbers = #tpu.dot_dimension_numbers<[1], [0], [0], [1], [0, 0, 1, 1], [], []>} : vector<2x32xbf16>, vector<32x32xbf16>, vector<2x32xf32> -> vector<2x32xf32>
    %c2_244 = arith.constant 2 : index
    %c0_245 = arith.constant 0 : index
    %c0_246 = arith.constant 0 : index
    %363 = vector.load %arg4[%c2_244, %c0_245, %c0_246] : memref<3x32x32xbf16, #tpu.memory_space<vmem>>, vector<1x32x32xbf16>
    %364 = vector.shape_cast %363 : vector<1x32x32xbf16> to vector<32x32xbf16>
    %cst_247 = arith.constant dense<0.000000e+00> : vector<2x32xf32>
    %365 = tpu.matmul %356, %364, %cst_247 {dimension_numbers = #tpu.dot_dimension_numbers<[1], [0], [0], [1], [0, 0, 1, 1], [], []>} : vector<2x32xbf16>, vector<32x32xbf16>, vector<2x32xf32> -> vector<2x32xf32>
    %366 = arith.addf %349, %359 : vector<2x32xf32>
    %367 = vector.broadcast %6 : vector<1x32xf32> to vector<2x32xf32>
    %368 = arith.addf %366, %367 : vector<2x32xf32>
    %369 = arith.negf %368 : vector<2x32xf32>
    %370 = math.exp %369 : vector<2x32xf32>
    %cst_248 = arith.constant 1.000000e+00 : f32
    %371 = vector.broadcast %cst_248 : f32 to vector<2x32xf32>
    %372 = arith.addf %371, %370 : vector<2x32xf32>
    %373 = arith.divf %371, %372 : vector<2x32xf32>
    %374 = arith.addf %352, %362 : vector<2x32xf32>
    %375 = vector.broadcast %8 : vector<1x32xf32> to vector<2x32xf32>
    %376 = arith.addf %374, %375 : vector<2x32xf32>
    %377 = arith.negf %376 : vector<2x32xf32>
    %378 = math.exp %377 : vector<2x32xf32>
    %cst_249 = arith.constant 1.000000e+00 : f32
    %379 = vector.broadcast %cst_249 : f32 to vector<2x32xf32>
    %380 = arith.addf %379, %378 : vector<2x32xf32>
    %381 = arith.divf %379, %380 : vector<2x32xf32>
    %382 = vector.broadcast %10 : vector<1x32xf32> to vector<2x32xf32>
    %383 = arith.addf %355, %382 : vector<2x32xf32>
    %384 = vector.broadcast %4 : vector<1x32xf32> to vector<2x32xf32>
    %385 = arith.addf %365, %384 : vector<2x32xf32>
    %386 = arith.mulf %373, %385 : vector<2x32xf32>
    %387 = arith.addf %383, %386 : vector<2x32xf32>
    %388 = math.tanh %387 : vector<2x32xf32>
    %cst_250 = arith.constant 1.000000e+00 : f32
    %389 = vector.broadcast %cst_250 : f32 to vector<2x32xf32>
    %390 = arith.subf %389, %381 : vector<2x32xf32>
    %391 = arith.mulf %390, %388 : vector<2x32xf32>
    %392 = arith.mulf %381, %345 : vector<2x32xf32>
    %393 = arith.addf %391, %392 : vector<2x32xf32>
    %c0_251 = arith.constant 0 : index
    %c0_252 = arith.constant 0 : index
    %394 = vector.load %arg12[%c0_251, %c0_252] : memref<2x32xf32, #tpu.memory_space<vmem>>, vector<2x32xf32>
    tpu.vector_store %arg12[%c0_251, %c0_252], %393 {strides = array<i32>} : memref<2x32xf32, #tpu.memory_space<vmem>>, vector<2x32xf32>,
    %395 = arith.index_cast %c3_i32 : i32 to index
    %c0_253 = arith.constant 0 : index
    %c0_254 = arith.constant 0 : index
    %396 = vector.load %arg8[%395, %c0_253, %c0_254] : memref<8x2x32xf32, #tpu.memory_space<vmem>>, vector<1x2x32xf32>
    %397 = vector.shape_cast %396 : vector<1x2x32xf32> to vector<2x32xf32>
    %398 = vector.shape_cast %393 : vector<2x32xf32> to vector<1x2x32xf32>
    tpu.vector_store %arg8[%395, %c0_253, %c0_254], %398 {strides = array<i32>} : memref<8x2x32xf32, #tpu.memory_space<vmem>>, vector<1x2x32xf32>,
    %c4_i32 = arith.constant 4 : i32
    %c0_255 = arith.constant 0 : index
    %c0_256 = arith.constant 0 : index
    %399 = vector.load %arg11[%c0_255, %c0_256] : memref<2x32xf32, #tpu.memory_space<vmem>>, vector<2x32xf32>
    %400 = arith.truncf %399 : vector<2x32xf32> to vector<2x32xbf16>
    %c0_257 = arith.constant 0 : index
    %c0_258 = arith.constant 0 : index
    %c0_259 = arith.constant 0 : index
    %401 = vector.load %arg2[%c0_257, %c0_258, %c0_259] : memref<3x32x32xbf16, #tpu.memory_space<vmem>>, vector<1x32x32xbf16>
    %402 = vector.shape_cast %401 : vector<1x32x32xbf16> to vector<32x32xbf16>
    %cst_260 = arith.constant dense<0.000000e+00> : vector<2x32xf32>
    %403 = tpu.matmul %400, %402, %cst_260 {dimension_numbers = #tpu.dot_dimension_numbers<[1], [0], [0], [1], [0, 0, 1, 1], [], []>} : vector<2x32xbf16>, vector<32x32xbf16>, vector<2x32xf32> -> vector<2x32xf32>
    %c1_261 = arith.constant 1 : index
    %c0_262 = arith.constant 0 : index
    %c0_263 = arith.constant 0 : index
    %404 = vector.load %arg2[%c1_261, %c0_262, %c0_263] : memref<3x32x32xbf16, #tpu.memory_space<vmem>>, vector<1x32x32xbf16>
    %405 = vector.shape_cast %404 : vector<1x32x32xbf16> to vector<32x32xbf16>
    %cst_264 = arith.constant dense<0.000000e+00> : vector<2x32xf32>
    %406 = tpu.matmul %400, %405, %cst_264 {dimension_numbers = #tpu.dot_dimension_numbers<[1], [0], [0], [1], [0, 0, 1, 1], [], []>} : vector<2x32xbf16>, vector<32x32xbf16>, vector<2x32xf32> -> vector<2x32xf32>
    %c2_265 = arith.constant 2 : index
    %c0_266 = arith.constant 0 : index
    %c0_267 = arith.constant 0 : index
    %407 = vector.load %arg2[%c2_265, %c0_266, %c0_267] : memref<3x32x32xbf16, #tpu.memory_space<vmem>>, vector<1x32x32xbf16>
    %408 = vector.shape_cast %407 : vector<1x32x32xbf16> to vector<32x32xbf16>
    %cst_268 = arith.constant dense<0.000000e+00> : vector<2x32xf32>
    %409 = tpu.matmul %400, %408, %cst_268 {dimension_numbers = #tpu.dot_dimension_numbers<[1], [0], [0], [1], [0, 0, 1, 1], [], []>} : vector<2x32xbf16>, vector<32x32xbf16>, vector<2x32xf32> -> vector<2x32xf32>
    %c0_269 = arith.constant 0 : index
    %410 = arith.index_cast %c4_i32 : i32 to index
    %c0_270 = arith.constant 0 : index
    %c0_271 = arith.constant 0 : index
    %411 = vector.load %arg1[%c0_269, %410, %c0_270, %c0_271] : memref<3x8x2x32xf32, #tpu.memory_space<vmem>>, vector<1x1x2x32xf32>
    %412 = vector.shape_cast %411 : vector<1x1x2x32xf32> to vector<2x32xf32>
    %c1_272 = arith.constant 1 : index
    %413 = arith.index_cast %c4_i32 : i32 to index
    %c0_273 = arith.constant 0 : index
    %c0_274 = arith.constant 0 : index
    %414 = vector.load %arg1[%c1_272, %413, %c0_273, %c0_274] : memref<3x8x2x32xf32, #tpu.memory_space<vmem>>, vector<1x1x2x32xf32>
    %415 = vector.shape_cast %414 : vector<1x1x2x32xf32> to vector<2x32xf32>
    %c2_275 = arith.constant 2 : index
    %416 = arith.index_cast %c4_i32 : i32 to index
    %c0_276 = arith.constant 0 : index
    %c0_277 = arith.constant 0 : index
    %417 = vector.load %arg1[%c2_275, %416, %c0_276, %c0_277] : memref<3x8x2x32xf32, #tpu.memory_space<vmem>>, vector<1x1x2x32xf32>
    %418 = vector.shape_cast %417 : vector<1x1x2x32xf32> to vector<2x32xf32>
    %419 = arith.addf %412, %403 : vector<2x32xf32>
    %420 = arith.negf %419 : vector<2x32xf32>
    %421 = math.exp %420 : vector<2x32xf32>
    %cst_278 = arith.constant 1.000000e+00 : f32
    %422 = vector.broadcast %cst_278 : f32 to vector<2x32xf32>
    %423 = arith.addf %422, %421 : vector<2x32xf32>
    %424 = arith.divf %422, %423 : vector<2x32xf32>
    %425 = arith.addf %415, %406 : vector<2x32xf32>
    %426 = arith.negf %425 : vector<2x32xf32>
    %427 = math.exp %426 : vector<2x32xf32>
    %cst_279 = arith.constant 1.000000e+00 : f32
    %428 = vector.broadcast %cst_279 : f32 to vector<2x32xf32>
    %429 = arith.addf %428, %427 : vector<2x32xf32>
    %430 = arith.divf %428, %429 : vector<2x32xf32>
    %431 = vector.broadcast %3 : vector<1x32xf32> to vector<2x32xf32>
    %432 = arith.addf %409, %431 : vector<2x32xf32>
    %433 = arith.mulf %424, %432 : vector<2x32xf32>
    %434 = arith.addf %418, %433 : vector<2x32xf32>
    %435 = math.tanh %434 : vector<2x32xf32>
    %cst_280 = arith.constant 1.000000e+00 : f32
    %436 = vector.broadcast %cst_280 : f32 to vector<2x32xf32>
    %437 = arith.subf %436, %430 : vector<2x32xf32>
    %438 = arith.mulf %437, %435 : vector<2x32xf32>
    %439 = arith.mulf %430, %399 : vector<2x32xf32>
    %440 = arith.addf %438, %439 : vector<2x32xf32>
    %c0_281 = arith.constant 0 : index
    %c0_282 = arith.constant 0 : index
    %441 = vector.load %arg11[%c0_281, %c0_282] : memref<2x32xf32, #tpu.memory_space<vmem>>, vector<2x32xf32>
    tpu.vector_store %arg11[%c0_281, %c0_282], %440 {strides = array<i32>} : memref<2x32xf32, #tpu.memory_space<vmem>>, vector<2x32xf32>,
    %c0_283 = arith.constant 0 : index
    %c0_284 = arith.constant 0 : index
    %442 = vector.load %arg12[%c0_283, %c0_284] : memref<2x32xf32, #tpu.memory_space<vmem>>, vector<2x32xf32>
    %443 = arith.truncf %440 : vector<2x32xf32> to vector<2x32xbf16>
    %c0_285 = arith.constant 0 : index
    %c0_286 = arith.constant 0 : index
    %c0_287 = arith.constant 0 : index
    %444 = vector.load %arg3[%c0_285, %c0_286, %c0_287] : memref<3x32x32xbf16, #tpu.memory_space<vmem>>, vector<1x32x32xbf16>
    %445 = vector.shape_cast %444 : vector<1x32x32xbf16> to vector<32x32xbf16>
    %cst_288 = arith.constant dense<0.000000e+00> : vector<2x32xf32>
    %446 = tpu.matmul %443, %445, %cst_288 {dimension_numbers = #tpu.dot_dimension_numbers<[1], [0], [0], [1], [0, 0, 1, 1], [], []>} : vector<2x32xbf16>, vector<32x32xbf16>, vector<2x32xf32> -> vector<2x32xf32>
    %c1_289 = arith.constant 1 : index
    %c0_290 = arith.constant 0 : index
    %c0_291 = arith.constant 0 : index
    %447 = vector.load %arg3[%c1_289, %c0_290, %c0_291] : memref<3x32x32xbf16, #tpu.memory_space<vmem>>, vector<1x32x32xbf16>
    %448 = vector.shape_cast %447 : vector<1x32x32xbf16> to vector<32x32xbf16>
    %cst_292 = arith.constant dense<0.000000e+00> : vector<2x32xf32>
    %449 = tpu.matmul %443, %448, %cst_292 {dimension_numbers = #tpu.dot_dimension_numbers<[1], [0], [0], [1], [0, 0, 1, 1], [], []>} : vector<2x32xbf16>, vector<32x32xbf16>, vector<2x32xf32> -> vector<2x32xf32>
    %c2_293 = arith.constant 2 : index
    %c0_294 = arith.constant 0 : index
    %c0_295 = arith.constant 0 : index
    %450 = vector.load %arg3[%c2_293, %c0_294, %c0_295] : memref<3x32x32xbf16, #tpu.memory_space<vmem>>, vector<1x32x32xbf16>
    %451 = vector.shape_cast %450 : vector<1x32x32xbf16> to vector<32x32xbf16>
    %cst_296 = arith.constant dense<0.000000e+00> : vector<2x32xf32>
    %452 = tpu.matmul %443, %451, %cst_296 {dimension_numbers = #tpu.dot_dimension_numbers<[1], [0], [0], [1], [0, 0, 1, 1], [], []>} : vector<2x32xbf16>, vector<32x32xbf16>, vector<2x32xf32> -> vector<2x32xf32>
    %453 = arith.truncf %442 : vector<2x32xf32> to vector<2x32xbf16>
    %c0_297 = arith.constant 0 : index
    %c0_298 = arith.constant 0 : index
    %c0_299 = arith.constant 0 : index
    %454 = vector.load %arg4[%c0_297, %c0_298, %c0_299] : memref<3x32x32xbf16, #tpu.memory_space<vmem>>, vector<1x32x32xbf16>
    %455 = vector.shape_cast %454 : vector<1x32x32xbf16> to vector<32x32xbf16>
    %cst_300 = arith.constant dense<0.000000e+00> : vector<2x32xf32>
    %456 = tpu.matmul %453, %455, %cst_300 {dimension_numbers = #tpu.dot_dimension_numbers<[1], [0], [0], [1], [0, 0, 1, 1], [], []>} : vector<2x32xbf16>, vector<32x32xbf16>, vector<2x32xf32> -> vector<2x32xf32>
    %c1_301 = arith.constant 1 : index
    %c0_302 = arith.constant 0 : index
    %c0_303 = arith.constant 0 : index
    %457 = vector.load %arg4[%c1_301, %c0_302, %c0_303] : memref<3x32x32xbf16, #tpu.memory_space<vmem>>, vector<1x32x32xbf16>
    %458 = vector.shape_cast %457 : vector<1x32x32xbf16> to vector<32x32xbf16>
    %cst_304 = arith.constant dense<0.000000e+00> : vector<2x32xf32>
    %459 = tpu.matmul %453, %458, %cst_304 {dimension_numbers = #tpu.dot_dimension_numbers<[1], [0], [0], [1], [0, 0, 1, 1], [], []>} : vector<2x32xbf16>, vector<32x32xbf16>, vector<2x32xf32> -> vector<2x32xf32>
    %c2_305 = arith.constant 2 : index
    %c0_306 = arith.constant 0 : index
    %c0_307 = arith.constant 0 : index
    %460 = vector.load %arg4[%c2_305, %c0_306, %c0_307] : memref<3x32x32xbf16, #tpu.memory_space<vmem>>, vector<1x32x32xbf16>
    %461 = vector.shape_cast %460 : vector<1x32x32xbf16> to vector<32x32xbf16>
    %cst_308 = arith.constant dense<0.000000e+00> : vector<2x32xf32>
    %462 = tpu.matmul %453, %461, %cst_308 {dimension_numbers = #tpu.dot_dimension_numbers<[1], [0], [0], [1], [0, 0, 1, 1], [], []>} : vector<2x32xbf16>, vector<32x32xbf16>, vector<2x32xf32> -> vector<2x32xf32>
    %463 = arith.addf %446, %456 : vector<2x32xf32>
    %464 = vector.broadcast %6 : vector<1x32xf32> to vector<2x32xf32>
    %465 = arith.addf %463, %464 : vector<2x32xf32>
    %466 = arith.negf %465 : vector<2x32xf32>
    %467 = math.exp %466 : vector<2x32xf32>
    %cst_309 = arith.constant 1.000000e+00 : f32
    %468 = vector.broadcast %cst_309 : f32 to vector<2x32xf32>
    %469 = arith.addf %468, %467 : vector<2x32xf32>
    %470 = arith.divf %468, %469 : vector<2x32xf32>
    %471 = arith.addf %449, %459 : vector<2x32xf32>
    %472 = vector.broadcast %8 : vector<1x32xf32> to vector<2x32xf32>
    %473 = arith.addf %471, %472 : vector<2x32xf32>
    %474 = arith.negf %473 : vector<2x32xf32>
    %475 = math.exp %474 : vector<2x32xf32>
    %cst_310 = arith.constant 1.000000e+00 : f32
    %476 = vector.broadcast %cst_310 : f32 to vector<2x32xf32>
    %477 = arith.addf %476, %475 : vector<2x32xf32>
    %478 = arith.divf %476, %477 : vector<2x32xf32>
    %479 = vector.broadcast %10 : vector<1x32xf32> to vector<2x32xf32>
    %480 = arith.addf %452, %479 : vector<2x32xf32>
    %481 = vector.broadcast %4 : vector<1x32xf32> to vector<2x32xf32>
    %482 = arith.addf %462, %481 : vector<2x32xf32>
    %483 = arith.mulf %470, %482 : vector<2x32xf32>
    %484 = arith.addf %480, %483 : vector<2x32xf32>
    %485 = math.tanh %484 : vector<2x32xf32>
    %cst_311 = arith.constant 1.000000e+00 : f32
    %486 = vector.broadcast %cst_311 : f32 to vector<2x32xf32>
    %487 = arith.subf %486, %478 : vector<2x32xf32>
    %488 = arith.mulf %487, %485 : vector<2x32xf32>
    %489 = arith.mulf %478, %442 : vector<2x32xf32>
    %490 = arith.addf %488, %489 : vector<2x32xf32>
    %c0_312 = arith.constant 0 : index
    %c0_313 = arith.constant 0 : index
    %491 = vector.load %arg12[%c0_312, %c0_313] : memref<2x32xf32, #tpu.memory_space<vmem>>, vector<2x32xf32>
    tpu.vector_store %arg12[%c0_312, %c0_313], %490 {strides = array<i32>} : memref<2x32xf32, #tpu.memory_space<vmem>>, vector<2x32xf32>,
    %492 = arith.index_cast %c4_i32 : i32 to index
    %c0_314 = arith.constant 0 : index
    %c0_315 = arith.constant 0 : index
    %493 = vector.load %arg8[%492, %c0_314, %c0_315] : memref<8x2x32xf32, #tpu.memory_space<vmem>>, vector<1x2x32xf32>
    %494 = vector.shape_cast %493 : vector<1x2x32xf32> to vector<2x32xf32>
    %495 = vector.shape_cast %490 : vector<2x32xf32> to vector<1x2x32xf32>
    tpu.vector_store %arg8[%492, %c0_314, %c0_315], %495 {strides = array<i32>} : memref<8x2x32xf32, #tpu.memory_space<vmem>>, vector<1x2x32xf32>,
    %c5_i32 = arith.constant 5 : i32
    %c0_316 = arith.constant 0 : index
    %c0_317 = arith.constant 0 : index
    %496 = vector.load %arg11[%c0_316, %c0_317] : memref<2x32xf32, #tpu.memory_space<vmem>>, vector<2x32xf32>
    %497 = arith.truncf %496 : vector<2x32xf32> to vector<2x32xbf16>
    %c0_318 = arith.constant 0 : index
    %c0_319 = arith.constant 0 : index
    %c0_320 = arith.constant 0 : index
    %498 = vector.load %arg2[%c0_318, %c0_319, %c0_320] : memref<3x32x32xbf16, #tpu.memory_space<vmem>>, vector<1x32x32xbf16>
    %499 = vector.shape_cast %498 : vector<1x32x32xbf16> to vector<32x32xbf16>
    %cst_321 = arith.constant dense<0.000000e+00> : vector<2x32xf32>
    %500 = tpu.matmul %497, %499, %cst_321 {dimension_numbers = #tpu.dot_dimension_numbers<[1], [0], [0], [1], [0, 0, 1, 1], [], []>} : vector<2x32xbf16>, vector<32x32xbf16>, vector<2x32xf32> -> vector<2x32xf32>
    %c1_322 = arith.constant 1 : index
    %c0_323 = arith.constant 0 : index
    %c0_324 = arith.constant 0 : index
    %501 = vector.load %arg2[%c1_322, %c0_323, %c0_324] : memref<3x32x32xbf16, #tpu.memory_space<vmem>>, vector<1x32x32xbf16>
    %502 = vector.shape_cast %501 : vector<1x32x32xbf16> to vector<32x32xbf16>
    %cst_325 = arith.constant dense<0.000000e+00> : vector<2x32xf32>
    %503 = tpu.matmul %497, %502, %cst_325 {dimension_numbers = #tpu.dot_dimension_numbers<[1], [0], [0], [1], [0, 0, 1, 1], [], []>} : vector<2x32xbf16>, vector<32x32xbf16>, vector<2x32xf32> -> vector<2x32xf32>
    %c2_326 = arith.constant 2 : index
    %c0_327 = arith.constant 0 : index
    %c0_328 = arith.constant 0 : index
    %504 = vector.load %arg2[%c2_326, %c0_327, %c0_328] : memref<3x32x32xbf16, #tpu.memory_space<vmem>>, vector<1x32x32xbf16>
    %505 = vector.shape_cast %504 : vector<1x32x32xbf16> to vector<32x32xbf16>
    %cst_329 = arith.constant dense<0.000000e+00> : vector<2x32xf32>
    %506 = tpu.matmul %497, %505, %cst_329 {dimension_numbers = #tpu.dot_dimension_numbers<[1], [0], [0], [1], [0, 0, 1, 1], [], []>} : vector<2x32xbf16>, vector<32x32xbf16>, vector<2x32xf32> -> vector<2x32xf32>
    %c0_330 = arith.constant 0 : index
    %507 = arith.index_cast %c5_i32 : i32 to index
    %c0_331 = arith.constant 0 : index
    %c0_332 = arith.constant 0 : index
    %508 = vector.load %arg1[%c0_330, %507, %c0_331, %c0_332] : memref<3x8x2x32xf32, #tpu.memory_space<vmem>>, vector<1x1x2x32xf32>
    %509 = vector.shape_cast %508 : vector<1x1x2x32xf32> to vector<2x32xf32>
    %c1_333 = arith.constant 1 : index
    %510 = arith.index_cast %c5_i32 : i32 to index
    %c0_334 = arith.constant 0 : index
    %c0_335 = arith.constant 0 : index
    %511 = vector.load %arg1[%c1_333, %510, %c0_334, %c0_335] : memref<3x8x2x32xf32, #tpu.memory_space<vmem>>, vector<1x1x2x32xf32>
    %512 = vector.shape_cast %511 : vector<1x1x2x32xf32> to vector<2x32xf32>
    %c2_336 = arith.constant 2 : index
    %513 = arith.index_cast %c5_i32 : i32 to index
    %c0_337 = arith.constant 0 : index
    %c0_338 = arith.constant 0 : index
    %514 = vector.load %arg1[%c2_336, %513, %c0_337, %c0_338] : memref<3x8x2x32xf32, #tpu.memory_space<vmem>>, vector<1x1x2x32xf32>
    %515 = vector.shape_cast %514 : vector<1x1x2x32xf32> to vector<2x32xf32>
    %516 = arith.addf %509, %500 : vector<2x32xf32>
    %517 = arith.negf %516 : vector<2x32xf32>
    %518 = math.exp %517 : vector<2x32xf32>
    %cst_339 = arith.constant 1.000000e+00 : f32
    %519 = vector.broadcast %cst_339 : f32 to vector<2x32xf32>
    %520 = arith.addf %519, %518 : vector<2x32xf32>
    %521 = arith.divf %519, %520 : vector<2x32xf32>
    %522 = arith.addf %512, %503 : vector<2x32xf32>
    %523 = arith.negf %522 : vector<2x32xf32>
    %524 = math.exp %523 : vector<2x32xf32>
    %cst_340 = arith.constant 1.000000e+00 : f32
    %525 = vector.broadcast %cst_340 : f32 to vector<2x32xf32>
    %526 = arith.addf %525, %524 : vector<2x32xf32>
    %527 = arith.divf %525, %526 : vector<2x32xf32>
    %528 = vector.broadcast %3 : vector<1x32xf32> to vector<2x32xf32>
    %529 = arith.addf %506, %528 : vector<2x32xf32>
    %530 = arith.mulf %521, %529 : vector<2x32xf32>
    %531 = arith.addf %515, %530 : vector<2x32xf32>
    %532 = math.tanh %531 : vector<2x32xf32>
    %cst_341 = arith.constant 1.000000e+00 : f32
    %533 = vector.broadcast %cst_341 : f32 to vector<2x32xf32>
    %534 = arith.subf %533, %527 : vector<2x32xf32>
    %535 = arith.mulf %534, %532 : vector<2x32xf32>
    %536 = arith.mulf %527, %496 : vector<2x32xf32>
    %537 = arith.addf %535, %536 : vector<2x32xf32>
    %c0_342 = arith.constant 0 : index
    %c0_343 = arith.constant 0 : index
    %538 = vector.load %arg11[%c0_342, %c0_343] : memref<2x32xf32, #tpu.memory_space<vmem>>, vector<2x32xf32>
    tpu.vector_store %arg11[%c0_342, %c0_343], %537 {strides = array<i32>} : memref<2x32xf32, #tpu.memory_space<vmem>>, vector<2x32xf32>,
    %c0_344 = arith.constant 0 : index
    %c0_345 = arith.constant 0 : index
    %539 = vector.load %arg12[%c0_344, %c0_345] : memref<2x32xf32, #tpu.memory_space<vmem>>, vector<2x32xf32>
    %540 = arith.truncf %537 : vector<2x32xf32> to vector<2x32xbf16>
    %c0_346 = arith.constant 0 : index
    %c0_347 = arith.constant 0 : index
    %c0_348 = arith.constant 0 : index
    %541 = vector.load %arg3[%c0_346, %c0_347, %c0_348] : memref<3x32x32xbf16, #tpu.memory_space<vmem>>, vector<1x32x32xbf16>
    %542 = vector.shape_cast %541 : vector<1x32x32xbf16> to vector<32x32xbf16>
    %cst_349 = arith.constant dense<0.000000e+00> : vector<2x32xf32>
    %543 = tpu.matmul %540, %542, %cst_349 {dimension_numbers = #tpu.dot_dimension_numbers<[1], [0], [0], [1], [0, 0, 1, 1], [], []>} : vector<2x32xbf16>, vector<32x32xbf16>, vector<2x32xf32> -> vector<2x32xf32>
    %c1_350 = arith.constant 1 : index
    %c0_351 = arith.constant 0 : index
    %c0_352 = arith.constant 0 : index
    %544 = vector.load %arg3[%c1_350, %c0_351, %c0_352] : memref<3x32x32xbf16, #tpu.memory_space<vmem>>, vector<1x32x32xbf16>
    %545 = vector.shape_cast %544 : vector<1x32x32xbf16> to vector<32x32xbf16>
    %cst_353 = arith.constant dense<0.000000e+00> : vector<2x32xf32>
    %546 = tpu.matmul %540, %545, %cst_353 {dimension_numbers = #tpu.dot_dimension_numbers<[1], [0], [0], [1], [0, 0, 1, 1], [], []>} : vector<2x32xbf16>, vector<32x32xbf16>, vector<2x32xf32> -> vector<2x32xf32>
    %c2_354 = arith.constant 2 : index
    %c0_355 = arith.constant 0 : index
    %c0_356 = arith.constant 0 : index
    %547 = vector.load %arg3[%c2_354, %c0_355, %c0_356] : memref<3x32x32xbf16, #tpu.memory_space<vmem>>, vector<1x32x32xbf16>
    %548 = vector.shape_cast %547 : vector<1x32x32xbf16> to vector<32x32xbf16>
    %cst_357 = arith.constant dense<0.000000e+00> : vector<2x32xf32>
    %549 = tpu.matmul %540, %548, %cst_357 {dimension_numbers = #tpu.dot_dimension_numbers<[1], [0], [0], [1], [0, 0, 1, 1], [], []>} : vector<2x32xbf16>, vector<32x32xbf16>, vector<2x32xf32> -> vector<2x32xf32>
    %550 = arith.truncf %539 : vector<2x32xf32> to vector<2x32xbf16>
    %c0_358 = arith.constant 0 : index
    %c0_359 = arith.constant 0 : index
    %c0_360 = arith.constant 0 : index
    %551 = vector.load %arg4[%c0_358, %c0_359, %c0_360] : memref<3x32x32xbf16, #tpu.memory_space<vmem>>, vector<1x32x32xbf16>
    %552 = vector.shape_cast %551 : vector<1x32x32xbf16> to vector<32x32xbf16>
    %cst_361 = arith.constant dense<0.000000e+00> : vector<2x32xf32>
    %553 = tpu.matmul %550, %552, %cst_361 {dimension_numbers = #tpu.dot_dimension_numbers<[1], [0], [0], [1], [0, 0, 1, 1], [], []>} : vector<2x32xbf16>, vector<32x32xbf16>, vector<2x32xf32> -> vector<2x32xf32>
    %c1_362 = arith.constant 1 : index
    %c0_363 = arith.constant 0 : index
    %c0_364 = arith.constant 0 : index
    %554 = vector.load %arg4[%c1_362, %c0_363, %c0_364] : memref<3x32x32xbf16, #tpu.memory_space<vmem>>, vector<1x32x32xbf16>
    %555 = vector.shape_cast %554 : vector<1x32x32xbf16> to vector<32x32xbf16>
    %cst_365 = arith.constant dense<0.000000e+00> : vector<2x32xf32>
    %556 = tpu.matmul %550, %555, %cst_365 {dimension_numbers = #tpu.dot_dimension_numbers<[1], [0], [0], [1], [0, 0, 1, 1], [], []>} : vector<2x32xbf16>, vector<32x32xbf16>, vector<2x32xf32> -> vector<2x32xf32>
    %c2_366 = arith.constant 2 : index
    %c0_367 = arith.constant 0 : index
    %c0_368 = arith.constant 0 : index
    %557 = vector.load %arg4[%c2_366, %c0_367, %c0_368] : memref<3x32x32xbf16, #tpu.memory_space<vmem>>, vector<1x32x32xbf16>
    %558 = vector.shape_cast %557 : vector<1x32x32xbf16> to vector<32x32xbf16>
    %cst_369 = arith.constant dense<0.000000e+00> : vector<2x32xf32>
    %559 = tpu.matmul %550, %558, %cst_369 {dimension_numbers = #tpu.dot_dimension_numbers<[1], [0], [0], [1], [0, 0, 1, 1], [], []>} : vector<2x32xbf16>, vector<32x32xbf16>, vector<2x32xf32> -> vector<2x32xf32>
    %560 = arith.addf %543, %553 : vector<2x32xf32>
    %561 = vector.broadcast %6 : vector<1x32xf32> to vector<2x32xf32>
    %562 = arith.addf %560, %561 : vector<2x32xf32>
    %563 = arith.negf %562 : vector<2x32xf32>
    %564 = math.exp %563 : vector<2x32xf32>
    %cst_370 = arith.constant 1.000000e+00 : f32
    %565 = vector.broadcast %cst_370 : f32 to vector<2x32xf32>
    %566 = arith.addf %565, %564 : vector<2x32xf32>
    %567 = arith.divf %565, %566 : vector<2x32xf32>
    %568 = arith.addf %546, %556 : vector<2x32xf32>
    %569 = vector.broadcast %8 : vector<1x32xf32> to vector<2x32xf32>
    %570 = arith.addf %568, %569 : vector<2x32xf32>
    %571 = arith.negf %570 : vector<2x32xf32>
    %572 = math.exp %571 : vector<2x32xf32>
    %cst_371 = arith.constant 1.000000e+00 : f32
    %573 = vector.broadcast %cst_371 : f32 to vector<2x32xf32>
    %574 = arith.addf %573, %572 : vector<2x32xf32>
    %575 = arith.divf %573, %574 : vector<2x32xf32>
    %576 = vector.broadcast %10 : vector<1x32xf32> to vector<2x32xf32>
    %577 = arith.addf %549, %576 : vector<2x32xf32>
    %578 = vector.broadcast %4 : vector<1x32xf32> to vector<2x32xf32>
    %579 = arith.addf %559, %578 : vector<2x32xf32>
    %580 = arith.mulf %567, %579 : vector<2x32xf32>
    %581 = arith.addf %577, %580 : vector<2x32xf32>
    %582 = math.tanh %581 : vector<2x32xf32>
    %cst_372 = arith.constant 1.000000e+00 : f32
    %583 = vector.broadcast %cst_372 : f32 to vector<2x32xf32>
    %584 = arith.subf %583, %575 : vector<2x32xf32>
    %585 = arith.mulf %584, %582 : vector<2x32xf32>
    %586 = arith.mulf %575, %539 : vector<2x32xf32>
    %587 = arith.addf %585, %586 : vector<2x32xf32>
    %c0_373 = arith.constant 0 : index
    %c0_374 = arith.constant 0 : index
    %588 = vector.load %arg12[%c0_373, %c0_374] : memref<2x32xf32, #tpu.memory_space<vmem>>, vector<2x32xf32>
    tpu.vector_store %arg12[%c0_373, %c0_374], %587 {strides = array<i32>} : memref<2x32xf32, #tpu.memory_space<vmem>>, vector<2x32xf32>,
    %589 = arith.index_cast %c5_i32 : i32 to index
    %c0_375 = arith.constant 0 : index
    %c0_376 = arith.constant 0 : index
    %590 = vector.load %arg8[%589, %c0_375, %c0_376] : memref<8x2x32xf32, #tpu.memory_space<vmem>>, vector<1x2x32xf32>
    %591 = vector.shape_cast %590 : vector<1x2x32xf32> to vector<2x32xf32>
    %592 = vector.shape_cast %587 : vector<2x32xf32> to vector<1x2x32xf32>
    tpu.vector_store %arg8[%589, %c0_375, %c0_376], %592 {strides = array<i32>} : memref<8x2x32xf32, #tpu.memory_space<vmem>>, vector<1x2x32xf32>,
    %c6_i32 = arith.constant 6 : i32
    %c0_377 = arith.constant 0 : index
    %c0_378 = arith.constant 0 : index
    %593 = vector.load %arg11[%c0_377, %c0_378] : memref<2x32xf32, #tpu.memory_space<vmem>>, vector<2x32xf32>
    %594 = arith.truncf %593 : vector<2x32xf32> to vector<2x32xbf16>
    %c0_379 = arith.constant 0 : index
    %c0_380 = arith.constant 0 : index
    %c0_381 = arith.constant 0 : index
    %595 = vector.load %arg2[%c0_379, %c0_380, %c0_381] : memref<3x32x32xbf16, #tpu.memory_space<vmem>>, vector<1x32x32xbf16>
    %596 = vector.shape_cast %595 : vector<1x32x32xbf16> to vector<32x32xbf16>
    %cst_382 = arith.constant dense<0.000000e+00> : vector<2x32xf32>
    %597 = tpu.matmul %594, %596, %cst_382 {dimension_numbers = #tpu.dot_dimension_numbers<[1], [0], [0], [1], [0, 0, 1, 1], [], []>} : vector<2x32xbf16>, vector<32x32xbf16>, vector<2x32xf32> -> vector<2x32xf32>
    %c1_383 = arith.constant 1 : index
    %c0_384 = arith.constant 0 : index
    %c0_385 = arith.constant 0 : index
    %598 = vector.load %arg2[%c1_383, %c0_384, %c0_385] : memref<3x32x32xbf16, #tpu.memory_space<vmem>>, vector<1x32x32xbf16>
    %599 = vector.shape_cast %598 : vector<1x32x32xbf16> to vector<32x32xbf16>
    %cst_386 = arith.constant dense<0.000000e+00> : vector<2x32xf32>
    %600 = tpu.matmul %594, %599, %cst_386 {dimension_numbers = #tpu.dot_dimension_numbers<[1], [0], [0], [1], [0, 0, 1, 1], [], []>} : vector<2x32xbf16>, vector<32x32xbf16>, vector<2x32xf32> -> vector<2x32xf32>
    %c2_387 = arith.constant 2 : index
    %c0_388 = arith.constant 0 : index
    %c0_389 = arith.constant 0 : index
    %601 = vector.load %arg2[%c2_387, %c0_388, %c0_389] : memref<3x32x32xbf16, #tpu.memory_space<vmem>>, vector<1x32x32xbf16>
    %602 = vector.shape_cast %601 : vector<1x32x32xbf16> to vector<32x32xbf16>
    %cst_390 = arith.constant dense<0.000000e+00> : vector<2x32xf32>
    %603 = tpu.matmul %594, %602, %cst_390 {dimension_numbers = #tpu.dot_dimension_numbers<[1], [0], [0], [1], [0, 0, 1, 1], [], []>} : vector<2x32xbf16>, vector<32x32xbf16>, vector<2x32xf32> -> vector<2x32xf32>
    %c0_391 = arith.constant 0 : index
    %604 = arith.index_cast %c6_i32 : i32 to index
    %c0_392 = arith.constant 0 : index
    %c0_393 = arith.constant 0 : index
    %605 = vector.load %arg1[%c0_391, %604, %c0_392, %c0_393] : memref<3x8x2x32xf32, #tpu.memory_space<vmem>>, vector<1x1x2x32xf32>
    %606 = vector.shape_cast %605 : vector<1x1x2x32xf32> to vector<2x32xf32>
    %c1_394 = arith.constant 1 : index
    %607 = arith.index_cast %c6_i32 : i32 to index
    %c0_395 = arith.constant 0 : index
    %c0_396 = arith.constant 0 : index
    %608 = vector.load %arg1[%c1_394, %607, %c0_395, %c0_396] : memref<3x8x2x32xf32, #tpu.memory_space<vmem>>, vector<1x1x2x32xf32>
    %609 = vector.shape_cast %608 : vector<1x1x2x32xf32> to vector<2x32xf32>
    %c2_397 = arith.constant 2 : index
    %610 = arith.index_cast %c6_i32 : i32 to index
    %c0_398 = arith.constant 0 : index
    %c0_399 = arith.constant 0 : index
    %611 = vector.load %arg1[%c2_397, %610, %c0_398, %c0_399] : memref<3x8x2x32xf32, #tpu.memory_space<vmem>>, vector<1x1x2x32xf32>
    %612 = vector.shape_cast %611 : vector<1x1x2x32xf32> to vector<2x32xf32>
    %613 = arith.addf %606, %597 : vector<2x32xf32>
    %614 = arith.negf %613 : vector<2x32xf32>
    %615 = math.exp %614 : vector<2x32xf32>
    %cst_400 = arith.constant 1.000000e+00 : f32
    %616 = vector.broadcast %cst_400 : f32 to vector<2x32xf32>
    %617 = arith.addf %616, %615 : vector<2x32xf32>
    %618 = arith.divf %616, %617 : vector<2x32xf32>
    %619 = arith.addf %609, %600 : vector<2x32xf32>
    %620 = arith.negf %619 : vector<2x32xf32>
    %621 = math.exp %620 : vector<2x32xf32>
    %cst_401 = arith.constant 1.000000e+00 : f32
    %622 = vector.broadcast %cst_401 : f32 to vector<2x32xf32>
    %623 = arith.addf %622, %621 : vector<2x32xf32>
    %624 = arith.divf %622, %623 : vector<2x32xf32>
    %625 = vector.broadcast %3 : vector<1x32xf32> to vector<2x32xf32>
    %626 = arith.addf %603, %625 : vector<2x32xf32>
    %627 = arith.mulf %618, %626 : vector<2x32xf32>
    %628 = arith.addf %612, %627 : vector<2x32xf32>
    %629 = math.tanh %628 : vector<2x32xf32>
    %cst_402 = arith.constant 1.000000e+00 : f32
    %630 = vector.broadcast %cst_402 : f32 to vector<2x32xf32>
    %631 = arith.subf %630, %624 : vector<2x32xf32>
    %632 = arith.mulf %631, %629 : vector<2x32xf32>
    %633 = arith.mulf %624, %593 : vector<2x32xf32>
    %634 = arith.addf %632, %633 : vector<2x32xf32>
    %c0_403 = arith.constant 0 : index
    %c0_404 = arith.constant 0 : index
    %635 = vector.load %arg11[%c0_403, %c0_404] : memref<2x32xf32, #tpu.memory_space<vmem>>, vector<2x32xf32>
    tpu.vector_store %arg11[%c0_403, %c0_404], %634 {strides = array<i32>} : memref<2x32xf32, #tpu.memory_space<vmem>>, vector<2x32xf32>,
    %c0_405 = arith.constant 0 : index
    %c0_406 = arith.constant 0 : index
    %636 = vector.load %arg12[%c0_405, %c0_406] : memref<2x32xf32, #tpu.memory_space<vmem>>, vector<2x32xf32>
    %637 = arith.truncf %634 : vector<2x32xf32> to vector<2x32xbf16>
    %c0_407 = arith.constant 0 : index
    %c0_408 = arith.constant 0 : index
    %c0_409 = arith.constant 0 : index
    %638 = vector.load %arg3[%c0_407, %c0_408, %c0_409] : memref<3x32x32xbf16, #tpu.memory_space<vmem>>, vector<1x32x32xbf16>
    %639 = vector.shape_cast %638 : vector<1x32x32xbf16> to vector<32x32xbf16>
    %cst_410 = arith.constant dense<0.000000e+00> : vector<2x32xf32>
    %640 = tpu.matmul %637, %639, %cst_410 {dimension_numbers = #tpu.dot_dimension_numbers<[1], [0], [0], [1], [0, 0, 1, 1], [], []>} : vector<2x32xbf16>, vector<32x32xbf16>, vector<2x32xf32> -> vector<2x32xf32>
    %c1_411 = arith.constant 1 : index
    %c0_412 = arith.constant 0 : index
    %c0_413 = arith.constant 0 : index
    %641 = vector.load %arg3[%c1_411, %c0_412, %c0_413] : memref<3x32x32xbf16, #tpu.memory_space<vmem>>, vector<1x32x32xbf16>
    %642 = vector.shape_cast %641 : vector<1x32x32xbf16> to vector<32x32xbf16>
    %cst_414 = arith.constant dense<0.000000e+00> : vector<2x32xf32>
    %643 = tpu.matmul %637, %642, %cst_414 {dimension_numbers = #tpu.dot_dimension_numbers<[1], [0], [0], [1], [0, 0, 1, 1], [], []>} : vector<2x32xbf16>, vector<32x32xbf16>, vector<2x32xf32> -> vector<2x32xf32>
    %c2_415 = arith.constant 2 : index
    %c0_416 = arith.constant 0 : index
    %c0_417 = arith.constant 0 : index
    %644 = vector.load %arg3[%c2_415, %c0_416, %c0_417] : memref<3x32x32xbf16, #tpu.memory_space<vmem>>, vector<1x32x32xbf16>
    %645 = vector.shape_cast %644 : vector<1x32x32xbf16> to vector<32x32xbf16>
    %cst_418 = arith.constant dense<0.000000e+00> : vector<2x32xf32>
    %646 = tpu.matmul %637, %645, %cst_418 {dimension_numbers = #tpu.dot_dimension_numbers<[1], [0], [0], [1], [0, 0, 1, 1], [], []>} : vector<2x32xbf16>, vector<32x32xbf16>, vector<2x32xf32> -> vector<2x32xf32>
    %647 = arith.truncf %636 : vector<2x32xf32> to vector<2x32xbf16>
    %c0_419 = arith.constant 0 : index
    %c0_420 = arith.constant 0 : index
    %c0_421 = arith.constant 0 : index
    %648 = vector.load %arg4[%c0_419, %c0_420, %c0_421] : memref<3x32x32xbf16, #tpu.memory_space<vmem>>, vector<1x32x32xbf16>
    %649 = vector.shape_cast %648 : vector<1x32x32xbf16> to vector<32x32xbf16>
    %cst_422 = arith.constant dense<0.000000e+00> : vector<2x32xf32>
    %650 = tpu.matmul %647, %649, %cst_422 {dimension_numbers = #tpu.dot_dimension_numbers<[1], [0], [0], [1], [0, 0, 1, 1], [], []>} : vector<2x32xbf16>, vector<32x32xbf16>, vector<2x32xf32> -> vector<2x32xf32>
    %c1_423 = arith.constant 1 : index
    %c0_424 = arith.constant 0 : index
    %c0_425 = arith.constant 0 : index
    %651 = vector.load %arg4[%c1_423, %c0_424, %c0_425] : memref<3x32x32xbf16, #tpu.memory_space<vmem>>, vector<1x32x32xbf16>
    %652 = vector.shape_cast %651 : vector<1x32x32xbf16> to vector<32x32xbf16>
    %cst_426 = arith.constant dense<0.000000e+00> : vector<2x32xf32>
    %653 = tpu.matmul %647, %652, %cst_426 {dimension_numbers = #tpu.dot_dimension_numbers<[1], [0], [0], [1], [0, 0, 1, 1], [], []>} : vector<2x32xbf16>, vector<32x32xbf16>, vector<2x32xf32> -> vector<2x32xf32>
    %c2_427 = arith.constant 2 : index
    %c0_428 = arith.constant 0 : index
    %c0_429 = arith.constant 0 : index
    %654 = vector.load %arg4[%c2_427, %c0_428, %c0_429] : memref<3x32x32xbf16, #tpu.memory_space<vmem>>, vector<1x32x32xbf16>
    %655 = vector.shape_cast %654 : vector<1x32x32xbf16> to vector<32x32xbf16>
    %cst_430 = arith.constant dense<0.000000e+00> : vector<2x32xf32>
    %656 = tpu.matmul %647, %655, %cst_430 {dimension_numbers = #tpu.dot_dimension_numbers<[1], [0], [0], [1], [0, 0, 1, 1], [], []>} : vector<2x32xbf16>, vector<32x32xbf16>, vector<2x32xf32> -> vector<2x32xf32>
    %657 = arith.addf %640, %650 : vector<2x32xf32>
    %658 = vector.broadcast %6 : vector<1x32xf32> to vector<2x32xf32>
    %659 = arith.addf %657, %658 : vector<2x32xf32>
    %660 = arith.negf %659 : vector<2x32xf32>
    %661 = math.exp %660 : vector<2x32xf32>
    %cst_431 = arith.constant 1.000000e+00 : f32
    %662 = vector.broadcast %cst_431 : f32 to vector<2x32xf32>
    %663 = arith.addf %662, %661 : vector<2x32xf32>
    %664 = arith.divf %662, %663 : vector<2x32xf32>
    %665 = arith.addf %643, %653 : vector<2x32xf32>
    %666 = vector.broadcast %8 : vector<1x32xf32> to vector<2x32xf32>
    %667 = arith.addf %665, %666 : vector<2x32xf32>
    %668 = arith.negf %667 : vector<2x32xf32>
    %669 = math.exp %668 : vector<2x32xf32>
    %cst_432 = arith.constant 1.000000e+00 : f32
    %670 = vector.broadcast %cst_432 : f32 to vector<2x32xf32>
    %671 = arith.addf %670, %669 : vector<2x32xf32>
    %672 = arith.divf %670, %671 : vector<2x32xf32>
    %673 = vector.broadcast %10 : vector<1x32xf32> to vector<2x32xf32>
    %674 = arith.addf %646, %673 : vector<2x32xf32>
    %675 = vector.broadcast %4 : vector<1x32xf32> to vector<2x32xf32>
    %676 = arith.addf %656, %675 : vector<2x32xf32>
    %677 = arith.mulf %664, %676 : vector<2x32xf32>
    %678 = arith.addf %674, %677 : vector<2x32xf32>
    %679 = math.tanh %678 : vector<2x32xf32>
    %cst_433 = arith.constant 1.000000e+00 : f32
    %680 = vector.broadcast %cst_433 : f32 to vector<2x32xf32>
    %681 = arith.subf %680, %672 : vector<2x32xf32>
    %682 = arith.mulf %681, %679 : vector<2x32xf32>
    %683 = arith.mulf %672, %636 : vector<2x32xf32>
    %684 = arith.addf %682, %683 : vector<2x32xf32>
    %c0_434 = arith.constant 0 : index
    %c0_435 = arith.constant 0 : index
    %685 = vector.load %arg12[%c0_434, %c0_435] : memref<2x32xf32, #tpu.memory_space<vmem>>, vector<2x32xf32>
    tpu.vector_store %arg12[%c0_434, %c0_435], %684 {strides = array<i32>} : memref<2x32xf32, #tpu.memory_space<vmem>>, vector<2x32xf32>,
    %686 = arith.index_cast %c6_i32 : i32 to index
    %c0_436 = arith.constant 0 : index
    %c0_437 = arith.constant 0 : index
    %687 = vector.load %arg8[%686, %c0_436, %c0_437] : memref<8x2x32xf32, #tpu.memory_space<vmem>>, vector<1x2x32xf32>
    %688 = vector.shape_cast %687 : vector<1x2x32xf32> to vector<2x32xf32>
    %689 = vector.shape_cast %684 : vector<2x32xf32> to vector<1x2x32xf32>
    tpu.vector_store %arg8[%686, %c0_436, %c0_437], %689 {strides = array<i32>} : memref<8x2x32xf32, #tpu.memory_space<vmem>>, vector<1x2x32xf32>,
    %c7_i32 = arith.constant 7 : i32
    %c0_438 = arith.constant 0 : index
    %c0_439 = arith.constant 0 : index
    %690 = vector.load %arg11[%c0_438, %c0_439] : memref<2x32xf32, #tpu.memory_space<vmem>>, vector<2x32xf32>
    %691 = arith.truncf %690 : vector<2x32xf32> to vector<2x32xbf16>
    %c0_440 = arith.constant 0 : index
    %c0_441 = arith.constant 0 : index
    %c0_442 = arith.constant 0 : index
    %692 = vector.load %arg2[%c0_440, %c0_441, %c0_442] : memref<3x32x32xbf16, #tpu.memory_space<vmem>>, vector<1x32x32xbf16>
    %693 = vector.shape_cast %692 : vector<1x32x32xbf16> to vector<32x32xbf16>
    %cst_443 = arith.constant dense<0.000000e+00> : vector<2x32xf32>
    %694 = tpu.matmul %691, %693, %cst_443 {dimension_numbers = #tpu.dot_dimension_numbers<[1], [0], [0], [1], [0, 0, 1, 1], [], []>} : vector<2x32xbf16>, vector<32x32xbf16>, vector<2x32xf32> -> vector<2x32xf32>
    %c1_444 = arith.constant 1 : index
    %c0_445 = arith.constant 0 : index
    %c0_446 = arith.constant 0 : index
    %695 = vector.load %arg2[%c1_444, %c0_445, %c0_446] : memref<3x32x32xbf16, #tpu.memory_space<vmem>>, vector<1x32x32xbf16>
    %696 = vector.shape_cast %695 : vector<1x32x32xbf16> to vector<32x32xbf16>
    %cst_447 = arith.constant dense<0.000000e+00> : vector<2x32xf32>
    %697 = tpu.matmul %691, %696, %cst_447 {dimension_numbers = #tpu.dot_dimension_numbers<[1], [0], [0], [1], [0, 0, 1, 1], [], []>} : vector<2x32xbf16>, vector<32x32xbf16>, vector<2x32xf32> -> vector<2x32xf32>
    %c2_448 = arith.constant 2 : index
    %c0_449 = arith.constant 0 : index
    %c0_450 = arith.constant 0 : index
    %698 = vector.load %arg2[%c2_448, %c0_449, %c0_450] : memref<3x32x32xbf16, #tpu.memory_space<vmem>>, vector<1x32x32xbf16>
    %699 = vector.shape_cast %698 : vector<1x32x32xbf16> to vector<32x32xbf16>
    %cst_451 = arith.constant dense<0.000000e+00> : vector<2x32xf32>
    %700 = tpu.matmul %691, %699, %cst_451 {dimension_numbers = #tpu.dot_dimension_numbers<[1], [0], [0], [1], [0, 0, 1, 1], [], []>} : vector<2x32xbf16>, vector<32x32xbf16>, vector<2x32xf32> -> vector<2x32xf32>
    %c0_452 = arith.constant 0 : index
    %701 = arith.index_cast %c7_i32 : i32 to index
    %c0_453 = arith.constant 0 : index
    %c0_454 = arith.constant 0 : index
    %702 = vector.load %arg1[%c0_452, %701, %c0_453, %c0_454] : memref<3x8x2x32xf32, #tpu.memory_space<vmem>>, vector<1x1x2x32xf32>
    %703 = vector.shape_cast %702 : vector<1x1x2x32xf32> to vector<2x32xf32>
    %c1_455 = arith.constant 1 : index
    %704 = arith.index_cast %c7_i32 : i32 to index
    %c0_456 = arith.constant 0 : index
    %c0_457 = arith.constant 0 : index
    %705 = vector.load %arg1[%c1_455, %704, %c0_456, %c0_457] : memref<3x8x2x32xf32, #tpu.memory_space<vmem>>, vector<1x1x2x32xf32>
    %706 = vector.shape_cast %705 : vector<1x1x2x32xf32> to vector<2x32xf32>
    %c2_458 = arith.constant 2 : index
    %707 = arith.index_cast %c7_i32 : i32 to index
    %c0_459 = arith.constant 0 : index
    %c0_460 = arith.constant 0 : index
    %708 = vector.load %arg1[%c2_458, %707, %c0_459, %c0_460] : memref<3x8x2x32xf32, #tpu.memory_space<vmem>>, vector<1x1x2x32xf32>
    %709 = vector.shape_cast %708 : vector<1x1x2x32xf32> to vector<2x32xf32>
    %710 = arith.addf %703, %694 : vector<2x32xf32>
    %711 = arith.negf %710 : vector<2x32xf32>
    %712 = math.exp %711 : vector<2x32xf32>
    %cst_461 = arith.constant 1.000000e+00 : f32
    %713 = vector.broadcast %cst_461 : f32 to vector<2x32xf32>
    %714 = arith.addf %713, %712 : vector<2x32xf32>
    %715 = arith.divf %713, %714 : vector<2x32xf32>
    %716 = arith.addf %706, %697 : vector<2x32xf32>
    %717 = arith.negf %716 : vector<2x32xf32>
    %718 = math.exp %717 : vector<2x32xf32>
    %cst_462 = arith.constant 1.000000e+00 : f32
    %719 = vector.broadcast %cst_462 : f32 to vector<2x32xf32>
    %720 = arith.addf %719, %718 : vector<2x32xf32>
    %721 = arith.divf %719, %720 : vector<2x32xf32>
    %722 = vector.broadcast %3 : vector<1x32xf32> to vector<2x32xf32>
    %723 = arith.addf %700, %722 : vector<2x32xf32>
    %724 = arith.mulf %715, %723 : vector<2x32xf32>
    %725 = arith.addf %709, %724 : vector<2x32xf32>
    %726 = math.tanh %725 : vector<2x32xf32>
    %cst_463 = arith.constant 1.000000e+00 : f32
    %727 = vector.broadcast %cst_463 : f32 to vector<2x32xf32>
    %728 = arith.subf %727, %721 : vector<2x32xf32>
    %729 = arith.mulf %728, %726 : vector<2x32xf32>
    %730 = arith.mulf %721, %690 : vector<2x32xf32>
    %731 = arith.addf %729, %730 : vector<2x32xf32>
    %c0_464 = arith.constant 0 : index
    %c0_465 = arith.constant 0 : index
    %732 = vector.load %arg11[%c0_464, %c0_465] : memref<2x32xf32, #tpu.memory_space<vmem>>, vector<2x32xf32>
    tpu.vector_store %arg11[%c0_464, %c0_465], %731 {strides = array<i32>} : memref<2x32xf32, #tpu.memory_space<vmem>>, vector<2x32xf32>,
    %c0_466 = arith.constant 0 : index
    %c0_467 = arith.constant 0 : index
    %733 = vector.load %arg12[%c0_466, %c0_467] : memref<2x32xf32, #tpu.memory_space<vmem>>, vector<2x32xf32>
    %734 = arith.truncf %731 : vector<2x32xf32> to vector<2x32xbf16>
    %c0_468 = arith.constant 0 : index
    %c0_469 = arith.constant 0 : index
    %c0_470 = arith.constant 0 : index
    %735 = vector.load %arg3[%c0_468, %c0_469, %c0_470] : memref<3x32x32xbf16, #tpu.memory_space<vmem>>, vector<1x32x32xbf16>
    %736 = vector.shape_cast %735 : vector<1x32x32xbf16> to vector<32x32xbf16>
    %cst_471 = arith.constant dense<0.000000e+00> : vector<2x32xf32>
    %737 = tpu.matmul %734, %736, %cst_471 {dimension_numbers = #tpu.dot_dimension_numbers<[1], [0], [0], [1], [0, 0, 1, 1], [], []>} : vector<2x32xbf16>, vector<32x32xbf16>, vector<2x32xf32> -> vector<2x32xf32>
    %c1_472 = arith.constant 1 : index
    %c0_473 = arith.constant 0 : index
    %c0_474 = arith.constant 0 : index
    %738 = vector.load %arg3[%c1_472, %c0_473, %c0_474] : memref<3x32x32xbf16, #tpu.memory_space<vmem>>, vector<1x32x32xbf16>
    %739 = vector.shape_cast %738 : vector<1x32x32xbf16> to vector<32x32xbf16>
    %cst_475 = arith.constant dense<0.000000e+00> : vector<2x32xf32>
    %740 = tpu.matmul %734, %739, %cst_475 {dimension_numbers = #tpu.dot_dimension_numbers<[1], [0], [0], [1], [0, 0, 1, 1], [], []>} : vector<2x32xbf16>, vector<32x32xbf16>, vector<2x32xf32> -> vector<2x32xf32>
    %c2_476 = arith.constant 2 : index
    %c0_477 = arith.constant 0 : index
    %c0_478 = arith.constant 0 : index
    %741 = vector.load %arg3[%c2_476, %c0_477, %c0_478] : memref<3x32x32xbf16, #tpu.memory_space<vmem>>, vector<1x32x32xbf16>
    %742 = vector.shape_cast %741 : vector<1x32x32xbf16> to vector<32x32xbf16>
    %cst_479 = arith.constant dense<0.000000e+00> : vector<2x32xf32>
    %743 = tpu.matmul %734, %742, %cst_479 {dimension_numbers = #tpu.dot_dimension_numbers<[1], [0], [0], [1], [0, 0, 1, 1], [], []>} : vector<2x32xbf16>, vector<32x32xbf16>, vector<2x32xf32> -> vector<2x32xf32>
    %744 = arith.truncf %733 : vector<2x32xf32> to vector<2x32xbf16>
    %c0_480 = arith.constant 0 : index
    %c0_481 = arith.constant 0 : index
    %c0_482 = arith.constant 0 : index
    %745 = vector.load %arg4[%c0_480, %c0_481, %c0_482] : memref<3x32x32xbf16, #tpu.memory_space<vmem>>, vector<1x32x32xbf16>
    %746 = vector.shape_cast %745 : vector<1x32x32xbf16> to vector<32x32xbf16>
    %cst_483 = arith.constant dense<0.000000e+00> : vector<2x32xf32>
    %747 = tpu.matmul %744, %746, %cst_483 {dimension_numbers = #tpu.dot_dimension_numbers<[1], [0], [0], [1], [0, 0, 1, 1], [], []>} : vector<2x32xbf16>, vector<32x32xbf16>, vector<2x32xf32> -> vector<2x32xf32>
    %c1_484 = arith.constant 1 : index
    %c0_485 = arith.constant 0 : index
    %c0_486 = arith.constant 0 : index
    %748 = vector.load %arg4[%c1_484, %c0_485, %c0_486] : memref<3x32x32xbf16, #tpu.memory_space<vmem>>, vector<1x32x32xbf16>
    %749 = vector.shape_cast %748 : vector<1x32x32xbf16> to vector<32x32xbf16>
    %cst_487 = arith.constant dense<0.000000e+00> : vector<2x32xf32>
    %750 = tpu.matmul %744, %749, %cst_487 {dimension_numbers = #tpu.dot_dimension_numbers<[1], [0], [0], [1], [0, 0, 1, 1], [], []>} : vector<2x32xbf16>, vector<32x32xbf16>, vector<2x32xf32> -> vector<2x32xf32>
    %c2_488 = arith.constant 2 : index
    %c0_489 = arith.constant 0 : index
    %c0_490 = arith.constant 0 : index
    %751 = vector.load %arg4[%c2_488, %c0_489, %c0_490] : memref<3x32x32xbf16, #tpu.memory_space<vmem>>, vector<1x32x32xbf16>
    %752 = vector.shape_cast %751 : vector<1x32x32xbf16> to vector<32x32xbf16>
    %cst_491 = arith.constant dense<0.000000e+00> : vector<2x32xf32>
    %753 = tpu.matmul %744, %752, %cst_491 {dimension_numbers = #tpu.dot_dimension_numbers<[1], [0], [0], [1], [0, 0, 1, 1], [], []>} : vector<2x32xbf16>, vector<32x32xbf16>, vector<2x32xf32> -> vector<2x32xf32>
    %754 = arith.addf %737, %747 : vector<2x32xf32>
    %755 = vector.broadcast %6 : vector<1x32xf32> to vector<2x32xf32>
    %756 = arith.addf %754, %755 : vector<2x32xf32>
    %757 = arith.negf %756 : vector<2x32xf32>
    %758 = math.exp %757 : vector<2x32xf32>
    %cst_492 = arith.constant 1.000000e+00 : f32
    %759 = vector.broadcast %cst_492 : f32 to vector<2x32xf32>
    %760 = arith.addf %759, %758 : vector<2x32xf32>
    %761 = arith.divf %759, %760 : vector<2x32xf32>
    %762 = arith.addf %740, %750 : vector<2x32xf32>
    %763 = vector.broadcast %8 : vector<1x32xf32> to vector<2x32xf32>
    %764 = arith.addf %762, %763 : vector<2x32xf32>
    %765 = arith.negf %764 : vector<2x32xf32>
    %766 = math.exp %765 : vector<2x32xf32>
    %cst_493 = arith.constant 1.000000e+00 : f32
    %767 = vector.broadcast %cst_493 : f32 to vector<2x32xf32>
    %768 = arith.addf %767, %766 : vector<2x32xf32>
    %769 = arith.divf %767, %768 : vector<2x32xf32>
    %770 = vector.broadcast %10 : vector<1x32xf32> to vector<2x32xf32>
    %771 = arith.addf %743, %770 : vector<2x32xf32>
    %772 = vector.broadcast %4 : vector<1x32xf32> to vector<2x32xf32>
    %773 = arith.addf %753, %772 : vector<2x32xf32>
    %774 = arith.mulf %761, %773 : vector<2x32xf32>
    %775 = arith.addf %771, %774 : vector<2x32xf32>
    %776 = math.tanh %775 : vector<2x32xf32>
    %cst_494 = arith.constant 1.000000e+00 : f32
    %777 = vector.broadcast %cst_494 : f32 to vector<2x32xf32>
    %778 = arith.subf %777, %769 : vector<2x32xf32>
    %779 = arith.mulf %778, %776 : vector<2x32xf32>
    %780 = arith.mulf %769, %733 : vector<2x32xf32>
    %781 = arith.addf %779, %780 : vector<2x32xf32>
    %c0_495 = arith.constant 0 : index
    %c0_496 = arith.constant 0 : index
    %782 = vector.load %arg12[%c0_495, %c0_496] : memref<2x32xf32, #tpu.memory_space<vmem>>, vector<2x32xf32>
    tpu.vector_store %arg12[%c0_495, %c0_496], %781 {strides = array<i32>} : memref<2x32xf32, #tpu.memory_space<vmem>>, vector<2x32xf32>,
    %783 = arith.index_cast %c7_i32 : i32 to index
    %c0_497 = arith.constant 0 : index
    %c0_498 = arith.constant 0 : index
    %784 = vector.load %arg8[%783, %c0_497, %c0_498] : memref<8x2x32xf32, #tpu.memory_space<vmem>>, vector<1x2x32xf32>
    %785 = vector.shape_cast %784 : vector<1x2x32xf32> to vector<2x32xf32>
    %786 = vector.shape_cast %781 : vector<2x32xf32> to vector<1x2x32xf32>
    tpu.vector_store %arg8[%783, %c0_497, %c0_498], %786 {strides = array<i32>} : memref<8x2x32xf32, #tpu.memory_space<vmem>>, vector<1x2x32xf32>,
    %c8_i32 = arith.constant 8 : i32
    %c0_499 = arith.constant 0 : index
    %c0_500 = arith.constant 0 : index
    %787 = vector.load %arg11[%c0_499, %c0_500] : memref<2x32xf32, #tpu.memory_space<vmem>>, vector<2x32xf32>
    %c0_501 = arith.constant 0 : index
    %c0_502 = arith.constant 0 : index
    %788 = vector.load %arg9[%c0_501, %c0_502] : memref<2x32xf32, #tpu.memory_space<vmem>>, vector<2x32xf32>
    tpu.vector_store %arg9[%c0_501, %c0_502], %787 {strides = array<i32>} : memref<2x32xf32, #tpu.memory_space<vmem>>, vector<2x32xf32>,
    %c0_503 = arith.constant 0 : index
    %c0_504 = arith.constant 0 : index
    %789 = vector.load %arg12[%c0_503, %c0_504] : memref<2x32xf32, #tpu.memory_space<vmem>>, vector<2x32xf32>
    %c0_505 = arith.constant 0 : index
    %c0_506 = arith.constant 0 : index
    %790 = vector.load %arg10[%c0_505, %c0_506] : memref<2x32xf32, #tpu.memory_space<vmem>>, vector<2x32xf32>
    tpu.vector_store %arg10[%c0_505, %c0_506], %789 {strides = array<i32>} : memref<2x32xf32, #tpu.memory_space<vmem>>, vector<2x32xf32>,
    return
  }
  func.func @transform_0(%arg0: i32) -> (i32, i32, i32, i32) {
    %c0_i32 = arith.constant 0 : i32
    %c0_i32_0 = arith.constant 0 : i32
    %c0_i32_1 = arith.constant 0 : i32
    %c0_i32_2 = arith.constant 0 : i32
    return %c0_i32, %arg0, %c0_i32_0, %c0_i32_1 : i32, i32, i32, i32
  }
  func.func @transform_1(%arg0: i32) -> (i32, i32, i32) {
    %c0_i32 = arith.constant 0 : i32
    %c0_i32_0 = arith.constant 0 : i32
    %c0_i32_1 = arith.constant 0 : i32
    %c0_i32_2 = arith.constant 0 : i32
    return %c0_i32, %c0_i32_0, %c0_i32_1 : i32, i32, i32
  }
  func.func @transform_2(%arg0: i32) -> (i32, i32, i32) {
    %c0_i32 = arith.constant 0 : i32
    %c0_i32_0 = arith.constant 0 : i32
    %c0_i32_1 = arith.constant 0 : i32
    %c0_i32_2 = arith.constant 0 : i32
    return %c0_i32, %c0_i32_0, %c0_i32_1 : i32, i32, i32
  }
  func.func @transform_3(%arg0: i32) -> (i32, i32, i32) {
    %c0_i32 = arith.constant 0 : i32
    %c0_i32_0 = arith.constant 0 : i32
    %c0_i32_1 = arith.constant 0 : i32
    %c0_i32_2 = arith.constant 0 : i32
    return %c0_i32, %c0_i32_0, %c0_i32_1 : i32, i32, i32
  }
  func.func @transform_4(%arg0: i32) -> (i32, i32) {
    %c0_i32 = arith.constant 0 : i32
    %c0_i32_0 = arith.constant 0 : i32
    %c0_i32_1 = arith.constant 0 : i32
    return %c0_i32, %c0_i32_0 : i32, i32
  }
  func.func @transform_5(%arg0: i32) -> (i32, i32, i32) {
    %c0_i32 = arith.constant 0 : i32
    %c0_i32_0 = arith.constant 0 : i32
    %c0_i32_1 = arith.constant 0 : i32
    %c0_i32_2 = arith.constant 0 : i32
    return %c0_i32, %c0_i32_0, %c0_i32_1 : i32, i32, i32
  }
  func.func @transform_6(%arg0: i32) -> (i32, i32) {
    %c0_i32 = arith.constant 0 : i32
    %c0_i32_0 = arith.constant 0 : i32
    %c0_i32_1 = arith.constant 0 : i32
    return %c0_i32, %c0_i32_0 : i32, i32
  }
  func.func @transform_7(%arg0: i32) -> (i32, i32, i32) {
    %c0_i32 = arith.constant 0 : i32
    %c0_i32_0 = arith.constant 0 : i32
    %c0_i32_1 = arith.constant 0 : i32
    return %arg0, %c0_i32, %c0_i32_0 : i32, i32, i32
  }
  func.func @transform_8(%arg0: i32) -> (i32, i32) {
    %c0_i32 = arith.constant 0 : i32
    %c0_i32_0 = arith.constant 0 : i32
    %c0_i32_1 = arith.constant 0 : i32
    return %c0_i32, %c0_i32_0 : i32, i32
  }
  func.func @transform_9(%arg0: i32) -> (i32, i32) {
    %c0_i32 = arith.constant 0 : i32
    %c0_i32_0 = arith.constant 0 : i32
    %c0_i32_1 = arith.constant 0 : i32
    return %c0_i32, %c0_i32_0 : i32, i32
  }
}

</mosaic_0001>

<llo_original>
// kernel: encoder_forward.2
$region0: #{encoder_forward.2}
  #allocation0 [shape = 'u32[]', space=smem, size = 0x4, offset = 0x4, fixed_abs, tag = 'smem constant byte address 0x4 - core index']
  #allocation1 [shape = 'u32[144,128]{1,0:T(1,128)}', space=vmem, size = 0x12000, scoped, tag = 'internal scratch']
  %s0 = inlined_call_operand.vmem [shape: bf16[16,32], index: 0, kind: input, shape index: {}]
  %s1 = inlined_call_operand.vmem [shape: bf16[32,96], index: 1, kind: input, shape index: {}]
  %s2 = inlined_call_operand.vmem [shape: f32[1,96], index: 2, kind: input, shape index: {}]
  %s3 = inlined_call_operand.vmem [shape: f32[3,16,32], index: 3, kind: output, shape index: {}]
  %s4 = sld [smem:[#allocation0]]
  $region22: #{encoder_forward.2} parent=0
    _
  %s6 = ssub.s32 1, %s4
  %s7 = scalar_select 0, %s6, %s4
  // Predicated region
  $region2: #{encoder_forward.2} parent=0 // pred_check
    _
  $region3: #{encoder_forward.2} parent=0 // pred_check_branch
    %9 = sbr.rel (0) target = $region5
  $region4: #{encoder_forward.2} parent=0 // pred_region
    _
  $region5: #{encoder_forward.2} parent=0 // pred_fallthru
    _
  // Predicated region
  $region6: #{encoder_forward.2} parent=0 // pred_check
    _
  $region7: #{encoder_forward.2} parent=0 // pred_check_branch
    %11 = sbr.rel (0) target = $region9
  $region8: #{encoder_forward.2} parent=0 // pred_region
    _
  $region9: #{encoder_forward.2} parent=0 // pred_fallthru
    _
  // Predicated region
  $region10: #{encoder_forward.2} parent=0 // pred_check
    _
  $region11: #{encoder_forward.2} parent=0 // pred_check_branch
    %13 = sbr.rel (0) target = $region13
  $region12: #{encoder_forward.2} parent=0 // pred_region
    _
  $region13: #{encoder_forward.2} parent=0 // pred_fallthru
    _
  %v15 = vld [vmem:[%s0] sm:$0xf]
  %v16 = vld [vmem:[%s0 + $0x4] sm:$0xf]
  %v17 = vld [vmem:[%s1] sm:$0xf]
  %v18 = vld [vmem:[%s1 + $0x4] sm:$0xf]
  %v19 = vld [vmem:[%s1 + $0x8] sm:$0xf]
  %v20 = vld [vmem:[%s1 + $0xc] sm:$0xf]
  %v21 = vld [vmem:[%s2] sm:$0x1]
  %v23 = vlaneseq
  %v24 = vshrl.u32 %v23, 7
  %v25 = vsub.s32 0, %v24
  %v26 = vrot.slane %v21, %v25
  %v30 = vunpack.c.l.b16 %v15
  %v31 = vunpack.c.l.b16 %v16
  %v32 = vpack.c.b16 %v31, %v30
  %v37 = vunpack.c.l.b16 %v17
  %v38 = vunpack.c.l.b16 %v18
  %v39 = vunpack.c.l.b16 %v19
  %v40 = vunpack.c.l.b16 %v20
  %v41 = vpack.c.b16 %v38, %v37
  %v42 = vpack.c.b16 %v40, %v39
  %vm45 = vcmask 261120
  %v47 = vsel %vm45, %v32, 0
  %49 = vmatprep.subr.bf16.mxu0 0
  %50 = vmatpush1.bf16.msra.mxu0 %v41
  %51 = vmatprep.subr.bf16.mxu0 0
  %52 = vmatpush1.bf16.msra.mxu0 %v42
  %53 = vmatprep.subr.bf16.mxu0 0
  %54 = vmatpush1.bf16.msra.mxu0 0
  %55 = vmatprep.subr.bf16.mxu0 0
  %56 = vmatpush1.bf16.msra.mxu0 0
  %57 = vmatprep.subr.bf16.mxu0 0
  %58 = vmatpush1.bf16.msra.mxu0 0
  %59 = vmatprep.subr.bf16.mxu0 0
  %60 = vmatpush1.bf16.msra.mxu0 0
  %61 = vmatprep.subr.bf16.mxu0 0
  %62 = vmatpush1.bf16.msra.mxu0 0
  %63 = vmatprep.subr.bf16.mxu0 0
  %64 = vmatpush1.bf16.msra.mxu0 0
  %65 = vmatprep.subr.bf16.mxu0 0
  %66 = vmatpush1.bf16.msra.mxu0 0
  %67 = vmatprep.subr.bf16.mxu0 0
  %68 = vmatpush1.bf16.msra.mxu0 0
  %69 = vmatprep.subr.bf16.mxu0 0
  %70 = vmatpush1.bf16.msra.mxu0 0
  %71 = vmatprep.subr.bf16.mxu0 0
  %72 = vmatpush1.bf16.msra.mxu0 0
  %73 = vmatprep.subr.bf16.mxu0 0
  %74 = vmatpush1.bf16.msra.mxu0 0
  %75 = vmatprep.subr.bf16.mxu0 0
  %76 = vmatpush1.bf16.msra.mxu0 0
  %77 = vmatprep.subr.bf16.mxu0 0
  %78 = vmatpush1.bf16.msra.mxu0 0
  %79 = vmatprep.subr.bf16.mxu0 0
  %80 = vmatpush1.bf16.msra.mxu0 0
  %81 = vmatprep.mubr.bf16.mxu0 0
  %82 = vmatmul.mubr.bf16.gmra.mrb[0].mxu0 %v47
  %v83 = vpop.f32.mrb[0].mxu0
  %v84 = vadd.f32 %v26, %v83
  %v85 = vpop.f32.mrb[0].mxu0
  %v86 = vpop.f32.mrb[0].mxu0
  %v87 = vadd.f32 %v26, %v86
  %v88 = vpop.f32.mrb[0].mxu0
  %89 = vdwg.mxu0
  %90 = vst.msk [vmem:[%s3] sm:$0xff] %vm45, %v84
  %91 = vst.msk [vmem:[%s3 + $0x8] sm:$0xff] %vm45, %v87
  %94 = vrot.lane.b32.xlu0 %v84, 96
  %v95 = vpop.permute.xlu0 %94
  %96 = vrot.lane.b32.xlu0 %v87, 96
  %v97 = vpop.permute.xlu0 %96
  %s100 = scalar_lea.vmem %s3, 16
  %101 = vst.msk [vmem:[%s100] sm:$0xff] %vm45, %v95
  %102 = vst.msk [vmem:[%s100 + $0x8] sm:$0xff] %vm45, %v97
  %103 = vrot.lane.b32.xlu0 %v84, 64
  %v104 = vpop.permute.xlu0 %103
  %105 = vrot.lane.b32.xlu0 %v87, 64
  %v106 = vpop.permute.xlu0 %105
  %s109 = scalar_lea.vmem %s3, 32
  %110 = vst.msk [vmem:[%s109] sm:$0xff] %vm45, %v104
  %111 = vst.msk [vmem:[%s109 + $0x8] sm:$0xff] %vm45, %v106
  // Predicated region
  $region14: #{encoder_forward.2} parent=0 // pred_check
    _
  $region15: #{encoder_forward.2} parent=0 // pred_check_branch
    %113 = sbr.rel (0) target = $region17
  $region16: #{encoder_forward.2} parent=0 // pred_region
    _
  $region17: #{encoder_forward.2} parent=0 // pred_fallthru
    _
  // Predicated region
  $region18: #{encoder_forward.2} parent=0 // pred_check
    _
  $region19: #{encoder_forward.2} parent=0 // pred_check_branch
    %115 = sbr.rel (0) target = $region21
  $region20: #{encoder_forward.2} parent=0 // pred_region
    _
  $region21: #{encoder_forward.2} parent=0 // pred_fallthru
    _

// kernel: encoder_forward.3
$region0: #{encoder_forward.3}
  #allocation0 [shape = 'u32[]', space=smem, size = 0x4, offset = 0x4, fixed_abs, tag = 'smem constant byte address 0x4 - core index']
  #allocation1 [shape = 'u32[144,128]{1,0:T(1,128)}', space=vmem, size = 0x12000, scoped, tag = 'internal scratch']
  #allocation2 [shape = 'f32[2,32]{1,0:T(2,128)}', space=vmem, size = 0x400, scoped, tag = 'scratch operand']
  #allocation3 [shape = 'f32[2,32]{1,0:T(2,128)}', space=vmem, size = 0x400, scoped, tag = 'scratch operand']
  %s0 = inlined_call_operand.vmem [shape: f32[3,8,2,32], index: 0, kind: input, shape index: {}]
  %s1 = inlined_call_operand.vmem [shape: bf16[3,32,32], index: 1, kind: input, shape index: {}]
  %s2 = inlined_call_operand.vmem [shape: bf16[3,32,32], index: 2, kind: input, shape index: {}]
  %s3 = inlined_call_operand.vmem [shape: bf16[3,32,32], index: 3, kind: input, shape index: {}]
  %s4 = inlined_call_operand.vmem [shape: f32[1,32], index: 4, kind: input, shape index: {}]
  %s5 = inlined_call_operand.vmem [shape: f32[3,1,32], index: 5, kind: input, shape index: {}]
  %s6 = inlined_call_operand.vmem [shape: f32[1,32], index: 6, kind: input, shape index: {}]
  %s7 = inlined_call_operand.vmem [shape: f32[8,2,32], index: 7, kind: output, shape index: {0}]
  %s8 = inlined_call_operand.vmem [shape: f32[2,32], index: 8, kind: output, shape index: {1}]
  %s9 = inlined_call_operand.vmem [shape: f32[2,32], index: 9, kind: output, shape index: {2}]
  %10 = xla_tuple %s7, %s8, %s9
  %s11 = sld [smem:[#allocation0]]
  $region58: #{encoder_forward.3} parent=0
    _
  %s13 = ssub.s32 1, %s11
  %s14 = scalar_select 0, %s13, %s11
  // Predicated region
  $region2: #{encoder_forward.3} parent=0 // pred_check
    _
  $region3: #{encoder_forward.3} parent=0 // pred_check_branch
    %16 = sbr.rel (0) target = $region5
  $region4: #{encoder_forward.3} parent=0 // pred_region
    _
  $region5: #{encoder_forward.3} parent=0 // pred_fallthru
    _
  // Predicated region
  $region6: #{encoder_forward.3} parent=0 // pred_check
    _
  $region7: #{encoder_forward.3} parent=0 // pred_check_branch
    %18 = sbr.rel (0) target = $region9
  $region8: #{encoder_forward.3} parent=0 // pred_region
    _
  $region9: #{encoder_forward.3} parent=0 // pred_fallthru
    _
  // Predicated region
  $region10: #{encoder_forward.3} parent=0 // pred_check
    _
  $region11: #{encoder_forward.3} parent=0 // pred_check_branch
    %20 = sbr.rel (0) target = $region13
  $region12: #{encoder_forward.3} parent=0 // pred_region
    _
  $region13: #{encoder_forward.3} parent=0 // pred_fallthru
    _
  // Predicated region
  $region14: #{encoder_forward.3} parent=0 // pred_check
    _
  $region15: #{encoder_forward.3} parent=0 // pred_check_branch
    %22 = sbr.rel (0) target = $region17
  $region16: #{encoder_forward.3} parent=0 // pred_region
    _
  $region17: #{encoder_forward.3} parent=0 // pred_fallthru
    _
  // Predicated region
  $region18: #{encoder_forward.3} parent=0 // pred_check
    _
  $region19: #{encoder_forward.3} parent=0 // pred_check_branch
    %24 = sbr.rel (0) target = $region21
  $region20: #{encoder_forward.3} parent=0 // pred_region
    _
  $region21: #{encoder_forward.3} parent=0 // pred_fallthru
    _
  // Predicated region
  $region22: #{encoder_forward.3} parent=0 // pred_check
    _
  $region23: #{encoder_forward.3} parent=0 // pred_check_branch
    %26 = sbr.rel (0) target = $region25
  $region24: #{encoder_forward.3} parent=0 // pred_region
    _
  $region25: #{encoder_forward.3} parent=0 // pred_fallthru
    _
  // Predicated region
  $region26: #{encoder_forward.3} parent=0 // pred_check
    _
  $region27: #{encoder_forward.3} parent=0 // pred_check_branch
    %28 = sbr.rel (0) target = $region29
  $region28: #{encoder_forward.3} parent=0 // pred_region
    _
  $region29: #{encoder_forward.3} parent=0 // pred_fallthru
    _
  %p30 = scmp.eq.s32.totalorder 0, 0
  // Predicated region
  $region30: #{encoder_forward.3} parent=0 // pred_check
    %p31 = pneg %p30
  $region31: #{encoder_forward.3} parent=0 // pred_check_branch
    %33 = sbr.rel (%p31) target = $region33
  $region32: #{encoder_forward.3} parent=0 // pred_region
    %vm34 = vcmask 254976
    %35 = vst.msk [vmem:[#allocation2] sm:$0x3] %vm34, 0.0
    %36 = vst.msk [vmem:[#allocation3] sm:$0x3] %vm34, 0.0
  $region33: #{encoder_forward.3} parent=0 // pred_fallthru
    _
  %v37 = vld [vmem:[%s4] sm:$0x1]
  %v38 = vld [vmem:[%s6] sm:$0x1]
  %v39 = vld [vmem:[%s5] sm:$0x1]
  %s40 = scalar_lea.vmem %s5, 1
  %v41 = vld [vmem:[%s40] sm:$0x1]
  %s42 = scalar_lea.vmem %s5, 2
  %v43 = vld [vmem:[%s42] sm:$0x1]
  %v44 = vld [vmem:[#allocation2] sm:$0x3]
  %v45 = vpack.c.bf16 %v44, %v44
  %v46 = vld [vmem:[%s1] sm:$0xf]
  %v47 = vld [vmem:[%s1 + $0x4] sm:$0xf]
  %v48 = vld [vmem:[%s1 + $0x8] sm:$0xf]
  %v49 = vld [vmem:[%s1 + $0xc] sm:$0xf]
  %v54 = vunpack.c.l.b16 %v46
  %v55 = vunpack.c.l.b16 %v47
  %v56 = vunpack.c.l.b16 %v48
  %v57 = vunpack.c.l.b16 %v49
  %v58 = vpack.c.b16 %v55, %v54
  %v59 = vpack.c.b16 %v57, %v56
  %vm62 = vcmask 261120
  %v64 = vsel %vm62, %v45, 0
  %66 = vmatprep.subr.bf16.mxu0 0
  %67 = vmatpush1.bf16.msra.mxu0 %v58
  %68 = vmatprep.subr.bf16.mxu0 0
  %69 = vmatpush1.bf16.msra.mxu0 %v59
  %70 = vmatprep.subr.bf16.mxu0 0
  %71 = vmatpush1.bf16.msra.mxu0 0
  %72 = vmatprep.subr.bf16.mxu0 0
  %73 = vmatpush1.bf16.msra.mxu0 0
  %74 = vmatprep.subr.bf16.mxu0 0
  %75 = vmatpush1.bf16.msra.mxu0 0
  %76 = vmatprep.subr.bf16.mxu0 0
  %77 = vmatpush1.bf16.msra.mxu0 0
  %78 = vmatprep.subr.bf16.mxu0 0
  %79 = vmatpush1.bf16.msra.mxu0 0
  %80 = vmatprep.subr.bf16.mxu0 0
  %81 = vmatpush1.bf16.msra.mxu0 0
  %82 = vmatprep.subr.bf16.mxu0 0
  %83 = vmatpush1.bf16.msra.mxu0 0
  %84 = vmatprep.subr.bf16.mxu0 0
  %85 = vmatpush1.bf16.msra.mxu0 0
  %86 = vmatprep.subr.bf16.mxu0 0
  %87 = vmatpush1.bf16.msra.mxu0 0
  %88 = vmatprep.subr.bf16.mxu0 0
  %89 = vmatpush1.bf16.msra.mxu0 0
  %90 = vmatprep.subr.bf16.mxu0 0
  %91 = vmatpush1.bf16.msra.mxu0 0
  %92 = vmatprep.subr.bf16.mxu0 0
  %93 = vmatpush1.bf16.msra.mxu0 0
  %94 = vmatprep.subr.bf16.mxu0 0
  %95 = vmatpush1.bf16.msra.mxu0 0
  %96 = vmatprep.subr.bf16.mxu0 0
  %97 = vmatpush1.bf16.msra.mxu0 0
  %98 = vmatprep.mubr.bf16.mxu0 0
  %99 = vmatmul.mubr.bf16.gmra.mrb[0].mxu0 %v64
  %v100 = vpop.f32.mrb[0].mxu0
  %v101 = vadd.f32 0.0, %v100
  %v102 = vpop.f32.mrb[0].mxu0
  %v103 = vpop.f32.mrb[0].mxu0
  %v104 = vpop.f32.mrb[0].mxu0
  %105 = vdwg.mxu0
  %s106 = scalar_lea.vmem %s1, 16
  %v107 = vld [vmem:[%s106] sm:$0xf]
  %v108 = vld [vmem:[%s106 + $0x4] sm:$0xf]
  %v109 = vld [vmem:[%s106 + $0x8] sm:$0xf]
  %v110 = vld [vmem:[%s106 + $0xc] sm:$0xf]
  %v115 = vunpack.c.l.b16 %v107
  %v116 = vunpack.c.l.b16 %v108
  %v117 = vunpack.c.l.b16 %v109
  %v118 = vunpack.c.l.b16 %v110
  %v119 = vpack.c.b16 %v116, %v115
  %v120 = vpack.c.b16 %v118, %v117
  %123 = vmatprep.subr.bf16.mxu0 0
  %124 = vmatpush1.bf16.msra.mxu0 %v119
  %125 = vmatprep.subr.bf16.mxu0 0
  %126 = vmatpush1.bf16.msra.mxu0 %v120
  %127 = vmatprep.subr.bf16.mxu0 0
  %128 = vmatpush1.bf16.msra.mxu0 0
  %129 = vmatprep.subr.bf16.mxu0 0
  %130 = vmatpush1.bf16.msra.mxu0 0
  %131 = vmatprep.subr.bf16.mxu0 0
  %132 = vmatpush1.bf16.msra.mxu0 0
  %133 = vmatprep.subr.bf16.mxu0 0
  %134 = vmatpush1.bf16.msra.mxu0 0
  %135 = vmatprep.subr.bf16.mxu0 0
  %136 = vmatpush1.bf16.msra.mxu0 0
  %137 = vmatprep.subr.bf16.mxu0 0
  %138 = vmatpush1.bf16.msra.mxu0 0
  %139 = vmatprep.subr.bf16.mxu0 0
  %140 = vmatpush1.bf16.msra.mxu0 0
  %141 = vmatprep.subr.bf16.mxu0 0
  %142 = vmatpush1.bf16.msra.mxu0 0
  %143 = vmatprep.subr.bf16.mxu0 0
  %144 = vmatpush1.bf16.msra.mxu0 0
  %145 = vmatprep.subr.bf16.mxu0 0
  %146 = vmatpush1.bf16.msra.mxu0 0
  %147 = vmatprep.subr.bf16.mxu0 0
  %148 = vmatpush1.bf16.msra.mxu0 0
  %149 = vmatprep.subr.bf16.mxu0 0
  %150 = vmatpush1.bf16.msra.mxu0 0
  %151 = vmatprep.subr.bf16.mxu0 0
  %152 = vmatpush1.bf16.msra.mxu0 0
  %153 = vmatprep.subr.bf16.mxu0 0
  %154 = vmatpush1.bf16.msra.mxu0 0
  %155 = vmatprep.mubr.bf16.mxu0 0
  %156 = vmatmul.mubr.bf16.gmra.mrb[0].mxu0 %v64
  %v157 = vpop.f32.mrb[0].mxu0
  %v158 = vadd.f32 0.0, %v157
  %v159 = vpop.f32.mrb[0].mxu0
  %v160 = vpop.f32.mrb[0].mxu0
  %v161 = vpop.f32.mrb[0].mxu0
  %162 = vdwg.mxu0
  %s163 = scalar_lea.vmem %s1, 32
  %v164 = vld [vmem:[%s163] sm:$0xf]
  %v165 = vld [vmem:[%s163 + $0x4] sm:$0xf]
  %v166 = vld [vmem:[%s163 + $0x8] sm:$0xf]
  %v167 = vld [vmem:[%s163 + $0xc] sm:$0xf]
  %v168 = vld [vmem:[%s0] sm:$0x3]
  %s169 = scalar_lea.vmem %s0, 16
  %v170 = vld [vmem:[%s169] sm:$0x3]
  %s171 = scalar_lea.vmem %s0, 32
  %v172 = vld [vmem:[%s171] sm:$0x3]
  %v173 = vadd.f32 %v168, %v101
  %v174 = vxor.u32 %v173, 2147483648
  %v175 = vmul.f32 %v174, 1.442695
  %v176 = vpow.pop %v175
  %v177 = vadd.f32 %v176, 1.0
  %v178 = vrcp.pop %v177
  %v179 = vmul.f32 1.0, %v178
  %v180 = vadd.f32 %v170, %v158
  %v181 = vxor.u32 %v180, 2147483648
  %v182 = vmul.f32 %v181, 1.442695
  %v183 = vpow.pop %v182
  %v184 = vadd.f32 %v183, 1.0
  %v185 = vrcp.pop %v184
  %v186 = vmul.f32 1.0, %v185
  %v188 = vlaneseq
  %v189 = vshrl.u32 %v188, 7
  %v190 = vsub.s32 0, %v189
  %v191 = vrot.slane %v37, %v190
  %v197 = vunpack.c.l.b16 %v164
  %v198 = vunpack.c.l.b16 %v165
  %v199 = vunpack.c.l.b16 %v166
  %v200 = vunpack.c.l.b16 %v167
  %v201 = vpack.c.b16 %v198, %v197
  %v202 = vpack.c.b16 %v200, %v199
  %205 = vmatprep.subr.bf16.mxu0 0
  %206 = vmatpush1.bf16.msra.mxu0 %v201
  %207 = vmatprep.subr.bf16.mxu0 0
  %208 = vmatpush1.bf16.msra.mxu0 %v202
  %209 = vmatprep.subr.bf16.mxu0 0
  %210 = vmatpush1.bf16.msra.mxu0 0
  %211 = vmatprep.subr.bf16.mxu0 0
  %212 = vmatpush1.bf16.msra.mxu0 0
  %213 = vmatprep.subr.bf16.mxu0 0
  %214 = vmatpush1.bf16.msra.mxu0 0
  %215 = vmatprep.subr.bf16.mxu0 0
  %216 = vmatpush1.bf16.msra.mxu0 0
  %217 = vmatprep.subr.bf16.mxu0 0
  %218 = vmatpush1.bf16.msra.mxu0 0
  %219 = vmatprep.subr.bf16.mxu0 0
  %220 = vmatpush1.bf16.msra.mxu0 0
  %221 = vmatprep.subr.bf16.mxu0 0
  %222 = vmatpush1.bf16.msra.mxu0 0
  %223 = vmatprep.subr.bf16.mxu0 0
  %224 = vmatpush1.bf16.msra.mxu0 0
  %225 = vmatprep.subr.bf16.mxu0 0
  %226 = vmatpush1.bf16.msra.mxu0 0
  %227 = vmatprep.subr.bf16.mxu0 0
  %228 = vmatpush1.bf16.msra.mxu0 0
  %229 = vmatprep.subr.bf16.mxu0 0
  %230 = vmatpush1.bf16.msra.mxu0 0
  %231 = vmatprep.subr.bf16.mxu0 0
  %232 = vmatpush1.bf16.msra.mxu0 0
  %233 = vmatprep.subr.bf16.mxu0 0
  %234 = vmatpush1.bf16.msra.mxu0 0
  %235 = vmatprep.subr.bf16.mxu0 0
  %236 = vmatpush1.bf16.msra.mxu0 0
  %237 = vmatprep.mubr.bf16.mxu0 0
  %238 = vmatmul.mubr.bf16.gmra.mrb[0].mxu0 %v64
  %v239 = vpop.f32.mrb[0].mxu0
  %v240 = vadd.f32 %v191, %v239
  %v241 = vpop.f32.mrb[0].mxu0
  %v242 = vpop.f32.mrb[0].mxu0
  %v243 = vpop.f32.mrb[0].mxu0
  %244 = vdwg.mxu0
  %v245 = vmul.f32 %v179, %v240
  %v246 = vadd.f32 %v172, %v245
  %v247 = vtanh.pop %v246
  %v248 = vsub.f32 1.0, %v186
  %v249 = vmul.f32 %v248, %v247
  %v250 = vmul.f32 %v186, %v44
  %v251 = vadd.f32 %v249, %v250
  %vm252 = vcmask 254976
  %253 = vst.msk [vmem:[#allocation2] sm:$0x3] %vm252, %v251
  %v254 = vld [vmem:[#allocation3] sm:$0x3]
  %v255 = vpack.c.bf16 %v251, %v251
  %v256 = vld [vmem:[%s2] sm:$0xf]
  %v257 = vld [vmem:[%s2 + $0x4] sm:$0xf]
  %v258 = vld [vmem:[%s2 + $0x8] sm:$0xf]
  %v259 = vld [vmem:[%s2 + $0xc] sm:$0xf]
  %s260 = scalar_lea.vmem %s2, 16
  %v261 = vld [vmem:[%s260] sm:$0xf]
  %v262 = vld [vmem:[%s260 + $0x4] sm:$0xf]
  %v263 = vld [vmem:[%s260 + $0x8] sm:$0xf]
  %v264 = vld [vmem:[%s260 + $0xc] sm:$0xf]
  %s265 = scalar_lea.vmem %s2, 32
  %v266 = vld [vmem:[%s265] sm:$0xf]
  %v267 = vld [vmem:[%s265 + $0x4] sm:$0xf]
  %v268 = vld [vmem:[%s265 + $0x8] sm:$0xf]
  %v269 = vld [vmem:[%s265 + $0xc] sm:$0xf]
  %v270 = vpack.c.bf16 %v254, %v254
  %v271 = vld [vmem:[%s3] sm:$0xf]
  %v272 = vld [vmem:[%s3 + $0x4] sm:$0xf]
  %v273 = vld [vmem:[%s3 + $0x8] sm:$0xf]
  %v274 = vld [vmem:[%s3 + $0xc] sm:$0xf]
  %v279 = vunpack.c.l.b16 %v271
  %v280 = vunpack.c.l.b16 %v272
  %v281 = vunpack.c.l.b16 %v273
  %v282 = vunpack.c.l.b16 %v274
  %v283 = vpack.c.b16 %v280, %v279
  %v284 = vpack.c.b16 %v282, %v281
  %v288 = vsel %vm62, %v270, 0
  %290 = vmatprep.subr.bf16.mxu0 0
  %291 = vmatpush1.bf16.msra.mxu0 %v283
  %292 = vmatprep.subr.bf16.mxu0 0
  %293 = vmatpush1.bf16.msra.mxu0 %v284
  %294 = vmatprep.subr.bf16.mxu0 0
  %295 = vmatpush1.bf16.msra.mxu0 0
  %296 = vmatprep.subr.bf16.mxu0 0
  %297 = vmatpush1.bf16.msra.mxu0 0
  %298 = vmatprep.subr.bf16.mxu0 0
  %299 = vmatpush1.bf16.msra.mxu0 0
  %300 = vmatprep.subr.bf16.mxu0 0
  %301 = vmatpush1.bf16.msra.mxu0 0
  %302 = vmatprep.subr.bf16.mxu0 0
  %303 = vmatpush1.bf16.msra.mxu0 0
  %304 = vmatprep.subr.bf16.mxu0 0
  %305 = vmatpush1.bf16.msra.mxu0 0
  %306 = vmatprep.subr.bf16.mxu0 0
  %307 = vmatpush1.bf16.msra.mxu0 0
  %308 = vmatprep.subr.bf16.mxu0 0
  %309 = vmatpush1.bf16.msra.mxu0 0
  %310 = vmatprep.subr.bf16.mxu0 0
  %311 = vmatpush1.bf16.msra.mxu0 0
  %312 = vmatprep.subr.bf16.mxu0 0
  %313 = vmatpush1.bf16.msra.mxu0 0
  %314 = vmatprep.subr.bf16.mxu0 0
  %315 = vmatpush1.bf16.msra.mxu0 0
  %316 = vmatprep.subr.bf16.mxu0 0
  %317 = vmatpush1.bf16.msra.mxu0 0
  %318 = vmatprep.subr.bf16.mxu0 0
  %319 = vmatpush1.bf16.msra.mxu0 0
  %320 = vmatprep.subr.bf16.mxu0 0
  %321 = vmatpush1.bf16.msra.mxu0 0
  %322 = vmatprep.mubr.bf16.mxu0 0
  %323 = vmatmul.mubr.bf16.gmra.mrb[0].mxu0 %v288
  %v324 = vpop.f32.mrb[0].mxu0
  %v325 = vadd.f32 0.0, %v324
  %v326 = vpop.f32.mrb[0].mxu0
  %v327 = vpop.f32.mrb[0].mxu0
  %v328 = vpop.f32.mrb[0].mxu0
  %329 = vdwg.mxu0
  %s330 = scalar_lea.vmem %s3, 16
  %v331 = vld [vmem:[%s330] sm:$0xf]
  %v332 = vld [vmem:[%s330 + $0x4] sm:$0xf]
  %v333 = vld [vmem:[%s330 + $0x8] sm:$0xf]
  %v334 = vld [vmem:[%s330 + $0xc] sm:$0xf]
  %v339 = vunpack.c.l.b16 %v331
  %v340 = vunpack.c.l.b16 %v332
  %v341 = vunpack.c.l.b16 %v333
  %v342 = vunpack.c.l.b16 %v334
  %v343 = vpack.c.b16 %v340, %v339
  %v344 = vpack.c.b16 %v342, %v341
  %347 = vmatprep.subr.bf16.mxu0 0
  %348 = vmatpush1.bf16.msra.mxu0 %v343
  %349 = vmatprep.subr.bf16.mxu0 0
  %350 = vmatpush1.bf16.msra.mxu0 %v344
  %351 = vmatprep.subr.bf16.mxu0 0
  %352 = vmatpush1.bf16.msra.mxu0 0
  %353 = vmatprep.subr.bf16.mxu0 0
  %354 = vmatpush1.bf16.msra.mxu0 0
  %355 = vmatprep.subr.bf16.mxu0 0
  %356 = vmatpush1.bf16.msra.mxu0 0
  %357 = vmatprep.subr.bf16.mxu0 0
  %358 = vmatpush1.bf16.msra.mxu0 0
  %359 = vmatprep.subr.bf16.mxu0 0
  %360 = vmatpush1.bf16.msra.mxu0 0
  %361 = vmatprep.subr.bf16.mxu0 0
  %362 = vmatpush1.bf16.msra.mxu0 0
  %363 = vmatprep.subr.bf16.mxu0 0
  %364 = vmatpush1.bf16.msra.mxu0 0
  %365 = vmatprep.subr.bf16.mxu0 0
  %366 = vmatpush1.bf16.msra.mxu0 0
  %367 = vmatprep.subr.bf16.mxu0 0
  %368 = vmatpush1.bf16.msra.mxu0 0
  %369 = vmatprep.subr.bf16.mxu0 0
  %370 = vmatpush1.bf16.msra.mxu0 0
  %371 = vmatprep.subr.bf16.mxu0 0
  %372 = vmatpush1.bf16.msra.mxu0 0
  %373 = vmatprep.subr.bf16.mxu0 0
  %374 = vmatpush1.bf16.msra.mxu0 0
  %375 = vmatprep.subr.bf16.mxu0 0
  %376 = vmatpush1.bf16.msra.mxu0 0
  %377 = vmatprep.subr.bf16.mxu0 0
  %378 = vmatpush1.bf16.msra.mxu0 0
  %379 = vmatprep.mubr.bf16.mxu0 0
  %380 = vmatmul.mubr.bf16.gmra.mrb[0].mxu0 %v288
  %v381 = vpop.f32.mrb[0].mxu0
  %v382 = vadd.f32 0.0, %v381
  %v383 = vpop.f32.mrb[0].mxu0
  %v384 = vpop.f32.mrb[0].mxu0
  %v385 = vpop.f32.mrb[0].mxu0
  %386 = vdwg.mxu0
  %s387 = scalar_lea.vmem %s3, 32
  %v388 = vld [vmem:[%s387] sm:$0xf]
  %v389 = vld [vmem:[%s387 + $0x4] sm:$0xf]
  %v390 = vld [vmem:[%s387 + $0x8] sm:$0xf]
  %v391 = vld [vmem:[%s387 + $0xc] sm:$0xf]
  %v396 = vunpack.c.l.b16 %v256
  %v397 = vunpack.c.l.b16 %v257
  %v398 = vunpack.c.l.b16 %v258
  %v399 = vunpack.c.l.b16 %v259
  %v400 = vpack.c.b16 %v397, %v396
  %v401 = vpack.c.b16 %v399, %v398
  %v405 = vsel %vm62, %v255, 0
  %407 = vmatprep.subr.bf16.mxu0 0
  %408 = vmatpush1.bf16.msra.mxu0 %v400
  %409 = vmatprep.subr.bf16.mxu0 0
  %410 = vmatpush1.bf16.msra.mxu0 %v401
  %411 = vmatprep.subr.bf16.mxu0 0
  %412 = vmatpush1.bf16.msra.mxu0 0
  %413 = vmatprep.subr.bf16.mxu0 0
  %414 = vmatpush1.bf16.msra.mxu0 0
  %415 = vmatprep.subr.bf16.mxu0 0
  %416 = vmatpush1.bf16.msra.mxu0 0
  %417 = vmatprep.subr.bf16.mxu0 0
  %418 = vmatpush1.bf16.msra.mxu0 0
  %419 = vmatprep.subr.bf16.mxu0 0
  %420 = vmatpush1.bf16.msra.mxu0 0
  %421 = vmatprep.subr.bf16.mxu0 0
  %422 = vmatpush1.bf16.msra.mxu0 0
  %423 = vmatprep.subr.bf16.mxu0 0
  %424 = vmatpush1.bf16.msra.mxu0 0
  %425 = vmatprep.subr.bf16.mxu0 0
  %426 = vmatpush1.bf16.msra.mxu0 0
  %427 = vmatprep.subr.bf16.mxu0 0
  %428 = vmatpush1.bf16.msra.mxu0 0
  %429 = vmatprep.subr.bf16.mxu0 0
  %430 = vmatpush1.bf16.msra.mxu0 0
  %431 = vmatprep.subr.bf16.mxu0 0
  %432 = vmatpush1.bf16.msra.mxu0 0
  %433 = vmatprep.subr.bf16.mxu0 0
  %434 = vmatpush1.bf16.msra.mxu0 0
  %435 = vmatprep.subr.bf16.mxu0 0
  %436 = vmatpush1.bf16.msra.mxu0 0
  %437 = vmatprep.subr.bf16.mxu0 0
  %438 = vmatpush1.bf16.msra.mxu0 0
  %439 = vmatprep.mubr.bf16.mxu0 0
  %440 = vmatmul.mubr.bf16.gmra.mrb[0].mxu0 %v405
  %v441 = vpop.f32.mrb[0].mxu0
  %v442 = vadd.f32 %v325, %v441
  %v443 = vpop.f32.mrb[0].mxu0
  %v444 = vpop.f32.mrb[0].mxu0
  %v445 = vpop.f32.mrb[0].mxu0
  %446 = vdwg.mxu0
  %v448 = vlaneseq
  %v449 = vshrl.u32 %v448, 7
  %v450 = vsub.s32 0, %v449
  %v451 = vrot.slane %v39, %v450
  %v453 = vadd.f32 %v442, %v451
  %v454 = vxor.u32 %v453, 2147483648
  %v455 = vmul.f32 %v454, 1.442695
  %v456 = vpow.pop %v455
  %v457 = vadd.f32 %v456, 1.0
  %v458 = vrcp.pop %v457
  %v459 = vmul.f32 1.0, %v458
  %v464 = vunpack.c.l.b16 %v261
  %v465 = vunpack.c.l.b16 %v262
  %v466 = vunpack.c.l.b16 %v263
  %v467 = vunpack.c.l.b16 %v264
  %v468 = vpack.c.b16 %v465, %v464
  %v469 = vpack.c.b16 %v467, %v466
  %472 = vmatprep.subr.bf16.mxu0 0
  %473 = vmatpush1.bf16.msra.mxu0 %v468
  %474 = vmatprep.subr.bf16.mxu0 0
  %475 = vmatpush1.bf16.msra.mxu0 %v469
  %476 = vmatprep.subr.bf16.mxu0 0
  %477 = vmatpush1.bf16.msra.mxu0 0
  %478 = vmatprep.subr.bf16.mxu0 0
  %479 = vmatpush1.bf16.msra.mxu0 0
  %480 = vmatprep.subr.bf16.mxu0 0
  %481 = vmatpush1.bf16.msra.mxu0 0
  %482 = vmatprep.subr.bf16.mxu0 0
  %483 = vmatpush1.bf16.msra.mxu0 0
  %484 = vmatprep.subr.bf16.mxu0 0
  %485 = vmatpush1.bf16.msra.mxu0 0
  %486 = vmatprep.subr.bf16.mxu0 0
  %487 = vmatpush1.bf16.msra.mxu0 0
  %488 = vmatprep.subr.bf16.mxu0 0
  %489 = vmatpush1.bf16.msra.mxu0 0
  %490 = vmatprep.subr.bf16.mxu0 0
  %491 = vmatpush1.bf16.msra.mxu0 0
  %492 = vmatprep.subr.bf16.mxu0 0
  %493 = vmatpush1.bf16.msra.mxu0 0
  %494 = vmatprep.subr.bf16.mxu0 0
  %495 = vmatpush1.bf16.msra.mxu0 0
  %496 = vmatprep.subr.bf16.mxu0 0
  %497 = vmatpush1.bf16.msra.mxu0 0
  %498 = vmatprep.subr.bf16.mxu0 0
  %499 = vmatpush1.bf16.msra.mxu0 0
  %500 = vmatprep.subr.bf16.mxu0 0
  %501 = vmatpush1.bf16.msra.mxu0 0
  %502 = vmatprep.subr.bf16.mxu0 0
  %503 = vmatpush1.bf16.msra.mxu0 0
  %504 = vmatprep.mubr.bf16.mxu0 0
  %505 = vmatmul.mubr.bf16.gmra.mrb[0].mxu0 %v405
  %v506 = vpop.f32.mrb[0].mxu0
  %v507 = vadd.f32 %v382, %v506
  %v508 = vpop.f32.mrb[0].mxu0
  %v509 = vpop.f32.mrb[0].mxu0
  %v510 = vpop.f32.mrb[0].mxu0
  %511 = vdwg.mxu0
  %v513 = vlaneseq
  %v514 = vshrl.u32 %v513, 7
  %v515 = vsub.s32 0, %v514
  %v516 = vrot.slane %v41, %v515
  %v518 = vadd.f32 %v507, %v516
  %v519 = vxor.u32 %v518, 2147483648
  %v520 = vmul.f32 %v519, 1.442695
  %v521 = vpow.pop %v520
  %v522 = vadd.f32 %v521, 1.0
  %v523 = vrcp.pop %v522
  %v524 = vmul.f32 1.0, %v523
  %v526 = vlaneseq
  %v527 = vshrl.u32 %v526, 7
  %v528 = vsub.s32 0, %v527
  %v529 = vrot.slane %v43, %v528
  %v535 = vunpack.c.l.b16 %v266
  %v536 = vunpack.c.l.b16 %v267
  %v537 = vunpack.c.l.b16 %v268
  %v538 = vunpack.c.l.b16 %v269
  %v539 = vpack.c.b16 %v536, %v535
  %v540 = vpack.c.b16 %v538, %v537
  %543 = vmatprep.subr.bf16.mxu0 0
  %544 = vmatpush1.bf16.msra.mxu0 %v539
  %545 = vmatprep.subr.bf16.mxu0 0
  %546 = vmatpush1.bf16.msra.mxu0 %v540
  %547 = vmatprep.subr.bf16.mxu0 0
  %548 = vmatpush1.bf16.msra.mxu0 0
  %549 = vmatprep.subr.bf16.mxu0 0
  %550 = vmatpush1.bf16.msra.mxu0 0
  %551 = vmatprep.subr.bf16.mxu0 0
  %552 = vmatpush1.bf16.msra.mxu0 0
  %553 = vmatprep.subr.bf16.mxu0 0
  %554 = vmatpush1.bf16.msra.mxu0 0
  %555 = vmatprep.subr.bf16.mxu0 0
  %556 = vmatpush1.bf16.msra.mxu0 0
  %557 = vmatprep.subr.bf16.mxu0 0
  %558 = vmatpush1.bf16.msra.mxu0 0
  %559 = vmatprep.subr.bf16.mxu0 0
  %560 = vmatpush1.bf16.msra.mxu0 0
  %561 = vmatprep.subr.bf16.mxu0 0
  %562 = vmatpush1.bf16.msra.mxu0 0
  %563 = vmatprep.subr.bf16.mxu0 0
  %564 = vmatpush1.bf16.msra.mxu0 0
  %565 = vmatprep.subr.bf16.mxu0 0
  %566 = vmatpush1.bf16.msra.mxu0 0
  %567 = vmatprep.subr.bf16.mxu0 0
  %568 = vmatpush1.bf16.msra.mxu0 0
  %569 = vmatprep.subr.bf16.mxu0 0
  %570 = vmatpush1.bf16.msra.mxu0 0
  %571 = vmatprep.subr.bf16.mxu0 0
  %572 = vmatpush1.bf16.msra.mxu0 0
  %573 = vmatprep.subr.bf16.mxu0 0
  %574 = vmatpush1.bf16.msra.mxu0 0
  %575 = vmatprep.mubr.bf16.mxu0 0
  %576 = vmatmul.mubr.bf16.gmra.mrb[0].mxu0 %v405
  %v577 = vpop.f32.mrb[0].mxu0
  %v578 = vadd.f32 %v529, %v577
  %v579 = vpop.f32.mrb[0].mxu0
  %v580 = vpop.f32.mrb[0].mxu0
  %v581 = vpop.f32.mrb[0].mxu0
  %582 = vdwg.mxu0
  %v584 = vlaneseq
  %v585 = vshrl.u32 %v584, 7
  %v586 = vsub.s32 0, %v585
  %v587 = vrot.slane %v38, %v586
  %v593 = vunpack.c.l.b16 %v388
  %v594 = vunpack.c.l.b16 %v389
  %v595 = vunpack.c.l.b16 %v390
  %v596 = vunpack.c.l.b16 %v391
  %v597 = vpack.c.b16 %v594, %v593
  %v598 = vpack.c.b16 %v596, %v595
  %601 = vmatprep.subr.bf16.mxu0 0
  %602 = vmatpush1.bf16.msra.mxu0 %v597
  %603 = vmatprep.subr.bf16.mxu0 0
  %604 = vmatpush1.bf16.msra.mxu0 %v598
  %605 = vmatprep.subr.bf16.mxu0 0
  %606 = vmatpush1.bf16.msra.mxu0 0
  %607 = vmatprep.subr.bf16.mxu0 0
  %608 = vmatpush1.bf16.msra.mxu0 0
  %609 = vmatprep.subr.bf16.mxu0 0
  %610 = vmatpush1.bf16.msra.mxu0 0
  %611 = vmatprep.subr.bf16.mxu0 0
  %612 = vmatpush1.bf16.msra.mxu0 0
  %613 = vmatprep.subr.bf16.mxu0 0
  %614 = vmatpush1.bf16.msra.mxu0 0
  %615 = vmatprep.subr.bf16.mxu0 0
  %616 = vmatpush1.bf16.msra.mxu0 0
  %617 = vmatprep.subr.bf16.mxu0 0
  %618 = vmatpush1.bf16.msra.mxu0 0
  %619 = vmatprep.subr.bf16.mxu0 0
  %620 = vmatpush1.bf16.msra.mxu0 0
  %621 = vmatprep.subr.bf16.mxu0 0
  %622 = vmatpush1.bf16.msra.mxu0 0
  %623 = vmatprep.subr.bf16.mxu0 0
  %624 = vmatpush1.bf16.msra.mxu0 0
  %625 = vmatprep.subr.bf16.mxu0 0
  %626 = vmatpush1.bf16.msra.mxu0 0
  %627 = vmatprep.subr.bf16.mxu0 0
  %628 = vmatpush1.bf16.msra.mxu0 0
  %629 = vmatprep.subr.bf16.mxu0 0
  %630 = vmatpush1.bf16.msra.mxu0 0
  %631 = vmatprep.subr.bf16.mxu0 0
  %632 = vmatpush1.bf16.msra.mxu0 0
  %633 = vmatprep.mubr.bf16.mxu0 0
  %634 = vmatmul.mubr.bf16.gmra.mrb[0].mxu0 %v288
  %v635 = vpop.f32.mrb[0].mxu0
  %v636 = vadd.f32 %v587, %v635
  %v637 = vpop.f32.mrb[0].mxu0
  %v638 = vpop.f32.mrb[0].mxu0
  %v639 = vpop.f32.mrb[0].mxu0
  %640 = vdwg.mxu0
  %v641 = vmul.f32 %v459, %v636
  %v642 = vadd.f32 %v578, %v641
  %v643 = vtanh.pop %v642
  %v644 = vsub.f32 1.0, %v524
  %v645 = vmul.f32 %v644, %v643
  %v646 = vmul.f32 %v524, %v254
  %v647 = vadd.f32 %v645, %v646
  %648 = vst.msk [vmem:[#allocation3] sm:$0x3] %vm252, %v647
  %649 = vst.msk [vmem:[%s7] sm:$0x3] %vm252, %v647
  %v650 = vld [vmem:[#allocation2] sm:$0x3]
  %v651 = vpack.c.bf16 %v650, %v650
  %v652 = vld [vmem:[%s1] sm:$0xf]
  %v653 = vld [vmem:[%s1 + $0x4] sm:$0xf]
  %v654 = vld [vmem:[%s1 + $0x8] sm:$0xf]
  %v655 = vld [vmem:[%s1 + $0xc] sm:$0xf]
  %v660 = vunpack.c.l.b16 %v652
  %v661 = vunpack.c.l.b16 %v653
  %v662 = vunpack.c.l.b16 %v654
  %v663 = vunpack.c.l.b16 %v655
  %v664 = vpack.c.b16 %v661, %v660
  %v665 = vpack.c.b16 %v663, %v662
  %v669 = vsel %vm62, %v651, 0
  %671 = vmatprep.subr.bf16.mxu0 0
  %672 = vmatpush1.bf16.msra.mxu0 %v664
  %673 = vmatprep.subr.bf16.mxu0 0
  %674 = vmatpush1.bf16.msra.mxu0 %v665
  %675 = vmatprep.subr.bf16.mxu0 0
  %676 = vmatpush1.bf16.msra.mxu0 0
  %677 = vmatprep.subr.bf16.mxu0 0
  %678 = vmatpush1.bf16.msra.mxu0 0
  %679 = vmatprep.subr.bf16.mxu0 0
  %680 = vmatpush1.bf16.msra.mxu0 0
  %681 = vmatprep.subr.bf16.mxu0 0
  %682 = vmatpush1.bf16.msra.mxu0 0
  %683 = vmatprep.subr.bf16.mxu0 0
  %684 = vmatpush1.bf16.msra.mxu0 0
  %685 = vmatprep.subr.bf16.mxu0 0
  %686 = vmatpush1.bf16.msra.mxu0 0
  %687 = vmatprep.subr.bf16.mxu0 0
  %688 = vmatpush1.bf16.msra.mxu0 0
  %689 = vmatprep.subr.bf16.mxu0 0
  %690 = vmatpush1.bf16.msra.mxu0 0
  %691 = vmatprep.subr.bf16.mxu0 0
  %692 = vmatpush1.bf16.msra.mxu0 0
  %693 = vmatprep.subr.bf16.mxu0 0
  %694 = vmatpush1.bf16.msra.mxu0 0
  %695 = vmatprep.subr.bf16.mxu0 0
  %696 = vmatpush1.bf16.msra.mxu0 0
  %697 = vmatprep.subr.bf16.mxu0 0
  %698 = vmatpush1.bf16.msra.mxu0 0
  %699 = vmatprep.subr.bf16.mxu0 0
  %700 = vmatpush1.bf16.msra.mxu0 0
  %701 = vmatprep.subr.bf16.mxu0 0
  %702 = vmatpush1.bf16.msra.mxu0 0
  %703 = vmatprep.mubr.bf16.mxu0 0
  %704 = vmatmul.mubr.bf16.gmra.mrb[0].mxu0 %v669
  %v705 = vpop.f32.mrb[0].mxu0
  %v706 = vadd.f32 0.0, %v705
  %v707 = vpop.f32.mrb[0].mxu0
  %v708 = vpop.f32.mrb[0].mxu0
  %v709 = vpop.f32.mrb[0].mxu0
  %710 = vdwg.mxu0
  %v711 = vld [vmem:[%s106] sm:$0xf]
  %v712 = vld [vmem:[%s106 + $0x4] sm:$0xf]
  %v713 = vld [vmem:[%s106 + $0x8] sm:$0xf]
  %v714 = vld [vmem:[%s106 + $0xc] sm:$0xf]
  %v719 = vunpack.c.l.b16 %v711
  %v720 = vunpack.c.l.b16 %v712
  %v721 = vunpack.c.l.b16 %v713
  %v722 = vunpack.c.l.b16 %v714
  %v723 = vpack.c.b16 %v720, %v719
  %v724 = vpack.c.b16 %v722, %v721
  %727 = vmatprep.subr.bf16.mxu0 0
  %728 = vmatpush1.bf16.msra.mxu0 %v723
  %729 = vmatprep.subr.bf16.mxu0 0
  %730 = vmatpush1.bf16.msra.mxu0 %v724
  %731 = vmatprep.subr.bf16.mxu0 0
  %732 = vmatpush1.bf16.msra.mxu0 0
  %733 = vmatprep.subr.bf16.mxu0 0
  %734 = vmatpush1.bf16.msra.mxu0 0
  %735 = vmatprep.subr.bf16.mxu0 0
  %736 = vmatpush1.bf16.msra.mxu0 0
  %737 = vmatprep.subr.bf16.mxu0 0
  %738 = vmatpush1.bf16.msra.mxu0 0
  %739 = vmatprep.subr.bf16.mxu0 0
  %740 = vmatpush1.bf16.msra.mxu0 0
  %741 = vmatprep.subr.bf16.mxu0 0
  %742 = vmatpush1.bf16.msra.mxu0 0
  %743 = vmatprep.subr.bf16.mxu0 0
  %744 = vmatpush1.bf16.msra.mxu0 0
  %745 = vmatprep.subr.bf16.mxu0 0
  %746 = vmatpush1.bf16.msra.mxu0 0
  %747 = vmatprep.subr.bf16.mxu0 0
  %748 = vmatpush1.bf16.msra.mxu0 0
  %749 = vmatprep.subr.bf16.mxu0 0
  %750 = vmatpush1.bf16.msra.mxu0 0
  %751 = vmatprep.subr.bf16.mxu0 0
  %752 = vmatpush1.bf16.msra.mxu0 0
  %753 = vmatprep.subr.bf16.mxu0 0
  %754 = vmatpush1.bf16.msra.mxu0 0
  %755 = vmatprep.subr.bf16.mxu0 0
  %756 = vmatpush1.bf16.msra.mxu0 0
  %757 = vmatprep.subr.bf16.mxu0 0
  %758 = vmatpush1.bf16.msra.mxu0 0
  %759 = vmatprep.mubr.bf16.mxu0 0
  %760 = vmatmul.mubr.bf16.gmra.mrb[0].mxu0 %v669
  %v761 = vpop.f32.mrb[0].mxu0
  %v762 = vadd.f32 0.0, %v761
  %v763 = vpop.f32.mrb[0].mxu0
  %v764 = vpop.f32.mrb[0].mxu0
  %v765 = vpop.f32.mrb[0].mxu0
  %766 = vdwg.mxu0
  %v767 = vld [vmem:[%s163] sm:$0xf]
  %v768 = vld [vmem:[%s163 + $0x4] sm:$0xf]
  %v769 = vld [vmem:[%s163 + $0x8] sm:$0xf]
  %v770 = vld [vmem:[%s163 + $0xc] sm:$0xf]
  %s771 = scalar_lea.vmem %s0, 2
  %v772 = vld [vmem:[%s771] sm:$0x3]
  %s773 = scalar_lea.vmem %s0, 18
  %v774 = vld [vmem:[%s773] sm:$0x3]
  %s775 = scalar_lea.vmem %s0, 34
  %v776 = vld [vmem:[%s775] sm:$0x3]
  %v777 = vadd.f32 %v772, %v706
  %v778 = vxor.u32 %v777, 2147483648
  %v779 = vmul.f32 %v778, 1.442695
  %v780 = vpow.pop %v779
  %v781 = vadd.f32 %v780, 1.0
  %v782 = vrcp.pop %v781
  %v783 = vmul.f32 1.0, %v782
  %v784 = vadd.f32 %v774, %v762
  %v785 = vxor.u32 %v784, 2147483648
  %v786 = vmul.f32 %v785, 1.442695
  %v787 = vpow.pop %v786
  %v788 = vadd.f32 %v787, 1.0
  %v789 = vrcp.pop %v788
  %v790 = vmul.f32 1.0, %v789
  %v795 = vunpack.c.l.b16 %v767
  %v796 = vunpack.c.l.b16 %v768
  %v797 = vunpack.c.l.b16 %v769
  %v798 = vunpack.c.l.b16 %v770
  %v799 = vpack.c.b16 %v796, %v795
  %v800 = vpack.c.b16 %v798, %v797
  %803 = vmatprep.subr.bf16.mxu0 0
  %804 = vmatpush1.bf16.msra.mxu0 %v799
  %805 = vmatprep.subr.bf16.mxu0 0
  %806 = vmatpush1.bf16.msra.mxu0 %v800
  %807 = vmatprep.subr.bf16.mxu0 0
  %808 = vmatpush1.bf16.msra.mxu0 0
  %809 = vmatprep.subr.bf16.mxu0 0
  %810 = vmatpush1.bf16.msra.mxu0 0
  %811 = vmatprep.subr.bf16.mxu0 0
  %812 = vmatpush1.bf16.msra.mxu0 0
  %813 = vmatprep.subr.bf16.mxu0 0
  %814 = vmatpush1.bf16.msra.mxu0 0
  %815 = vmatprep.subr.bf16.mxu0 0
  %816 = vmatpush1.bf16.msra.mxu0 0
  %817 = vmatprep.subr.bf16.mxu0 0
  %818 = vmatpush1.bf16.msra.mxu0 0
  %819 = vmatprep.subr.bf16.mxu0 0
  %820 = vmatpush1.bf16.msra.mxu0 0
  %821 = vmatprep.subr.bf16.mxu0 0
  %822 = vmatpush1.bf16.msra.mxu0 0
  %823 = vmatprep.subr.bf16.mxu0 0
  %824 = vmatpush1.bf16.msra.mxu0 0
  %825 = vmatprep.subr.bf16.mxu0 0
  %826 = vmatpush1.bf16.msra.mxu0 0
  %827 = vmatprep.subr.bf16.mxu0 0
  %828 = vmatpush1.bf16.msra.mxu0 0
  %829 = vmatprep.subr.bf16.mxu0 0
  %830 = vmatpush1.bf16.msra.mxu0 0
  %831 = vmatprep.subr.bf16.mxu0 0
  %832 = vmatpush1.bf16.msra.mxu0 0
  %833 = vmatprep.subr.bf16.mxu0 0
  %834 = vmatpush1.bf16.msra.mxu0 0
  %835 = vmatprep.mubr.bf16.mxu0 0
  %836 = vmatmul.mubr.bf16.gmra.mrb[0].mxu0 %v669
  %v837 = vpop.f32.mrb[0].mxu0
  %v838 = vadd.f32 %v191, %v837
  %v839 = vpop.f32.mrb[0].mxu0
  %v840 = vpop.f32.mrb[0].mxu0
  %v841 = vpop.f32.mrb[0].mxu0
  %842 = vdwg.mxu0
  %v843 = vmul.f32 %v783, %v838
  %v844 = vadd.f32 %v776, %v843
  %v845 = vtanh.pop %v844
  %v846 = vsub.f32 1.0, %v790
  %v847 = vmul.f32 %v846, %v845
  %v848 = vmul.f32 %v790, %v650
  %v849 = vadd.f32 %v847, %v848
  %850 = vst.msk [vmem:[#allocation2] sm:$0x3] %vm252, %v849
  %v851 = vld [vmem:[#allocation3] sm:$0x3]
  %v852 = vpack.c.bf16 %v849, %v849
  %v853 = vld [vmem:[%s2] sm:$0xf]
  %v854 = vld [vmem:[%s2 + $0x4] sm:$0xf]
  %v855 = vld [vmem:[%s2 + $0x8] sm:$0xf]
  %v856 = vld [vmem:[%s2 + $0xc] sm:$0xf]
  %v857 = vld [vmem:[%s260] sm:$0xf]
  %v858 = vld [vmem:[%s260 + $0x4] sm:$0xf]
  %v859 = vld [vmem:[%s260 + $0x8] sm:$0xf]
  %v860 = vld [vmem:[%s260 + $0xc] sm:$0xf]
  %v861 = vld [vmem:[%s265] sm:$0xf]
  %v862 = vld [vmem:[%s265 + $0x4] sm:$0xf]
  %v863 = vld [vmem:[%s265 + $0x8] sm:$0xf]
  %v864 = vld [vmem:[%s265 + $0xc] sm:$0xf]
  %v865 = vpack.c.bf16 %v851, %v851
  %v866 = vld [vmem:[%s3] sm:$0xf]
  %v867 = vld [vmem:[%s3 + $0x4] sm:$0xf]
  %v868 = vld [vmem:[%s3 + $0x8] sm:$0xf]
  %v869 = vld [vmem:[%s3 + $0xc] sm:$0xf]
  %v874 = vunpack.c.l.b16 %v866
  %v875 = vunpack.c.l.b16 %v867
  %v876 = vunpack.c.l.b16 %v868
  %v877 = vunpack.c.l.b16 %v869
  %v878 = vpack.c.b16 %v875, %v874
  %v879 = vpack.c.b16 %v877, %v876
  %v883 = vsel %vm62, %v865, 0
  %885 = vmatprep.subr.bf16.mxu0 0
  %886 = vmatpush1.bf16.msra.mxu0 %v878
  %887 = vmatprep.subr.bf16.mxu0 0
  %888 = vmatpush1.bf16.msra.mxu0 %v879
  %889 = vmatprep.subr.bf16.mxu0 0
  %890 = vmatpush1.bf16.msra.mxu0 0
  %891 = vmatprep.subr.bf16.mxu0 0
  %892 = vmatpush1.bf16.msra.mxu0 0
  %893 = vmatprep.subr.bf16.mxu0 0
  %894 = vmatpush1.bf16.msra.mxu0 0
  %895 = vmatprep.subr.bf16.mxu0 0
  %896 = vmatpush1.bf16.msra.mxu0 0
  %897 = vmatprep.subr.bf16.mxu0 0
  %898 = vmatpush1.bf16.msra.mxu0 0
  %899 = vmatprep.subr.bf16.mxu0 0
  %900 = vmatpush1.bf16.msra.mxu0 0
  %901 = vmatprep.subr.bf16.mxu0 0
  %902 = vmatpush1.bf16.msra.mxu0 0
  %903 = vmatprep.subr.bf16.mxu0 0
  %904 = vmatpush1.bf16.msra.mxu0 0
  %905 = vmatprep.subr.bf16.mxu0 0
  %906 = vmatpush1.bf16.msra.mxu0 0
  %907 = vmatprep.subr.bf16.mxu0 0
  %908 = vmatpush1.bf16.msra.mxu0 0
  %909 = vmatprep.subr.bf16.mxu0 0
  %910 = vmatpush1.bf16.msra.mxu0 0
  %911 = vmatprep.subr.bf16.mxu0 0
  %912 = vmatpush1.bf16.msra.mxu0 0
  %913 = vmatprep.subr.bf16.mxu0 0
  %914 = vmatpush1.bf16.msra.mxu0 0
  %915 = vmatprep.subr.bf16.mxu0 0
  %916 = vmatpush1.bf16.msra.mxu0 0
  %917 = vmatprep.mubr.bf16.mxu0 0
  %918 = vmatmul.mubr.bf16.gmra.mrb[0].mxu0 %v883
  %v919 = vpop.f32.mrb[0].mxu0
  %v920 = vadd.f32 0.0, %v919
  %v921 = vpop.f32.mrb[0].mxu0
  %v922 = vpop.f32.mrb[0].mxu0
  %v923 = vpop.f32.mrb[0].mxu0
  %924 = vdwg.mxu0
  %v925 = vld [vmem:[%s330] sm:$0xf]
  %v926 = vld [vmem:[%s330 + $0x4] sm:$0xf]
  %v927 = vld [vmem:[%s330 + $0x8] sm:$0xf]
  %v928 = vld [vmem:[%s330 + $0xc] sm:$0xf]
  %v933 = vunpack.c.l.b16 %v925
  %v934 = vunpack.c.l.b16 %v926
  %v935 = vunpack.c.l.b16 %v927
  %v936 = vunpack.c.l.b16 %v928
  %v937 = vpack.c.b16 %v934, %v933
  %v938 = vpack.c.b16 %v936, %v935
  %941 = vmatprep.subr.bf16.mxu0 0
  %942 = vmatpush1.bf16.msra.mxu0 %v937
  %943 = vmatprep.subr.bf16.mxu0 0
  %944 = vmatpush1.bf16.msra.mxu0 %v938
  %945 = vmatprep.subr.bf16.mxu0 0
  %946 = vmatpush1.bf16.msra.mxu0 0
  %947 = vmatprep.subr.bf16.mxu0 0
  %948 = vmatpush1.bf16.msra.mxu0 0
  %949 = vmatprep.subr.bf16.mxu0 0
  %950 = vmatpush1.bf16.msra.mxu0 0
  %951 = vmatprep.subr.bf16.mxu0 0
  %952 = vmatpush1.bf16.msra.mxu0 0
  %953 = vmatprep.subr.bf16.mxu0 0
  %954 = vmatpush1.bf16.msra.mxu0 0
  %955 = vmatprep.subr.bf16.mxu0 0
  %956 = vmatpush1.bf16.msra.mxu0 0
  %957 = vmatprep.subr.bf16.mxu0 0
  %958 = vmatpush1.bf16.msra.mxu0 0
  %959 = vmatprep.subr.bf16.mxu0 0
  %960 = vmatpush1.bf16.msra.mxu0 0
  %961 = vmatprep.subr.bf16.mxu0 0
  %962 = vmatpush1.bf16.msra.mxu0 0
  %963 = vmatprep.subr.bf16.mxu0 0
  %964 = vmatpush1.bf16.msra.mxu0 0
  %965 = vmatprep.subr.bf16.mxu0 0
  %966 = vmatpush1.bf16.msra.mxu0 0
  %967 = vmatprep.subr.bf16.mxu0 0
  %968 = vmatpush1.bf16.msra.mxu0 0
  %969 = vmatprep.subr.bf16.mxu0 0
  %970 = vmatpush1.bf16.msra.mxu0 0
  %971 = vmatprep.subr.bf16.mxu0 0
  %972 = vmatpush1.bf16.msra.mxu0 0
  %973 = vmatprep.mubr.bf16.mxu0 0
  %974 = vmatmul.mubr.bf16.gmra.mrb[0].mxu0 %v883
  %v975 = vpop.f32.mrb[0].mxu0
  %v976 = vadd.f32 0.0, %v975
  %v977 = vpop.f32.mrb[0].mxu0
  %v978 = vpop.f32.mrb[0].mxu0
  %v979 = vpop.f32.mrb[0].mxu0
  %980 = vdwg.mxu0
  %v981 = vld [vmem:[%s387] sm:$0xf]
  %v982 = vld [vmem:[%s387 + $0x4] sm:$0xf]
  %v983 = vld [vmem:[%s387 + $0x8] sm:$0xf]
  %v984 = vld [vmem:[%s387 + $0xc] sm:$0xf]
  %v989 = vunpack.c.l.b16 %v853
  %v990 = vunpack.c.l.b16 %v854
  %v991 = vunpack.c.l.b16 %v855
  %v992 = vunpack.c.l.b16 %v856
  %v993 = vpack.c.b16 %v990, %v989
  %v994 = vpack.c.b16 %v992, %v991
  %v998 = vsel %vm62, %v852, 0
  %1000 = vmatprep.subr.bf16.mxu0 0
  %1001 = vmatpush1.bf16.msra.mxu0 %v993
  %1002 = vmatprep.subr.bf16.mxu0 0
  %1003 = vmatpush1.bf16.msra.mxu0 %v994
  %1004 = vmatprep.subr.bf16.mxu0 0
  %1005 = vmatpush1.bf16.msra.mxu0 0
  %1006 = vmatprep.subr.bf16.mxu0 0
  %1007 = vmatpush1.bf16.msra.mxu0 0
  %1008 = vmatprep.subr.bf16.mxu0 0
  %1009 = vmatpush1.bf16.msra.mxu0 0
  %1010 = vmatprep.subr.bf16.mxu0 0
  %1011 = vmatpush1.bf16.msra.mxu0 0
  %1012 = vmatprep.subr.bf16.mxu0 0
  %1013 = vmatpush1.bf16.msra.mxu0 0
  %1014 = vmatprep.subr.bf16.mxu0 0
  %1015 = vmatpush1.bf16.msra.mxu0 0
  %1016 = vmatprep.subr.bf16.mxu0 0
  %1017 = vmatpush1.bf16.msra.mxu0 0
  %1018 = vmatprep.subr.bf16.mxu0 0
  %1019 = vmatpush1.bf16.msra.mxu0 0
  %1020 = vmatprep.subr.bf16.mxu0 0
  %1021 = vmatpush1.bf16.msra.mxu0 0
  %1022 = vmatprep.subr.bf16.mxu0 0
  %1023 = vmatpush1.bf16.msra.mxu0 0
  %1024 = vmatprep.subr.bf16.mxu0 0
  %1025 = vmatpush1.bf16.msra.mxu0 0
  %1026 = vmatprep.subr.bf16.mxu0 0
  %1027 = vmatpush1.bf16.msra.mxu0 0
  %1028 = vmatprep.subr.bf16.mxu0 0
  %1029 = vmatpush1.bf16.msra.mxu0 0
  %1030 = vmatprep.subr.bf16.mxu0 0
  %1031 = vmatpush1.bf16.msra.mxu0 0
  %1032 = vmatprep.mubr.bf16.mxu0 0
  %1033 = vmatmul.mubr.bf16.gmra.mrb[0].mxu0 %v998
  %v1034 = vpop.f32.mrb[0].mxu0
  %v1035 = vadd.f32 %v920, %v1034
  %v1036 = vpop.f32.mrb[0].mxu0
  %v1037 = vpop.f32.mrb[0].mxu0
  %v1038 = vpop.f32.mrb[0].mxu0
  %1039 = vdwg.mxu0
  %v1040 = vadd.f32 %v1035, %v451
  %v1041 = vxor.u32 %v1040, 2147483648
  %v1042 = vmul.f32 %v1041, 1.442695
  %v1043 = vpow.pop %v1042
  %v1044 = vadd.f32 %v1043, 1.0
  %v1045 = vrcp.pop %v1044
  %v1046 = vmul.f32 1.0, %v1045
  %v1051 = vunpack.c.l.b16 %v857
  %v1052 = vunpack.c.l.b16 %v858
  %v1053 = vunpack.c.l.b16 %v859
  %v1054 = vunpack.c.l.b16 %v860
  %v1055 = vpack.c.b16 %v1052, %v1051
  %v1056 = vpack.c.b16 %v1054, %v1053
  %1059 = vmatprep.subr.bf16.mxu0 0
  %1060 = vmatpush1.bf16.msra.mxu0 %v1055
  %1061 = vmatprep.subr.bf16.mxu0 0
  %1062 = vmatpush1.bf16.msra.mxu0 %v1056
  %1063 = vmatprep.subr.bf16.mxu0 0
  %1064 = vmatpush1.bf16.msra.mxu0 0
  %1065 = vmatprep.subr.bf16.mxu0 0
  %1066 = vmatpush1.bf16.msra.mxu0 0
  %1067 = vmatprep.subr.bf16.mxu0 0
  %1068 = vmatpush1.bf16.msra.mxu0 0
  %1069 = vmatprep.subr.bf16.mxu0 0
  %1070 = vmatpush1.bf16.msra.mxu0 0
  %1071 = vmatprep.subr.bf16.mxu0 0
  %1072 = vmatpush1.bf16.msra.mxu0 0
  %1073 = vmatprep.subr.bf16.mxu0 0
  %1074 = vmatpush1.bf16.msra.mxu0 0
  %1075 = vmatprep.subr.bf16.mxu0 0
  %1076 = vmatpush1.bf16.msra.mxu0 0
  %1077 = vmatprep.subr.bf16.mxu0 0
  %1078 = vmatpush1.bf16.msra.mxu0 0
  %1079 = vmatprep.subr.bf16.mxu0 0
  %1080 = vmatpush1.bf16.msra.mxu0 0
  %1081 = vmatprep.subr.bf16.mxu0 0
  %1082 = vmatpush1.bf16.msra.mxu0 0
  %1083 = vmatprep.subr.bf16.mxu0 0
  %1084 = vmatpush1.bf16.msra.mxu0 0
  %1085 = vmatprep.subr.bf16.mxu0 0
  %1086 = vmatpush1.bf16.msra.mxu0 0
  %1087 = vmatprep.subr.bf16.mxu0 0
  %1088 = vmatpush1.bf16.msra.mxu0 0
  %1089 = vmatprep.subr.bf16.mxu0 0
  %1090 = vmatpush1.bf16.msra.mxu0 0
  %1091 = vmatprep.mubr.bf16.mxu0 0
  %1092 = vmatmul.mubr.bf16.gmra.mrb[0].mxu0 %v998
  %v1093 = vpop.f32.mrb[0].mxu0
  %v1094 = vadd.f32 %v976, %v1093
  %v1095 = vpop.f32.mrb[0].mxu0
  %v1096 = vpop.f32.mrb[0].mxu0
  %v1097 = vpop.f32.mrb[0].mxu0
  %1098 = vdwg.mxu0
  %v1099 = vadd.f32 %v1094, %v516
  %v1100 = vxor.u32 %v1099, 2147483648
  %v1101 = vmul.f32 %v1100, 1.442695
  %v1102 = vpow.pop %v1101
  %v1103 = vadd.f32 %v1102, 1.0
  %v1104 = vrcp.pop %v1103
  %v1105 = vmul.f32 1.0, %v1104
  %v1110 = vunpack.c.l.b16 %v861
  %v1111 = vunpack.c.l.b16 %v862
  %v1112 = vunpack.c.l.b16 %v863
  %v1113 = vunpack.c.l.b16 %v864
  %v1114 = vpack.c.b16 %v1111, %v1110
  %v1115 = vpack.c.b16 %v1113, %v1112
  %1118 = vmatprep.subr.bf16.mxu0 0
  %1119 = vmatpush1.bf16.msra.mxu0 %v1114
  %1120 = vmatprep.subr.bf16.mxu0 0
  %1121 = vmatpush1.bf16.msra.mxu0 %v1115
  %1122 = vmatprep.subr.bf16.mxu0 0
  %1123 = vmatpush1.bf16.msra.mxu0 0
  %1124 = vmatprep.subr.bf16.mxu0 0
  %1125 = vmatpush1.bf16.msra.mxu0 0
  %1126 = vmatprep.subr.bf16.mxu0 0
  %1127 = vmatpush1.bf16.msra.mxu0 0
  %1128 = vmatprep.subr.bf16.mxu0 0
  %1129 = vmatpush1.bf16.msra.mxu0 0
  %1130 = vmatprep.subr.bf16.mxu0 0
  %1131 = vmatpush1.bf16.msra.mxu0 0
  %1132 = vmatprep.subr.bf16.mxu0 0
  %1133 = vmatpush1.bf16.msra.mxu0 0
  %1134 = vmatprep.subr.bf16.mxu0 0
  %1135 = vmatpush1.bf16.msra.mxu0 0
  %1136 = vmatprep.subr.bf16.mxu0 0
  %1137 = vmatpush1.bf16.msra.mxu0 0
  %1138 = vmatprep.subr.bf16.mxu0 0
  %1139 = vmatpush1.bf16.msra.mxu0 0
  %1140 = vmatprep.subr.bf16.mxu0 0
  %1141 = vmatpush1.bf16.msra.mxu0 0
  %1142 = vmatprep.subr.bf16.mxu0 0
  %1143 = vmatpush1.bf16.msra.mxu0 0
  %1144 = vmatprep.subr.bf16.mxu0 0
  %1145 = vmatpush1.bf16.msra.mxu0 0
  %1146 = vmatprep.subr.bf16.mxu0 0
  %1147 = vmatpush1.bf16.msra.mxu0 0
  %1148 = vmatprep.subr.bf16.mxu0 0
  %1149 = vmatpush1.bf16.msra.mxu0 0
  %1150 = vmatprep.mubr.bf16.mxu0 0
  %1151 = vmatmul.mubr.bf16.gmra.mrb[0].mxu0 %v998
  %v1152 = vpop.f32.mrb[0].mxu0
  %v1153 = vadd.f32 %v529, %v1152
  %v1154 = vpop.f32.mrb[0].mxu0
  %v1155 = vpop.f32.mrb[0].mxu0
  %v1156 = vpop.f32.mrb[0].mxu0
  %1157 = vdwg.mxu0
  %v1162 = vunpack.c.l.b16 %v981
  %v1163 = vunpack.c.l.b16 %v982
  %v1164 = vunpack.c.l.b16 %v983
  %v1165 = vunpack.c.l.b16 %v984
  %v1166 = vpack.c.b16 %v1163, %v1162
  %v1167 = vpack.c.b16 %v1165, %v1164
  %1170 = vmatprep.subr.bf16.mxu0 0
  %1171 = vmatpush1.bf16.msra.mxu0 %v1166
  %1172 = vmatprep.subr.bf16.mxu0 0
  %1173 = vmatpush1.bf16.msra.mxu0 %v1167
  %1174 = vmatprep.subr.bf16.mxu0 0
  %1175 = vmatpush1.bf16.msra.mxu0 0
  %1176 = vmatprep.subr.bf16.mxu0 0
  %1177 = vmatpush1.bf16.msra.mxu0 0
  %1178 = vmatprep.subr.bf16.mxu0 0
  %1179 = vmatpush1.bf16.msra.mxu0 0
  %1180 = vmatprep.subr.bf16.mxu0 0
  %1181 = vmatpush1.bf16.msra.mxu0 0
  %1182 = vmatprep.subr.bf16.mxu0 0
  %1183 = vmatpush1.bf16.msra.mxu0 0
  %1184 = vmatprep.subr.bf16.mxu0 0
  %1185 = vmatpush1.bf16.msra.mxu0 0
  %1186 = vmatprep.subr.bf16.mxu0 0
  %1187 = vmatpush1.bf16.msra.mxu0 0
  %1188 = vmatprep.subr.bf16.mxu0 0
  %1189 = vmatpush1.bf16.msra.mxu0 0
  %1190 = vmatprep.subr.bf16.mxu0 0
  %1191 = vmatpush1.bf16.msra.mxu0 0
  %1192 = vmatprep.subr.bf16.mxu0 0
  %1193 = vmatpush1.bf16.msra.mxu0 0
  %1194 = vmatprep.subr.bf16.mxu0 0
  %1195 = vmatpush1.bf16.msra.mxu0 0
  %1196 = vmatprep.subr.bf16.mxu0 0
  %1197 = vmatpush1.bf16.msra.mxu0 0
  %1198 = vmatprep.subr.bf16.mxu0 0
  %1199 = vmatpush1.bf16.msra.mxu0 0
  %1200 = vmatprep.subr.bf16.mxu0 0
  %1201 = vmatpush1.bf16.msra.mxu0 0
  %1202 = vmatprep.mubr.bf16.mxu0 0
  %1203 = vmatmul.mubr.bf16.gmra.mrb[0].mxu0 %v883
  %v1204 = vpop.f32.mrb[0].mxu0
  %v1205 = vadd.f32 %v587, %v1204
  %v1206 = vpop.f32.mrb[0].mxu0
  %v1207 = vpop.f32.mrb[0].mxu0
  %v1208 = vpop.f32.mrb[0].mxu0
  %1209 = vdwg.mxu0
  %v1210 = vmul.f32 %v1046, %v1205
  %v1211 = vadd.f32 %v1153, %v1210
  %v1212 = vtanh.pop %v1211
  %v1213 = vsub.f32 1.0, %v1105
  %v1214 = vmul.f32 %v1213, %v1212
  %v1215 = vmul.f32 %v1105, %v851
  %v1216 = vadd.f32 %v1214, %v1215
  %1217 = vst.msk [vmem:[#allocation3] sm:$0x3] %vm252, %v1216
  %s1218 = scalar_lea.vmem %s7, 2
  %1219 = vst.msk [vmem:[%s1218] sm:$0x3] %vm252, %v1216
  %v1220 = vld [vmem:[#allocation2] sm:$0x3]
  %v1221 = vpack.c.bf16 %v1220, %v1220
  %v1222 = vld [vmem:[%s1] sm:$0xf]
  %v1223 = vld [vmem:[%s1 + $0x4] sm:$0xf]
  %v1224 = vld [vmem:[%s1 + $0x8] sm:$0xf]
  %v1225 = vld [vmem:[%s1 + $0xc] sm:$0xf]
  %v1230 = vunpack.c.l.b16 %v1222
  %v1231 = vunpack.c.l.b16 %v1223
  %v1232 = vunpack.c.l.b16 %v1224
  %v1233 = vunpack.c.l.b16 %v1225
  %v1234 = vpack.c.b16 %v1231, %v1230
  %v1235 = vpack.c.b16 %v1233, %v1232
  %v1239 = vsel %vm62, %v1221, 0
  %1241 = vmatprep.subr.bf16.mxu0 0
  %1242 = vmatpush1.bf16.msra.mxu0 %v1234
  %1243 = vmatprep.subr.bf16.mxu0 0
  %1244 = vmatpush1.bf16.msra.mxu0 %v1235
  %1245 = vmatprep.subr.bf16.mxu0 0
  %1246 = vmatpush1.bf16.msra.mxu0 0
  %1247 = vmatprep.subr.bf16.mxu0 0
  %1248 = vmatpush1.bf16.msra.mxu0 0
  %1249 = vmatprep.subr.bf16.mxu0 0
  %1250 = vmatpush1.bf16.msra.mxu0 0
  %1251 = vmatprep.subr.bf16.mxu0 0
  %1252 = vmatpush1.bf16.msra.mxu0 0
  %1253 = vmatprep.subr.bf16.mxu0 0
  %1254 = vmatpush1.bf16.msra.mxu0 0
  %1255 = vmatprep.subr.bf16.mxu0 0
  %1256 = vmatpush1.bf16.msra.mxu0 0
  %1257 = vmatprep.subr.bf16.mxu0 0
  %1258 = vmatpush1.bf16.msra.mxu0 0
  %1259 = vmatprep.subr.bf16.mxu0 0
  %1260 = vmatpush1.bf16.msra.mxu0 0
  %1261 = vmatprep.subr.bf16.mxu0 0
  %1262 = vmatpush1.bf16.msra.mxu0 0
  %1263 = vmatprep.subr.bf16.mxu0 0
  %1264 = vmatpush1.bf16.msra.mxu0 0
  %1265 = vmatprep.subr.bf16.mxu0 0
  %1266 = vmatpush1.bf16.msra.mxu0 0
  %1267 = vmatprep.subr.bf16.mxu0 0
  %1268 = vmatpush1.bf16.msra.mxu0 0
  %1269 = vmatprep.subr.bf16.mxu0 0
  %1270 = vmatpush1.bf16.msra.mxu0 0
  %1271 = vmatprep.subr.bf16.mxu0 0
  %1272 = vmatpush1.bf16.msra.mxu0 0
  %1273 = vmatprep.mubr.bf16.mxu0 0
  %1274 = vmatmul.mubr.bf16.gmra.mrb[0].mxu0 %v1239
  %v1275 = vpop.f32.mrb[0].mxu0
  %v1276 = vadd.f32 0.0, %v1275
  %v1277 = vpop.f32.mrb[0].mxu0
  %v1278 = vpop.f32.mrb[0].mxu0
  %v1279 = vpop.f32.mrb[0].mxu0
  %1280 = vdwg.mxu0
  %v1281 = vld [vmem:[%s106] sm:$0xf]
  %v1282 = vld [vmem:[%s106 + $0x4] sm:$0xf]
  %v1283 = vld [vmem:[%s106 + $0x8] sm:$0xf]
  %v1284 = vld [vmem:[%s106 + $0xc] sm:$0xf]
  %v1289 = vunpack.c.l.b16 %v1281
  %v1290 = vunpack.c.l.b16 %v1282
  %v1291 = vunpack.c.l.b16 %v1283
  %v1292 = vunpack.c.l.b16 %v1284
  %v1293 = vpack.c.b16 %v1290, %v1289
  %v1294 = vpack.c.b16 %v1292, %v1291
  %1297 = vmatprep.subr.bf16.mxu0 0
  %1298 = vmatpush1.bf16.msra.mxu0 %v1293
  %1299 = vmatprep.subr.bf16.mxu0 0
  %1300 = vmatpush1.bf16.msra.mxu0 %v1294
  %1301 = vmatprep.subr.bf16.mxu0 0
  %1302 = vmatpush1.bf16.msra.mxu0 0
  %1303 = vmatprep.subr.bf16.mxu0 0
  %1304 = vmatpush1.bf16.msra.mxu0 0
  %1305 = vmatprep.subr.bf16.mxu0 0
  %1306 = vmatpush1.bf16.msra.mxu0 0
  %1307 = vmatprep.subr.bf16.mxu0 0
  %1308 = vmatpush1.bf16.msra.mxu0 0
  %1309 = vmatprep.subr.bf16.mxu0 0
  %1310 = vmatpush1.bf16.msra.mxu0 0
  %1311 = vmatprep.subr.bf16.mxu0 0
  %1312 = vmatpush1.bf16.msra.mxu0 0
  %1313 = vmatprep.subr.bf16.mxu0 0
  %1314 = vmatpush1.bf16.msra.mxu0 0
  %1315 = vmatprep.subr.bf16.mxu0 0
  %1316 = vmatpush1.bf16.msra.mxu0 0
  %1317 = vmatprep.subr.bf16.mxu0 0
  %1318 = vmatpush1.bf16.msra.mxu0 0
  %1319 = vmatprep.subr.bf16.mxu0 0
  %1320 = vmatpush1.bf16.msra.mxu0 0
  %1321 = vmatprep.subr.bf16.mxu0 0
  %1322 = vmatpush1.bf16.msra.mxu0 0
  %1323 = vmatprep.subr.bf16.mxu0 0
  %1324 = vmatpush1.bf16.msra.mxu0 0
  %1325 = vmatprep.subr.bf16.mxu0 0
  %1326 = vmatpush1.bf16.msra.mxu0 0
  %1327 = vmatprep.subr.bf16.mxu0 0
  %1328 = vmatpush1.bf16.msra.mxu0 0
  %1329 = vmatprep.mubr.bf16.mxu0 0
  %1330 = vmatmul.mubr.bf16.gmra.mrb[0].mxu0 %v1239
  %v1331 = vpop.f32.mrb[0].mxu0
  %v1332 = vadd.f32 0.0, %v1331
  %v1333 = vpop.f32.mrb[0].mxu0
  %v1334 = vpop.f32.mrb[0].mxu0
  %v1335 = vpop.f32.mrb[0].mxu0
  %1336 = vdwg.mxu0
  %v1337 = vld [vmem:[%s163] sm:$0xf]
  %v1338 = vld [vmem:[%s163 + $0x4] sm:$0xf]
  %v1339 = vld [vmem:[%s163 + $0x8] sm:$0xf]
  %v1340 = vld [vmem:[%s163 + $0xc] sm:$0xf]
  %s1341 = scalar_lea.vmem %s0, 4
  %v1342 = vld [vmem:[%s1341] sm:$0x3]
  %s1343 = scalar_lea.vmem %s0, 20
  %v1344 = vld [vmem:[%s1343] sm:$0x3]
  %s1345 = scalar_lea.vmem %s0, 36
  %v1346 = vld [vmem:[%s1345] sm:$0x3]
  %v1347 = vadd.f32 %v1342, %v1276
  %v1348 = vxor.u32 %v1347, 2147483648
  %v1349 = vmul.f32 %v1348, 1.442695
  %v1350 = vpow.pop %v1349
  %v1351 = vadd.f32 %v1350, 1.0
  %v1352 = vrcp.pop %v1351
  %v1353 = vmul.f32 1.0, %v1352
  %v1354 = vadd.f32 %v1344, %v1332
  %v1355 = vxor.u32 %v1354, 2147483648
  %v1356 = vmul.f32 %v1355, 1.442695
  %v1357 = vpow.pop %v1356
  %v1358 = vadd.f32 %v1357, 1.0
  %v1359 = vrcp.pop %v1358
  %v1360 = vmul.f32 1.0, %v1359
  %v1365 = vunpack.c.l.b16 %v1337
  %v1366 = vunpack.c.l.b16 %v1338
  %v1367 = vunpack.c.l.b16 %v1339
  %v1368 = vunpack.c.l.b16 %v1340
  %v1369 = vpack.c.b16 %v1366, %v1365
  %v1370 = vpack.c.b16 %v1368, %v1367
  %1373 = vmatprep.subr.bf16.mxu0 0
  %1374 = vmatpush1.bf16.msra.mxu0 %v1369
  %1375 = vmatprep.subr.bf16.mxu0 0
  %1376 = vmatpush1.bf16.msra.mxu0 %v1370
  %1377 = vmatprep.subr.bf16.mxu0 0
  %1378 = vmatpush1.bf16.msra.mxu0 0
  %1379 = vmatprep.subr.bf16.mxu0 0
  %1380 = vmatpush1.bf16.msra.mxu0 0
  %1381 = vmatprep.subr.bf16.mxu0 0
  %1382 = vmatpush1.bf16.msra.mxu0 0
  %1383 = vmatprep.subr.bf16.mxu0 0
  %1384 = vmatpush1.bf16.msra.mxu0 0
  %1385 = vmatprep.subr.bf16.mxu0 0
  %1386 = vmatpush1.bf16.msra.mxu0 0
  %1387 = vmatprep.subr.bf16.mxu0 0
  %1388 = vmatpush1.bf16.msra.mxu0 0
  %1389 = vmatprep.subr.bf16.mxu0 0
  %1390 = vmatpush1.bf16.msra.mxu0 0
  %1391 = vmatprep.subr.bf16.mxu0 0
  %1392 = vmatpush1.bf16.msra.mxu0 0
  %1393 = vmatprep.subr.bf16.mxu0 0
  %1394 = vmatpush1.bf16.msra.mxu0 0
  %1395 = vmatprep.subr.bf16.mxu0 0
  %1396 = vmatpush1.bf16.msra.mxu0 0
  %1397 = vmatprep.subr.bf16.mxu0 0
  %1398 = vmatpush1.bf16.msra.mxu0 0
  %1399 = vmatprep.subr.bf16.mxu0 0
  %1400 = vmatpush1.bf16.msra.mxu0 0
  %1401 = vmatprep.subr.bf16.mxu0 0
  %1402 = vmatpush1.bf16.msra.mxu0 0
  %1403 = vmatprep.subr.bf16.mxu0 0
  %1404 = vmatpush1.bf16.msra.mxu0 0
  %1405 = vmatprep.mubr.bf16.mxu0 0
  %1406 = vmatmul.mubr.bf16.gmra.mrb[0].mxu0 %v1239
  %v1407 = vpop.f32.mrb[0].mxu0
  %v1408 = vadd.f32 %v191, %v1407
  %v1409 = vpop.f32.mrb[0].mxu0
  %v1410 = vpop.f32.mrb[0].mxu0
  %v1411 = vpop.f32.mrb[0].mxu0
  %1412 = vdwg.mxu0
  %v1413 = vmul.f32 %v1353, %v1408
  %v1414 = vadd.f32 %v1346, %v1413
  %v1415 = vtanh.pop %v1414
  %v1416 = vsub.f32 1.0, %v1360
  %v1417 = vmul.f32 %v1416, %v1415
  %v1418 = vmul.f32 %v1360, %v1220
  %v1419 = vadd.f32 %v1417, %v1418
  %1420 = vst.msk [vmem:[#allocation2] sm:$0x3] %vm252, %v1419
  %v1421 = vld [vmem:[#allocation3] sm:$0x3]
  %v1422 = vpack.c.bf16 %v1419, %v1419
  %v1423 = vld [vmem:[%s2] sm:$0xf]
  %v1424 = vld [vmem:[%s2 + $0x4] sm:$0xf]
  %v1425 = vld [vmem:[%s2 + $0x8] sm:$0xf]
  %v1426 = vld [vmem:[%s2 + $0xc] sm:$0xf]
  %v1427 = vld [vmem:[%s260] sm:$0xf]
  %v1428 = vld [vmem:[%s260 + $0x4] sm:$0xf]
  %v1429 = vld [vmem:[%s260 + $0x8] sm:$0xf]
  %v1430 = vld [vmem:[%s260 + $0xc] sm:$0xf]
  %v1431 = vld [vmem:[%s265] sm:$0xf]
  %v1432 = vld [vmem:[%s265 + $0x4] sm:$0xf]
  %v1433 = vld [vmem:[%s265 + $0x8] sm:$0xf]
  %v1434 = vld [vmem:[%s265 + $0xc] sm:$0xf]
  %v1435 = vpack.c.bf16 %v1421, %v1421
  %v1436 = vld [vmem:[%s3] sm:$0xf]
  %v1437 = vld [vmem:[%s3 + $0x4] sm:$0xf]
  %v1438 = vld [vmem:[%s3 + $0x8] sm:$0xf]
  %v1439 = vld [vmem:[%s3 + $0xc] sm:$0xf]
  %v1444 = vunpack.c.l.b16 %v1436
  %v1445 = vunpack.c.l.b16 %v1437
  %v1446 = vunpack.c.l.b16 %v1438
  %v1447 = vunpack.c.l.b16 %v1439
  %v1448 = vpack.c.b16 %v1445, %v1444
  %v1449 = vpack.c.b16 %v1447, %v1446
  %v1453 = vsel %vm62, %v1435, 0
  %1455 = vmatprep.subr.bf16.mxu0 0
  %1456 = vmatpush1.bf16.msra.mxu0 %v1448
  %1457 = vmatprep.subr.bf16.mxu0 0
  %1458 = vmatpush1.bf16.msra.mxu0 %v1449
  %1459 = vmatprep.subr.bf16.mxu0 0
  %1460 = vmatpush1.bf16.msra.mxu0 0
  %1461 = vmatprep.subr.bf16.mxu0 0
  %1462 = vmatpush1.bf16.msra.mxu0 0
  %1463 = vmatprep.subr.bf16.mxu0 0
  %1464 = vmatpush1.bf16.msra.mxu0 0
  %1465 = vmatprep.subr.bf16.mxu0 0
  %1466 = vmatpush1.bf16.msra.mxu0 0
  %1467 = vmatprep.subr.bf16.mxu0 0
  %1468 = vmatpush1.bf16.msra.mxu0 0
  %1469 = vmatprep.subr.bf16.mxu0 0
  %1470 = vmatpush1.bf16.msra.mxu0 0
  %1471 = vmatprep.subr.bf16.mxu0 0
  %1472 = vmatpush1.bf16.msra.mxu0 0
  %1473 = vmatprep.subr.bf16.mxu0 0
  %1474 = vmatpush1.bf16.msra.mxu0 0
  %1475 = vmatprep.subr.bf16.mxu0 0
  %1476 = vmatpush1.bf16.msra.mxu0 0
  %1477 = vmatprep.subr.bf16.mxu0 0
  %1478 = vmatpush1.bf16.msra.mxu0 0
  %1479 = vmatprep.subr.bf16.mxu0 0
  %1480 = vmatpush1.bf16.msra.mxu0 0
  %1481 = vmatprep.subr.bf16.mxu0 0
  %1482 = vmatpush1.bf16.msra.mxu0 0
  %1483 = vmatprep.subr.bf16.mxu0 0
  %1484 = vmatpush1.bf16.msra.mxu0 0
  %1485 = vmatprep.subr.bf16.mxu0 0
  %1486 = vmatpush1.bf16.msra.mxu0 0
  %1487 = vmatprep.mubr.bf16.mxu0 0
  %1488 = vmatmul.mubr.bf16.gmra.mrb[0].mxu0 %v1453
  %v1489 = vpop.f32.mrb[0].mxu0
  %v1490 = vadd.f32 0.0, %v1489
  %v1491 = vpop.f32.mrb[0].mxu0
  %v1492 = vpop.f32.mrb[0].mxu0
  %v1493 = vpop.f32.mrb[0].mxu0
  %1494 = vdwg.mxu0
  %v1495 = vld [vmem:[%s330] sm:$0xf]
  %v1496 = vld [vmem:[%s330 + $0x4] sm:$0xf]
  %v1497 = vld [vmem:[%s330 + $0x8] sm:$0xf]
  %v1498 = vld [vmem:[%s330 + $0xc] sm:$0xf]
  %v1503 = vunpack.c.l.b16 %v1495
  %v1504 = vunpack.c.l.b16 %v1496
  %v1505 = vunpack.c.l.b16 %v1497
  %v1506 = vunpack.c.l.b16 %v1498
  %v1507 = vpack.c.b16 %v1504, %v1503
  %v1508 = vpack.c.b16 %v1506, %v1505
  %1511 = vmatprep.subr.bf16.mxu0 0
  %1512 = vmatpush1.bf16.msra.mxu0 %v1507
  %1513 = vmatprep.subr.bf16.mxu0 0
  %1514 = vmatpush1.bf16.msra.mxu0 %v1508
  %1515 = vmatprep.subr.bf16.mxu0 0
  %1516 = vmatpush1.bf16.msra.mxu0 0
  %1517 = vmatprep.subr.bf16.mxu0 0
  %1518 = vmatpush1.bf16.msra.mxu0 0
  %1519 = vmatprep.subr.bf16.mxu0 0
  %1520 = vmatpush1.bf16.msra.mxu0 0
  %1521 = vmatprep.subr.bf16.mxu0 0
  %1522 = vmatpush1.bf16.msra.mxu0 0
  %1523 = vmatprep.subr.bf16.mxu0 0
  %1524 = vmatpush1.bf16.msra.mxu0 0
  %1525 = vmatprep.subr.bf16.mxu0 0
  %1526 = vmatpush1.bf16.msra.mxu0 0
  %1527 = vmatprep.subr.bf16.mxu0 0
  %1528 = vmatpush1.bf16.msra.mxu0 0
  %1529 = vmatprep.subr.bf16.mxu0 0
  %1530 = vmatpush1.bf16.msra.mxu0 0
  %1531 = vmatprep.subr.bf16.mxu0 0
  %1532 = vmatpush1.bf16.msra.mxu0 0
  %1533 = vmatprep.subr.bf16.mxu0 0
  %1534 = vmatpush1.bf16.msra.mxu0 0
  %1535 = vmatprep.subr.bf16.mxu0 0
  %1536 = vmatpush1.bf16.msra.mxu0 0
  %1537 = vmatprep.subr.bf16.mxu0 0
  %1538 = vmatpush1.bf16.msra.mxu0 0
  %1539 = vmatprep.subr.bf16.mxu0 0
  %1540 = vmatpush1.bf16.msra.mxu0 0
  %1541 = vmatprep.subr.bf16.mxu0 0
  %1542 = vmatpush1.bf16.msra.mxu0 0
  %1543 = vmatprep.mubr.bf16.mxu0 0
  %1544 = vmatmul.mubr.bf16.gmra.mrb[0].mxu0 %v1453
  %v1545 = vpop.f32.mrb[0].mxu0
  %v1546 = vadd.f32 0.0, %v1545
  %v1547 = vpop.f32.mrb[0].mxu0
  %v1548 = vpop.f32.mrb[0].mxu0
  %v1549 = vpop.f32.mrb[0].mxu0
  %1550 = vdwg.mxu0
  %v1551 = vld [vmem:[%s387] sm:$0xf]
  %v1552 = vld [vmem:[%s387 + $0x4] sm:$0xf]
  %v1553 = vld [vmem:[%s387 + $0x8] sm:$0xf]
  %v1554 = vld [vmem:[%s387 + $0xc] sm:$0xf]
  %v1559 = vunpack.c.l.b16 %v1423
  %v1560 = vunpack.c.l.b16 %v1424
  %v1561 = vunpack.c.l.b16 %v1425
  %v1562 = vunpack.c.l.b16 %v1426
  %v1563 = vpack.c.b16 %v1560, %v1559
  %v1564 = vpack.c.b16 %v1562, %v1561
  %v1568 = vsel %vm62, %v1422, 0
  %1570 = vmatprep.subr.bf16.mxu0 0
  %1571 = vmatpush1.bf16.msra.mxu0 %v1563
  %1572 = vmatprep.subr.bf16.mxu0 0
  %1573 = vmatpush1.bf16.msra.mxu0 %v1564
  %1574 = vmatprep.subr.bf16.mxu0 0
  %1575 = vmatpush1.bf16.msra.mxu0 0
  %1576 = vmatprep.subr.bf16.mxu0 0
  %1577 = vmatpush1.bf16.msra.mxu0 0
  %1578 = vmatprep.subr.bf16.mxu0 0
  %1579 = vmatpush1.bf16.msra.mxu0 0
  %1580 = vmatprep.subr.bf16.mxu0 0
  %1581 = vmatpush1.bf16.msra.mxu0 0
  %1582 = vmatprep.subr.bf16.mxu0 0
  %1583 = vmatpush1.bf16.msra.mxu0 0
  %1584 = vmatprep.subr.bf16.mxu0 0
  %1585 = vmatpush1.bf16.msra.mxu0 0
  %1586 = vmatprep.subr.bf16.mxu0 0
  %1587 = vmatpush1.bf16.msra.mxu0 0
  %1588 = vmatprep.subr.bf16.mxu0 0
  %1589 = vmatpush1.bf16.msra.mxu0 0
  %1590 = vmatprep.subr.bf16.mxu0 0
  %1591 = vmatpush1.bf16.msra.mxu0 0
  %1592 = vmatprep.subr.bf16.mxu0 0
  %1593 = vmatpush1.bf16.msra.mxu0 0
  %1594 = vmatprep.subr.bf16.mxu0 0
  %1595 = vmatpush1.bf16.msra.mxu0 0
  %1596 = vmatprep.subr.bf16.mxu0 0
  %1597 = vmatpush1.bf16.msra.mxu0 0
  %1598 = vmatprep.subr.bf16.mxu0 0
  %1599 = vmatpush1.bf16.msra.mxu0 0
  %1600 = vmatprep.subr.bf16.mxu0 0
  %1601 = vmatpush1.bf16.msra.mxu0 0
  %1602 = vmatprep.mubr.bf16.mxu0 0
  %1603 = vmatmul.mubr.bf16.gmra.mrb[0].mxu0 %v1568
  %v1604 = vpop.f32.mrb[0].mxu0
  %v1605 = vadd.f32 %v1490, %v1604
  %v1606 = vpop.f32.mrb[0].mxu0
  %v1607 = vpop.f32.mrb[0].mxu0
  %v1608 = vpop.f32.mrb[0].mxu0
  %1609 = vdwg.mxu0
  %v1610 = vadd.f32 %v1605, %v451
  %v1611 = vxor.u32 %v1610, 2147483648
  %v1612 = vmul.f32 %v1611, 1.442695
  %v1613 = vpow.pop %v1612
  %v1614 = vadd.f32 %v1613, 1.0
  %v1615 = vrcp.pop %v1614
  %v1616 = vmul.f32 1.0, %v1615
  %v1621 = vunpack.c.l.b16 %v1427
  %v1622 = vunpack.c.l.b16 %v1428
  %v1623 = vunpack.c.l.b16 %v1429
  %v1624 = vunpack.c.l.b16 %v1430
  %v1625 = vpack.c.b16 %v1622, %v1621
  %v1626 = vpack.c.b16 %v1624, %v1623
  %1629 = vmatprep.subr.bf16.mxu0 0
  %1630 = vmatpush1.bf16.msra.mxu0 %v1625
  %1631 = vmatprep.subr.bf16.mxu0 0
  %1632 = vmatpush1.bf16.msra.mxu0 %v1626
  %1633 = vmatprep.subr.bf16.mxu0 0
  %1634 = vmatpush1.bf16.msra.mxu0 0
  %1635 = vmatprep.subr.bf16.mxu0 0
  %1636 = vmatpush1.bf16.msra.mxu0 0
  %1637 = vmatprep.subr.bf16.mxu0 0
  %1638 = vmatpush1.bf16.msra.mxu0 0
  %1639 = vmatprep.subr.bf16.mxu0 0
  %1640 = vmatpush1.bf16.msra.mxu0 0
  %1641 = vmatprep.subr.bf16.mxu0 0
  %1642 = vmatpush1.bf16.msra.mxu0 0
  %1643 = vmatprep.subr.bf16.mxu0 0
  %1644 = vmatpush1.bf16.msra.mxu0 0
  %1645 = vmatprep.subr.bf16.mxu0 0
  %1646 = vmatpush1.bf16.msra.mxu0 0
  %1647 = vmatprep.subr.bf16.mxu0 0
  %1648 = vmatpush1.bf16.msra.mxu0 0
  %1649 = vmatprep.subr.bf16.mxu0 0
  %1650 = vmatpush1.bf16.msra.mxu0 0
  %1651 = vmatprep.subr.bf16.mxu0 0
  %1652 = vmatpush1.bf16.msra.mxu0 0
  %1653 = vmatprep.subr.bf16.mxu0 0
  %1654 = vmatpush1.bf16.msra.mxu0 0
  %1655 = vmatprep.subr.bf16.mxu0 0
  %1656 = vmatpush1.bf16.msra.mxu0 0
  %1657 = vmatprep.subr.bf16.mxu0 0
  %1658 = vmatpush1.bf16.msra.mxu0 0
  %1659 = vmatprep.subr.bf16.mxu0 0
  %1660 = vmatpush1.bf16.msra.mxu0 0
  %1661 = vmatprep.mubr.bf16.mxu0 0
  %1662 = vmatmul.mubr.bf16.gmra.mrb[0].mxu0 %v1568
  %v1663 = vpop.f32.mrb[0].mxu0
  %v1664 = vadd.f32 %v1546, %v1663
  %v1665 = vpop.f32.mrb[0].mxu0
  %v1666 = vpop.f32.mrb[0].mxu0
  %v1667 = vpop.f32.mrb[0].mxu0
  %1668 = vdwg.mxu0
  %v1669 = vadd.f32 %v1664, %v516
  %v1670 = vxor.u32 %v1669, 2147483648
  %v1671 = vmul.f32 %v1670, 1.442695
  %v1672 = vpow.pop %v1671
  %v1673 = vadd.f32 %v1672, 1.0
  %v1674 = vrcp.pop %v1673
  %v1675 = vmul.f32 1.0, %v1674
  %v1680 = vunpack.c.l.b16 %v1431
  %v1681 = vunpack.c.l.b16 %v1432
  %v1682 = vunpack.c.l.b16 %v1433
  %v1683 = vunpack.c.l.b16 %v1434
  %v1684 = vpack.c.b16 %v1681, %v1680
  %v1685 = vpack.c.b16 %v1683, %v1682
  %1688 = vmatprep.subr.bf16.mxu0 0
  %1689 = vmatpush1.bf16.msra.mxu0 %v1684
  %1690 = vmatprep.subr.bf16.mxu0 0
  %1691 = vmatpush1.bf16.msra.mxu0 %v1685
  %1692 = vmatprep.subr.bf16.mxu0 0
  %1693 = vmatpush1.bf16.msra.mxu0 0
  %1694 = vmatprep.subr.bf16.mxu0 0
  %1695 = vmatpush1.bf16.msra.mxu0 0
  %1696 = vmatprep.subr.bf16.mxu0 0
  %1697 = vmatpush1.bf16.msra.mxu0 0
  %1698 = vmatprep.subr.bf16.mxu0 0
  %1699 = vmatpush1.bf16.msra.mxu0 0
  %1700 = vmatprep.subr.bf16.mxu0 0
  %1701 = vmatpush1.bf16.msra.mxu0 0
  %1702 = vmatprep.subr.bf16.mxu0 0
  %1703 = vmatpush1.bf16.msra.mxu0 0
  %1704 = vmatprep.subr.bf16.mxu0 0
  %1705 = vmatpush1.bf16.msra.mxu0 0
  %1706 = vmatprep.subr.bf16.mxu0 0
  %1707 = vmatpush1.bf16.msra.mxu0 0
  %1708 = vmatprep.subr.bf16.mxu0 0
  %1709 = vmatpush1.bf16.msra.mxu0 0
  %1710 = vmatprep.subr.bf16.mxu0 0
  %1711 = vmatpush1.bf16.msra.mxu0 0
  %1712 = vmatprep.subr.bf16.mxu0 0
  %1713 = vmatpush1.bf16.msra.mxu0 0
  %1714 = vmatprep.subr.bf16.mxu0 0
  %1715 = vmatpush1.bf16.msra.mxu0 0
  %1716 = vmatprep.subr.bf16.mxu0 0
  %1717 = vmatpush1.bf16.msra.mxu0 0
  %1718 = vmatprep.subr.bf16.mxu0 0
  %1719 = vmatpush1.bf16.msra.mxu0 0
  %1720 = vmatprep.mubr.bf16.mxu0 0
  %1721 = vmatmul.mubr.bf16.gmra.mrb[0].mxu0 %v1568
  %v1722 = vpop.f32.mrb[0].mxu0
  %v1723 = vadd.f32 %v529, %v1722
  %v1724 = vpop.f32.mrb[0].mxu0
  %v1725 = vpop.f32.mrb[0].mxu0
  %v1726 = vpop.f32.mrb[0].mxu0
  %1727 = vdwg.mxu0
  %v1732 = vunpack.c.l.b16 %v1551
  %v1733 = vunpack.c.l.b16 %v1552
  %v1734 = vunpack.c.l.b16 %v1553
  %v1735 = vunpack.c.l.b16 %v1554
  %v1736 = vpack.c.b16 %v1733, %v1732
  %v1737 = vpack.c.b16 %v1735, %v1734
  %1740 = vmatprep.subr.bf16.mxu0 0
  %1741 = vmatpush1.bf16.msra.mxu0 %v1736
  %1742 = vmatprep.subr.bf16.mxu0 0
  %1743 = vmatpush1.bf16.msra.mxu0 %v1737
  %1744 = vmatprep.subr.bf16.mxu0 0
  %1745 = vmatpush1.bf16.msra.mxu0 0
  %1746 = vmatprep.subr.bf16.mxu0 0
  %1747 = vmatpush1.bf16.msra.mxu0 0
  %1748 = vmatprep.subr.bf16.mxu0 0
  %1749 = vmatpush1.bf16.msra.mxu0 0
  %1750 = vmatprep.subr.bf16.mxu0 0
  %1751 = vmatpush1.bf16.msra.mxu0 0
  %1752 = vmatprep.subr.bf16.mxu0 0
  %1753 = vmatpush1.bf16.msra.mxu0 0
  %1754 = vmatprep.subr.bf16.mxu0 0
  %1755 = vmatpush1.bf16.msra.mxu0 0
  %1756 = vmatprep.subr.bf16.mxu0 0
  %1757 = vmatpush1.bf16.msra.mxu0 0
  %1758 = vmatprep.subr.bf16.mxu0 0
  %1759 = vmatpush1.bf16.msra.mxu0 0
  %1760 = vmatprep.subr.bf16.mxu0 0
  %1761 = vmatpush1.bf16.msra.mxu0 0
  %1762 = vmatprep.subr.bf16.mxu0 0
  %1763 = vmatpush1.bf16.msra.mxu0 0
  %1764 = vmatprep.subr.bf16.mxu0 0
  %1765 = vmatpush1.bf16.msra.mxu0 0
  %1766 = vmatprep.subr.bf16.mxu0 0
  %1767 = vmatpush1.bf16.msra.mxu0 0
  %1768 = vmatprep.subr.bf16.mxu0 0
  %1769 = vmatpush1.bf16.msra.mxu0 0
  %1770 = vmatprep.subr.bf16.mxu0 0
  %1771 = vmatpush1.bf16.msra.mxu0 0
  %1772 = vmatprep.mubr.bf16.mxu0 0
  %1773 = vmatmul.mubr.bf16.gmra.mrb[0].mxu0 %v1453
  %v1774 = vpop.f32.mrb[0].mxu0
  %v1775 = vadd.f32 %v587, %v1774
  %v1776 = vpop.f32.mrb[0].mxu0
  %v1777 = vpop.f32.mrb[0].mxu0
  %v1778 = vpop.f32.mrb[0].mxu0
  %1779 = vdwg.mxu0
  %v1780 = vmul.f32 %v1616, %v1775
  %v1781 = vadd.f32 %v1723, %v1780
  %v1782 = vtanh.pop %v1781
  %v1783 = vsub.f32 1.0, %v1675
  %v1784 = vmul.f32 %v1783, %v1782
  %v1785 = vmul.f32 %v1675, %v1421
  %v1786 = vadd.f32 %v1784, %v1785
  %1787 = vst.msk [vmem:[#allocation3] sm:$0x3] %vm252, %v1786
  %s1788 = scalar_lea.vmem %s7, 4
  %1789 = vst.msk [vmem:[%s1788] sm:$0x3] %vm252, %v1786
  %v1790 = vld [vmem:[#allocation2] sm:$0x3]
  %v1791 = vpack.c.bf16 %v1790, %v1790
  %v1792 = vld [vmem:[%s1] sm:$0xf]
  %v1793 = vld [vmem:[%s1 + $0x4] sm:$0xf]
  %v1794 = vld [vmem:[%s1 + $0x8] sm:$0xf]
  %v1795 = vld [vmem:[%s1 + $0xc] sm:$0xf]
  %v1800 = vunpack.c.l.b16 %v1792
  %v1801 = vunpack.c.l.b16 %v1793
  %v1802 = vunpack.c.l.b16 %v1794
  %v1803 = vunpack.c.l.b16 %v1795
  %v1804 = vpack.c.b16 %v1801, %v1800
  %v1805 = vpack.c.b16 %v1803, %v1802
  %v1809 = vsel %vm62, %v1791, 0
  %1811 = vmatprep.subr.bf16.mxu0 0
  %1812 = vmatpush1.bf16.msra.mxu0 %v1804
  %1813 = vmatprep.subr.bf16.mxu0 0
  %1814 = vmatpush1.bf16.msra.mxu0 %v1805
  %1815 = vmatprep.subr.bf16.mxu0 0
  %1816 = vmatpush1.bf16.msra.mxu0 0
  %1817 = vmatprep.subr.bf16.mxu0 0
  %1818 = vmatpush1.bf16.msra.mxu0 0
  %1819 = vmatprep.subr.bf16.mxu0 0
  %1820 = vmatpush1.bf16.msra.mxu0 0
  %1821 = vmatprep.subr.bf16.mxu0 0
  %1822 = vmatpush1.bf16.msra.mxu0 0
  %1823 = vmatprep.subr.bf16.mxu0 0
  %1824 = vmatpush1.bf16.msra.mxu0 0
  %1825 = vmatprep.subr.bf16.mxu0 0
  %1826 = vmatpush1.bf16.msra.mxu0 0
  %1827 = vmatprep.subr.bf16.mxu0 0
  %1828 = vmatpush1.bf16.msra.mxu0 0
  %1829 = vmatprep.subr.bf16.mxu0 0
  %1830 = vmatpush1.bf16.msra.mxu0 0
  %1831 = vmatprep.subr.bf16.mxu0 0
  %1832 = vmatpush1.bf16.msra.mxu0 0
  %1833 = vmatprep.subr.bf16.mxu0 0
  %1834 = vmatpush1.bf16.msra.mxu0 0
  %1835 = vmatprep.subr.bf16.mxu0 0
  %1836 = vmatpush1.bf16.msra.mxu0 0
  %1837 = vmatprep.subr.bf16.mxu0 0
  %1838 = vmatpush1.bf16.msra.mxu0 0
  %1839 = vmatprep.subr.bf16.mxu0 0
  %1840 = vmatpush1.bf16.msra.mxu0 0
  %1841 = vmatprep.subr.bf16.mxu0 0
  %1842 = vmatpush1.bf16.msra.mxu0 0
  %1843 = vmatprep.mubr.bf16.mxu0 0
  %1844 = vmatmul.mubr.bf16.gmra.mrb[0].mxu0 %v1809
  %v1845 = vpop.f32.mrb[0].mxu0
  %v1846 = vadd.f32 0.0, %v1845
  %v1847 = vpop.f32.mrb[0].mxu0
  %v1848 = vpop.f32.mrb[0].mxu0
  %v1849 = vpop.f32.mrb[0].mxu0
  %1850 = vdwg.mxu0
  %v1851 = vld [vmem:[%s106] sm:$0xf]
  %v1852 = vld [vmem:[%s106 + $0x4] sm:$0xf]
  %v1853 = vld [vmem:[%s106 + $0x8] sm:$0xf]
  %v1854 = vld [vmem:[%s106 + $0xc] sm:$0xf]
  %v1859 = vunpack.c.l.b16 %v1851
  %v1860 = vunpack.c.l.b16 %v1852
  %v1861 = vunpack.c.l.b16 %v1853
  %v1862 = vunpack.c.l.b16 %v1854
  %v1863 = vpack.c.b16 %v1860, %v1859
  %v1864 = vpack.c.b16 %v1862, %v1861
  %1867 = vmatprep.subr.bf16.mxu0 0
  %1868 = vmatpush1.bf16.msra.mxu0 %v1863
  %1869 = vmatprep.subr.bf16.mxu0 0
  %1870 = vmatpush1.bf16.msra.mxu0 %v1864
  %1871 = vmatprep.subr.bf16.mxu0 0
  %1872 = vmatpush1.bf16.msra.mxu0 0
  %1873 = vmatprep.subr.bf16.mxu0 0
  %1874 = vmatpush1.bf16.msra.mxu0 0
  %1875 = vmatprep.subr.bf16.mxu0 0
  %1876 = vmatpush1.bf16.msra.mxu0 0
  %1877 = vmatprep.subr.bf16.mxu0 0
  %1878 = vmatpush1.bf16.msra.mxu0 0
  %1879 = vmatprep.subr.bf16.mxu0 0
  %1880 = vmatpush1.bf16.msra.mxu0 0
  %1881 = vmatprep.subr.bf16.mxu0 0
  %1882 = vmatpush1.bf16.msra.mxu0 0
  %1883 = vmatprep.subr.bf16.mxu0 0
  %1884 = vmatpush1.bf16.msra.mxu0 0
  %1885 = vmatprep.subr.bf16.mxu0 0
  %1886 = vmatpush1.bf16.msra.mxu0 0
  %1887 = vmatprep.subr.bf16.mxu0 0
  %1888 = vmatpush1.bf16.msra.mxu0 0
  %1889 = vmatprep.subr.bf16.mxu0 0
  %1890 = vmatpush1.bf16.msra.mxu0 0
  %1891 = vmatprep.subr.bf16.mxu0 0
  %1892 = vmatpush1.bf16.msra.mxu0 0
  %1893 = vmatprep.subr.bf16.mxu0 0
  %1894 = vmatpush1.bf16.msra.mxu0 0
  %1895 = vmatprep.subr.bf16.mxu0 0
  %1896 = vmatpush1.bf16.msra.mxu0 0
  %1897 = vmatprep.subr.bf16.mxu0 0
  %1898 = vmatpush1.bf16.msra.mxu0 0
  %1899 = vmatprep.mubr.bf16.mxu0 0
  %1900 = vmatmul.mubr.bf16.gmra.mrb[0].mxu0 %v1809
  %v1901 = vpop.f32.mrb[0].mxu0
  %v1902 = vadd.f32 0.0, %v1901
  %v1903 = vpop.f32.mrb[0].mxu0
  %v1904 = vpop.f32.mrb[0].mxu0
  %v1905 = vpop.f32.mrb[0].mxu0
  %1906 = vdwg.mxu0
  %v1907 = vld [vmem:[%s163] sm:$0xf]
  %v1908 = vld [vmem:[%s163 + $0x4] sm:$0xf]
  %v1909 = vld [vmem:[%s163 + $0x8] sm:$0xf]
  %v1910 = vld [vmem:[%s163 + $0xc] sm:$0xf]
  %s1911 = scalar_lea.vmem %s0, 6
  %v1912 = vld [vmem:[%s1911] sm:$0x3]
  %s1913 = scalar_lea.vmem %s0, 22
  %v1914 = vld [vmem:[%s1913] sm:$0x3]
  %s1915 = scalar_lea.vmem %s0, 38
  %v1916 = vld [vmem:[%s1915] sm:$0x3]
  %v1917 = vadd.f32 %v1912, %v1846
  %v1918 = vxor.u32 %v1917, 2147483648
  %v1919 = vmul.f32 %v1918, 1.442695
  %v1920 = vpow.pop %v1919
  %v1921 = vadd.f32 %v1920, 1.0
  %v1922 = vrcp.pop %v1921
  %v1923 = vmul.f32 1.0, %v1922
  %v1924 = vadd.f32 %v1914, %v1902
  %v1925 = vxor.u32 %v1924, 2147483648
  %v1926 = vmul.f32 %v1925, 1.442695
  %v1927 = vpow.pop %v1926
  %v1928 = vadd.f32 %v1927, 1.0
  %v1929 = vrcp.pop %v1928
  %v1930 = vmul.f32 1.0, %v1929
  %v1935 = vunpack.c.l.b16 %v1907
  %v1936 = vunpack.c.l.b16 %v1908
  %v1937 = vunpack.c.l.b16 %v1909
  %v1938 = vunpack.c.l.b16 %v1910
  %v1939 = vpack.c.b16 %v1936, %v1935
  %v1940 = vpack.c.b16 %v1938, %v1937
  %1943 = vmatprep.subr.bf16.mxu0 0
  %1944 = vmatpush1.bf16.msra.mxu0 %v1939
  %1945 = vmatprep.subr.bf16.mxu0 0
  %1946 = vmatpush1.bf16.msra.mxu0 %v1940
  %1947 = vmatprep.subr.bf16.mxu0 0
  %1948 = vmatpush1.bf16.msra.mxu0 0
  %1949 = vmatprep.subr.bf16.mxu0 0
  %1950 = vmatpush1.bf16.msra.mxu0 0
  %1951 = vmatprep.subr.bf16.mxu0 0
  %1952 = vmatpush1.bf16.msra.mxu0 0
  %1953 = vmatprep.subr.bf16.mxu0 0
  %1954 = vmatpush1.bf16.msra.mxu0 0
  %1955 = vmatprep.subr.bf16.mxu0 0
  %1956 = vmatpush1.bf16.msra.mxu0 0
  %1957 = vmatprep.subr.bf16.mxu0 0
  %1958 = vmatpush1.bf16.msra.mxu0 0
  %1959 = vmatprep.subr.bf16.mxu0 0
  %1960 = vmatpush1.bf16.msra.mxu0 0
  %1961 = vmatprep.subr.bf16.mxu0 0
  %1962 = vmatpush1.bf16.msra.mxu0 0
  %1963 = vmatprep.subr.bf16.mxu0 0
  %1964 = vmatpush1.bf16.msra.mxu0 0
  %1965 = vmatprep.subr.bf16.mxu0 0
  %1966 = vmatpush1.bf16.msra.mxu0 0
  %1967 = vmatprep.subr.bf16.mxu0 0
  %1968 = vmatpush1.bf16.msra.mxu0 0
  %1969 = vmatprep.subr.bf16.mxu0 0
  %1970 = vmatpush1.bf16.msra.mxu0 0
  %1971 = vmatprep.subr.bf16.mxu0 0
  %1972 = vmatpush1.bf16.msra.mxu0 0
  %1973 = vmatprep.subr.bf16.mxu0 0
  %1974 = vmatpush1.bf16.msra.mxu0 0
  %1975 = vmatprep.mubr.bf16.mxu0 0
  %1976 = vmatmul.mubr.bf16.gmra.mrb[0].mxu0 %v1809
  %v1977 = vpop.f32.mrb[0].mxu0
  %v1978 = vadd.f32 %v191, %v1977
  %v1979 = vpop.f32.mrb[0].mxu0
  %v1980 = vpop.f32.mrb[0].mxu0
  %v1981 = vpop.f32.mrb[0].mxu0
  %1982 = vdwg.mxu0
  %v1983 = vmul.f32 %v1923, %v1978
  %v1984 = vadd.f32 %v1916, %v1983
  %v1985 = vtanh.pop %v1984
  %v1986 = vsub.f32 1.0, %v1930
  %v1987 = vmul.f32 %v1986, %v1985
  %v1988 = vmul.f32 %v1930, %v1790
  %v1989 = vadd.f32 %v1987, %v1988
  %1990 = vst.msk [vmem:[#allocation2] sm:$0x3] %vm252, %v1989
  %v1991 = vld [vmem:[#allocation3] sm:$0x3]
  %v1992 = vpack.c.bf16 %v1989, %v1989
  %v1993 = vld [vmem:[%s2] sm:$0xf]
  %v1994 = vld [vmem:[%s2 + $0x4] sm:$0xf]
  %v1995 = vld [vmem:[%s2 + $0x8] sm:$0xf]
  %v1996 = vld [vmem:[%s2 + $0xc] sm:$0xf]
  %v1997 = vld [vmem:[%s260] sm:$0xf]
  %v1998 = vld [vmem:[%s260 + $0x4] sm:$0xf]
  %v1999 = vld [vmem:[%s260 + $0x8] sm:$0xf]
  %v2000 = vld [vmem:[%s260 + $0xc] sm:$0xf]
  %v2001 = vld [vmem:[%s265] sm:$0xf]
  %v2002 = vld [vmem:[%s265 + $0x4] sm:$0xf]
  %v2003 = vld [vmem:[%s265 + $0x8] sm:$0xf]
  %v2004 = vld [vmem:[%s265 + $0xc] sm:$0xf]
  %v2005 = vpack.c.bf16 %v1991, %v1991
  %v2006 = vld [vmem:[%s3] sm:$0xf]
  %v2007 = vld [vmem:[%s3 + $0x4] sm:$0xf]
  %v2008 = vld [vmem:[%s3 + $0x8] sm:$0xf]
  %v2009 = vld [vmem:[%s3 + $0xc] sm:$0xf]
  %v2014 = vunpack.c.l.b16 %v2006
  %v2015 = vunpack.c.l.b16 %v2007
  %v2016 = vunpack.c.l.b16 %v2008
  %v2017 = vunpack.c.l.b16 %v2009
  %v2018 = vpack.c.b16 %v2015, %v2014
  %v2019 = vpack.c.b16 %v2017, %v2016
  %v2023 = vsel %vm62, %v2005, 0
  %2025 = vmatprep.subr.bf16.mxu0 0
  %2026 = vmatpush1.bf16.msra.mxu0 %v2018
  %2027 = vmatprep.subr.bf16.mxu0 0
  %2028 = vmatpush1.bf16.msra.mxu0 %v2019
  %2029 = vmatprep.subr.bf16.mxu0 0
  %2030 = vmatpush1.bf16.msra.mxu0 0
  %2031 = vmatprep.subr.bf16.mxu0 0
  %2032 = vmatpush1.bf16.msra.mxu0 0
  %2033 = vmatprep.subr.bf16.mxu0 0
  %2034 = vmatpush1.bf16.msra.mxu0 0
  %2035 = vmatprep.subr.bf16.mxu0 0
  %2036 = vmatpush1.bf16.msra.mxu0 0
  %2037 = vmatprep.subr.bf16.mxu0 0
  %2038 = vmatpush1.bf16.msra.mxu0 0
  %2039 = vmatprep.subr.bf16.mxu0 0
  %2040 = vmatpush1.bf16.msra.mxu0 0
  %2041 = vmatprep.subr.bf16.mxu0 0
  %2042 = vmatpush1.bf16.msra.mxu0 0
  %2043 = vmatprep.subr.bf16.mxu0 0
  %2044 = vmatpush1.bf16.msra.mxu0 0
  %2045 = vmatprep.subr.bf16.mxu0 0
  %2046 = vmatpush1.bf16.msra.mxu0 0
  %2047 = vmatprep.subr.bf16.mxu0 0
  %2048 = vmatpush1.bf16.msra.mxu0 0
  %2049 = vmatprep.subr.bf16.mxu0 0
  %2050 = vmatpush1.bf16.msra.mxu0 0
  %2051 = vmatprep.subr.bf16.mxu0 0
  %2052 = vmatpush1.bf16.msra.mxu0 0
  %2053 = vmatprep.subr.bf16.mxu0 0
  %2054 = vmatpush1.bf16.msra.mxu0 0
  %2055 = vmatprep.subr.bf16.mxu0 0
  %2056 = vmatpush1.bf16.msra.mxu0 0
  %2057 = vmatprep.mubr.bf16.mxu0 0
  %2058 = vmatmul.mubr.bf16.gmra.mrb[0].mxu0 %v2023
  %v2059 = vpop.f32.mrb[0].mxu0
  %v2060 = vadd.f32 0.0, %v2059
  %v2061 = vpop.f32.mrb[0].mxu0
  %v2062 = vpop.f32.mrb[0].mxu0
  %v2063 = vpop.f32.mrb[0].mxu0
  %2064 = vdwg.mxu0
  %v2065 = vld [vmem:[%s330] sm:$0xf]
  %v2066 = vld [vmem:[%s330 + $0x4] sm:$0xf]
  %v2067 = vld [vmem:[%s330 + $0x8] sm:$0xf]
  %v2068 = vld [vmem:[%s330 + $0xc] sm:$0xf]
  %v2073 = vunpack.c.l.b16 %v2065
  %v2074 = vunpack.c.l.b16 %v2066
  %v2075 = vunpack.c.l.b16 %v2067
  %v2076 = vunpack.c.l.b16 %v2068
  %v2077 = vpack.c.b16 %v2074, %v2073
  %v2078 = vpack.c.b16 %v2076, %v2075
  %2081 = vmatprep.subr.bf16.mxu0 0
  %2082 = vmatpush1.bf16.msra.mxu0 %v2077
  %2083 = vmatprep.subr.bf16.mxu0 0
  %2084 = vmatpush1.bf16.msra.mxu0 %v2078
  %2085 = vmatprep.subr.bf16.mxu0 0
  %2086 = vmatpush1.bf16.msra.mxu0 0
  %2087 = vmatprep.subr.bf16.mxu0 0
  %2088 = vmatpush1.bf16.msra.mxu0 0
  %2089 = vmatprep.subr.bf16.mxu0 0
  %2090 = vmatpush1.bf16.msra.mxu0 0
  %2091 = vmatprep.subr.bf16.mxu0 0
  %2092 = vmatpush1.bf16.msra.mxu0 0
  %2093 = vmatprep.subr.bf16.mxu0 0
  %2094 = vmatpush1.bf16.msra.mxu0 0
  %2095 = vmatprep.subr.bf16.mxu0 0
  %2096 = vmatpush1.bf16.msra.mxu0 0
  %2097 = vmatprep.subr.bf16.mxu0 0
  %2098 = vmatpush1.bf16.msra.mxu0 0
  %2099 = vmatprep.subr.bf16.mxu0 0
  %2100 = vmatpush1.bf16.msra.mxu0 0
  %2101 = vmatprep.subr.bf16.mxu0 0
  %2102 = vmatpush1.bf16.msra.mxu0 0
  %2103 = vmatprep.subr.bf16.mxu0 0
  %2104 = vmatpush1.bf16.msra.mxu0 0
  %2105 = vmatprep.subr.bf16.mxu0 0
  %2106 = vmatpush1.bf16.msra.mxu0 0
  %2107 = vmatprep.subr.bf16.mxu0 0
  %2108 = vmatpush1.bf16.msra.mxu0 0
  %2109 = vmatprep.subr.bf16.mxu0 0
  %2110 = vmatpush1.bf16.msra.mxu0 0
  %2111 = vmatprep.subr.bf16.mxu0 0
  %2112 = vmatpush1.bf16.msra.mxu0 0
  %2113 = vmatprep.mubr.bf16.mxu0 0
  %2114 = vmatmul.mubr.bf16.gmra.mrb[0].mxu0 %v2023
  %v2115 = vpop.f32.mrb[0].mxu0
  %v2116 = vadd.f32 0.0, %v2115
  %v2117 = vpop.f32.mrb[0].mxu0
  %v2118 = vpop.f32.mrb[0].mxu0
  %v2119 = vpop.f32.mrb[0].mxu0
  %2120 = vdwg.mxu0
  %v2121 = vld [vmem:[%s387] sm:$0xf]
  %v2122 = vld [vmem:[%s387 + $0x4] sm:$0xf]
  %v2123 = vld [vmem:[%s387 + $0x8] sm:$0xf]
  %v2124 = vld [vmem:[%s387 + $0xc] sm:$0xf]
  %v2129 = vunpack.c.l.b16 %v1993
  %v2130 = vunpack.c.l.b16 %v1994
  %v2131 = vunpack.c.l.b16 %v1995
  %v2132 = vunpack.c.l.b16 %v1996
  %v2133 = vpack.c.b16 %v2130, %v2129
  %v2134 = vpack.c.b16 %v2132, %v2131
  %v2138 = vsel %vm62, %v1992, 0
  %2140 = vmatprep.subr.bf16.mxu0 0
  %2141 = vmatpush1.bf16.msra.mxu0 %v2133
  %2142 = vmatprep.subr.bf16.mxu0 0
  %2143 = vmatpush1.bf16.msra.mxu0 %v2134
  %2144 = vmatprep.subr.bf16.mxu0 0
  %2145 = vmatpush1.bf16.msra.mxu0 0
  %2146 = vmatprep.subr.bf16.mxu0 0
  %2147 = vmatpush1.bf16.msra.mxu0 0
  %2148 = vmatprep.subr.bf16.mxu0 0
  %2149 = vmatpush1.bf16.msra.mxu0 0
  %2150 = vmatprep.subr.bf16.mxu0 0
  %2151 = vmatpush1.bf16.msra.mxu0 0
  %2152 = vmatprep.subr.bf16.mxu0 0
  %2153 = vmatpush1.bf16.msra.mxu0 0
  %2154 = vmatprep.subr.bf16.mxu0 0
  %2155 = vmatpush1.bf16.msra.mxu0 0
  %2156 = vmatprep.subr.bf16.mxu0 0
  %2157 = vmatpush1.bf16.msra.mxu0 0
  %2158 = vmatprep.subr.bf16.mxu0 0
  %2159 = vmatpush1.bf16.msra.mxu0 0
  %2160 = vmatprep.subr.bf16.mxu0 0
  %2161 = vmatpush1.bf16.msra.mxu0 0
  %2162 = vmatprep.subr.bf16.mxu0 0
  %2163 = vmatpush1.bf16.msra.mxu0 0
  %2164 = vmatprep.subr.bf16.mxu0 0
  %2165 = vmatpush1.bf16.msra.mxu0 0
  %2166 = vmatprep.subr.bf16.mxu0 0
  %2167 = vmatpush1.bf16.msra.mxu0 0
  %2168 = vmatprep.subr.bf16.mxu0 0
  %2169 = vmatpush1.bf16.msra.mxu0 0
  %2170 = vmatprep.subr.bf16.mxu0 0
  %2171 = vmatpush1.bf16.msra.mxu0 0
  %2172 = vmatprep.mubr.bf16.mxu0 0
  %2173 = vmatmul.mubr.bf16.gmra.mrb[0].mxu0 %v2138
  %v2174 = vpop.f32.mrb[0].mxu0
  %v2175 = vadd.f32 %v2060, %v2174
  %v2176 = vpop.f32.mrb[0].mxu0
  %v2177 = vpop.f32.mrb[0].mxu0
  %v2178 = vpop.f32.mrb[0].mxu0
  %2179 = vdwg.mxu0
  %v2180 = vadd.f32 %v2175, %v451
  %v2181 = vxor.u32 %v2180, 2147483648
  %v2182 = vmul.f32 %v2181, 1.442695
  %v2183 = vpow.pop %v2182
  %v2184 = vadd.f32 %v2183, 1.0
  %v2185 = vrcp.pop %v2184
  %v2186 = vmul.f32 1.0, %v2185
  %v2191 = vunpack.c.l.b16 %v1997
  %v2192 = vunpack.c.l.b16 %v1998
  %v2193 = vunpack.c.l.b16 %v1999
  %v2194 = vunpack.c.l.b16 %v2000
  %v2195 = vpack.c.b16 %v2192, %v2191
  %v2196 = vpack.c.b16 %v2194, %v2193
  %2199 = vmatprep.subr.bf16.mxu0 0
  %2200 = vmatpush1.bf16.msra.mxu0 %v2195
  %2201 = vmatprep.subr.bf16.mxu0 0
  %2202 = vmatpush1.bf16.msra.mxu0 %v2196
  %2203 = vmatprep.subr.bf16.mxu0 0
  %2204 = vmatpush1.bf16.msra.mxu0 0
  %2205 = vmatprep.subr.bf16.mxu0 0
  %2206 = vmatpush1.bf16.msra.mxu0 0
  %2207 = vmatprep.subr.bf16.mxu0 0
  %2208 = vmatpush1.bf16.msra.mxu0 0
  %2209 = vmatprep.subr.bf16.mxu0 0
  %2210 = vmatpush1.bf16.msra.mxu0 0
  %2211 = vmatprep.subr.bf16.mxu0 0
  %2212 = vmatpush1.bf16.msra.mxu0 0
  %2213 = vmatprep.subr.bf16.mxu0 0
  %2214 = vmatpush1.bf16.msra.mxu0 0
  %2215 = vmatprep.subr.bf16.mxu0 0
  %2216 = vmatpush1.bf16.msra.mxu0 0
  %2217 = vmatprep.subr.bf16.mxu0 0
  %2218 = vmatpush1.bf16.msra.mxu0 0
  %2219 = vmatprep.subr.bf16.mxu0 0
  %2220 = vmatpush1.bf16.msra.mxu0 0
  %2221 = vmatprep.subr.bf16.mxu0 0
  %2222 = vmatpush1.bf16.msra.mxu0 0
  %2223 = vmatprep.subr.bf16.mxu0 0
  %2224 = vmatpush1.bf16.msra.mxu0 0
  %2225 = vmatprep.subr.bf16.mxu0 0
  %2226 = vmatpush1.bf16.msra.mxu0 0
  %2227 = vmatprep.subr.bf16.mxu0 0
  %2228 = vmatpush1.bf16.msra.mxu0 0
  %2229 = vmatprep.subr.bf16.mxu0 0
  %2230 = vmatpush1.bf16.msra.mxu0 0
  %2231 = vmatprep.mubr.bf16.mxu0 0
  %2232 = vmatmul.mubr.bf16.gmra.mrb[0].mxu0 %v2138
  %v2233 = vpop.f32.mrb[0].mxu0
  %v2234 = vadd.f32 %v2116, %v2233
  %v2235 = vpop.f32.mrb[0].mxu0
  %v2236 = vpop.f32.mrb[0].mxu0
  %v2237 = vpop.f32.mrb[0].mxu0
  %2238 = vdwg.mxu0
  %v2239 = vadd.f32 %v2234, %v516
  %v2240 = vxor.u32 %v2239, 2147483648
  %v2241 = vmul.f32 %v2240, 1.442695
  %v2242 = vpow.pop %v2241
  %v2243 = vadd.f32 %v2242, 1.0
  %v2244 = vrcp.pop %v2243
  %v2245 = vmul.f32 1.0, %v2244
  %v2250 = vunpack.c.l.b16 %v2001
  %v2251 = vunpack.c.l.b16 %v2002
  %v2252 = vunpack.c.l.b16 %v2003
  %v2253 = vunpack.c.l.b16 %v2004
  %v2254 = vpack.c.b16 %v2251, %v2250
  %v2255 = vpack.c.b16 %v2253, %v2252
  %2258 = vmatprep.subr.bf16.mxu0 0
  %2259 = vmatpush1.bf16.msra.mxu0 %v2254
  %2260 = vmatprep.subr.bf16.mxu0 0
  %2261 = vmatpush1.bf16.msra.mxu0 %v2255
  %2262 = vmatprep.subr.bf16.mxu0 0
  %2263 = vmatpush1.bf16.msra.mxu0 0
  %2264 = vmatprep.subr.bf16.mxu0 0
  %2265 = vmatpush1.bf16.msra.mxu0 0
  %2266 = vmatprep.subr.bf16.mxu0 0
  %2267 = vmatpush1.bf16.msra.mxu0 0
  %2268 = vmatprep.subr.bf16.mxu0 0
  %2269 = vmatpush1.bf16.msra.mxu0 0
  %2270 = vmatprep.subr.bf16.mxu0 0
  %2271 = vmatpush1.bf16.msra.mxu0 0
  %2272 = vmatprep.subr.bf16.mxu0 0
  %2273 = vmatpush1.bf16.msra.mxu0 0
  %2274 = vmatprep.subr.bf16.mxu0 0
  %2275 = vmatpush1.bf16.msra.mxu0 0
  %2276 = vmatprep.subr.bf16.mxu0 0
  %2277 = vmatpush1.bf16.msra.mxu0 0
  %2278 = vmatprep.subr.bf16.mxu0 0
  %2279 = vmatpush1.bf16.msra.mxu0 0
  %2280 = vmatprep.subr.bf16.mxu0 0
  %2281 = vmatpush1.bf16.msra.mxu0 0
  %2282 = vmatprep.subr.bf16.mxu0 0
  %2283 = vmatpush1.bf16.msra.mxu0 0
  %2284 = vmatprep.subr.bf16.mxu0 0
  %2285 = vmatpush1.bf16.msra.mxu0 0
  %2286 = vmatprep.subr.bf16.mxu0 0
  %2287 = vmatpush1.bf16.msra.mxu0 0
  %2288 = vmatprep.subr.bf16.mxu0 0
  %2289 = vmatpush1.bf16.msra.mxu0 0
  %2290 = vmatprep.mubr.bf16.mxu0 0
  %2291 = vmatmul.mubr.bf16.gmra.mrb[0].mxu0 %v2138
  %v2292 = vpop.f32.mrb[0].mxu0
  %v2293 = vadd.f32 %v529, %v2292
  %v2294 = vpop.f32.mrb[0].mxu0
  %v2295 = vpop.f32.mrb[0].mxu0
  %v2296 = vpop.f32.mrb[0].mxu0
  %2297 = vdwg.mxu0
  %v2302 = vunpack.c.l.b16 %v2121
  %v2303 = vunpack.c.l.b16 %v2122
  %v2304 = vunpack.c.l.b16 %v2123
  %v2305 = vunpack.c.l.b16 %v2124
  %v2306 = vpack.c.b16 %v2303, %v2302
  %v2307 = vpack.c.b16 %v2305, %v2304
  %2310 = vmatprep.subr.bf16.mxu0 0
  %2311 = vmatpush1.bf16.msra.mxu0 %v2306
  %2312 = vmatprep.subr.bf16.mxu0 0
  %2313 = vmatpush1.bf16.msra.mxu0 %v2307
  %2314 = vmatprep.subr.bf16.mxu0 0
  %2315 = vmatpush1.bf16.msra.mxu0 0
  %2316 = vmatprep.subr.bf16.mxu0 0
  %2317 = vmatpush1.bf16.msra.mxu0 0
  %2318 = vmatprep.subr.bf16.mxu0 0
  %2319 = vmatpush1.bf16.msra.mxu0 0
  %2320 = vmatprep.subr.bf16.mxu0 0
  %2321 = vmatpush1.bf16.msra.mxu0 0
  %2322 = vmatprep.subr.bf16.mxu0 0
  %2323 = vmatpush1.bf16.msra.mxu0 0
  %2324 = vmatprep.subr.bf16.mxu0 0
  %2325 = vmatpush1.bf16.msra.mxu0 0
  %2326 = vmatprep.subr.bf16.mxu0 0
  %2327 = vmatpush1.bf16.msra.mxu0 0
  %2328 = vmatprep.subr.bf16.mxu0 0
  %2329 = vmatpush1.bf16.msra.mxu0 0
  %2330 = vmatprep.subr.bf16.mxu0 0
  %2331 = vmatpush1.bf16.msra.mxu0 0
  %2332 = vmatprep.subr.bf16.mxu0 0
  %2333 = vmatpush1.bf16.msra.mxu0 0
  %2334 = vmatprep.subr.bf16.mxu0 0
  %2335 = vmatpush1.bf16.msra.mxu0 0
  %2336 = vmatprep.subr.bf16.mxu0 0
  %2337 = vmatpush1.bf16.msra.mxu0 0
  %2338 = vmatprep.subr.bf16.mxu0 0
  %2339 = vmatpush1.bf16.msra.mxu0 0
  %2340 = vmatprep.subr.bf16.mxu0 0
  %2341 = vmatpush1.bf16.msra.mxu0 0
  %2342 = vmatprep.mubr.bf16.mxu0 0
  %2343 = vmatmul.mubr.bf16.gmra.mrb[0].mxu0 %v2023
  %v2344 = vpop.f32.mrb[0].mxu0
  %v2345 = vadd.f32 %v587, %v2344
  %v2346 = vpop.f32.mrb[0].mxu0
  %v2347 = vpop.f32.mrb[0].mxu0
  %v2348 = vpop.f32.mrb[0].mxu0
  %2349 = vdwg.mxu0
  %v2350 = vmul.f32 %v2186, %v2345
  %v2351 = vadd.f32 %v2293, %v2350
  %v2352 = vtanh.pop %v2351
  %v2353 = vsub.f32 1.0, %v2245
  %v2354 = vmul.f32 %v2353, %v2352
  %v2355 = vmul.f32 %v2245, %v1991
  %v2356 = vadd.f32 %v2354, %v2355
  %2357 = vst.msk [vmem:[#allocation3] sm:$0x3] %vm252, %v2356
  %s2358 = scalar_lea.vmem %s7, 6
  %2359 = vst.msk [vmem:[%s2358] sm:$0x3] %vm252, %v2356
  %v2360 = vld [vmem:[#allocation2] sm:$0x3]
  %v2361 = vpack.c.bf16 %v2360, %v2360
  %v2362 = vld [vmem:[%s1] sm:$0xf]
  %v2363 = vld [vmem:[%s1 + $0x4] sm:$0xf]
  %v2364 = vld [vmem:[%s1 + $0x8] sm:$0xf]
  %v2365 = vld [vmem:[%s1 + $0xc] sm:$0xf]
  %v2370 = vunpack.c.l.b16 %v2362
  %v2371 = vunpack.c.l.b16 %v2363
  %v2372 = vunpack.c.l.b16 %v2364
  %v2373 = vunpack.c.l.b16 %v2365
  %v2374 = vpack.c.b16 %v2371, %v2370
  %v2375 = vpack.c.b16 %v2373, %v2372
  %v2379 = vsel %vm62, %v2361, 0
  %2381 = vmatprep.subr.bf16.mxu0 0
  %2382 = vmatpush1.bf16.msra.mxu0 %v2374
  %2383 = vmatprep.subr.bf16.mxu0 0
  %2384 = vmatpush1.bf16.msra.mxu0 %v2375
  %2385 = vmatprep.subr.bf16.mxu0 0
  %2386 = vmatpush1.bf16.msra.mxu0 0
  %2387 = vmatprep.subr.bf16.mxu0 0
  %2388 = vmatpush1.bf16.msra.mxu0 0
  %2389 = vmatprep.subr.bf16.mxu0 0
  %2390 = vmatpush1.bf16.msra.mxu0 0
  %2391 = vmatprep.subr.bf16.mxu0 0
  %2392 = vmatpush1.bf16.msra.mxu0 0
  %2393 = vmatprep.subr.bf16.mxu0 0
  %2394 = vmatpush1.bf16.msra.mxu0 0
  %2395 = vmatprep.subr.bf16.mxu0 0
  %2396 = vmatpush1.bf16.msra.mxu0 0
  %2397 = vmatprep.subr.bf16.mxu0 0
  %2398 = vmatpush1.bf16.msra.mxu0 0
  %2399 = vmatprep.subr.bf16.mxu0 0
  %2400 = vmatpush1.bf16.msra.mxu0 0
  %2401 = vmatprep.subr.bf16.mxu0 0
  %2402 = vmatpush1.bf16.msra.mxu0 0
  %2403 = vmatprep.subr.bf16.mxu0 0
  %2404 = vmatpush1.bf16.msra.mxu0 0
  %2405 = vmatprep.subr.bf16.mxu0 0
  %2406 = vmatpush1.bf16.msra.mxu0 0
  %2407 = vmatprep.subr.bf16.mxu0 0
  %2408 = vmatpush1.bf16.msra.mxu0 0
  %2409 = vmatprep.subr.bf16.mxu0 0
  %2410 = vmatpush1.bf16.msra.mxu0 0
  %2411 = vmatprep.subr.bf16.mxu0 0
  %2412 = vmatpush1.bf16.msra.mxu0 0
  %2413 = vmatprep.mubr.bf16.mxu0 0
  %2414 = vmatmul.mubr.bf16.gmra.mrb[0].mxu0 %v2379
  %v2415 = vpop.f32.mrb[0].mxu0
  %v2416 = vadd.f32 0.0, %v2415
  %v2417 = vpop.f32.mrb[0].mxu0
  %v2418 = vpop.f32.mrb[0].mxu0
  %v2419 = vpop.f32.mrb[0].mxu0
  %2420 = vdwg.mxu0
  %v2421 = vld [vmem:[%s106] sm:$0xf]
  %v2422 = vld [vmem:[%s106 + $0x4] sm:$0xf]
  %v2423 = vld [vmem:[%s106 + $0x8] sm:$0xf]
  %v2424 = vld [vmem:[%s106 + $0xc] sm:$0xf]
  %v2429 = vunpack.c.l.b16 %v2421
  %v2430 = vunpack.c.l.b16 %v2422
  %v2431 = vunpack.c.l.b16 %v2423
  %v2432 = vunpack.c.l.b16 %v2424
  %v2433 = vpack.c.b16 %v2430, %v2429
  %v2434 = vpack.c.b16 %v2432, %v2431
  %2437 = vmatprep.subr.bf16.mxu0 0
  %2438 = vmatpush1.bf16.msra.mxu0 %v2433
  %2439 = vmatprep.subr.bf16.mxu0 0
  %2440 = vmatpush1.bf16.msra.mxu0 %v2434
  %2441 = vmatprep.subr.bf16.mxu0 0
  %2442 = vmatpush1.bf16.msra.mxu0 0
  %2443 = vmatprep.subr.bf16.mxu0 0
  %2444 = vmatpush1.bf16.msra.mxu0 0
  %2445 = vmatprep.subr.bf16.mxu0 0
  %2446 = vmatpush1.bf16.msra.mxu0 0
  %2447 = vmatprep.subr.bf16.mxu0 0
  %2448 = vmatpush1.bf16.msra.mxu0 0
  %2449 = vmatprep.subr.bf16.mxu0 0
  %2450 = vmatpush1.bf16.msra.mxu0 0
  %2451 = vmatprep.subr.bf16.mxu0 0
  %2452 = vmatpush1.bf16.msra.mxu0 0
  %2453 = vmatprep.subr.bf16.mxu0 0
  %2454 = vmatpush1.bf16.msra.mxu0 0
  %2455 = vmatprep.subr.bf16.mxu0 0
  %2456 = vmatpush1.bf16.msra.mxu0 0
  %2457 = vmatprep.subr.bf16.mxu0 0
  %2458 = vmatpush1.bf16.msra.mxu0 0
  %2459 = vmatprep.subr.bf16.mxu0 0
  %2460 = vmatpush1.bf16.msra.mxu0 0
  %2461 = vmatprep.subr.bf16.mxu0 0
  %2462 = vmatpush1.bf16.msra.mxu0 0
  %2463 = vmatprep.subr.bf16.mxu0 0
  %2464 = vmatpush1.bf16.msra.mxu0 0
  %2465 = vmatprep.subr.bf16.mxu0 0
  %2466 = vmatpush1.bf16.msra.mxu0 0
  %2467 = vmatprep.subr.bf16.mxu0 0
  %2468 = vmatpush1.bf16.msra.mxu0 0
  %2469 = vmatprep.mubr.bf16.mxu0 0
  %2470 = vmatmul.mubr.bf16.gmra.mrb[0].mxu0 %v2379
  %v2471 = vpop.f32.mrb[0].mxu0
  %v2472 = vadd.f32 0.0, %v2471
  %v2473 = vpop.f32.mrb[0].mxu0
  %v2474 = vpop.f32.mrb[0].mxu0
  %v2475 = vpop.f32.mrb[0].mxu0
  %2476 = vdwg.mxu0
  %v2477 = vld [vmem:[%s163] sm:$0xf]
  %v2478 = vld [vmem:[%s163 + $0x4] sm:$0xf]
  %v2479 = vld [vmem:[%s163 + $0x8] sm:$0xf]
  %v2480 = vld [vmem:[%s163 + $0xc] sm:$0xf]
  %s2481 = scalar_lea.vmem %s0, 8
  %v2482 = vld [vmem:[%s2481] sm:$0x3]
  %s2483 = scalar_lea.vmem %s0, 24
  %v2484 = vld [vmem:[%s2483] sm:$0x3]
  %s2485 = scalar_lea.vmem %s0, 40
  %v2486 = vld [vmem:[%s2485] sm:$0x3]
  %v2487 = vadd.f32 %v2482, %v2416
  %v2488 = vxor.u32 %v2487, 2147483648
  %v2489 = vmul.f32 %v2488, 1.442695
  %v2490 = vpow.pop %v2489
  %v2491 = vadd.f32 %v2490, 1.0
  %v2492 = vrcp.pop %v2491
  %v2493 = vmul.f32 1.0, %v2492
  %v2494 = vadd.f32 %v2484, %v2472
  %v2495 = vxor.u32 %v2494, 2147483648
  %v2496 = vmul.f32 %v2495, 1.442695
  %v2497 = vpow.pop %v2496
  %v2498 = vadd.f32 %v2497, 1.0
  %v2499 = vrcp.pop %v2498
  %v2500 = vmul.f32 1.0, %v2499
  %v2505 = vunpack.c.l.b16 %v2477
  %v2506 = vunpack.c.l.b16 %v2478
  %v2507 = vunpack.c.l.b16 %v2479
  %v2508 = vunpack.c.l.b16 %v2480
  %v2509 = vpack.c.b16 %v2506, %v2505
  %v2510 = vpack.c.b16 %v2508, %v2507
  %2513 = vmatprep.subr.bf16.mxu0 0
  %2514 = vmatpush1.bf16.msra.mxu0 %v2509
  %2515 = vmatprep.subr.bf16.mxu0 0
  %2516 = vmatpush1.bf16.msra.mxu0 %v2510
  %2517 = vmatprep.subr.bf16.mxu0 0
  %2518 = vmatpush1.bf16.msra.mxu0 0
  %2519 = vmatprep.subr.bf16.mxu0 0
  %2520 = vmatpush1.bf16.msra.mxu0 0
  %2521 = vmatprep.subr.bf16.mxu0 0
  %2522 = vmatpush1.bf16.msra.mxu0 0
  %2523 = vmatprep.subr.bf16.mxu0 0
  %2524 = vmatpush1.bf16.msra.mxu0 0
  %2525 = vmatprep.subr.bf16.mxu0 0
  %2526 = vmatpush1.bf16.msra.mxu0 0
  %2527 = vmatprep.subr.bf16.mxu0 0
  %2528 = vmatpush1.bf16.msra.mxu0 0
  %2529 = vmatprep.subr.bf16.mxu0 0
  %2530 = vmatpush1.bf16.msra.mxu0 0
  %2531 = vmatprep.subr.bf16.mxu0 0
  %2532 = vmatpush1.bf16.msra.mxu0 0
  %2533 = vmatprep.subr.bf16.mxu0 0
  %2534 = vmatpush1.bf16.msra.mxu0 0
  %2535 = vmatprep.subr.bf16.mxu0 0
  %2536 = vmatpush1.bf16.msra.mxu0 0
  %2537 = vmatprep.subr.bf16.mxu0 0
  %2538 = vmatpush1.bf16.msra.mxu0 0
  %2539 = vmatprep.subr.bf16.mxu0 0
  %2540 = vmatpush1.bf16.msra.mxu0 0
  %2541 = vmatprep.subr.bf16.mxu0 0
  %2542 = vmatpush1.bf16.msra.mxu0 0
  %2543 = vmatprep.subr.bf16.mxu0 0
  %2544 = vmatpush1.bf16.msra.mxu0 0
  %2545 = vmatprep.mubr.bf16.mxu0 0
  %2546 = vmatmul.mubr.bf16.gmra.mrb[0].mxu0 %v2379
  %v2547 = vpop.f32.mrb[0].mxu0
  %v2548 = vadd.f32 %v191, %v2547
  %v2549 = vpop.f32.mrb[0].mxu0
  %v2550 = vpop.f32.mrb[0].mxu0
  %v2551 = vpop.f32.mrb[0].mxu0
  %2552 = vdwg.mxu0
  %v2553 = vmul.f32 %v2493, %v2548
  %v2554 = vadd.f32 %v2486, %v2553
  %v2555 = vtanh.pop %v2554
  %v2556 = vsub.f32 1.0, %v2500
  %v2557 = vmul.f32 %v2556, %v2555
  %v2558 = vmul.f32 %v2500, %v2360
  %v2559 = vadd.f32 %v2557, %v2558
  %2560 = vst.msk [vmem:[#allocation2] sm:$0x3] %vm252, %v2559
  %v2561 = vld [vmem:[#allocation3] sm:$0x3]
  %v2562 = vpack.c.bf16 %v2559, %v2559
  %v2563 = vld [vmem:[%s2] sm:$0xf]
  %v2564 = vld [vmem:[%s2 + $0x4] sm:$0xf]
  %v2565 = vld [vmem:[%s2 + $0x8] sm:$0xf]
  %v2566 = vld [vmem:[%s2 + $0xc] sm:$0xf]
  %v2567 = vld [vmem:[%s260] sm:$0xf]
  %v2568 = vld [vmem:[%s260 + $0x4] sm:$0xf]
  %v2569 = vld [vmem:[%s260 + $0x8] sm:$0xf]
  %v2570 = vld [vmem:[%s260 + $0xc] sm:$0xf]
  %v2571 = vld [vmem:[%s265] sm:$0xf]
  %v2572 = vld [vmem:[%s265 + $0x4] sm:$0xf]
  %v2573 = vld [vmem:[%s265 + $0x8] sm:$0xf]
  %v2574 = vld [vmem:[%s265 + $0xc] sm:$0xf]
  %v2575 = vpack.c.bf16 %v2561, %v2561
  %v2576 = vld [vmem:[%s3] sm:$0xf]
  %v2577 = vld [vmem:[%s3 + $0x4] sm:$0xf]
  %v2578 = vld [vmem:[%s3 + $0x8] sm:$0xf]
  %v2579 = vld [vmem:[%s3 + $0xc] sm:$0xf]
  %v2584 = vunpack.c.l.b16 %v2576
  %v2585 = vunpack.c.l.b16 %v2577
  %v2586 = vunpack.c.l.b16 %v2578
  %v2587 = vunpack.c.l.b16 %v2579
  %v2588 = vpack.c.b16 %v2585, %v2584
  %v2589 = vpack.c.b16 %v2587, %v2586
  %v2593 = vsel %vm62, %v2575, 0
  %2595 = vmatprep.subr.bf16.mxu0 0
  %2596 = vmatpush1.bf16.msra.mxu0 %v2588
  %2597 = vmatprep.subr.bf16.mxu0 0
  %2598 = vmatpush1.bf16.msra.mxu0 %v2589
  %2599 = vmatprep.subr.bf16.mxu0 0
  %2600 = vmatpush1.bf16.msra.mxu0 0
  %2601 = vmatprep.subr.bf16.mxu0 0
  %2602 = vmatpush1.bf16.msra.mxu0 0
  %2603 = vmatprep.subr.bf16.mxu0 0
  %2604 = vmatpush1.bf16.msra.mxu0 0
  %2605 = vmatprep.subr.bf16.mxu0 0
  %2606 = vmatpush1.bf16.msra.mxu0 0
  %2607 = vmatprep.subr.bf16.mxu0 0
  %2608 = vmatpush1.bf16.msra.mxu0 0
  %2609 = vmatprep.subr.bf16.mxu0 0
  %2610 = vmatpush1.bf16.msra.mxu0 0
  %2611 = vmatprep.subr.bf16.mxu0 0
  %2612 = vmatpush1.bf16.msra.mxu0 0
  %2613 = vmatprep.subr.bf16.mxu0 0
  %2614 = vmatpush1.bf16.msra.mxu0 0
  %2615 = vmatprep.subr.bf16.mxu0 0
  %2616 = vmatpush1.bf16.msra.mxu0 0
  %2617 = vmatprep.subr.bf16.mxu0 0
  %2618 = vmatpush1.bf16.msra.mxu0 0
  %2619 = vmatprep.subr.bf16.mxu0 0
  %2620 = vmatpush1.bf16.msra.mxu0 0
  %2621 = vmatprep.subr.bf16.mxu0 0
  %2622 = vmatpush1.bf16.msra.mxu0 0
  %2623 = vmatprep.subr.bf16.mxu0 0
  %2624 = vmatpush1.bf16.msra.mxu0 0
  %2625 = vmatprep.subr.bf16.mxu0 0
  %2626 = vmatpush1.bf16.msra.mxu0 0
  %2627 = vmatprep.mubr.bf16.mxu0 0
  %2628 = vmatmul.mubr.bf16.gmra.mrb[0].mxu0 %v2593
  %v2629 = vpop.f32.mrb[0].mxu0
  %v2630 = vadd.f32 0.0, %v2629
  %v2631 = vpop.f32.mrb[0].mxu0
  %v2632 = vpop.f32.mrb[0].mxu0
  %v2633 = vpop.f32.mrb[0].mxu0
  %2634 = vdwg.mxu0
  %v2635 = vld [vmem:[%s330] sm:$0xf]
  %v2636 = vld [vmem:[%s330 + $0x4] sm:$0xf]
  %v2637 = vld [vmem:[%s330 + $0x8] sm:$0xf]
  %v2638 = vld [vmem:[%s330 + $0xc] sm:$0xf]
  %v2643 = vunpack.c.l.b16 %v2635
  %v2644 = vunpack.c.l.b16 %v2636
  %v2645 = vunpack.c.l.b16 %v2637
  %v2646 = vunpack.c.l.b16 %v2638
  %v2647 = vpack.c.b16 %v2644, %v2643
  %v2648 = vpack.c.b16 %v2646, %v2645
  %2651 = vmatprep.subr.bf16.mxu0 0
  %2652 = vmatpush1.bf16.msra.mxu0 %v2647
  %2653 = vmatprep.subr.bf16.mxu0 0
  %2654 = vmatpush1.bf16.msra.mxu0 %v2648
  %2655 = vmatprep.subr.bf16.mxu0 0
  %2656 = vmatpush1.bf16.msra.mxu0 0
  %2657 = vmatprep.subr.bf16.mxu0 0
  %2658 = vmatpush1.bf16.msra.mxu0 0
  %2659 = vmatprep.subr.bf16.mxu0 0
  %2660 = vmatpush1.bf16.msra.mxu0 0
  %2661 = vmatprep.subr.bf16.mxu0 0
  %2662 = vmatpush1.bf16.msra.mxu0 0
  %2663 = vmatprep.subr.bf16.mxu0 0
  %2664 = vmatpush1.bf16.msra.mxu0 0
  %2665 = vmatprep.subr.bf16.mxu0 0
  %2666 = vmatpush1.bf16.msra.mxu0 0
  %2667 = vmatprep.subr.bf16.mxu0 0
  %2668 = vmatpush1.bf16.msra.mxu0 0
  %2669 = vmatprep.subr.bf16.mxu0 0
  %2670 = vmatpush1.bf16.msra.mxu0 0
  %2671 = vmatprep.subr.bf16.mxu0 0
  %2672 = vmatpush1.bf16.msra.mxu0 0
  %2673 = vmatprep.subr.bf16.mxu0 0
  %2674 = vmatpush1.bf16.msra.mxu0 0
  %2675 = vmatprep.subr.bf16.mxu0 0
  %2676 = vmatpush1.bf16.msra.mxu0 0
  %2677 = vmatprep.subr.bf16.mxu0 0
  %2678 = vmatpush1.bf16.msra.mxu0 0
  %2679 = vmatprep.subr.bf16.mxu0 0
  %2680 = vmatpush1.bf16.msra.mxu0 0
  %2681 = vmatprep.subr.bf16.mxu0 0
  %2682 = vmatpush1.bf16.msra.mxu0 0
  %2683 = vmatprep.mubr.bf16.mxu0 0
  %2684 = vmatmul.mubr.bf16.gmra.mrb[0].mxu0 %v2593
  %v2685 = vpop.f32.mrb[0].mxu0
  %v2686 = vadd.f32 0.0, %v2685
  %v2687 = vpop.f32.mrb[0].mxu0
  %v2688 = vpop.f32.mrb[0].mxu0
  %v2689 = vpop.f32.mrb[0].mxu0
  %2690 = vdwg.mxu0
  %v2691 = vld [vmem:[%s387] sm:$0xf]
  %v2692 = vld [vmem:[%s387 + $0x4] sm:$0xf]
  %v2693 = vld [vmem:[%s387 + $0x8] sm:$0xf]
  %v2694 = vld [vmem:[%s387 + $0xc] sm:$0xf]
  %v2699 = vunpack.c.l.b16 %v2563
  %v2700 = vunpack.c.l.b16 %v2564
  %v2701 = vunpack.c.l.b16 %v2565
  %v2702 = vunpack.c.l.b16 %v2566
  %v2703 = vpack.c.b16 %v2700, %v2699
  %v2704 = vpack.c.b16 %v2702, %v2701
  %v2708 = vsel %vm62, %v2562, 0
  %2710 = vmatprep.subr.bf16.mxu0 0
  %2711 = vmatpush1.bf16.msra.mxu0 %v2703
  %2712 = vmatprep.subr.bf16.mxu0 0
  %2713 = vmatpush1.bf16.msra.mxu0 %v2704
  %2714 = vmatprep.subr.bf16.mxu0 0
  %2715 = vmatpush1.bf16.msra.mxu0 0
  %2716 = vmatprep.subr.bf16.mxu0 0
  %2717 = vmatpush1.bf16.msra.mxu0 0
  %2718 = vmatprep.subr.bf16.mxu0 0
  %2719 = vmatpush1.bf16.msra.mxu0 0
  %2720 = vmatprep.subr.bf16.mxu0 0
  %2721 = vmatpush1.bf16.msra.mxu0 0
  %2722 = vmatprep.subr.bf16.mxu0 0
  %2723 = vmatpush1.bf16.msra.mxu0 0
  %2724 = vmatprep.subr.bf16.mxu0 0
  %2725 = vmatpush1.bf16.msra.mxu0 0
  %2726 = vmatprep.subr.bf16.mxu0 0
  %2727 = vmatpush1.bf16.msra.mxu0 0
  %2728 = vmatprep.subr.bf16.mxu0 0
  %2729 = vmatpush1.bf16.msra.mxu0 0
  %2730 = vmatprep.subr.bf16.mxu0 0
  %2731 = vmatpush1.bf16.msra.mxu0 0
  %2732 = vmatprep.subr.bf16.mxu0 0
  %2733 = vmatpush1.bf16.msra.mxu0 0
  %2734 = vmatprep.subr.bf16.mxu0 0
  %2735 = vmatpush1.bf16.msra.mxu0 0
  %2736 = vmatprep.subr.bf16.mxu0 0
  %2737 = vmatpush1.bf16.msra.mxu0 0
  %2738 = vmatprep.subr.bf16.mxu0 0
  %2739 = vmatpush1.bf16.msra.mxu0 0
  %2740 = vmatprep.subr.bf16.mxu0 0
  %2741 = vmatpush1.bf16.msra.mxu0 0
  %2742 = vmatprep.mubr.bf16.mxu0 0
  %2743 = vmatmul.mubr.bf16.gmra.mrb[0].mxu0 %v2708
  %v2744 = vpop.f32.mrb[0].mxu0
  %v2745 = vadd.f32 %v2630, %v2744
  %v2746 = vpop.f32.mrb[0].mxu0
  %v2747 = vpop.f32.mrb[0].mxu0
  %v2748 = vpop.f32.mrb[0].mxu0
  %2749 = vdwg.mxu0
  %v2750 = vadd.f32 %v2745, %v451
  %v2751 = vxor.u32 %v2750, 2147483648
  %v2752 = vmul.f32 %v2751, 1.442695
  %v2753 = vpow.pop %v2752
  %v2754 = vadd.f32 %v2753, 1.0
  %v2755 = vrcp.pop %v2754
  %v2756 = vmul.f32 1.0, %v2755
  %v2761 = vunpack.c.l.b16 %v2567
  %v2762 = vunpack.c.l.b16 %v2568
  %v2763 = vunpack.c.l.b16 %v2569
  %v2764 = vunpack.c.l.b16 %v2570
  %v2765 = vpack.c.b16 %v2762, %v2761
  %v2766 = vpack.c.b16 %v2764, %v2763
  %2769 = vmatprep.subr.bf16.mxu0 0
  %2770 = vmatpush1.bf16.msra.mxu0 %v2765
  %2771 = vmatprep.subr.bf16.mxu0 0
  %2772 = vmatpush1.bf16.msra.mxu0 %v2766
  %2773 = vmatprep.subr.bf16.mxu0 0
  %2774 = vmatpush1.bf16.msra.mxu0 0
  %2775 = vmatprep.subr.bf16.mxu0 0
  %2776 = vmatpush1.bf16.msra.mxu0 0
  %2777 = vmatprep.subr.bf16.mxu0 0
  %2778 = vmatpush1.bf16.msra.mxu0 0
  %2779 = vmatprep.subr.bf16.mxu0 0
  %2780 = vmatpush1.bf16.msra.mxu0 0
  %2781 = vmatprep.subr.bf16.mxu0 0
  %2782 = vmatpush1.bf16.msra.mxu0 0
  %2783 = vmatprep.subr.bf16.mxu0 0
  %2784 = vmatpush1.bf16.msra.mxu0 0
  %2785 = vmatprep.subr.bf16.mxu0 0
  %2786 = vmatpush1.bf16.msra.mxu0 0
  %2787 = vmatprep.subr.bf16.mxu0 0
  %2788 = vmatpush1.bf16.msra.mxu0 0
  %2789 = vmatprep.subr.bf16.mxu0 0
  %2790 = vmatpush1.bf16.msra.mxu0 0
  %2791 = vmatprep.subr.bf16.mxu0 0
  %2792 = vmatpush1.bf16.msra.mxu0 0
  %2793 = vmatprep.subr.bf16.mxu0 0
  %2794 = vmatpush1.bf16.msra.mxu0 0
  %2795 = vmatprep.subr.bf16.mxu0 0
  %2796 = vmatpush1.bf16.msra.mxu0 0
  %2797 = vmatprep.subr.bf16.mxu0 0
  %2798 = vmatpush1.bf16.msra.mxu0 0
  %2799 = vmatprep.subr.bf16.mxu0 0
  %2800 = vmatpush1.bf16.msra.mxu0 0
  %2801 = vmatprep.mubr.bf16.mxu0 0
  %2802 = vmatmul.mubr.bf16.gmra.mrb[0].mxu0 %v2708
  %v2803 = vpop.f32.mrb[0].mxu0
  %v2804 = vadd.f32 %v2686, %v2803
  %v2805 = vpop.f32.mrb[0].mxu0
  %v2806 = vpop.f32.mrb[0].mxu0
  %v2807 = vpop.f32.mrb[0].mxu0
  %2808 = vdwg.mxu0
  %v2809 = vadd.f32 %v2804, %v516
  %v2810 = vxor.u32 %v2809, 2147483648
  %v2811 = vmul.f32 %v2810, 1.442695
  %v2812 = vpow.pop %v2811
  %v2813 = vadd.f32 %v2812, 1.0
  %v2814 = vrcp.pop %v2813
  %v2815 = vmul.f32 1.0, %v2814
  %v2820 = vunpack.c.l.b16 %v2571
  %v2821 = vunpack.c.l.b16 %v2572
  %v2822 = vunpack.c.l.b16 %v2573
  %v2823 = vunpack.c.l.b16 %v2574
  %v2824 = vpack.c.b16 %v2821, %v2820
  %v2825 = vpack.c.b16 %v2823, %v2822
  %2828 = vmatprep.subr.bf16.mxu0 0
  %2829 = vmatpush1.bf16.msra.mxu0 %v2824
  %2830 = vmatprep.subr.bf16.mxu0 0
  %2831 = vmatpush1.bf16.msra.mxu0 %v2825
  %2832 = vmatprep.subr.bf16.mxu0 0
  %2833 = vmatpush1.bf16.msra.mxu0 0
  %2834 = vmatprep.subr.bf16.mxu0 0
  %2835 = vmatpush1.bf16.msra.mxu0 0
  %2836 = vmatprep.subr.bf16.mxu0 0
  %2837 = vmatpush1.bf16.msra.mxu0 0
  %2838 = vmatprep.subr.bf16.mxu0 0
  %2839 = vmatpush1.bf16.msra.mxu0 0
  %2840 = vmatprep.subr.bf16.mxu0 0
  %2841 = vmatpush1.bf16.msra.mxu0 0
  %2842 = vmatprep.subr.bf16.mxu0 0
  %2843 = vmatpush1.bf16.msra.mxu0 0
  %2844 = vmatprep.subr.bf16.mxu0 0
  %2845 = vmatpush1.bf16.msra.mxu0 0
  %2846 = vmatprep.subr.bf16.mxu0 0
  %2847 = vmatpush1.bf16.msra.mxu0 0
  %2848 = vmatprep.subr.bf16.mxu0 0
  %2849 = vmatpush1.bf16.msra.mxu0 0
  %2850 = vmatprep.subr.bf16.mxu0 0
  %2851 = vmatpush1.bf16.msra.mxu0 0
  %2852 = vmatprep.subr.bf16.mxu0 0
  %2853 = vmatpush1.bf16.msra.mxu0 0
  %2854 = vmatprep.subr.bf16.mxu0 0
  %2855 = vmatpush1.bf16.msra.mxu0 0
  %2856 = vmatprep.subr.bf16.mxu0 0
  %2857 = vmatpush1.bf16.msra.mxu0 0
  %2858 = vmatprep.subr.bf16.mxu0 0
  %2859 = vmatpush1.bf16.msra.mxu0 0
  %2860 = vmatprep.mubr.bf16.mxu0 0
  %2861 = vmatmul.mubr.bf16.gmra.mrb[0].mxu0 %v2708
  %v2862 = vpop.f32.mrb[0].mxu0
  %v2863 = vadd.f32 %v529, %v2862
  %v2864 = vpop.f32.mrb[0].mxu0
  %v2865 = vpop.f32.mrb[0].mxu0
  %v2866 = vpop.f32.mrb[0].mxu0
  %2867 = vdwg.mxu0
  %v2872 = vunpack.c.l.b16 %v2691
  %v2873 = vunpack.c.l.b16 %v2692
  %v2874 = vunpack.c.l.b16 %v2693
  %v2875 = vunpack.c.l.b16 %v2694
  %v2876 = vpack.c.b16 %v2873, %v2872
  %v2877 = vpack.c.b16 %v2875, %v2874
  %2880 = vmatprep.subr.bf16.mxu0 0
  %2881 = vmatpush1.bf16.msra.mxu0 %v2876
  %2882 = vmatprep.subr.bf16.mxu0 0
  %2883 = vmatpush1.bf16.msra.mxu0 %v2877
  %2884 = vmatprep.subr.bf16.mxu0 0
  %2885 = vmatpush1.bf16.msra.mxu0 0
  %2886 = vmatprep.subr.bf16.mxu0 0
  %2887 = vmatpush1.bf16.msra.mxu0 0
  %2888 = vmatprep.subr.bf16.mxu0 0
  %2889 = vmatpush1.bf16.msra.mxu0 0
  %2890 = vmatprep.subr.bf16.mxu0 0
  %2891 = vmatpush1.bf16.msra.mxu0 0
  %2892 = vmatprep.subr.bf16.mxu0 0
  %2893 = vmatpush1.bf16.msra.mxu0 0
  %2894 = vmatprep.subr.bf16.mxu0 0
  %2895 = vmatpush1.bf16.msra.mxu0 0
  %2896 = vmatprep.subr.bf16.mxu0 0
  %2897 = vmatpush1.bf16.msra.mxu0 0
  %2898 = vmatprep.subr.bf16.mxu0 0
  %2899 = vmatpush1.bf16.msra.mxu0 0
  %2900 = vmatprep.subr.bf16.mxu0 0
  %2901 = vmatpush1.bf16.msra.mxu0 0
  %2902 = vmatprep.subr.bf16.mxu0 0
  %2903 = vmatpush1.bf16.msra.mxu0 0
  %2904 = vmatprep.subr.bf16.mxu0 0
  %2905 = vmatpush1.bf16.msra.mxu0 0
  %2906 = vmatprep.subr.bf16.mxu0 0
  %2907 = vmatpush1.bf16.msra.mxu0 0
  %2908 = vmatprep.subr.bf16.mxu0 0
  %2909 = vmatpush1.bf16.msra.mxu0 0
  %2910 = vmatprep.subr.bf16.mxu0 0
  %2911 = vmatpush1.bf16.msra.mxu0 0
  %2912 = vmatprep.mubr.bf16.mxu0 0
  %2913 = vmatmul.mubr.bf16.gmra.mrb[0].mxu0 %v2593
  %v2914 = vpop.f32.mrb[0].mxu0
  %v2915 = vadd.f32 %v587, %v2914
  %v2916 = vpop.f32.mrb[0].mxu0
  %v2917 = vpop.f32.mrb[0].mxu0
  %v2918 = vpop.f32.mrb[0].mxu0
  %2919 = vdwg.mxu0
  %v2920 = vmul.f32 %v2756, %v2915
  %v2921 = vadd.f32 %v2863, %v2920
  %v2922 = vtanh.pop %v2921
  %v2923 = vsub.f32 1.0, %v2815
  %v2924 = vmul.f32 %v2923, %v2922
  %v2925 = vmul.f32 %v2815, %v2561
  %v2926 = vadd.f32 %v2924, %v2925
  %2927 = vst.msk [vmem:[#allocation3] sm:$0x3] %vm252, %v2926
  %s2928 = scalar_lea.vmem %s7, 8
  %2929 = vst.msk [vmem:[%s2928] sm:$0x3] %vm252, %v2926
  %v2930 = vld [vmem:[#allocation2] sm:$0x3]
  %v2931 = vpack.c.bf16 %v2930, %v2930
  %v2932 = vld [vmem:[%s1] sm:$0xf]
  %v2933 = vld [vmem:[%s1 + $0x4] sm:$0xf]
  %v2934 = vld [vmem:[%s1 + $0x8] sm:$0xf]
  %v2935 = vld [vmem:[%s1 + $0xc] sm:$0xf]
  %v2940 = vunpack.c.l.b16 %v2932
  %v2941 = vunpack.c.l.b16 %v2933
  %v2942 = vunpack.c.l.b16 %v2934
  %v2943 = vunpack.c.l.b16 %v2935
  %v2944 = vpack.c.b16 %v2941, %v2940
  %v2945 = vpack.c.b16 %v2943, %v2942
  %v2949 = vsel %vm62, %v2931, 0
  %2951 = vmatprep.subr.bf16.mxu0 0
  %2952 = vmatpush1.bf16.msra.mxu0 %v2944
  %2953 = vmatprep.subr.bf16.mxu0 0
  %2954 = vmatpush1.bf16.msra.mxu0 %v2945
  %2955 = vmatprep.subr.bf16.mxu0 0
  %2956 = vmatpush1.bf16.msra.mxu0 0
  %2957 = vmatprep.subr.bf16.mxu0 0
  %2958 = vmatpush1.bf16.msra.mxu0 0
  %2959 = vmatprep.subr.bf16.mxu0 0
  %2960 = vmatpush1.bf16.msra.mxu0 0
  %2961 = vmatprep.subr.bf16.mxu0 0
  %2962 = vmatpush1.bf16.msra.mxu0 0
  %2963 = vmatprep.subr.bf16.mxu0 0
  %2964 = vmatpush1.bf16.msra.mxu0 0
  %2965 = vmatprep.subr.bf16.mxu0 0
  %2966 = vmatpush1.bf16.msra.mxu0 0
  %2967 = vmatprep.subr.bf16.mxu0 0
  %2968 = vmatpush1.bf16.msra.mxu0 0
  %2969 = vmatprep.subr.bf16.mxu0 0
  %2970 = vmatpush1.bf16.msra.mxu0 0
  %2971 = vmatprep.subr.bf16.mxu0 0
  %2972 = vmatpush1.bf16.msra.mxu0 0
  %2973 = vmatprep.subr.bf16.mxu0 0
  %2974 = vmatpush1.bf16.msra.mxu0 0
  %2975 = vmatprep.subr.bf16.mxu0 0
  %2976 = vmatpush1.bf16.msra.mxu0 0
  %2977 = vmatprep.subr.bf16.mxu0 0
  %2978 = vmatpush1.bf16.msra.mxu0 0
  %2979 = vmatprep.subr.bf16.mxu0 0
  %2980 = vmatpush1.bf16.msra.mxu0 0
  %2981 = vmatprep.subr.bf16.mxu0 0
  %2982 = vmatpush1.bf16.msra.mxu0 0
  %2983 = vmatprep.mubr.bf16.mxu0 0
  %2984 = vmatmul.mubr.bf16.gmra.mrb[0].mxu0 %v2949
  %v2985 = vpop.f32.mrb[0].mxu0
  %v2986 = vadd.f32 0.0, %v2985
  %v2987 = vpop.f32.mrb[0].mxu0
  %v2988 = vpop.f32.mrb[0].mxu0
  %v2989 = vpop.f32.mrb[0].mxu0
  %2990 = vdwg.mxu0
  %v2991 = vld [vmem:[%s106] sm:$0xf]
  %v2992 = vld [vmem:[%s106 + $0x4] sm:$0xf]
  %v2993 = vld [vmem:[%s106 + $0x8] sm:$0xf]
  %v2994 = vld [vmem:[%s106 + $0xc] sm:$0xf]
  %v2999 = vunpack.c.l.b16 %v2991
  %v3000 = vunpack.c.l.b16 %v2992
  %v3001 = vunpack.c.l.b16 %v2993
  %v3002 = vunpack.c.l.b16 %v2994
  %v3003 = vpack.c.b16 %v3000, %v2999
  %v3004 = vpack.c.b16 %v3002, %v3001
  %3007 = vmatprep.subr.bf16.mxu0 0
  %3008 = vmatpush1.bf16.msra.mxu0 %v3003
  %3009 = vmatprep.subr.bf16.mxu0 0
  %3010 = vmatpush1.bf16.msra.mxu0 %v3004
  %3011 = vmatprep.subr.bf16.mxu0 0
  %3012 = vmatpush1.bf16.msra.mxu0 0
  %3013 = vmatprep.subr.bf16.mxu0 0
  %3014 = vmatpush1.bf16.msra.mxu0 0
  %3015 = vmatprep.subr.bf16.mxu0 0
  %3016 = vmatpush1.bf16.msra.mxu0 0
  %3017 = vmatprep.subr.bf16.mxu0 0
  %3018 = vmatpush1.bf16.msra.mxu0 0
  %3019 = vmatprep.subr.bf16.mxu0 0
  %3020 = vmatpush1.bf16.msra.mxu0 0
  %3021 = vmatprep.subr.bf16.mxu0 0
  %3022 = vmatpush1.bf16.msra.mxu0 0
  %3023 = vmatprep.subr.bf16.mxu0 0
  %3024 = vmatpush1.bf16.msra.mxu0 0
  %3025 = vmatprep.subr.bf16.mxu0 0
  %3026 = vmatpush1.bf16.msra.mxu0 0
  %3027 = vmatprep.subr.bf16.mxu0 0
  %3028 = vmatpush1.bf16.msra.mxu0 0
  %3029 = vmatprep.subr.bf16.mxu0 0
  %3030 = vmatpush1.bf16.msra.mxu0 0
  %3031 = vmatprep.subr.bf16.mxu0 0
  %3032 = vmatpush1.bf16.msra.mxu0 0
  %3033 = vmatprep.subr.bf16.mxu0 0
  %3034 = vmatpush1.bf16.msra.mxu0 0
  %3035 = vmatprep.subr.bf16.mxu0 0
  %3036 = vmatpush1.bf16.msra.mxu0 0
  %3037 = vmatprep.subr.bf16.mxu0 0
  %3038 = vmatpush1.bf16.msra.mxu0 0
  %3039 = vmatprep.mubr.bf16.mxu0 0
  %3040 = vmatmul.mubr.bf16.gmra.mrb[0].mxu0 %v2949
  %v3041 = vpop.f32.mrb[0].mxu0
  %v3042 = vadd.f32 0.0, %v3041
  %v3043 = vpop.f32.mrb[0].mxu0
  %v3044 = vpop.f32.mrb[0].mxu0
  %v3045 = vpop.f32.mrb[0].mxu0
  %3046 = vdwg.mxu0
  %v3047 = vld [vmem:[%s163] sm:$0xf]
  %v3048 = vld [vmem:[%s163 + $0x4] sm:$0xf]
  %v3049 = vld [vmem:[%s163 + $0x8] sm:$0xf]
  %v3050 = vld [vmem:[%s163 + $0xc] sm:$0xf]
  %s3051 = scalar_lea.vmem %s0, 10
  %v3052 = vld [vmem:[%s3051] sm:$0x3]
  %s3053 = scalar_lea.vmem %s0, 26
  %v3054 = vld [vmem:[%s3053] sm:$0x3]
  %s3055 = scalar_lea.vmem %s0, 42
  %v3056 = vld [vmem:[%s3055] sm:$0x3]
  %v3057 = vadd.f32 %v3052, %v2986
  %v3058 = vxor.u32 %v3057, 2147483648
  %v3059 = vmul.f32 %v3058, 1.442695
  %v3060 = vpow.pop %v3059
  %v3061 = vadd.f32 %v3060, 1.0
  %v3062 = vrcp.pop %v3061
  %v3063 = vmul.f32 1.0, %v3062
  %v3064 = vadd.f32 %v3054, %v3042
  %v3065 = vxor.u32 %v3064, 2147483648
  %v3066 = vmul.f32 %v3065, 1.442695
  %v3067 = vpow.pop %v3066
  %v3068 = vadd.f32 %v3067, 1.0
  %v3069 = vrcp.pop %v3068
  %v3070 = vmul.f32 1.0, %v3069
  %v3075 = vunpack.c.l.b16 %v3047
  %v3076 = vunpack.c.l.b16 %v3048
  %v3077 = vunpack.c.l.b16 %v3049
  %v3078 = vunpack.c.l.b16 %v3050
  %v3079 = vpack.c.b16 %v3076, %v3075
  %v3080 = vpack.c.b16 %v3078, %v3077
  %3083 = vmatprep.subr.bf16.mxu0 0
  %3084 = vmatpush1.bf16.msra.mxu0 %v3079
  %3085 = vmatprep.subr.bf16.mxu0 0
  %3086 = vmatpush1.bf16.msra.mxu0 %v3080
  %3087 = vmatprep.subr.bf16.mxu0 0
  %3088 = vmatpush1.bf16.msra.mxu0 0
  %3089 = vmatprep.subr.bf16.mxu0 0
  %3090 = vmatpush1.bf16.msra.mxu0 0
  %3091 = vmatprep.subr.bf16.mxu0 0
  %3092 = vmatpush1.bf16.msra.mxu0 0
  %3093 = vmatprep.subr.bf16.mxu0 0
  %3094 = vmatpush1.bf16.msra.mxu0 0
  %3095 = vmatprep.subr.bf16.mxu0 0
  %3096 = vmatpush1.bf16.msra.mxu0 0
  %3097 = vmatprep.subr.bf16.mxu0 0
  %3098 = vmatpush1.bf16.msra.mxu0 0
  %3099 = vmatprep.subr.bf16.mxu0 0
  %3100 = vmatpush1.bf16.msra.mxu0 0
  %3101 = vmatprep.subr.bf16.mxu0 0
  %3102 = vmatpush1.bf16.msra.mxu0 0
  %3103 = vmatprep.subr.bf16.mxu0 0
  %3104 = vmatpush1.bf16.msra.mxu0 0
  %3105 = vmatprep.subr.bf16.mxu0 0
  %3106 = vmatpush1.bf16.msra.mxu0 0
  %3107 = vmatprep.subr.bf16.mxu0 0
  %3108 = vmatpush1.bf16.msra.mxu0 0
  %3109 = vmatprep.subr.bf16.mxu0 0
  %3110 = vmatpush1.bf16.msra.mxu0 0
  %3111 = vmatprep.subr.bf16.mxu0 0
  %3112 = vmatpush1.bf16.msra.mxu0 0
  %3113 = vmatprep.subr.bf16.mxu0 0
  %3114 = vmatpush1.bf16.msra.mxu0 0
  %3115 = vmatprep.mubr.bf16.mxu0 0
  %3116 = vmatmul.mubr.bf16.gmra.mrb[0].mxu0 %v2949
  %v3117 = vpop.f32.mrb[0].mxu0
  %v3118 = vadd.f32 %v191, %v3117
  %v3119 = vpop.f32.mrb[0].mxu0
  %v3120 = vpop.f32.mrb[0].mxu0
  %v3121 = vpop.f32.mrb[0].mxu0
  %3122 = vdwg.mxu0
  %v3123 = vmul.f32 %v3063, %v3118
  %v3124 = vadd.f32 %v3056, %v3123
  %v3125 = vtanh.pop %v3124
  %v3126 = vsub.f32 1.0, %v3070
  %v3127 = vmul.f32 %v3126, %v3125
  %v3128 = vmul.f32 %v3070, %v2930
  %v3129 = vadd.f32 %v3127, %v3128
  %3130 = vst.msk [vmem:[#allocation2] sm:$0x3] %vm252, %v3129
  %v3131 = vld [vmem:[#allocation3] sm:$0x3]
  %v3132 = vpack.c.bf16 %v3129, %v3129
  %v3133 = vld [vmem:[%s2] sm:$0xf]
  %v3134 = vld [vmem:[%s2 + $0x4] sm:$0xf]
  %v3135 = vld [vmem:[%s2 + $0x8] sm:$0xf]
  %v3136 = vld [vmem:[%s2 + $0xc] sm:$0xf]
  %v3137 = vld [vmem:[%s260] sm:$0xf]
  %v3138 = vld [vmem:[%s260 + $0x4] sm:$0xf]
  %v3139 = vld [vmem:[%s260 + $0x8] sm:$0xf]
  %v3140 = vld [vmem:[%s260 + $0xc] sm:$0xf]
  %v3141 = vld [vmem:[%s265] sm:$0xf]
  %v3142 = vld [vmem:[%s265 + $0x4] sm:$0xf]
  %v3143 = vld [vmem:[%s265 + $0x8] sm:$0xf]
  %v3144 = vld [vmem:[%s265 + $0xc] sm:$0xf]
  %v3145 = vpack.c.bf16 %v3131, %v3131
  %v3146 = vld [vmem:[%s3] sm:$0xf]
  %v3147 = vld [vmem:[%s3 + $0x4] sm:$0xf]
  %v3148 = vld [vmem:[%s3 + $0x8] sm:$0xf]
  %v3149 = vld [vmem:[%s3 + $0xc] sm:$0xf]
  %v3154 = vunpack.c.l.b16 %v3146
  %v3155 = vunpack.c.l.b16 %v3147
  %v3156 = vunpack.c.l.b16 %v3148
  %v3157 = vunpack.c.l.b16 %v3149
  %v3158 = vpack.c.b16 %v3155, %v3154
  %v3159 = vpack.c.b16 %v3157, %v3156
  %v3163 = vsel %vm62, %v3145, 0
  %3165 = vmatprep.subr.bf16.mxu0 0
  %3166 = vmatpush1.bf16.msra.mxu0 %v3158
  %3167 = vmatprep.subr.bf16.mxu0 0
  %3168 = vmatpush1.bf16.msra.mxu0 %v3159
  %3169 = vmatprep.subr.bf16.mxu0 0
  %3170 = vmatpush1.bf16.msra.mxu0 0
  %3171 = vmatprep.subr.bf16.mxu0 0
  %3172 = vmatpush1.bf16.msra.mxu0 0
  %3173 = vmatprep.subr.bf16.mxu0 0
  %3174 = vmatpush1.bf16.msra.mxu0 0
  %3175 = vmatprep.subr.bf16.mxu0 0
  %3176 = vmatpush1.bf16.msra.mxu0 0
  %3177 = vmatprep.subr.bf16.mxu0 0
  %3178 = vmatpush1.bf16.msra.mxu0 0
  %3179 = vmatprep.subr.bf16.mxu0 0
  %3180 = vmatpush1.bf16.msra.mxu0 0
  %3181 = vmatprep.subr.bf16.mxu0 0
  %3182 = vmatpush1.bf16.msra.mxu0 0
  %3183 = vmatprep.subr.bf16.mxu0 0
  %3184 = vmatpush1.bf16.msra.mxu0 0
  %3185 = vmatprep.subr.bf16.mxu0 0
  %3186 = vmatpush1.bf16.msra.mxu0 0
  %3187 = vmatprep.subr.bf16.mxu0 0
  %3188 = vmatpush1.bf16.msra.mxu0 0
  %3189 = vmatprep.subr.bf16.mxu0 0
  %3190 = vmatpush1.bf16.msra.mxu0 0
  %3191 = vmatprep.subr.bf16.mxu0 0
  %3192 = vmatpush1.bf16.msra.mxu0 0
  %3193 = vmatprep.subr.bf16.mxu0 0
  %3194 = vmatpush1.bf16.msra.mxu0 0
  %3195 = vmatprep.subr.bf16.mxu0 0
  %3196 = vmatpush1.bf16.msra.mxu0 0
  %3197 = vmatprep.mubr.bf16.mxu0 0
  %3198 = vmatmul.mubr.bf16.gmra.mrb[0].mxu0 %v3163
  %v3199 = vpop.f32.mrb[0].mxu0
  %v3200 = vadd.f32 0.0, %v3199
  %v3201 = vpop.f32.mrb[0].mxu0
  %v3202 = vpop.f32.mrb[0].mxu0
  %v3203 = vpop.f32.mrb[0].mxu0
  %3204 = vdwg.mxu0
  %v3205 = vld [vmem:[%s330] sm:$0xf]
  %v3206 = vld [vmem:[%s330 + $0x4] sm:$0xf]
  %v3207 = vld [vmem:[%s330 + $0x8] sm:$0xf]
  %v3208 = vld [vmem:[%s330 + $0xc] sm:$0xf]
  %v3213 = vunpack.c.l.b16 %v3205
  %v3214 = vunpack.c.l.b16 %v3206
  %v3215 = vunpack.c.l.b16 %v3207
  %v3216 = vunpack.c.l.b16 %v3208
  %v3217 = vpack.c.b16 %v3214, %v3213
  %v3218 = vpack.c.b16 %v3216, %v3215
  %3221 = vmatprep.subr.bf16.mxu0 0
  %3222 = vmatpush1.bf16.msra.mxu0 %v3217
  %3223 = vmatprep.subr.bf16.mxu0 0
  %3224 = vmatpush1.bf16.msra.mxu0 %v3218
  %3225 = vmatprep.subr.bf16.mxu0 0
  %3226 = vmatpush1.bf16.msra.mxu0 0
  %3227 = vmatprep.subr.bf16.mxu0 0
  %3228 = vmatpush1.bf16.msra.mxu0 0
  %3229 = vmatprep.subr.bf16.mxu0 0
  %3230 = vmatpush1.bf16.msra.mxu0 0
  %3231 = vmatprep.subr.bf16.mxu0 0
  %3232 = vmatpush1.bf16.msra.mxu0 0
  %3233 = vmatprep.subr.bf16.mxu0 0
  %3234 = vmatpush1.bf16.msra.mxu0 0
  %3235 = vmatprep.subr.bf16.mxu0 0
  %3236 = vmatpush1.bf16.msra.mxu0 0
  %3237 = vmatprep.subr.bf16.mxu0 0
  %3238 = vmatpush1.bf16.msra.mxu0 0
  %3239 = vmatprep.subr.bf16.mxu0 0
  %3240 = vmatpush1.bf16.msra.mxu0 0
  %3241 = vmatprep.subr.bf16.mxu0 0
  %3242 = vmatpush1.bf16.msra.mxu0 0
  %3243 = vmatprep.subr.bf16.mxu0 0
  %3244 = vmatpush1.bf16.msra.mxu0 0
  %3245 = vmatprep.subr.bf16.mxu0 0
  %3246 = vmatpush1.bf16.msra.mxu0 0
  %3247 = vmatprep.subr.bf16.mxu0 0
  %3248 = vmatpush1.bf16.msra.mxu0 0
  %3249 = vmatprep.subr.bf16.mxu0 0
  %3250 = vmatpush1.bf16.msra.mxu0 0
  %3251 = vmatprep.subr.bf16.mxu0 0
  %3252 = vmatpush1.bf16.msra.mxu0 0
  %3253 = vmatprep.mubr.bf16.mxu0 0
  %3254 = vmatmul.mubr.bf16.gmra.mrb[0].mxu0 %v3163
  %v3255 = vpop.f32.mrb[0].mxu0
  %v3256 = vadd.f32 0.0, %v3255
  %v3257 = vpop.f32.mrb[0].mxu0
  %v3258 = vpop.f32.mrb[0].mxu0
  %v3259 = vpop.f32.mrb[0].mxu0
  %3260 = vdwg.mxu0
  %v3261 = vld [vmem:[%s387] sm:$0xf]
  %v3262 = vld [vmem:[%s387 + $0x4] sm:$0xf]
  %v3263 = vld [vmem:[%s387 + $0x8] sm:$0xf]
  %v3264 = vld [vmem:[%s387 + $0xc] sm:$0xf]
  %v3269 = vunpack.c.l.b16 %v3133
  %v3270 = vunpack.c.l.b16 %v3134
  %v3271 = vunpack.c.l.b16 %v3135
  %v3272 = vunpack.c.l.b16 %v3136
  %v3273 = vpack.c.b16 %v3270, %v3269
  %v3274 = vpack.c.b16 %v3272, %v3271
  %v3278 = vsel %vm62, %v3132, 0
  %3280 = vmatprep.subr.bf16.mxu0 0
  %3281 = vmatpush1.bf16.msra.mxu0 %v3273
  %3282 = vmatprep.subr.bf16.mxu0 0
  %3283 = vmatpush1.bf16.msra.mxu0 %v3274
  %3284 = vmatprep.subr.bf16.mxu0 0
  %3285 = vmatpush1.bf16.msra.mxu0 0
  %3286 = vmatprep.subr.bf16.mxu0 0
  %3287 = vmatpush1.bf16.msra.mxu0 0
  %3288 = vmatprep.subr.bf16.mxu0 0
  %3289 = vmatpush1.bf16.msra.mxu0 0
  %3290 = vmatprep.subr.bf16.mxu0 0
  %3291 = vmatpush1.bf16.msra.mxu0 0
  %3292 = vmatprep.subr.bf16.mxu0 0
  %3293 = vmatpush1.bf16.msra.mxu0 0
  %3294 = vmatprep.subr.bf16.mxu0 0
  %3295 = vmatpush1.bf16.msra.mxu0 0
  %3296 = vmatprep.subr.bf16.mxu0 0
  %3297 = vmatpush1.bf16.msra.mxu0 0
  %3298 = vmatprep.subr.bf16.mxu0 0
  %3299 = vmatpush1.bf16.msra.mxu0 0
  %3300 = vmatprep.subr.bf16.mxu0 0
  %3301 = vmatpush1.bf16.msra.mxu0 0
  %3302 = vmatprep.subr.bf16.mxu0 0
  %3303 = vmatpush1.bf16.msra.mxu0 0
  %3304 = vmatprep.subr.bf16.mxu0 0
  %3305 = vmatpush1.bf16.msra.mxu0 0
  %3306 = vmatprep.subr.bf16.mxu0 0
  %3307 = vmatpush1.bf16.msra.mxu0 0
  %3308 = vmatprep.subr.bf16.mxu0 0
  %3309 = vmatpush1.bf16.msra.mxu0 0
  %3310 = vmatprep.subr.bf16.mxu0 0
  %3311 = vmatpush1.bf16.msra.mxu0 0
  %3312 = vmatprep.mubr.bf16.mxu0 0
  %3313 = vmatmul.mubr.bf16.gmra.mrb[0].mxu0 %v3278
  %v3314 = vpop.f32.mrb[0].mxu0
  %v3315 = vadd.f32 %v3200, %v3314
  %v3316 = vpop.f32.mrb[0].mxu0
  %v3317 = vpop.f32.mrb[0].mxu0
  %v3318 = vpop.f32.mrb[0].mxu0
  %3319 = vdwg.mxu0
  %v3320 = vadd.f32 %v3315, %v451
  %v3321 = vxor.u32 %v3320, 2147483648
  %v3322 = vmul.f32 %v3321, 1.442695
  %v3323 = vpow.pop %v3322
  %v3324 = vadd.f32 %v3323, 1.0
  %v3325 = vrcp.pop %v3324
  %v3326 = vmul.f32 1.0, %v3325
  %v3331 = vunpack.c.l.b16 %v3137
  %v3332 = vunpack.c.l.b16 %v3138
  %v3333 = vunpack.c.l.b16 %v3139
  %v3334 = vunpack.c.l.b16 %v3140
  %v3335 = vpack.c.b16 %v3332, %v3331
  %v3336 = vpack.c.b16 %v3334, %v3333
  %3339 = vmatprep.subr.bf16.mxu0 0
  %3340 = vmatpush1.bf16.msra.mxu0 %v3335
  %3341 = vmatprep.subr.bf16.mxu0 0
  %3342 = vmatpush1.bf16.msra.mxu0 %v3336
  %3343 = vmatprep.subr.bf16.mxu0 0
  %3344 = vmatpush1.bf16.msra.mxu0 0
  %3345 = vmatprep.subr.bf16.mxu0 0
  %3346 = vmatpush1.bf16.msra.mxu0 0
  %3347 = vmatprep.subr.bf16.mxu0 0
  %3348 = vmatpush1.bf16.msra.mxu0 0
  %3349 = vmatprep.subr.bf16.mxu0 0
  %3350 = vmatpush1.bf16.msra.mxu0 0
  %3351 = vmatprep.subr.bf16.mxu0 0
  %3352 = vmatpush1.bf16.msra.mxu0 0
  %3353 = vmatprep.subr.bf16.mxu0 0
  %3354 = vmatpush1.bf16.msra.mxu0 0
  %3355 = vmatprep.subr.bf16.mxu0 0
  %3356 = vmatpush1.bf16.msra.mxu0 0
  %3357 = vmatprep.subr.bf16.mxu0 0
  %3358 = vmatpush1.bf16.msra.mxu0 0
  %3359 = vmatprep.subr.bf16.mxu0 0
  %3360 = vmatpush1.bf16.msra.mxu0 0
  %3361 = vmatprep.subr.bf16.mxu0 0
  %3362 = vmatpush1.bf16.msra.mxu0 0
  %3363 = vmatprep.subr.bf16.mxu0 0
  %3364 = vmatpush1.bf16.msra.mxu0 0
  %3365 = vmatprep.subr.bf16.mxu0 0
  %3366 = vmatpush1.bf16.msra.mxu0 0
  %3367 = vmatprep.subr.bf16.mxu0 0
  %3368 = vmatpush1.bf16.msra.mxu0 0
  %3369 = vmatprep.subr.bf16.mxu0 0
  %3370 = vmatpush1.bf16.msra.mxu0 0
  %3371 = vmatprep.mubr.bf16.mxu0 0
  %3372 = vmatmul.mubr.bf16.gmra.mrb[0].mxu0 %v3278
  %v3373 = vpop.f32.mrb[0].mxu0
  %v3374 = vadd.f32 %v3256, %v3373
  %v3375 = vpop.f32.mrb[0].mxu0
  %v3376 = vpop.f32.mrb[0].mxu0
  %v3377 = vpop.f32.mrb[0].mxu0
  %3378 = vdwg.mxu0
  %v3379 = vadd.f32 %v3374, %v516
  %v3380 = vxor.u32 %v3379, 2147483648
  %v3381 = vmul.f32 %v3380, 1.442695
  %v3382 = vpow.pop %v3381
  %v3383 = vadd.f32 %v3382, 1.0
  %v3384 = vrcp.pop %v3383
  %v3385 = vmul.f32 1.0, %v3384
  %v3390 = vunpack.c.l.b16 %v3141
  %v3391 = vunpack.c.l.b16 %v3142
  %v3392 = vunpack.c.l.b16 %v3143
  %v3393 = vunpack.c.l.b16 %v3144
  %v3394 = vpack.c.b16 %v3391, %v3390
  %v3395 = vpack.c.b16 %v3393, %v3392
  %3398 = vmatprep.subr.bf16.mxu0 0
  %3399 = vmatpush1.bf16.msra.mxu0 %v3394
  %3400 = vmatprep.subr.bf16.mxu0 0
  %3401 = vmatpush1.bf16.msra.mxu0 %v3395
  %3402 = vmatprep.subr.bf16.mxu0 0
  %3403 = vmatpush1.bf16.msra.mxu0 0
  %3404 = vmatprep.subr.bf16.mxu0 0
  %3405 = vmatpush1.bf16.msra.mxu0 0
  %3406 = vmatprep.subr.bf16.mxu0 0
  %3407 = vmatpush1.bf16.msra.mxu0 0
  %3408 = vmatprep.subr.bf16.mxu0 0
  %3409 = vmatpush1.bf16.msra.mxu0 0
  %3410 = vmatprep.subr.bf16.mxu0 0
  %3411 = vmatpush1.bf16.msra.mxu0 0
  %3412 = vmatprep.subr.bf16.mxu0 0
  %3413 = vmatpush1.bf16.msra.mxu0 0
  %3414 = vmatprep.subr.bf16.mxu0 0
  %3415 = vmatpush1.bf16.msra.mxu0 0
  %3416 = vmatprep.subr.bf16.mxu0 0
  %3417 = vmatpush1.bf16.msra.mxu0 0
  %3418 = vmatprep.subr.bf16.mxu0 0
  %3419 = vmatpush1.bf16.msra.mxu0 0
  %3420 = vmatprep.subr.bf16.mxu0 0
  %3421 = vmatpush1.bf16.msra.mxu0 0
  %3422 = vmatprep.subr.bf16.mxu0 0
  %3423 = vmatpush1.bf16.msra.mxu0 0
  %3424 = vmatprep.subr.bf16.mxu0 0
  %3425 = vmatpush1.bf16.msra.mxu0 0
  %3426 = vmatprep.subr.bf16.mxu0 0
  %3427 = vmatpush1.bf16.msra.mxu0 0
  %3428 = vmatprep.subr.bf16.mxu0 0
  %3429 = vmatpush1.bf16.msra.mxu0 0
  %3430 = vmatprep.mubr.bf16.mxu0 0
  %3431 = vmatmul.mubr.bf16.gmra.mrb[0].mxu0 %v3278
  %v3432 = vpop.f32.mrb[0].mxu0
  %v3433 = vadd.f32 %v529, %v3432
  %v3434 = vpop.f32.mrb[0].mxu0
  %v3435 = vpop.f32.mrb[0].mxu0
  %v3436 = vpop.f32.mrb[0].mxu0
  %3437 = vdwg.mxu0
  %v3442 = vunpack.c.l.b16 %v3261
  %v3443 = vunpack.c.l.b16 %v3262
  %v3444 = vunpack.c.l.b16 %v3263
  %v3445 = vunpack.c.l.b16 %v3264
  %v3446 = vpack.c.b16 %v3443, %v3442
  %v3447 = vpack.c.b16 %v3445, %v3444
  %3450 = vmatprep.subr.bf16.mxu0 0
  %3451 = vmatpush1.bf16.msra.mxu0 %v3446
  %3452 = vmatprep.subr.bf16.mxu0 0
  %3453 = vmatpush1.bf16.msra.mxu0 %v3447
  %3454 = vmatprep.subr.bf16.mxu0 0
  %3455 = vmatpush1.bf16.msra.mxu0 0
  %3456 = vmatprep.subr.bf16.mxu0 0
  %3457 = vmatpush1.bf16.msra.mxu0 0
  %3458 = vmatprep.subr.bf16.mxu0 0
  %3459 = vmatpush1.bf16.msra.mxu0 0
  %3460 = vmatprep.subr.bf16.mxu0 0
  %3461 = vmatpush1.bf16.msra.mxu0 0
  %3462 = vmatprep.subr.bf16.mxu0 0
  %3463 = vmatpush1.bf16.msra.mxu0 0
  %3464 = vmatprep.subr.bf16.mxu0 0
  %3465 = vmatpush1.bf16.msra.mxu0 0
  %3466 = vmatprep.subr.bf16.mxu0 0
  %3467 = vmatpush1.bf16.msra.mxu0 0
  %3468 = vmatprep.subr.bf16.mxu0 0
  %3469 = vmatpush1.bf16.msra.mxu0 0
  %3470 = vmatprep.subr.bf16.mxu0 0
  %3471 = vmatpush1.bf16.msra.mxu0 0
  %3472 = vmatprep.subr.bf16.mxu0 0
  %3473 = vmatpush1.bf16.msra.mxu0 0
  %3474 = vmatprep.subr.bf16.mxu0 0
  %3475 = vmatpush1.bf16.msra.mxu0 0
  %3476 = vmatprep.subr.bf16.mxu0 0
  %3477 = vmatpush1.bf16.msra.mxu0 0
  %3478 = vmatprep.subr.bf16.mxu0 0
  %3479 = vmatpush1.bf16.msra.mxu0 0
  %3480 = vmatprep.subr.bf16.mxu0 0
  %3481 = vmatpush1.bf16.msra.mxu0 0
  %3482 = vmatprep.mubr.bf16.mxu0 0
  %3483 = vmatmul.mubr.bf16.gmra.mrb[0].mxu0 %v3163
  %v3484 = vpop.f32.mrb[0].mxu0
  %v3485 = vadd.f32 %v587, %v3484
  %v3486 = vpop.f32.mrb[0].mxu0
  %v3487 = vpop.f32.mrb[0].mxu0
  %v3488 = vpop.f32.mrb[0].mxu0
  %3489 = vdwg.mxu0
  %v3490 = vmul.f32 %v3326, %v3485
  %v3491 = vadd.f32 %v3433, %v3490
  %v3492 = vtanh.pop %v3491
  %v3493 = vsub.f32 1.0, %v3385
  %v3494 = vmul.f32 %v3493, %v3492
  %v3495 = vmul.f32 %v3385, %v3131
  %v3496 = vadd.f32 %v3494, %v3495
  %3497 = vst.msk [vmem:[#allocation3] sm:$0x3] %vm252, %v3496
  %s3498 = scalar_lea.vmem %s7, 10
  %3499 = vst.msk [vmem:[%s3498] sm:$0x3] %vm252, %v3496
  %v3500 = vld [vmem:[#allocation2] sm:$0x3]
  %v3501 = vpack.c.bf16 %v3500, %v3500
  %v3502 = vld [vmem:[%s1] sm:$0xf]
  %v3503 = vld [vmem:[%s1 + $0x4] sm:$0xf]
  %v3504 = vld [vmem:[%s1 + $0x8] sm:$0xf]
  %v3505 = vld [vmem:[%s1 + $0xc] sm:$0xf]
  %v3510 = vunpack.c.l.b16 %v3502
  %v3511 = vunpack.c.l.b16 %v3503
  %v3512 = vunpack.c.l.b16 %v3504
  %v3513 = vunpack.c.l.b16 %v3505
  %v3514 = vpack.c.b16 %v3511, %v3510
  %v3515 = vpack.c.b16 %v3513, %v3512
  %v3519 = vsel %vm62, %v3501, 0
  %3521 = vmatprep.subr.bf16.mxu0 0
  %3522 = vmatpush1.bf16.msra.mxu0 %v3514
  %3523 = vmatprep.subr.bf16.mxu0 0
  %3524 = vmatpush1.bf16.msra.mxu0 %v3515
  %3525 = vmatprep.subr.bf16.mxu0 0
  %3526 = vmatpush1.bf16.msra.mxu0 0
  %3527 = vmatprep.subr.bf16.mxu0 0
  %3528 = vmatpush1.bf16.msra.mxu0 0
  %3529 = vmatprep.subr.bf16.mxu0 0
  %3530 = vmatpush1.bf16.msra.mxu0 0
  %3531 = vmatprep.subr.bf16.mxu0 0
  %3532 = vmatpush1.bf16.msra.mxu0 0
  %3533 = vmatprep.subr.bf16.mxu0 0
  %3534 = vmatpush1.bf16.msra.mxu0 0
  %3535 = vmatprep.subr.bf16.mxu0 0
  %3536 = vmatpush1.bf16.msra.mxu0 0
  %3537 = vmatprep.subr.bf16.mxu0 0
  %3538 = vmatpush1.bf16.msra.mxu0 0
  %3539 = vmatprep.subr.bf16.mxu0 0
  %3540 = vmatpush1.bf16.msra.mxu0 0
  %3541 = vmatprep.subr.bf16.mxu0 0
  %3542 = vmatpush1.bf16.msra.mxu0 0
  %3543 = vmatprep.subr.bf16.mxu0 0
  %3544 = vmatpush1.bf16.msra.mxu0 0
  %3545 = vmatprep.subr.bf16.mxu0 0
  %3546 = vmatpush1.bf16.msra.mxu0 0
  %3547 = vmatprep.subr.bf16.mxu0 0
  %3548 = vmatpush1.bf16.msra.mxu0 0
  %3549 = vmatprep.subr.bf16.mxu0 0
  %3550 = vmatpush1.bf16.msra.mxu0 0
  %3551 = vmatprep.subr.bf16.mxu0 0
  %3552 = vmatpush1.bf16.msra.mxu0 0
  %3553 = vmatprep.mubr.bf16.mxu0 0
  %3554 = vmatmul.mubr.bf16.gmra.mrb[0].mxu0 %v3519
  %v3555 = vpop.f32.mrb[0].mxu0
  %v3556 = vadd.f32 0.0, %v3555
  %v3557 = vpop.f32.mrb[0].mxu0
  %v3558 = vpop.f32.mrb[0].mxu0
  %v3559 = vpop.f32.mrb[0].mxu0
  %3560 = vdwg.mxu0
  %v3561 = vld [vmem:[%s106] sm:$0xf]
  %v3562 = vld [vmem:[%s106 + $0x4] sm:$0xf]
  %v3563 = vld [vmem:[%s106 + $0x8] sm:$0xf]
  %v3564 = vld [vmem:[%s106 + $0xc] sm:$0xf]
  %v3569 = vunpack.c.l.b16 %v3561
  %v3570 = vunpack.c.l.b16 %v3562
  %v3571 = vunpack.c.l.b16 %v3563
  %v3572 = vunpack.c.l.b16 %v3564
  %v3573 = vpack.c.b16 %v3570, %v3569
  %v3574 = vpack.c.b16 %v3572, %v3571
  %3577 = vmatprep.subr.bf16.mxu0 0
  %3578 = vmatpush1.bf16.msra.mxu0 %v3573
  %3579 = vmatprep.subr.bf16.mxu0 0
  %3580 = vmatpush1.bf16.msra.mxu0 %v3574
  %3581 = vmatprep.subr.bf16.mxu0 0
  %3582 = vmatpush1.bf16.msra.mxu0 0
  %3583 = vmatprep.subr.bf16.mxu0 0
  %3584 = vmatpush1.bf16.msra.mxu0 0
  %3585 = vmatprep.subr.bf16.mxu0 0
  %3586 = vmatpush1.bf16.msra.mxu0 0
  %3587 = vmatprep.subr.bf16.mxu0 0
  %3588 = vmatpush1.bf16.msra.mxu0 0
  %3589 = vmatprep.subr.bf16.mxu0 0
  %3590 = vmatpush1.bf16.msra.mxu0 0
  %3591 = vmatprep.subr.bf16.mxu0 0
  %3592 = vmatpush1.bf16.msra.mxu0 0
  %3593 = vmatprep.subr.bf16.mxu0 0
  %3594 = vmatpush1.bf16.msra.mxu0 0
  %3595 = vmatprep.subr.bf16.mxu0 0
  %3596 = vmatpush1.bf16.msra.mxu0 0
  %3597 = vmatprep.subr.bf16.mxu0 0
  %3598 = vmatpush1.bf16.msra.mxu0 0
  %3599 = vmatprep.subr.bf16.mxu0 0
  %3600 = vmatpush1.bf16.msra.mxu0 0
  %3601 = vmatprep.subr.bf16.mxu0 0
  %3602 = vmatpush1.bf16.msra.mxu0 0
  %3603 = vmatprep.subr.bf16.mxu0 0
  %3604 = vmatpush1.bf16.msra.mxu0 0
  %3605 = vmatprep.subr.bf16.mxu0 0
  %3606 = vmatpush1.bf16.msra.mxu0 0
  %3607 = vmatprep.subr.bf16.mxu0 0
  %3608 = vmatpush1.bf16.msra.mxu0 0
  %3609 = vmatprep.mubr.bf16.mxu0 0
  %3610 = vmatmul.mubr.bf16.gmra.mrb[0].mxu0 %v3519
  %v3611 = vpop.f32.mrb[0].mxu0
  %v3612 = vadd.f32 0.0, %v3611
  %v3613 = vpop.f32.mrb[0].mxu0
  %v3614 = vpop.f32.mrb[0].mxu0
  %v3615 = vpop.f32.mrb[0].mxu0
  %3616 = vdwg.mxu0
  %v3617 = vld [vmem:[%s163] sm:$0xf]
  %v3618 = vld [vmem:[%s163 + $0x4] sm:$0xf]
  %v3619 = vld [vmem:[%s163 + $0x8] sm:$0xf]
  %v3620 = vld [vmem:[%s163 + $0xc] sm:$0xf]
  %s3621 = scalar_lea.vmem %s0, 12
  %v3622 = vld [vmem:[%s3621] sm:$0x3]
  %s3623 = scalar_lea.vmem %s0, 28
  %v3624 = vld [vmem:[%s3623] sm:$0x3]
  %s3625 = scalar_lea.vmem %s0, 44
  %v3626 = vld [vmem:[%s3625] sm:$0x3]
  %v3627 = vadd.f32 %v3622, %v3556
  %v3628 = vxor.u32 %v3627, 2147483648
  %v3629 = vmul.f32 %v3628, 1.442695
  %v3630 = vpow.pop %v3629
  %v3631 = vadd.f32 %v3630, 1.0
  %v3632 = vrcp.pop %v3631
  %v3633 = vmul.f32 1.0, %v3632
  %v3634 = vadd.f32 %v3624, %v3612
  %v3635 = vxor.u32 %v3634, 2147483648
  %v3636 = vmul.f32 %v3635, 1.442695
  %v3637 = vpow.pop %v3636
  %v3638 = vadd.f32 %v3637, 1.0
  %v3639 = vrcp.pop %v3638
  %v3640 = vmul.f32 1.0, %v3639
  %v3645 = vunpack.c.l.b16 %v3617
  %v3646 = vunpack.c.l.b16 %v3618
  %v3647 = vunpack.c.l.b16 %v3619
  %v3648 = vunpack.c.l.b16 %v3620
  %v3649 = vpack.c.b16 %v3646, %v3645
  %v3650 = vpack.c.b16 %v3648, %v3647
  %3653 = vmatprep.subr.bf16.mxu0 0
  %3654 = vmatpush1.bf16.msra.mxu0 %v3649
  %3655 = vmatprep.subr.bf16.mxu0 0
  %3656 = vmatpush1.bf16.msra.mxu0 %v3650
  %3657 = vmatprep.subr.bf16.mxu0 0
  %3658 = vmatpush1.bf16.msra.mxu0 0
  %3659 = vmatprep.subr.bf16.mxu0 0
  %3660 = vmatpush1.bf16.msra.mxu0 0
  %3661 = vmatprep.subr.bf16.mxu0 0
  %3662 = vmatpush1.bf16.msra.mxu0 0
  %3663 = vmatprep.subr.bf16.mxu0 0
  %3664 = vmatpush1.bf16.msra.mxu0 0
  %3665 = vmatprep.subr.bf16.mxu0 0
  %3666 = vmatpush1.bf16.msra.mxu0 0
  %3667 = vmatprep.subr.bf16.mxu0 0
  %3668 = vmatpush1.bf16.msra.mxu0 0
  %3669 = vmatprep.subr.bf16.mxu0 0
  %3670 = vmatpush1.bf16.msra.mxu0 0
  %3671 = vmatprep.subr.bf16.mxu0 0
  %3672 = vmatpush1.bf16.msra.mxu0 0
  %3673 = vmatprep.subr.bf16.mxu0 0
  %3674 = vmatpush1.bf16.msra.mxu0 0
  %3675 = vmatprep.subr.bf16.mxu0 0
  %3676 = vmatpush1.bf16.msra.mxu0 0
  %3677 = vmatprep.subr.bf16.mxu0 0
  %3678 = vmatpush1.bf16.msra.mxu0 0
  %3679 = vmatprep.subr.bf16.mxu0 0
  %3680 = vmatpush1.bf16.msra.mxu0 0
  %3681 = vmatprep.subr.bf16.mxu0 0
  %3682 = vmatpush1.bf16.msra.mxu0 0
  %3683 = vmatprep.subr.bf16.mxu0 0
  %3684 = vmatpush1.bf16.msra.mxu0 0
  %3685 = vmatprep.mubr.bf16.mxu0 0
  %3686 = vmatmul.mubr.bf16.gmra.mrb[0].mxu0 %v3519
  %v3687 = vpop.f32.mrb[0].mxu0
  %v3688 = vadd.f32 %v191, %v3687
  %v3689 = vpop.f32.mrb[0].mxu0
  %v3690 = vpop.f32.mrb[0].mxu0
  %v3691 = vpop.f32.mrb[0].mxu0
  %3692 = vdwg.mxu0
  %v3693 = vmul.f32 %v3633, %v3688
  %v3694 = vadd.f32 %v3626, %v3693
  %v3695 = vtanh.pop %v3694
  %v3696 = vsub.f32 1.0, %v3640
  %v3697 = vmul.f32 %v3696, %v3695
  %v3698 = vmul.f32 %v3640, %v3500
  %v3699 = vadd.f32 %v3697, %v3698
  %3700 = vst.msk [vmem:[#allocation2] sm:$0x3] %vm252, %v3699
  %v3701 = vld [vmem:[#allocation3] sm:$0x3]
  %v3702 = vpack.c.bf16 %v3699, %v3699
  %v3703 = vld [vmem:[%s2] sm:$0xf]
  %v3704 = vld [vmem:[%s2 + $0x4] sm:$0xf]
  %v3705 = vld [vmem:[%s2 + $0x8] sm:$0xf]
  %v3706 = vld [vmem:[%s2 + $0xc] sm:$0xf]
  %v3707 = vld [vmem:[%s260] sm:$0xf]
  %v3708 = vld [vmem:[%s260 + $0x4] sm:$0xf]
  %v3709 = vld [vmem:[%s260 + $0x8] sm:$0xf]
  %v3710 = vld [vmem:[%s260 + $0xc] sm:$0xf]
  %v3711 = vld [vmem:[%s265] sm:$0xf]
  %v3712 = vld [vmem:[%s265 + $0x4] sm:$0xf]
  %v3713 = vld [vmem:[%s265 + $0x8] sm:$0xf]
  %v3714 = vld [vmem:[%s265 + $0xc] sm:$0xf]
  %v3715 = vpack.c.bf16 %v3701, %v3701
  %v3716 = vld [vmem:[%s3] sm:$0xf]
  %v3717 = vld [vmem:[%s3 + $0x4] sm:$0xf]
  %v3718 = vld [vmem:[%s3 + $0x8] sm:$0xf]
  %v3719 = vld [vmem:[%s3 + $0xc] sm:$0xf]
  %v3724 = vunpack.c.l.b16 %v3716
  %v3725 = vunpack.c.l.b16 %v3717
  %v3726 = vunpack.c.l.b16 %v3718
  %v3727 = vunpack.c.l.b16 %v3719
  %v3728 = vpack.c.b16 %v3725, %v3724
  %v3729 = vpack.c.b16 %v3727, %v3726
  %v3733 = vsel %vm62, %v3715, 0
  %3735 = vmatprep.subr.bf16.mxu0 0
  %3736 = vmatpush1.bf16.msra.mxu0 %v3728
  %3737 = vmatprep.subr.bf16.mxu0 0
  %3738 = vmatpush1.bf16.msra.mxu0 %v3729
  %3739 = vmatprep.subr.bf16.mxu0 0
  %3740 = vmatpush1.bf16.msra.mxu0 0
  %3741 = vmatprep.subr.bf16.mxu0 0
  %3742 = vmatpush1.bf16.msra.mxu0 0
  %3743 = vmatprep.subr.bf16.mxu0 0
  %3744 = vmatpush1.bf16.msra.mxu0 0
  %3745 = vmatprep.subr.bf16.mxu0 0
  %3746 = vmatpush1.bf16.msra.mxu0 0
  %3747 = vmatprep.subr.bf16.mxu0 0
  %3748 = vmatpush1.bf16.msra.mxu0 0
  %3749 = vmatprep.subr.bf16.mxu0 0
  %3750 = vmatpush1.bf16.msra.mxu0 0
  %3751 = vmatprep.subr.bf16.mxu0 0
  %3752 = vmatpush1.bf16.msra.mxu0 0
  %3753 = vmatprep.subr.bf16.mxu0 0
  %3754 = vmatpush1.bf16.msra.mxu0 0
  %3755 = vmatprep.subr.bf16.mxu0 0
  %3756 = vmatpush1.bf16.msra.mxu0 0
  %3757 = vmatprep.subr.bf16.mxu0 0
  %3758 = vmatpush1.bf16.msra.mxu0 0
  %3759 = vmatprep.subr.bf16.mxu0 0
  %3760 = vmatpush1.bf16.msra.mxu0 0
  %3761 = vmatprep.subr.bf16.mxu0 0
  %3762 = vmatpush1.bf16.msra.mxu0 0
  %3763 = vmatprep.subr.bf16.mxu0 0
  %3764 = vmatpush1.bf16.msra.mxu0 0
  %3765 = vmatprep.subr.bf16.mxu0 0
  %3766 = vmatpush1.bf16.msra.mxu0 0
  %3767 = vmatprep.mubr.bf16.mxu0 0
  %3768 = vmatmul.mubr.bf16.gmra.mrb[0].mxu0 %v3733
  %v3769 = vpop.f32.mrb[0].mxu0
  %v3770 = vadd.f32 0.0, %v3769
  %v3771 = vpop.f32.mrb[0].mxu0
  %v3772 = vpop.f32.mrb[0].mxu0
  %v3773 = vpop.f32.mrb[0].mxu0
  %3774 = vdwg.mxu0
  %v3775 = vld [vmem:[%s330] sm:$0xf]
  %v3776 = vld [vmem:[%s330 + $0x4] sm:$0xf]
  %v3777 = vld [vmem:[%s330 + $0x8] sm:$0xf]
  %v3778 = vld [vmem:[%s330 + $0xc] sm:$0xf]
  %v3783 = vunpack.c.l.b16 %v3775
  %v3784 = vunpack.c.l.b16 %v3776
  %v3785 = vunpack.c.l.b16 %v3777
  %v3786 = vunpack.c.l.b16 %v3778
  %v3787 = vpack.c.b16 %v3784, %v3783
  %v3788 = vpack.c.b16 %v3786, %v3785
  %3791 = vmatprep.subr.bf16.mxu0 0
  %3792 = vmatpush1.bf16.msra.mxu0 %v3787
  %3793 = vmatprep.subr.bf16.mxu0 0
  %3794 = vmatpush1.bf16.msra.mxu0 %v3788
  %3795 = vmatprep.subr.bf16.mxu0 0
  %3796 = vmatpush1.bf16.msra.mxu0 0
  %3797 = vmatprep.subr.bf16.mxu0 0
  %3798 = vmatpush1.bf16.msra.mxu0 0
  %3799 = vmatprep.subr.bf16.mxu0 0
  %3800 = vmatpush1.bf16.msra.mxu0 0
  %3801 = vmatprep.subr.bf16.mxu0 0
  %3802 = vmatpush1.bf16.msra.mxu0 0
  %3803 = vmatprep.subr.bf16.mxu0 0
  %3804 = vmatpush1.bf16.msra.mxu0 0
  %3805 = vmatprep.subr.bf16.mxu0 0
  %3806 = vmatpush1.bf16.msra.mxu0 0
  %3807 = vmatprep.subr.bf16.mxu0 0
  %3808 = vmatpush1.bf16.msra.mxu0 0
  %3809 = vmatprep.subr.bf16.mxu0 0
  %3810 = vmatpush1.bf16.msra.mxu0 0
  %3811 = vmatprep.subr.bf16.mxu0 0
  %3812 = vmatpush1.bf16.msra.mxu0 0
  %3813 = vmatprep.subr.bf16.mxu0 0
  %3814 = vmatpush1.bf16.msra.mxu0 0
  %3815 = vmatprep.subr.bf16.mxu0 0
  %3816 = vmatpush1.bf16.msra.mxu0 0
  %3817 = vmatprep.subr.bf16.mxu0 0
  %3818 = vmatpush1.bf16.msra.mxu0 0
  %3819 = vmatprep.subr.bf16.mxu0 0
  %3820 = vmatpush1.bf16.msra.mxu0 0
  %3821 = vmatprep.subr.bf16.mxu0 0
  %3822 = vmatpush1.bf16.msra.mxu0 0
  %3823 = vmatprep.mubr.bf16.mxu0 0
  %3824 = vmatmul.mubr.bf16.gmra.mrb[0].mxu0 %v3733
  %v3825 = vpop.f32.mrb[0].mxu0
  %v3826 = vadd.f32 0.0, %v3825
  %v3827 = vpop.f32.mrb[0].mxu0
  %v3828 = vpop.f32.mrb[0].mxu0
  %v3829 = vpop.f32.mrb[0].mxu0
  %3830 = vdwg.mxu0
  %v3831 = vld [vmem:[%s387] sm:$0xf]
  %v3832 = vld [vmem:[%s387 + $0x4] sm:$0xf]
  %v3833 = vld [vmem:[%s387 + $0x8] sm:$0xf]
  %v3834 = vld [vmem:[%s387 + $0xc] sm:$0xf]
  %v3839 = vunpack.c.l.b16 %v3703
  %v3840 = vunpack.c.l.b16 %v3704
  %v3841 = vunpack.c.l.b16 %v3705
  %v3842 = vunpack.c.l.b16 %v3706
  %v3843 = vpack.c.b16 %v3840, %v3839
  %v3844 = vpack.c.b16 %v3842, %v3841
  %v3848 = vsel %vm62, %v3702, 0
  %3850 = vmatprep.subr.bf16.mxu0 0
  %3851 = vmatpush1.bf16.msra.mxu0 %v3843
  %3852 = vmatprep.subr.bf16.mxu0 0
  %3853 = vmatpush1.bf16.msra.mxu0 %v3844
  %3854 = vmatprep.subr.bf16.mxu0 0
  %3855 = vmatpush1.bf16.msra.mxu0 0
  %3856 = vmatprep.subr.bf16.mxu0 0
  %3857 = vmatpush1.bf16.msra.mxu0 0
  %3858 = vmatprep.subr.bf16.mxu0 0
  %3859 = vmatpush1.bf16.msra.mxu0 0
  %3860 = vmatprep.subr.bf16.mxu0 0
  %3861 = vmatpush1.bf16.msra.mxu0 0
  %3862 = vmatprep.subr.bf16.mxu0 0
  %3863 = vmatpush1.bf16.msra.mxu0 0
  %3864 = vmatprep.subr.bf16.mxu0 0
  %3865 = vmatpush1.bf16.msra.mxu0 0
  %3866 = vmatprep.subr.bf16.mxu0 0
  %3867 = vmatpush1.bf16.msra.mxu0 0
  %3868 = vmatprep.subr.bf16.mxu0 0
  %3869 = vmatpush1.bf16.msra.mxu0 0
  %3870 = vmatprep.subr.bf16.mxu0 0
  %3871 = vmatpush1.bf16.msra.mxu0 0
  %3872 = vmatprep.subr.bf16.mxu0 0
  %3873 = vmatpush1.bf16.msra.mxu0 0
  %3874 = vmatprep.subr.bf16.mxu0 0
  %3875 = vmatpush1.bf16.msra.mxu0 0
  %3876 = vmatprep.subr.bf16.mxu0 0
  %3877 = vmatpush1.bf16.msra.mxu0 0
  %3878 = vmatprep.subr.bf16.mxu0 0
  %3879 = vmatpush1.bf16.msra.mxu0 0
  %3880 = vmatprep.subr.bf16.mxu0 0
  %3881 = vmatpush1.bf16.msra.mxu0 0
  %3882 = vmatprep.mubr.bf16.mxu0 0
  %3883 = vmatmul.mubr.bf16.gmra.mrb[0].mxu0 %v3848
  %v3884 = vpop.f32.mrb[0].mxu0
  %v3885 = vadd.f32 %v3770, %v3884
  %v3886 = vpop.f32.mrb[0].mxu0
  %v3887 = vpop.f32.mrb[0].mxu0
  %v3888 = vpop.f32.mrb[0].mxu0
  %3889 = vdwg.mxu0
  %v3890 = vadd.f32 %v3885, %v451
  %v3891 = vxor.u32 %v3890, 2147483648
  %v3892 = vmul.f32 %v3891, 1.442695
  %v3893 = vpow.pop %v3892
  %v3894 = vadd.f32 %v3893, 1.0
  %v3895 = vrcp.pop %v3894
  %v3896 = vmul.f32 1.0, %v3895
  %v3901 = vunpack.c.l.b16 %v3707
  %v3902 = vunpack.c.l.b16 %v3708
  %v3903 = vunpack.c.l.b16 %v3709
  %v3904 = vunpack.c.l.b16 %v3710
  %v3905 = vpack.c.b16 %v3902, %v3901
  %v3906 = vpack.c.b16 %v3904, %v3903
  %3909 = vmatprep.subr.bf16.mxu0 0
  %3910 = vmatpush1.bf16.msra.mxu0 %v3905
  %3911 = vmatprep.subr.bf16.mxu0 0
  %3912 = vmatpush1.bf16.msra.mxu0 %v3906
  %3913 = vmatprep.subr.bf16.mxu0 0
  %3914 = vmatpush1.bf16.msra.mxu0 0
  %3915 = vmatprep.subr.bf16.mxu0 0
  %3916 = vmatpush1.bf16.msra.mxu0 0
  %3917 = vmatprep.subr.bf16.mxu0 0
  %3918 = vmatpush1.bf16.msra.mxu0 0
  %3919 = vmatprep.subr.bf16.mxu0 0
  %3920 = vmatpush1.bf16.msra.mxu0 0
  %3921 = vmatprep.subr.bf16.mxu0 0
  %3922 = vmatpush1.bf16.msra.mxu0 0
  %3923 = vmatprep.subr.bf16.mxu0 0
  %3924 = vmatpush1.bf16.msra.mxu0 0
  %3925 = vmatprep.subr.bf16.mxu0 0
  %3926 = vmatpush1.bf16.msra.mxu0 0
  %3927 = vmatprep.subr.bf16.mxu0 0
  %3928 = vmatpush1.bf16.msra.mxu0 0
  %3929 = vmatprep.subr.bf16.mxu0 0
  %3930 = vmatpush1.bf16.msra.mxu0 0
  %3931 = vmatprep.subr.bf16.mxu0 0
  %3932 = vmatpush1.bf16.msra.mxu0 0
  %3933 = vmatprep.subr.bf16.mxu0 0
  %3934 = vmatpush1.bf16.msra.mxu0 0
  %3935 = vmatprep.subr.bf16.mxu0 0
  %3936 = vmatpush1.bf16.msra.mxu0 0
  %3937 = vmatprep.subr.bf16.mxu0 0
  %3938 = vmatpush1.bf16.msra.mxu0 0
  %3939 = vmatprep.subr.bf16.mxu0 0
  %3940 = vmatpush1.bf16.msra.mxu0 0
  %3941 = vmatprep.mubr.bf16.mxu0 0
  %3942 = vmatmul.mubr.bf16.gmra.mrb[0].mxu0 %v3848
  %v3943 = vpop.f32.mrb[0].mxu0
  %v3944 = vadd.f32 %v3826, %v3943
  %v3945 = vpop.f32.mrb[0].mxu0
  %v3946 = vpop.f32.mrb[0].mxu0
  %v3947 = vpop.f32.mrb[0].mxu0
  %3948 = vdwg.mxu0
  %v3949 = vadd.f32 %v3944, %v516
  %v3950 = vxor.u32 %v3949, 2147483648
  %v3951 = vmul.f32 %v3950, 1.442695
  %v3952 = vpow.pop %v3951
  %v3953 = vadd.f32 %v3952, 1.0
  %v3954 = vrcp.pop %v3953
  %v3955 = vmul.f32 1.0, %v3954
  %v3960 = vunpack.c.l.b16 %v3711
  %v3961 = vunpack.c.l.b16 %v3712
  %v3962 = vunpack.c.l.b16 %v3713
  %v3963 = vunpack.c.l.b16 %v3714
  %v3964 = vpack.c.b16 %v3961, %v3960
  %v3965 = vpack.c.b16 %v3963, %v3962
  %3968 = vmatprep.subr.bf16.mxu0 0
  %3969 = vmatpush1.bf16.msra.mxu0 %v3964
  %3970 = vmatprep.subr.bf16.mxu0 0
  %3971 = vmatpush1.bf16.msra.mxu0 %v3965
  %3972 = vmatprep.subr.bf16.mxu0 0
  %3973 = vmatpush1.bf16.msra.mxu0 0
  %3974 = vmatprep.subr.bf16.mxu0 0
  %3975 = vmatpush1.bf16.msra.mxu0 0
  %3976 = vmatprep.subr.bf16.mxu0 0
  %3977 = vmatpush1.bf16.msra.mxu0 0
  %3978 = vmatprep.subr.bf16.mxu0 0
  %3979 = vmatpush1.bf16.msra.mxu0 0
  %3980 = vmatprep.subr.bf16.mxu0 0
  %3981 = vmatpush1.bf16.msra.mxu0 0
  %3982 = vmatprep.subr.bf16.mxu0 0
  %3983 = vmatpush1.bf16.msra.mxu0 0
  %3984 = vmatprep.subr.bf16.mxu0 0
  %3985 = vmatpush1.bf16.msra.mxu0 0
  %3986 = vmatprep.subr.bf16.mxu0 0
  %3987 = vmatpush1.bf16.msra.mxu0 0
  %3988 = vmatprep.subr.bf16.mxu0 0
  %3989 = vmatpush1.bf16.msra.mxu0 0
  %3990 = vmatprep.subr.bf16.mxu0 0
  %3991 = vmatpush1.bf16.msra.mxu0 0
  %3992 = vmatprep.subr.bf16.mxu0 0
  %3993 = vmatpush1.bf16.msra.mxu0 0
  %3994 = vmatprep.subr.bf16.mxu0 0
  %3995 = vmatpush1.bf16.msra.mxu0 0
  %3996 = vmatprep.subr.bf16.mxu0 0
  %3997 = vmatpush1.bf16.msra.mxu0 0
  %3998 = vmatprep.subr.bf16.mxu0 0
  %3999 = vmatpush1.bf16.msra.mxu0 0
  %4000 = vmatprep.mubr.bf16.mxu0 0
  %4001 = vmatmul.mubr.bf16.gmra.mrb[0].mxu0 %v3848
  %v4002 = vpop.f32.mrb[0].mxu0
  %v4003 = vadd.f32 %v529, %v4002
  %v4004 = vpop.f32.mrb[0].mxu0
  %v4005 = vpop.f32.mrb[0].mxu0
  %v4006 = vpop.f32.mrb[0].mxu0
  %4007 = vdwg.mxu0
  %v4012 = vunpack.c.l.b16 %v3831
  %v4013 = vunpack.c.l.b16 %v3832
  %v4014 = vunpack.c.l.b16 %v3833
  %v4015 = vunpack.c.l.b16 %v3834
  %v4016 = vpack.c.b16 %v4013, %v4012
  %v4017 = vpack.c.b16 %v4015, %v4014
  %4020 = vmatprep.subr.bf16.mxu0 0
  %4021 = vmatpush1.bf16.msra.mxu0 %v4016
  %4022 = vmatprep.subr.bf16.mxu0 0
  %4023 = vmatpush1.bf16.msra.mxu0 %v4017
  %4024 = vmatprep.subr.bf16.mxu0 0
  %4025 = vmatpush1.bf16.msra.mxu0 0
  %4026 = vmatprep.subr.bf16.mxu0 0
  %4027 = vmatpush1.bf16.msra.mxu0 0
  %4028 = vmatprep.subr.bf16.mxu0 0
  %4029 = vmatpush1.bf16.msra.mxu0 0
  %4030 = vmatprep.subr.bf16.mxu0 0
  %4031 = vmatpush1.bf16.msra.mxu0 0
  %4032 = vmatprep.subr.bf16.mxu0 0
  %4033 = vmatpush1.bf16.msra.mxu0 0
  %4034 = vmatprep.subr.bf16.mxu0 0
  %4035 = vmatpush1.bf16.msra.mxu0 0
  %4036 = vmatprep.subr.bf16.mxu0 0
  %4037 = vmatpush1.bf16.msra.mxu0 0
  %4038 = vmatprep.subr.bf16.mxu0 0
  %4039 = vmatpush1.bf16.msra.mxu0 0
  %4040 = vmatprep.subr.bf16.mxu0 0
  %4041 = vmatpush1.bf16.msra.mxu0 0
  %4042 = vmatprep.subr.bf16.mxu0 0
  %4043 = vmatpush1.bf16.msra.mxu0 0
  %4044 = vmatprep.subr.bf16.mxu0 0
  %4045 = vmatpush1.bf16.msra.mxu0 0
  %4046 = vmatprep.subr.bf16.mxu0 0
  %4047 = vmatpush1.bf16.msra.mxu0 0
  %4048 = vmatprep.subr.bf16.mxu0 0
  %4049 = vmatpush1.bf16.msra.mxu0 0
  %4050 = vmatprep.subr.bf16.mxu0 0
  %4051 = vmatpush1.bf16.msra.mxu0 0
  %4052 = vmatprep.mubr.bf16.mxu0 0
  %4053 = vmatmul.mubr.bf16.gmra.mrb[0].mxu0 %v3733
  %v4054 = vpop.f32.mrb[0].mxu0
  %v4055 = vadd.f32 %v587, %v4054
  %v4056 = vpop.f32.mrb[0].mxu0
  %v4057 = vpop.f32.mrb[0].mxu0
  %v4058 = vpop.f32.mrb[0].mxu0
  %4059 = vdwg.mxu0
  %v4060 = vmul.f32 %v3896, %v4055
  %v4061 = vadd.f32 %v4003, %v4060
  %v4062 = vtanh.pop %v4061
  %v4063 = vsub.f32 1.0, %v3955
  %v4064 = vmul.f32 %v4063, %v4062
  %v4065 = vmul.f32 %v3955, %v3701
  %v4066 = vadd.f32 %v4064, %v4065
  %4067 = vst.msk [vmem:[#allocation3] sm:$0x3] %vm252, %v4066
  %s4068 = scalar_lea.vmem %s7, 12
  %4069 = vst.msk [vmem:[%s4068] sm:$0x3] %vm252, %v4066
  %v4070 = vld [vmem:[#allocation2] sm:$0x3]
  %v4071 = vpack.c.bf16 %v4070, %v4070
  %v4072 = vld [vmem:[%s1] sm:$0xf]
  %v4073 = vld [vmem:[%s1 + $0x4] sm:$0xf]
  %v4074 = vld [vmem:[%s1 + $0x8] sm:$0xf]
  %v4075 = vld [vmem:[%s1 + $0xc] sm:$0xf]
  %v4080 = vunpack.c.l.b16 %v4072
  %v4081 = vunpack.c.l.b16 %v4073
  %v4082 = vunpack.c.l.b16 %v4074
  %v4083 = vunpack.c.l.b16 %v4075
  %v4084 = vpack.c.b16 %v4081, %v4080
  %v4085 = vpack.c.b16 %v4083, %v4082
  %v4089 = vsel %vm62, %v4071, 0
  %4091 = vmatprep.subr.bf16.mxu0 0
  %4092 = vmatpush1.bf16.msra.mxu0 %v4084
  %4093 = vmatprep.subr.bf16.mxu0 0
  %4094 = vmatpush1.bf16.msra.mxu0 %v4085
  %4095 = vmatprep.subr.bf16.mxu0 0
  %4096 = vmatpush1.bf16.msra.mxu0 0
  %4097 = vmatprep.subr.bf16.mxu0 0
  %4098 = vmatpush1.bf16.msra.mxu0 0
  %4099 = vmatprep.subr.bf16.mxu0 0
  %4100 = vmatpush1.bf16.msra.mxu0 0
  %4101 = vmatprep.subr.bf16.mxu0 0
  %4102 = vmatpush1.bf16.msra.mxu0 0
  %4103 = vmatprep.subr.bf16.mxu0 0
  %4104 = vmatpush1.bf16.msra.mxu0 0
  %4105 = vmatprep.subr.bf16.mxu0 0
  %4106 = vmatpush1.bf16.msra.mxu0 0
  %4107 = vmatprep.subr.bf16.mxu0 0
  %4108 = vmatpush1.bf16.msra.mxu0 0
  %4109 = vmatprep.subr.bf16.mxu0 0
  %4110 = vmatpush1.bf16.msra.mxu0 0
  %4111 = vmatprep.subr.bf16.mxu0 0
  %4112 = vmatpush1.bf16.msra.mxu0 0
  %4113 = vmatprep.subr.bf16.mxu0 0
  %4114 = vmatpush1.bf16.msra.mxu0 0
  %4115 = vmatprep.subr.bf16.mxu0 0
  %4116 = vmatpush1.bf16.msra.mxu0 0
  %4117 = vmatprep.subr.bf16.mxu0 0
  %4118 = vmatpush1.bf16.msra.mxu0 0
  %4119 = vmatprep.subr.bf16.mxu0 0
  %4120 = vmatpush1.bf16.msra.mxu0 0
  %4121 = vmatprep.subr.bf16.mxu0 0
  %4122 = vmatpush1.bf16.msra.mxu0 0
  %4123 = vmatprep.mubr.bf16.mxu0 0
  %4124 = vmatmul.mubr.bf16.gmra.mrb[0].mxu0 %v4089
  %v4125 = vpop.f32.mrb[0].mxu0
  %v4126 = vadd.f32 0.0, %v4125
  %v4127 = vpop.f32.mrb[0].mxu0
  %v4128 = vpop.f32.mrb[0].mxu0
  %v4129 = vpop.f32.mrb[0].mxu0
  %4130 = vdwg.mxu0
  %v4131 = vld [vmem:[%s106] sm:$0xf]
  %v4132 = vld [vmem:[%s106 + $0x4] sm:$0xf]
  %v4133 = vld [vmem:[%s106 + $0x8] sm:$0xf]
  %v4134 = vld [vmem:[%s106 + $0xc] sm:$0xf]
  %v4139 = vunpack.c.l.b16 %v4131
  %v4140 = vunpack.c.l.b16 %v4132
  %v4141 = vunpack.c.l.b16 %v4133
  %v4142 = vunpack.c.l.b16 %v4134
  %v4143 = vpack.c.b16 %v4140, %v4139
  %v4144 = vpack.c.b16 %v4142, %v4141
  %4147 = vmatprep.subr.bf16.mxu0 0
  %4148 = vmatpush1.bf16.msra.mxu0 %v4143
  %4149 = vmatprep.subr.bf16.mxu0 0
  %4150 = vmatpush1.bf16.msra.mxu0 %v4144
  %4151 = vmatprep.subr.bf16.mxu0 0
  %4152 = vmatpush1.bf16.msra.mxu0 0
  %4153 = vmatprep.subr.bf16.mxu0 0
  %4154 = vmatpush1.bf16.msra.mxu0 0
  %4155 = vmatprep.subr.bf16.mxu0 0
  %4156 = vmatpush1.bf16.msra.mxu0 0
  %4157 = vmatprep.subr.bf16.mxu0 0
  %4158 = vmatpush1.bf16.msra.mxu0 0
  %4159 = vmatprep.subr.bf16.mxu0 0
  %4160 = vmatpush1.bf16.msra.mxu0 0
  %4161 = vmatprep.subr.bf16.mxu0 0
  %4162 = vmatpush1.bf16.msra.mxu0 0
  %4163 = vmatprep.subr.bf16.mxu0 0
  %4164 = vmatpush1.bf16.msra.mxu0 0
  %4165 = vmatprep.subr.bf16.mxu0 0
  %4166 = vmatpush1.bf16.msra.mxu0 0
  %4167 = vmatprep.subr.bf16.mxu0 0
  %4168 = vmatpush1.bf16.msra.mxu0 0
  %4169 = vmatprep.subr.bf16.mxu0 0
  %4170 = vmatpush1.bf16.msra.mxu0 0
  %4171 = vmatprep.subr.bf16.mxu0 0
  %4172 = vmatpush1.bf16.msra.mxu0 0
  %4173 = vmatprep.subr.bf16.mxu0 0
  %4174 = vmatpush1.bf16.msra.mxu0 0
  %4175 = vmatprep.subr.bf16.mxu0 0
  %4176 = vmatpush1.bf16.msra.mxu0 0
  %4177 = vmatprep.subr.bf16.mxu0 0
  %4178 = vmatpush1.bf16.msra.mxu0 0
  %4179 = vmatprep.mubr.bf16.mxu0 0
  %4180 = vmatmul.mubr.bf16.gmra.mrb[0].mxu0 %v4089
  %v4181 = vpop.f32.mrb[0].mxu0
  %v4182 = vadd.f32 0.0, %v4181
  %v4183 = vpop.f32.mrb[0].mxu0
  %v4184 = vpop.f32.mrb[0].mxu0
  %v4185 = vpop.f32.mrb[0].mxu0
  %4186 = vdwg.mxu0
  %v4187 = vld [vmem:[%s163] sm:$0xf]
  %v4188 = vld [vmem:[%s163 + $0x4] sm:$0xf]
  %v4189 = vld [vmem:[%s163 + $0x8] sm:$0xf]
  %v4190 = vld [vmem:[%s163 + $0xc] sm:$0xf]
  %s4191 = scalar_lea.vmem %s0, 14
  %v4192 = vld [vmem:[%s4191] sm:$0x3]
  %s4193 = scalar_lea.vmem %s0, 30
  %v4194 = vld [vmem:[%s4193] sm:$0x3]
  %s4195 = scalar_lea.vmem %s0, 46
  %v4196 = vld [vmem:[%s4195] sm:$0x3]
  %v4197 = vadd.f32 %v4192, %v4126
  %v4198 = vxor.u32 %v4197, 2147483648
  %v4199 = vmul.f32 %v4198, 1.442695
  %v4200 = vpow.pop %v4199
  %v4201 = vadd.f32 %v4200, 1.0
  %v4202 = vrcp.pop %v4201
  %v4203 = vmul.f32 1.0, %v4202
  %v4204 = vadd.f32 %v4194, %v4182
  %v4205 = vxor.u32 %v4204, 2147483648
  %v4206 = vmul.f32 %v4205, 1.442695
  %v4207 = vpow.pop %v4206
  %v4208 = vadd.f32 %v4207, 1.0
  %v4209 = vrcp.pop %v4208
  %v4210 = vmul.f32 1.0, %v4209
  %v4215 = vunpack.c.l.b16 %v4187
  %v4216 = vunpack.c.l.b16 %v4188
  %v4217 = vunpack.c.l.b16 %v4189
  %v4218 = vunpack.c.l.b16 %v4190
  %v4219 = vpack.c.b16 %v4216, %v4215
  %v4220 = vpack.c.b16 %v4218, %v4217
  %4223 = vmatprep.subr.bf16.mxu0 0
  %4224 = vmatpush1.bf16.msra.mxu0 %v4219
  %4225 = vmatprep.subr.bf16.mxu0 0
  %4226 = vmatpush1.bf16.msra.mxu0 %v4220
  %4227 = vmatprep.subr.bf16.mxu0 0
  %4228 = vmatpush1.bf16.msra.mxu0 0
  %4229 = vmatprep.subr.bf16.mxu0 0
  %4230 = vmatpush1.bf16.msra.mxu0 0
  %4231 = vmatprep.subr.bf16.mxu0 0
  %4232 = vmatpush1.bf16.msra.mxu0 0
  %4233 = vmatprep.subr.bf16.mxu0 0
  %4234 = vmatpush1.bf16.msra.mxu0 0
  %4235 = vmatprep.subr.bf16.mxu0 0
  %4236 = vmatpush1.bf16.msra.mxu0 0
  %4237 = vmatprep.subr.bf16.mxu0 0
  %4238 = vmatpush1.bf16.msra.mxu0 0
  %4239 = vmatprep.subr.bf16.mxu0 0
  %4240 = vmatpush1.bf16.msra.mxu0 0
  %4241 = vmatprep.subr.bf16.mxu0 0
  %4242 = vmatpush1.bf16.msra.mxu0 0
  %4243 = vmatprep.subr.bf16.mxu0 0
  %4244 = vmatpush1.bf16.msra.mxu0 0
  %4245 = vmatprep.subr.bf16.mxu0 0
  %4246 = vmatpush1.bf16.msra.mxu0 0
  %4247 = vmatprep.subr.bf16.mxu0 0
  %4248 = vmatpush1.bf16.msra.mxu0 0
  %4249 = vmatprep.subr.bf16.mxu0 0
  %4250 = vmatpush1.bf16.msra.mxu0 0
  %4251 = vmatprep.subr.bf16.mxu0 0
  %4252 = vmatpush1.bf16.msra.mxu0 0
  %4253 = vmatprep.subr.bf16.mxu0 0
  %4254 = vmatpush1.bf16.msra.mxu0 0
  %4255 = vmatprep.mubr.bf16.mxu0 0
  %4256 = vmatmul.mubr.bf16.gmra.mrb[0].mxu0 %v4089
  %v4257 = vpop.f32.mrb[0].mxu0
  %v4258 = vadd.f32 %v191, %v4257
  %v4259 = vpop.f32.mrb[0].mxu0
  %v4260 = vpop.f32.mrb[0].mxu0
  %v4261 = vpop.f32.mrb[0].mxu0
  %4262 = vdwg.mxu0
  %v4263 = vmul.f32 %v4203, %v4258
  %v4264 = vadd.f32 %v4196, %v4263
  %v4265 = vtanh.pop %v4264
  %v4266 = vsub.f32 1.0, %v4210
  %v4267 = vmul.f32 %v4266, %v4265
  %v4268 = vmul.f32 %v4210, %v4070
  %v4269 = vadd.f32 %v4267, %v4268
  %4270 = vst.msk [vmem:[#allocation2] sm:$0x3] %vm252, %v4269
  %v4271 = vld [vmem:[#allocation3] sm:$0x3]
  %v4272 = vpack.c.bf16 %v4269, %v4269
  %v4273 = vld [vmem:[%s2] sm:$0xf]
  %v4274 = vld [vmem:[%s2 + $0x4] sm:$0xf]
  %v4275 = vld [vmem:[%s2 + $0x8] sm:$0xf]
  %v4276 = vld [vmem:[%s2 + $0xc] sm:$0xf]
  %v4277 = vld [vmem:[%s260] sm:$0xf]
  %v4278 = vld [vmem:[%s260 + $0x4] sm:$0xf]
  %v4279 = vld [vmem:[%s260 + $0x8] sm:$0xf]
  %v4280 = vld [vmem:[%s260 + $0xc] sm:$0xf]
  %v4281 = vld [vmem:[%s265] sm:$0xf]
  %v4282 = vld [vmem:[%s265 + $0x4] sm:$0xf]
  %v4283 = vld [vmem:[%s265 + $0x8] sm:$0xf]
  %v4284 = vld [vmem:[%s265 + $0xc] sm:$0xf]
  %v4285 = vpack.c.bf16 %v4271, %v4271
  %v4286 = vld [vmem:[%s3] sm:$0xf]
  %v4287 = vld [vmem:[%s3 + $0x4] sm:$0xf]
  %v4288 = vld [vmem:[%s3 + $0x8] sm:$0xf]
  %v4289 = vld [vmem:[%s3 + $0xc] sm:$0xf]
  %v4294 = vunpack.c.l.b16 %v4286
  %v4295 = vunpack.c.l.b16 %v4287
  %v4296 = vunpack.c.l.b16 %v4288
  %v4297 = vunpack.c.l.b16 %v4289
  %v4298 = vpack.c.b16 %v4295, %v4294
  %v4299 = vpack.c.b16 %v4297, %v4296
  %v4303 = vsel %vm62, %v4285, 0
  %4305 = vmatprep.subr.bf16.mxu0 0
  %4306 = vmatpush1.bf16.msra.mxu0 %v4298
  %4307 = vmatprep.subr.bf16.mxu0 0
  %4308 = vmatpush1.bf16.msra.mxu0 %v4299
  %4309 = vmatprep.subr.bf16.mxu0 0
  %4310 = vmatpush1.bf16.msra.mxu0 0
  %4311 = vmatprep.subr.bf16.mxu0 0
  %4312 = vmatpush1.bf16.msra.mxu0 0
  %4313 = vmatprep.subr.bf16.mxu0 0
  %4314 = vmatpush1.bf16.msra.mxu0 0
  %4315 = vmatprep.subr.bf16.mxu0 0
  %4316 = vmatpush1.bf16.msra.mxu0 0
  %4317 = vmatprep.subr.bf16.mxu0 0
  %4318 = vmatpush1.bf16.msra.mxu0 0
  %4319 = vmatprep.subr.bf16.mxu0 0
  %4320 = vmatpush1.bf16.msra.mxu0 0
  %4321 = vmatprep.subr.bf16.mxu0 0
  %4322 = vmatpush1.bf16.msra.mxu0 0
  %4323 = vmatprep.subr.bf16.mxu0 0
  %4324 = vmatpush1.bf16.msra.mxu0 0
  %4325 = vmatprep.subr.bf16.mxu0 0
  %4326 = vmatpush1.bf16.msra.mxu0 0
  %4327 = vmatprep.subr.bf16.mxu0 0
  %4328 = vmatpush1.bf16.msra.mxu0 0
  %4329 = vmatprep.subr.bf16.mxu0 0
  %4330 = vmatpush1.bf16.msra.mxu0 0
  %4331 = vmatprep.subr.bf16.mxu0 0
  %4332 = vmatpush1.bf16.msra.mxu0 0
  %4333 = vmatprep.subr.bf16.mxu0 0
  %4334 = vmatpush1.bf16.msra.mxu0 0
  %4335 = vmatprep.subr.bf16.mxu0 0
  %4336 = vmatpush1.bf16.msra.mxu0 0
  %4337 = vmatprep.mubr.bf16.mxu0 0
  %4338 = vmatmul.mubr.bf16.gmra.mrb[0].mxu0 %v4303
  %v4339 = vpop.f32.mrb[0].mxu0
  %v4340 = vadd.f32 0.0, %v4339
  %v4341 = vpop.f32.mrb[0].mxu0
  %v4342 = vpop.f32.mrb[0].mxu0
  %v4343 = vpop.f32.mrb[0].mxu0
  %4344 = vdwg.mxu0
  %v4345 = vld [vmem:[%s330] sm:$0xf]
  %v4346 = vld [vmem:[%s330 + $0x4] sm:$0xf]
  %v4347 = vld [vmem:[%s330 + $0x8] sm:$0xf]
  %v4348 = vld [vmem:[%s330 + $0xc] sm:$0xf]
  %v4353 = vunpack.c.l.b16 %v4345
  %v4354 = vunpack.c.l.b16 %v4346
  %v4355 = vunpack.c.l.b16 %v4347
  %v4356 = vunpack.c.l.b16 %v4348
  %v4357 = vpack.c.b16 %v4354, %v4353
  %v4358 = vpack.c.b16 %v4356, %v4355
  %4361 = vmatprep.subr.bf16.mxu0 0
  %4362 = vmatpush1.bf16.msra.mxu0 %v4357
  %4363 = vmatprep.subr.bf16.mxu0 0
  %4364 = vmatpush1.bf16.msra.mxu0 %v4358
  %4365 = vmatprep.subr.bf16.mxu0 0
  %4366 = vmatpush1.bf16.msra.mxu0 0
  %4367 = vmatprep.subr.bf16.mxu0 0
  %4368 = vmatpush1.bf16.msra.mxu0 0
  %4369 = vmatprep.subr.bf16.mxu0 0
  %4370 = vmatpush1.bf16.msra.mxu0 0
  %4371 = vmatprep.subr.bf16.mxu0 0
  %4372 = vmatpush1.bf16.msra.mxu0 0
  %4373 = vmatprep.subr.bf16.mxu0 0
  %4374 = vmatpush1.bf16.msra.mxu0 0
  %4375 = vmatprep.subr.bf16.mxu0 0
  %4376 = vmatpush1.bf16.msra.mxu0 0
  %4377 = vmatprep.subr.bf16.mxu0 0
  %4378 = vmatpush1.bf16.msra.mxu0 0
  %4379 = vmatprep.subr.bf16.mxu0 0
  %4380 = vmatpush1.bf16.msra.mxu0 0
  %4381 = vmatprep.subr.bf16.mxu0 0
  %4382 = vmatpush1.bf16.msra.mxu0 0
  %4383 = vmatprep.subr.bf16.mxu0 0
  %4384 = vmatpush1.bf16.msra.mxu0 0
  %4385 = vmatprep.subr.bf16.mxu0 0
  %4386 = vmatpush1.bf16.msra.mxu0 0
  %4387 = vmatprep.subr.bf16.mxu0 0
  %4388 = vmatpush1.bf16.msra.mxu0 0
  %4389 = vmatprep.subr.bf16.mxu0 0
  %4390 = vmatpush1.bf16.msra.mxu0 0
  %4391 = vmatprep.subr.bf16.mxu0 0
  %4392 = vmatpush1.bf16.msra.mxu0 0
  %4393 = vmatprep.mubr.bf16.mxu0 0
  %4394 = vmatmul.mubr.bf16.gmra.mrb[0].mxu0 %v4303
  %v4395 = vpop.f32.mrb[0].mxu0
  %v4396 = vadd.f32 0.0, %v4395
  %v4397 = vpop.f32.mrb[0].mxu0
  %v4398 = vpop.f32.mrb[0].mxu0
  %v4399 = vpop.f32.mrb[0].mxu0
  %4400 = vdwg.mxu0
  %v4401 = vld [vmem:[%s387] sm:$0xf]
  %v4402 = vld [vmem:[%s387 + $0x4] sm:$0xf]
  %v4403 = vld [vmem:[%s387 + $0x8] sm:$0xf]
  %v4404 = vld [vmem:[%s387 + $0xc] sm:$0xf]
  %v4409 = vunpack.c.l.b16 %v4273
  %v4410 = vunpack.c.l.b16 %v4274
  %v4411 = vunpack.c.l.b16 %v4275
  %v4412 = vunpack.c.l.b16 %v4276
  %v4413 = vpack.c.b16 %v4410, %v4409
  %v4414 = vpack.c.b16 %v4412, %v4411
  %v4418 = vsel %vm62, %v4272, 0
  %4420 = vmatprep.subr.bf16.mxu0 0
  %4421 = vmatpush1.bf16.msra.mxu0 %v4413
  %4422 = vmatprep.subr.bf16.mxu0 0
  %4423 = vmatpush1.bf16.msra.mxu0 %v4414
  %4424 = vmatprep.subr.bf16.mxu0 0
  %4425 = vmatpush1.bf16.msra.mxu0 0
  %4426 = vmatprep.subr.bf16.mxu0 0
  %4427 = vmatpush1.bf16.msra.mxu0 0
  %4428 = vmatprep.subr.bf16.mxu0 0
  %4429 = vmatpush1.bf16.msra.mxu0 0
  %4430 = vmatprep.subr.bf16.mxu0 0
  %4431 = vmatpush1.bf16.msra.mxu0 0
  %4432 = vmatprep.subr.bf16.mxu0 0
  %4433 = vmatpush1.bf16.msra.mxu0 0
  %4434 = vmatprep.subr.bf16.mxu0 0
  %4435 = vmatpush1.bf16.msra.mxu0 0
  %4436 = vmatprep.subr.bf16.mxu0 0
  %4437 = vmatpush1.bf16.msra.mxu0 0
  %4438 = vmatprep.subr.bf16.mxu0 0
  %4439 = vmatpush1.bf16.msra.mxu0 0
  %4440 = vmatprep.subr.bf16.mxu0 0
  %4441 = vmatpush1.bf16.msra.mxu0 0
  %4442 = vmatprep.subr.bf16.mxu0 0
  %4443 = vmatpush1.bf16.msra.mxu0 0
  %4444 = vmatprep.subr.bf16.mxu0 0
  %4445 = vmatpush1.bf16.msra.mxu0 0
  %4446 = vmatprep.subr.bf16.mxu0 0
  %4447 = vmatpush1.bf16.msra.mxu0 0
  %4448 = vmatprep.subr.bf16.mxu0 0
  %4449 = vmatpush1.bf16.msra.mxu0 0
  %4450 = vmatprep.subr.bf16.mxu0 0
  %4451 = vmatpush1.bf16.msra.mxu0 0
  %4452 = vmatprep.mubr.bf16.mxu0 0
  %4453 = vmatmul.mubr.bf16.gmra.mrb[0].mxu0 %v4418
  %v4454 = vpop.f32.mrb[0].mxu0
  %v4455 = vadd.f32 %v4340, %v4454
  %v4456 = vpop.f32.mrb[0].mxu0
  %v4457 = vpop.f32.mrb[0].mxu0
  %v4458 = vpop.f32.mrb[0].mxu0
  %4459 = vdwg.mxu0
  %v4460 = vadd.f32 %v4455, %v451
  %v4461 = vxor.u32 %v4460, 2147483648
  %v4462 = vmul.f32 %v4461, 1.442695
  %v4463 = vpow.pop %v4462
  %v4464 = vadd.f32 %v4463, 1.0
  %v4465 = vrcp.pop %v4464
  %v4466 = vmul.f32 1.0, %v4465
  %v4471 = vunpack.c.l.b16 %v4277
  %v4472 = vunpack.c.l.b16 %v4278
  %v4473 = vunpack.c.l.b16 %v4279
  %v4474 = vunpack.c.l.b16 %v4280
  %v4475 = vpack.c.b16 %v4472, %v4471
  %v4476 = vpack.c.b16 %v4474, %v4473
  %4479 = vmatprep.subr.bf16.mxu0 0
  %4480 = vmatpush1.bf16.msra.mxu0 %v4475
  %4481 = vmatprep.subr.bf16.mxu0 0
  %4482 = vmatpush1.bf16.msra.mxu0 %v4476
  %4483 = vmatprep.subr.bf16.mxu0 0
  %4484 = vmatpush1.bf16.msra.mxu0 0
  %4485 = vmatprep.subr.bf16.mxu0 0
  %4486 = vmatpush1.bf16.msra.mxu0 0
  %4487 = vmatprep.subr.bf16.mxu0 0
  %4488 = vmatpush1.bf16.msra.mxu0 0
  %4489 = vmatprep.subr.bf16.mxu0 0
  %4490 = vmatpush1.bf16.msra.mxu0 0
  %4491 = vmatprep.subr.bf16.mxu0 0
  %4492 = vmatpush1.bf16.msra.mxu0 0
  %4493 = vmatprep.subr.bf16.mxu0 0
  %4494 = vmatpush1.bf16.msra.mxu0 0
  %4495 = vmatprep.subr.bf16.mxu0 0
  %4496 = vmatpush1.bf16.msra.mxu0 0
  %4497 = vmatprep.subr.bf16.mxu0 0
  %4498 = vmatpush1.bf16.msra.mxu0 0
  %4499 = vmatprep.subr.bf16.mxu0 0
  %4500 = vmatpush1.bf16.msra.mxu0 0
  %4501 = vmatprep.subr.bf16.mxu0 0
  %4502 = vmatpush1.bf16.msra.mxu0 0
  %4503 = vmatprep.subr.bf16.mxu0 0
  %4504 = vmatpush1.bf16.msra.mxu0 0
  %4505 = vmatprep.subr.bf16.mxu0 0
  %4506 = vmatpush1.bf16.msra.mxu0 0
  %4507 = vmatprep.subr.bf16.mxu0 0
  %4508 = vmatpush1.bf16.msra.mxu0 0
  %4509 = vmatprep.subr.bf16.mxu0 0
  %4510 = vmatpush1.bf16.msra.mxu0 0
  %4511 = vmatprep.mubr.bf16.mxu0 0
  %4512 = vmatmul.mubr.bf16.gmra.mrb[0].mxu0 %v4418
  %v4513 = vpop.f32.mrb[0].mxu0
  %v4514 = vadd.f32 %v4396, %v4513
  %v4515 = vpop.f32.mrb[0].mxu0
  %v4516 = vpop.f32.mrb[0].mxu0
  %v4517 = vpop.f32.mrb[0].mxu0
  %4518 = vdwg.mxu0
  %v4519 = vadd.f32 %v4514, %v516
  %v4520 = vxor.u32 %v4519, 2147483648
  %v4521 = vmul.f32 %v4520, 1.442695
  %v4522 = vpow.pop %v4521
  %v4523 = vadd.f32 %v4522, 1.0
  %v4524 = vrcp.pop %v4523
  %v4525 = vmul.f32 1.0, %v4524
  %v4530 = vunpack.c.l.b16 %v4281
  %v4531 = vunpack.c.l.b16 %v4282
  %v4532 = vunpack.c.l.b16 %v4283
  %v4533 = vunpack.c.l.b16 %v4284
  %v4534 = vpack.c.b16 %v4531, %v4530
  %v4535 = vpack.c.b16 %v4533, %v4532
  %4538 = vmatprep.subr.bf16.mxu0 0
  %4539 = vmatpush1.bf16.msra.mxu0 %v4534
  %4540 = vmatprep.subr.bf16.mxu0 0
  %4541 = vmatpush1.bf16.msra.mxu0 %v4535
  %4542 = vmatprep.subr.bf16.mxu0 0
  %4543 = vmatpush1.bf16.msra.mxu0 0
  %4544 = vmatprep.subr.bf16.mxu0 0
  %4545 = vmatpush1.bf16.msra.mxu0 0
  %4546 = vmatprep.subr.bf16.mxu0 0
  %4547 = vmatpush1.bf16.msra.mxu0 0
  %4548 = vmatprep.subr.bf16.mxu0 0
  %4549 = vmatpush1.bf16.msra.mxu0 0
  %4550 = vmatprep.subr.bf16.mxu0 0
  %4551 = vmatpush1.bf16.msra.mxu0 0
  %4552 = vmatprep.subr.bf16.mxu0 0
  %4553 = vmatpush1.bf16.msra.mxu0 0
  %4554 = vmatprep.subr.bf16.mxu0 0
  %4555 = vmatpush1.bf16.msra.mxu0 0
  %4556 = vmatprep.subr.bf16.mxu0 0
  %4557 = vmatpush1.bf16.msra.mxu0 0
  %4558 = vmatprep.subr.bf16.mxu0 0
  %4559 = vmatpush1.bf16.msra.mxu0 0
  %4560 = vmatprep.subr.bf16.mxu0 0
  %4561 = vmatpush1.bf16.msra.mxu0 0
  %4562 = vmatprep.subr.bf16.mxu0 0
  %4563 = vmatpush1.bf16.msra.mxu0 0
  %4564 = vmatprep.subr.bf16.mxu0 0
  %4565 = vmatpush1.bf16.msra.mxu0 0
  %4566 = vmatprep.subr.bf16.mxu0 0
  %4567 = vmatpush1.bf16.msra.mxu0 0
  %4568 = vmatprep.subr.bf16.mxu0 0
  %4569 = vmatpush1.bf16.msra.mxu0 0
  %4570 = vmatprep.mubr.bf16.mxu0 0
  %4571 = vmatmul.mubr.bf16.gmra.mrb[0].mxu0 %v4418
  %v4572 = vpop.f32.mrb[0].mxu0
  %v4573 = vadd.f32 %v529, %v4572
  %v4574 = vpop.f32.mrb[0].mxu0
  %v4575 = vpop.f32.mrb[0].mxu0
  %v4576 = vpop.f32.mrb[0].mxu0
  %4577 = vdwg.mxu0
  %v4582 = vunpack.c.l.b16 %v4401
  %v4583 = vunpack.c.l.b16 %v4402
  %v4584 = vunpack.c.l.b16 %v4403
  %v4585 = vunpack.c.l.b16 %v4404
  %v4586 = vpack.c.b16 %v4583, %v4582
  %v4587 = vpack.c.b16 %v4585, %v4584
  %4590 = vmatprep.subr.bf16.mxu0 0
  %4591 = vmatpush1.bf16.msra.mxu0 %v4586
  %4592 = vmatprep.subr.bf16.mxu0 0
  %4593 = vmatpush1.bf16.msra.mxu0 %v4587
  %4594 = vmatprep.subr.bf16.mxu0 0
  %4595 = vmatpush1.bf16.msra.mxu0 0
  %4596 = vmatprep.subr.bf16.mxu0 0
  %4597 = vmatpush1.bf16.msra.mxu0 0
  %4598 = vmatprep.subr.bf16.mxu0 0
  %4599 = vmatpush1.bf16.msra.mxu0 0
  %4600 = vmatprep.subr.bf16.mxu0 0
  %4601 = vmatpush1.bf16.msra.mxu0 0
  %4602 = vmatprep.subr.bf16.mxu0 0
  %4603 = vmatpush1.bf16.msra.mxu0 0
  %4604 = vmatprep.subr.bf16.mxu0 0
  %4605 = vmatpush1.bf16.msra.mxu0 0
  %4606 = vmatprep.subr.bf16.mxu0 0
  %4607 = vmatpush1.bf16.msra.mxu0 0
  %4608 = vmatprep.subr.bf16.mxu0 0
  %4609 = vmatpush1.bf16.msra.mxu0 0
  %4610 = vmatprep.subr.bf16.mxu0 0
  %4611 = vmatpush1.bf16.msra.mxu0 0
  %4612 = vmatprep.subr.bf16.mxu0 0
  %4613 = vmatpush1.bf16.msra.mxu0 0
  %4614 = vmatprep.subr.bf16.mxu0 0
  %4615 = vmatpush1.bf16.msra.mxu0 0
  %4616 = vmatprep.subr.bf16.mxu0 0
  %4617 = vmatpush1.bf16.msra.mxu0 0
  %4618 = vmatprep.subr.bf16.mxu0 0
  %4619 = vmatpush1.bf16.msra.mxu0 0
  %4620 = vmatprep.subr.bf16.mxu0 0
  %4621 = vmatpush1.bf16.msra.mxu0 0
  %4622 = vmatprep.mubr.bf16.mxu0 0
  %4623 = vmatmul.mubr.bf16.gmra.mrb[0].mxu0 %v4303
  %v4624 = vpop.f32.mrb[0].mxu0
  %v4625 = vadd.f32 %v587, %v4624
  %v4626 = vpop.f32.mrb[0].mxu0
  %v4627 = vpop.f32.mrb[0].mxu0
  %v4628 = vpop.f32.mrb[0].mxu0
  %4629 = vdwg.mxu0
  %v4630 = vmul.f32 %v4466, %v4625
  %v4631 = vadd.f32 %v4573, %v4630
  %v4632 = vtanh.pop %v4631
  %v4633 = vsub.f32 1.0, %v4525
  %v4634 = vmul.f32 %v4633, %v4632
  %v4635 = vmul.f32 %v4525, %v4271
  %v4636 = vadd.f32 %v4634, %v4635
  %4637 = vst.msk [vmem:[#allocation3] sm:$0x3] %vm252, %v4636
  %s4638 = scalar_lea.vmem %s7, 14
  %4639 = vst.msk [vmem:[%s4638] sm:$0x3] %vm252, %v4636
  %v4640 = vld [vmem:[#allocation2] sm:$0x3]
  %4641 = vst.msk [vmem:[%s8] sm:$0x3] %vm252, %v4640
  %v4642 = vld [vmem:[#allocation3] sm:$0x3]
  %4643 = vst.msk [vmem:[%s9] sm:$0x3] %vm252, %v4642
  // Predicated region
  $region34: #{encoder_forward.3} parent=0 // pred_check
    _
  $region35: #{encoder_forward.3} parent=0 // pred_check_branch
    %4645 = sbr.rel (0) target = $region37
  $region36: #{encoder_forward.3} parent=0 // pred_region
    _
  $region37: #{encoder_forward.3} parent=0 // pred_fallthru
    _
  // Predicated region
  $region38: #{encoder_forward.3} parent=0 // pred_check
    _
  $region39: #{encoder_forward.3} parent=0 // pred_check_branch
    %4647 = sbr.rel (0) target = $region41
  $region40: #{encoder_forward.3} parent=0 // pred_region
    _
  $region41: #{encoder_forward.3} parent=0 // pred_fallthru
    _
  // Predicated region
  $region42: #{encoder_forward.3} parent=0 // pred_check
    _
  $region43: #{encoder_forward.3} parent=0 // pred_check_branch
    %4649 = sbr.rel (0) target = $region45
  $region44: #{encoder_forward.3} parent=0 // pred_region
    _
  $region45: #{encoder_forward.3} parent=0 // pred_fallthru
    _
  // Predicated region
  $region46: #{encoder_forward.3} parent=0 // pred_check
    _
  $region47: #{encoder_forward.3} parent=0 // pred_check_branch
    %4651 = sbr.rel (0) target = $region49
  $region48: #{encoder_forward.3} parent=0 // pred_region
    _
  $region49: #{encoder_forward.3} parent=0 // pred_fallthru
    _
  // Predicated region
  $region50: #{encoder_forward.3} parent=0 // pred_check
    _
  $region51: #{encoder_forward.3} parent=0 // pred_check_branch
    %4653 = sbr.rel (0) target = $region53
  $region52: #{encoder_forward.3} parent=0 // pred_region
    _
  $region53: #{encoder_forward.3} parent=0 // pred_fallthru
    _
  // Predicated region
  $region54: #{encoder_forward.3} parent=0 // pred_check
    _
  $region55: #{encoder_forward.3} parent=0 // pred_check_branch
    %4655 = sbr.rel (0) target = $region57
  $region56: #{encoder_forward.3} parent=0 // pred_region
    _
  $region57: #{encoder_forward.3} parent=0 // pred_fallthru
    _

</llo_original>
